<compile_context>
chip_gen: v7x
topology: tpu7x:2x2x1
jax: 0.10.0
libtpu: 0.0.40
codegen_flags: <defaults>
</compile_context>

<pallas_src>
import jax
import jax.numpy as jnp
from jax.experimental import pallas as pl
from jax.experimental.pallas import tpu as pltpu

Number_Channel = 3
Number_Feature_Gen = 64
Z_dim = 100
BN_EPS = 1e-5
VMEM_LIMIT = 32 * 1024 * 1024


def _pick_tile(n, cap, mult):
    """Largest tile <= cap that divides n and is a multiple of `mult`.
    If n <= cap the full dim is used (always a legal block)."""
    if n <= cap:
        return n
    t = (cap // mult) * mult
    while t >= mult:
        if n % t == 0:
            return t
        t -= mult
    return n  # fallback: full dimension


# --------------------------- Pallas kernels ---------------------------------

def _mm_stats_kernel(p_ref, w_ref, y_ref, st_ref):
    """One (parity, row-block, col-block) tile: y = P @ W on the MXU (bf16
    operands, f32 accumulation).  Writes y as bf16 plus the per-block,
    per-column sum / sum-of-squares (f32, taken before the bf16 cast) so the
    BatchNorm statistics come for free with the matmul."""
    y = jnp.dot(p_ref[...], w_ref[...], preferred_element_type=jnp.float32)
    st_ref[0:1, :] = jnp.sum(y, axis=0, keepdims=True)
    st_ref[1:2, :] = jnp.sum(y * y, axis=0, keepdims=True)
    y_ref[...] = y.astype(y_ref.dtype)


def _mm_tanh_kernel(p_ref, w_ref, o_ref):
    """Final layer: bf16 matmul, f32 accumulation, fused Tanh."""
    y = jnp.dot(p_ref[...], w_ref[...], preferred_element_type=jnp.float32)
    o_ref[...] = jnp.tanh(y).astype(o_ref.dtype)


def _bn_relu_kernel(y_ref, scale_ref, shift_ref, o_ref):
    """y * scale + shift, then ReLU; reads/writes bf16 activations."""
    z = y_ref[...].astype(jnp.float32) * scale_ref[...] + shift_ref[...]
    o_ref[...] = jnp.maximum(z, 0.0).astype(o_ref.dtype)


# --------------------------- Pallas wrappers ---------------------------------

def matmul_stats(patches, w_par):
    """(P, M, K) bf16 @ (P, K, C) bf16 -> y (P, M, C) bf16 plus per-(parity,
    row-block) column sum / sumsq partials (P, M//tm, 2, C) f32.

    Single K block (nk = 1) so there is no accumulator revisit; all three grid
    axes are 'parallel' (both v7x TensorCores get work even when M is one
    block, via the parity axis)."""
    P, M, K = patches.shape
    _, _, C = w_par.shape
    tm = _pick_tile(M, 512, 16)
    tn = _pick_tile(C, 512, 128)
    ni, nj = M // tm, C // tn
    return pl.pallas_call(
        _mm_stats_kernel,
        out_shape=(jax.ShapeDtypeStruct((P, M, C), jnp.bfloat16),
                   jax.ShapeDtypeStruct((P, ni, 2, C), jnp.float32)),
        grid_spec=pltpu.PrefetchScalarGridSpec(
            num_scalar_prefetch=0,
            grid=(P, nj, ni),                      # i innermost: weight block stays resident
            in_specs=[
                pl.BlockSpec((None, tm, K), lambda p, j, i: (p, i, 0)),
                pl.BlockSpec((None, K, tn), lambda p, j, i: (p, 0, j)),
            ],
            out_specs=(
                pl.BlockSpec((None, tm, tn), lambda p, j, i: (p, i, j)),
                pl.BlockSpec((None, None, 2, tn), lambda p, j, i: (p, i, 0, j)),
            ),
        ),
        compiler_params=pltpu.CompilerParams(
            dimension_semantics=("parallel", "parallel", "parallel"),
            vmem_limit_bytes=VMEM_LIMIT),
    )(patches, w_par)


def matmul_tanh(patches, w_par):
    """Final layer matmul (per output parity) with fused Tanh, f32 output."""
    P, M, K = patches.shape
    _, _, C = w_par.shape
    tm = _pick_tile(M, 512, 16)
    tn = _pick_tile(C, 512, 128)   # C = 3 -> full dim (lane-masked but tiny)
    return pl.pallas_call(
        _mm_tanh_kernel,
        out_shape=jax.ShapeDtypeStruct((P, M, C), jnp.float32),
        grid_spec=pltpu.PrefetchScalarGridSpec(
            num_scalar_prefetch=0,
            grid=(P, C // tn, M // tm),
            in_specs=[
                pl.BlockSpec((None, tm, K), lambda p, j, i: (p, i, 0)),
                pl.BlockSpec((None, K, tn), lambda p, j, i: (p, 0, j)),
            ],
            out_specs=pl.BlockSpec((None, tm, tn), lambda p, j, i: (p, i, j)),
        ),
        compiler_params=pltpu.CompilerParams(
            dimension_semantics=("parallel", "parallel", "parallel"),
            vmem_limit_bytes=VMEM_LIMIT),
    )(patches, w_par)


def bn_relu(y2d, scale, shift):
    """(M, C) * scale + shift, ReLU, bf16 out.  Channel dims < 128 are folded
    into 128-wide lanes (row-major no-op reshape + tiled scale/shift) so both
    loads and stores are lane-dense/unmasked."""
    M0, C0 = y2d.shape
    fold = 1
    if C0 < 128 and 128 % C0 == 0 and M0 % (128 // C0) == 0:
        fold = 128 // C0
        y2d = y2d.reshape(M0 // fold, C0 * fold)
        scale = jnp.tile(scale, (1, fold))
        shift = jnp.tile(shift, (1, fold))
    M, C = y2d.shape
    tm = _pick_tile(M, 1024, 16)
    row = pl.BlockSpec((1, C), lambda i: (0, 0))
    out = pl.pallas_call(
        _bn_relu_kernel,
        out_shape=jax.ShapeDtypeStruct((M, C), jnp.bfloat16),
        grid_spec=pltpu.PrefetchScalarGridSpec(
            num_scalar_prefetch=0,
            grid=(M // tm,),
            in_specs=[pl.BlockSpec((tm, C), lambda i: (i, 0)), row, row],
            out_specs=pl.BlockSpec((tm, C), lambda i: (i, 0)),
        ),
        compiler_params=pltpu.CompilerParams(
            dimension_semantics=("parallel",),
            vmem_limit_bytes=VMEM_LIMIT),
    )(y2d, scale, shift)
    return out.reshape(M0, C0)


# ------------------------------- JAX glue ------------------------------------

def _parity_patches(x):
    """x: (N, H, W, Cin) bf16 (H == W).  Returns (4, N*H*W, 4*Cin): for each
    output parity (rh, rw) of the stride-2 / pad-1 / 4x4 transposed conv, the
    2x2 sub-kernel patches over the 1-zero-padded input.  No structural zeros;
    K = 4*Cin instead of 16*Cin."""
    # TODO(synk): fuse this window gather into the matmul kernel (read shifted
    # slabs of the padded NHWC activation directly) to avoid the remaining 4x
    # patch duplication in HBM for large batches.
    N, H, W, C = x.shape
    xp = jnp.pad(x, ((0, 0), (1, 1), (1, 1), (0, 0)))
    pats = []
    for rh in (0, 1):
        for rw in (0, 1):
            taps = [xp[:, rh + dh:rh + dh + H, rw + dw:rw + dw + W, :]
                    for dh in (0, 1) for dw in (0, 1)]
            p = jnp.stack(taps, axis=3)                    # (N, H, W, 4, C)
            pats.append(p.reshape(N * H * W, 4 * C))
    return jnp.stack(pats, axis=0)                         # (4, M, 4*C)


def _interleave_parity(rows, N, H, C):
    """rows: (4*N*H*H, C) ordered (rh, rw, n, a, b) -> (N, 2H, 2H, C) with
    out[n, 2a+rh, 2b+rw, c] = rows[((rh*2+rw)*N + n)*H*H + a*H + b, c]."""
    t = rows.reshape(2, 2, N, H, H, C)
    t = jnp.transpose(t, (2, 3, 0, 4, 1, 5))
    return t.reshape(N, 2 * H, 2 * H, C)


def _bn_affine(stats, count, gamma, beta, fold=1):
    """Combine per-block partial (sum, sumsq) into the BatchNorm affine:
    scale = gamma * rsqrt(var + eps), shift = beta - mean * scale."""
    s = jnp.sum(stats[..., 0, :], axis=(0, 1))
    q = jnp.sum(stats[..., 1, :], axis=(0, 1))
    if fold > 1:  # layer 0: columns are (oh, ow, c) -> reduce over (oh, ow)
        c = s.shape[0] // fold
        s = s.reshape(fold, c).sum(axis=0)
        q = q.reshape(fold, c).sum(axis=0)
    mean = s / count
    var = jnp.maximum(q / count - mean * mean, 0.0)        # biased var, clamped
    scale = gamma.reshape(-1) * jax.lax.rsqrt(var + BN_EPS)
    shift = beta.reshape(-1) - mean * scale
    return scale.reshape(1, -1), shift.reshape(1, -1)


def generator_forward(z_nchw, params):
    N = z_nchw.shape[0]
    ngf = Number_Feature_Gen

    # Layer 0: ConvT(100 -> 8*ngf, 4x4, s1, p0) on a 1x1 input == matmul.
    x0 = z_nchw.reshape(N, Z_dim).astype(jnp.bfloat16)
    y0, st0 = matmul_stats(x0[None], params["w0"])          # (1, N, 16*8ngf)
    c0 = ngf * 8
    scale0, shift0 = _bn_affine(st0, count=N * 16, fold=16,
                                gamma=params["gamma0"], beta=params["beta0"])
    x = bn_relu(y0.reshape(N * 16, c0), scale0, shift0).reshape(N, 4, 4, c0)

    # Layers 1-3: stride-2 ConvT (parity decomposition) + BN + ReLU.
    H = 4
    for idx, cout in ((1, ngf * 4), (2, ngf * 2), (3, ngf)):
        patches = _parity_patches(x)                        # (4, N*H*H, 4*Cin)
        y, st = matmul_stats(patches, params[f"w{idx}"])    # (4, M, cout) bf16
        scale, shift = _bn_affine(st, count=4 * N * H * H,
                                  gamma=params[f"gamma{idx}"],
                                  beta=params[f"beta{idx}"])
        act = bn_relu(y.reshape(4 * N * H * H, cout), scale, shift)
        x = _interleave_parity(act, N, H, cout)             # (N, 2H, 2H, cout)
        H *= 2

    # Layer 4: stride-2 ConvT(ngf -> 3) + Tanh.
    patches = _parity_patches(x)                            # (4, N*32*32, 4*ngf)
    y = matmul_tanh(patches, params["w4"])                  # (4, M, 3) f32
    img = _interleave_parity(y.reshape(4 * N * H * H, Number_Channel),
                             N, H, Number_Channel)          # (N, 64, 64, 3)
    return jnp.transpose(img, (0, 3, 1, 2))                 # NCHW (N, 3, 64, 64)


# --------------------------- parameters --------------------------------------

def init_params(key):
    """Raw PyTorch-layout params: ConvTranspose2d weight is (Cin, Cout, 4, 4)."""
    ngf = Number_Feature_Gen
    chans = [(Z_dim, ngf * 8), (ngf * 8, ngf * 4), (ngf * 4, ngf * 2),
             (ngf * 2, ngf), (ngf, Number_Channel)]
    raw = {}
    for i, (cin, cout) in enumerate(chans):
        key, sub = jax.random.split(key)
        raw[f"w{i}"] = 0.02 * jax.random.normal(sub, (cin, cout, 4, 4), jnp.float32)
        if i < 4:                                           # layers with BatchNorm2d
            raw[f"gamma{i}"] = jnp.ones((1, cout), jnp.float32)
            raw[f"beta{i}"] = jnp.zeros((1, cout), jnp.float32)
    return raw


def _parity_weight(w):
    """(Cin, Cout, 4, 4) ConvT weight -> (4 parities, 4*Cin, Cout) 2x2
    sub-kernels: parity (rh, rw), tap (dh, dw) uses W[..., 3-rh-2dh, 3-rw-2dw]."""
    cin, cout = w.shape[0], w.shape[1]
    subs = []
    for rh in (0, 1):
        for rw in (0, 1):
            taps = [w[:, :, 3 - rh - 2 * dh, 3 - rw - 2 * dw]   # (Cin, Cout)
                    for dh in (0, 1) for dw in (0, 1)]
            subs.append(jnp.stack(taps, axis=0).reshape(4 * cin, cout))
    return jnp.stack(subs, axis=0)                              # (4, 4*Cin, Cout)


def preprocess_params(raw):
    """One-time prep (outside the jitted forward): reorder weights into matmul
    layout and cast to bf16."""
    prepped = {}
    # Layer 0: 1x1 input, s1, p0 -> columns ordered (oh, ow, cout), no flip.
    w0 = raw["w0"]
    cin, cout = w0.shape[0], w0.shape[1]
    prepped["w0"] = (jnp.transpose(w0, (0, 2, 3, 1))
                     .reshape(cin, 16 * cout).astype(jnp.bfloat16)[None])
    for i in range(1, 5):
        prepped[f"w{i}"] = _parity_weight(raw[f"w{i}"]).astype(jnp.bfloat16)
    for i in range(4):
        prepped[f"gamma{i}"] = raw[f"gamma{i}"]
        prepped[f"beta{i}"] = raw[f"beta{i}"]
    return prepped


if __name__ == "__main__":
    key = jax.random.PRNGKey(0)
    pkey, zkey = jax.random.split(key)
    params = preprocess_params(init_params(pkey))
    z = jax.random.normal(zkey, (2, Z_dim, 1, 1), jnp.float32)

    out = jax.jit(generator_forward)(z, params)
    out = jax.block_until_ready(out)

    assert out.shape == (2, Number_Channel, 64, 64), out.shape
    assert bool(jnp.all(jnp.isfinite(out)))
    assert bool(jnp.all((out >= -1.0) & (out <= 1.0)))   # tanh output range
    print("KERNEL_OK")
</pallas_src>

<mosaic_0001>
module attributes {stable_mosaic.version = 11 : i64} {
  func.func @_mm_stats_kernel(%arg0: i32, %arg1: i32, %arg2: i32, %arg3: memref<1x2x100xbf16, #tpu.memory_space<vmem>>, %arg4: memref<1x100x512xbf16, #tpu.memory_space<vmem>>, %arg5: memref<1x2x512xbf16, #tpu.memory_space<vmem>>, %arg6: memref<1x1x2x512xf32, #tpu.memory_space<vmem>>) attributes {dimension_semantics = [#tpu.dimension_semantics<parallel>, #tpu.dimension_semantics<parallel>, #tpu.dimension_semantics<parallel>], iteration_bounds = array<i64: 1, 16, 1>, scalar_prefetch = 0 : i64, scratch_operands = 0 : i64, tpu.core_type = #tpu.core_type<tc>, window_params = [{transform_indices = @transform_0, window_bounds = array<i64: 1, 2, 100>}, {transform_indices = @transform_1, window_bounds = array<i64: 1, 100, 512>}, {transform_indices = @transform_2, window_bounds = array<i64: 1, 2, 512>}, {transform_indices = @transform_3, window_bounds = array<i64: 1, 1, 2, 512>}]} {
    %c0 = arith.constant 0 : index
    %c0_0 = arith.constant 0 : index
    %c0_1 = arith.constant 0 : index
    %0 = vector.load %arg3[%c0, %c0_0, %c0_1] : memref<1x2x100xbf16, #tpu.memory_space<vmem>>, vector<1x2x100xbf16>
    %1 = vector.shape_cast %0 : vector<1x2x100xbf16> to vector<2x100xbf16>
    %c0_2 = arith.constant 0 : index
    %c0_3 = arith.constant 0 : index
    %c0_4 = arith.constant 0 : index
    %2 = vector.load %arg4[%c0_2, %c0_3, %c0_4] : memref<1x100x512xbf16, #tpu.memory_space<vmem>>, vector<1x100x512xbf16>
    %3 = vector.shape_cast %2 : vector<1x100x512xbf16> to vector<100x512xbf16>
    %cst = arith.constant dense<0.000000e+00> : vector<2x512xf32>
    %4 = tpu.matmul %1, %3, %cst {dimension_numbers = #tpu.dot_dimension_numbers<[1], [0], [0], [1], [0, 0, 1, 1], [], []>} : vector<2x100xbf16>, vector<100x512xbf16>, vector<2x512xf32> -> vector<2x512xf32>
    %cst_5 = arith.constant dense<0.000000e+00> : vector<512xf32>
    %5 = vector.multi_reduction <add>, %4, %cst_5 [0] : vector<2x512xf32> to vector<512xf32>
    %6 = vector.shape_cast %5 : vector<512xf32> to vector<1x512xf32>
    %c0_6 = arith.constant 0 : index
    %c0_7 = arith.constant 0 : index
    %c0_8 = arith.constant 0 : index
    %c0_9 = arith.constant 0 : index
    %7 = vector.load %arg6[%c0_6, %c0_7, %c0_8, %c0_9] : memref<1x1x2x512xf32, #tpu.memory_space<vmem>>, vector<1x1x1x512xf32>
    %8 = vector.shape_cast %7 : vector<1x1x1x512xf32> to vector<1x512xf32>
    %9 = vector.shape_cast %6 : vector<1x512xf32> to vector<1x1x1x512xf32>
    tpu.vector_store %arg6[%c0_6, %c0_7, %c0_8, %c0_9], %9 {strides = array<i32>} : memref<1x1x2x512xf32, #tpu.memory_space<vmem>>, vector<1x1x1x512xf32>,
    %10 = arith.mulf %4, %4 : vector<2x512xf32>
    %cst_10 = arith.constant dense<0.000000e+00> : vector<512xf32>
    %11 = vector.multi_reduction <add>, %10, %cst_10 [0] : vector<2x512xf32> to vector<512xf32>
    %12 = vector.shape_cast %11 : vector<512xf32> to vector<1x512xf32>
    %c0_11 = arith.constant 0 : index
    %c0_12 = arith.constant 0 : index
    %c1 = arith.constant 1 : index
    %c0_13 = arith.constant 0 : index
    %13 = vector.load %arg6[%c0_11, %c0_12, %c1, %c0_13] : memref<1x1x2x512xf32, #tpu.memory_space<vmem>>, vector<1x1x1x512xf32>
    %14 = vector.shape_cast %13 : vector<1x1x1x512xf32> to vector<1x512xf32>
    %15 = vector.shape_cast %12 : vector<1x512xf32> to vector<1x1x1x512xf32>
    tpu.vector_store %arg6[%c0_11, %c0_12, %c1, %c0_13], %15 {strides = array<i32>} : memref<1x1x2x512xf32, #tpu.memory_space<vmem>>, vector<1x1x1x512xf32>,
    %16 = arith.truncf %4 : vector<2x512xf32> to vector<2x512xbf16>
    %c0_14 = arith.constant 0 : index
    %c0_15 = arith.constant 0 : index
    %c0_16 = arith.constant 0 : index
    %17 = vector.load %arg5[%c0_14, %c0_15, %c0_16] : memref<1x2x512xbf16, #tpu.memory_space<vmem>>, vector<1x2x512xbf16>
    %18 = vector.shape_cast %17 : vector<1x2x512xbf16> to vector<2x512xbf16>
    %19 = vector.shape_cast %16 : vector<2x512xbf16> to vector<1x2x512xbf16>
    tpu.vector_store %arg5[%c0_14, %c0_15, %c0_16], %19 {strides = array<i32>} : memref<1x2x512xbf16, #tpu.memory_space<vmem>>, vector<1x2x512xbf16>,
    return
  }
  func.func @transform_0(%arg0: i32, %arg1: i32, %arg2: i32) -> (i32, i32, i32) {
    %c0_i32 = arith.constant 0 : i32
    %c0_i32_0 = arith.constant 0 : i32
    return %arg0, %arg2, %c0_i32 : i32, i32, i32
  }
  func.func @transform_1(%arg0: i32, %arg1: i32, %arg2: i32) -> (i32, i32, i32) {
    %c0_i32 = arith.constant 0 : i32
    %c0_i32_0 = arith.constant 0 : i32
    return %arg0, %c0_i32, %arg1 : i32, i32, i32
  }
  func.func @transform_2(%arg0: i32, %arg1: i32, %arg2: i32) -> (i32, i32, i32) {
    %c0_i32 = arith.constant 0 : i32
    return %arg0, %arg2, %arg1 : i32, i32, i32
  }
  func.func @transform_3(%arg0: i32, %arg1: i32, %arg2: i32) -> (i32, i32, i32, i32) {
    %c0_i32 = arith.constant 0 : i32
    %c0_i32_0 = arith.constant 0 : i32
    return %arg0, %arg2, %c0_i32, %arg1 : i32, i32, i32, i32
  }
}

module attributes {stable_mosaic.version = 11 : i64} {
  func.func @_bn_relu_kernel(%arg0: i32, %arg1: memref<32x512xbf16, #tpu.memory_space<vmem>>, %arg2: memref<1x512xf32, #tpu.memory_space<vmem>>, %arg3: memref<1x512xf32, #tpu.memory_space<vmem>>, %arg4: memref<32x512xbf16, #tpu.memory_space<vmem>>) attributes {dimension_semantics = [#tpu.dimension_semantics<parallel>], iteration_bounds = array<i64: 1>, scalar_prefetch = 0 : i64, scratch_operands = 0 : i64, tpu.core_type = #tpu.core_type<tc>, window_params = [{transform_indices = @transform_0, window_bounds = array<i64: 32, 512>}, {pipeline_mode = #tpu.pipeline_mode<synchronous>, transform_indices = @transform_1, window_bounds = array<i64: 1, 512>}, {pipeline_mode = #tpu.pipeline_mode<synchronous>, transform_indices = @transform_2, window_bounds = array<i64: 1, 512>}, {transform_indices = @transform_3, window_bounds = array<i64: 32, 512>}]} {
    %c0 = arith.constant 0 : index
    %c0_0 = arith.constant 0 : index
    %0 = vector.load %arg1[%c0, %c0_0] : memref<32x512xbf16, #tpu.memory_space<vmem>>, vector<32x512xbf16>
    %1 = arith.extf %0 : vector<32x512xbf16> to vector<32x512xf32>
    %c0_1 = arith.constant 0 : index
    %c0_2 = arith.constant 0 : index
    %2 = vector.load %arg2[%c0_1, %c0_2] : memref<1x512xf32, #tpu.memory_space<vmem>>, vector<1x512xf32>
    %3 = vector.broadcast %2 : vector<1x512xf32> to vector<32x512xf32>
    %4 = arith.mulf %1, %3 : vector<32x512xf32>
    %c0_3 = arith.constant 0 : index
    %c0_4 = arith.constant 0 : index
    %5 = vector.load %arg3[%c0_3, %c0_4] : memref<1x512xf32, #tpu.memory_space<vmem>>, vector<1x512xf32>
    %6 = vector.broadcast %5 : vector<1x512xf32> to vector<32x512xf32>
    %7 = arith.addf %4, %6 : vector<32x512xf32>
    %cst = arith.constant 0.000000e+00 : f32
    %8 = vector.broadcast %cst : f32 to vector<32x512xf32>
    %9 = arith.maximumf %7, %8 : vector<32x512xf32>
    %10 = arith.truncf %9 : vector<32x512xf32> to vector<32x512xbf16>
    %c0_5 = arith.constant 0 : index
    %c0_6 = arith.constant 0 : index
    %11 = vector.load %arg4[%c0_5, %c0_6] : memref<32x512xbf16, #tpu.memory_space<vmem>>, vector<32x512xbf16>
    tpu.vector_store %arg4[%c0_5, %c0_6], %10 {strides = array<i32>} : memref<32x512xbf16, #tpu.memory_space<vmem>>, vector<32x512xbf16>,
    return
  }
  func.func @transform_0(%arg0: i32) -> (i32, i32) {
    %c0_i32 = arith.constant 0 : i32
    %c0_i32_0 = arith.constant 0 : i32
    return %arg0, %c0_i32 : i32, i32
  }
  func.func @transform_1(%arg0: i32) -> (i32, i32) {
    %c0_i32 = arith.constant 0 : i32
    %c0_i32_0 = arith.constant 0 : i32
    %c0_i32_1 = arith.constant 0 : i32
    return %c0_i32, %c0_i32_0 : i32, i32
  }
  func.func @transform_2(%arg0: i32) -> (i32, i32) {
    %c0_i32 = arith.constant 0 : i32
    %c0_i32_0 = arith.constant 0 : i32
    %c0_i32_1 = arith.constant 0 : i32
    return %c0_i32, %c0_i32_0 : i32, i32
  }
  func.func @transform_3(%arg0: i32) -> (i32, i32) {
    %c0_i32 = arith.constant 0 : i32
    %c0_i32_0 = arith.constant 0 : i32
    return %arg0, %c0_i32 : i32, i32
  }
}

module attributes {stable_mosaic.version = 11 : i64} {
  func.func @_mm_stats_kernel(%arg0: i32, %arg1: i32, %arg2: i32, %arg3: memref<1x32x2048xbf16, #tpu.memory_space<vmem>>, %arg4: memref<1x2048x256xbf16, #tpu.memory_space<vmem>>, %arg5: memref<1x32x256xbf16, #tpu.memory_space<vmem>>, %arg6: memref<1x1x2x256xf32, #tpu.memory_space<vmem>>) attributes {dimension_semantics = [#tpu.dimension_semantics<parallel>, #tpu.dimension_semantics<parallel>, #tpu.dimension_semantics<parallel>], iteration_bounds = array<i64: 4, 1, 1>, scalar_prefetch = 0 : i64, scratch_operands = 0 : i64, tpu.core_type = #tpu.core_type<tc>, window_params = [{transform_indices = @transform_0, window_bounds = array<i64: 1, 32, 2048>}, {transform_indices = @transform_1, window_bounds = array<i64: 1, 2048, 256>}, {transform_indices = @transform_2, window_bounds = array<i64: 1, 32, 256>}, {transform_indices = @transform_3, window_bounds = array<i64: 1, 1, 2, 256>}]} {
    %c0 = arith.constant 0 : index
    %c0_0 = arith.constant 0 : index
    %c0_1 = arith.constant 0 : index
    %0 = vector.load %arg3[%c0, %c0_0, %c0_1] : memref<1x32x2048xbf16, #tpu.memory_space<vmem>>, vector<1x32x2048xbf16>
    %1 = vector.shape_cast %0 : vector<1x32x2048xbf16> to vector<32x2048xbf16>
    %c0_2 = arith.constant 0 : index
    %c0_3 = arith.constant 0 : index
    %c0_4 = arith.constant 0 : index
    %2 = vector.load %arg4[%c0_2, %c0_3, %c0_4] : memref<1x2048x256xbf16, #tpu.memory_space<vmem>>, vector<1x2048x256xbf16>
    %3 = vector.shape_cast %2 : vector<1x2048x256xbf16> to vector<2048x256xbf16>
    %cst = arith.constant dense<0.000000e+00> : vector<32x256xf32>
    %4 = tpu.matmul %1, %3, %cst {dimension_numbers = #tpu.dot_dimension_numbers<[1], [0], [0], [1], [0, 0, 1, 1], [], []>} : vector<32x2048xbf16>, vector<2048x256xbf16>, vector<32x256xf32> -> vector<32x256xf32>
    %cst_5 = arith.constant dense<0.000000e+00> : vector<256xf32>
    %5 = vector.multi_reduction <add>, %4, %cst_5 [0] : vector<32x256xf32> to vector<256xf32>
    %6 = vector.shape_cast %5 : vector<256xf32> to vector<1x256xf32>
    %c0_6 = arith.constant 0 : index
    %c0_7 = arith.constant 0 : index
    %c0_8 = arith.constant 0 : index
    %c0_9 = arith.constant 0 : index
    %7 = vector.load %arg6[%c0_6, %c0_7, %c0_8, %c0_9] : memref<1x1x2x256xf32, #tpu.memory_space<vmem>>, vector<1x1x1x256xf32>
    %8 = vector.shape_cast %7 : vector<1x1x1x256xf32> to vector<1x256xf32>
    %9 = vector.shape_cast %6 : vector<1x256xf32> to vector<1x1x1x256xf32>
    tpu.vector_store %arg6[%c0_6, %c0_7, %c0_8, %c0_9], %9 {strides = array<i32>} : memref<1x1x2x256xf32, #tpu.memory_space<vmem>>, vector<1x1x1x256xf32>,
    %10 = arith.mulf %4, %4 : vector<32x256xf32>
    %cst_10 = arith.constant dense<0.000000e+00> : vector<256xf32>
    %11 = vector.multi_reduction <add>, %10, %cst_10 [0] : vector<32x256xf32> to vector<256xf32>
    %12 = vector.shape_cast %11 : vector<256xf32> to vector<1x256xf32>
    %c0_11 = arith.constant 0 : index
    %c0_12 = arith.constant 0 : index
    %c1 = arith.constant 1 : index
    %c0_13 = arith.constant 0 : index
    %13 = vector.load %arg6[%c0_11, %c0_12, %c1, %c0_13] : memref<1x1x2x256xf32, #tpu.memory_space<vmem>>, vector<1x1x1x256xf32>
    %14 = vector.shape_cast %13 : vector<1x1x1x256xf32> to vector<1x256xf32>
    %15 = vector.shape_cast %12 : vector<1x256xf32> to vector<1x1x1x256xf32>
    tpu.vector_store %arg6[%c0_11, %c0_12, %c1, %c0_13], %15 {strides = array<i32>} : memref<1x1x2x256xf32, #tpu.memory_space<vmem>>, vector<1x1x1x256xf32>,
    %16 = arith.truncf %4 : vector<32x256xf32> to vector<32x256xbf16>
    %c0_14 = arith.constant 0 : index
    %c0_15 = arith.constant 0 : index
    %c0_16 = arith.constant 0 : index
    %17 = vector.load %arg5[%c0_14, %c0_15, %c0_16] : memref<1x32x256xbf16, #tpu.memory_space<vmem>>, vector<1x32x256xbf16>
    %18 = vector.shape_cast %17 : vector<1x32x256xbf16> to vector<32x256xbf16>
    %19 = vector.shape_cast %16 : vector<32x256xbf16> to vector<1x32x256xbf16>
    tpu.vector_store %arg5[%c0_14, %c0_15, %c0_16], %19 {strides = array<i32>} : memref<1x32x256xbf16, #tpu.memory_space<vmem>>, vector<1x32x256xbf16>,
    return
  }
  func.func @transform_0(%arg0: i32, %arg1: i32, %arg2: i32) -> (i32, i32, i32) {
    %c0_i32 = arith.constant 0 : i32
    %c0_i32_0 = arith.constant 0 : i32
    return %arg0, %arg2, %c0_i32 : i32, i32, i32
  }
  func.func @transform_1(%arg0: i32, %arg1: i32, %arg2: i32) -> (i32, i32, i32) {
    %c0_i32 = arith.constant 0 : i32
    %c0_i32_0 = arith.constant 0 : i32
    return %arg0, %c0_i32, %arg1 : i32, i32, i32
  }
  func.func @transform_2(%arg0: i32, %arg1: i32, %arg2: i32) -> (i32, i32, i32) {
    %c0_i32 = arith.constant 0 : i32
    return %arg0, %arg2, %arg1 : i32, i32, i32
  }
  func.func @transform_3(%arg0: i32, %arg1: i32, %arg2: i32) -> (i32, i32, i32, i32) {
    %c0_i32 = arith.constant 0 : i32
    %c0_i32_0 = arith.constant 0 : i32
    return %arg0, %arg2, %c0_i32, %arg1 : i32, i32, i32, i32
  }
}

module attributes {stable_mosaic.version = 11 : i64} {
  func.func @_bn_relu_kernel(%arg0: i32, %arg1: memref<128x256xbf16, #tpu.memory_space<vmem>>, %arg2: memref<1x256xf32, #tpu.memory_space<vmem>>, %arg3: memref<1x256xf32, #tpu.memory_space<vmem>>, %arg4: memref<128x256xbf16, #tpu.memory_space<vmem>>) attributes {dimension_semantics = [#tpu.dimension_semantics<parallel>], iteration_bounds = array<i64: 1>, scalar_prefetch = 0 : i64, scratch_operands = 0 : i64, tpu.core_type = #tpu.core_type<tc>, window_params = [{transform_indices = @transform_0, window_bounds = array<i64: 128, 256>}, {pipeline_mode = #tpu.pipeline_mode<synchronous>, transform_indices = @transform_1, window_bounds = array<i64: 1, 256>}, {pipeline_mode = #tpu.pipeline_mode<synchronous>, transform_indices = @transform_2, window_bounds = array<i64: 1, 256>}, {transform_indices = @transform_3, window_bounds = array<i64: 128, 256>}]} {
    %c0 = arith.constant 0 : index
    %c0_0 = arith.constant 0 : index
    %0 = vector.load %arg1[%c0, %c0_0] : memref<128x256xbf16, #tpu.memory_space<vmem>>, vector<128x256xbf16>
    %1 = arith.extf %0 : vector<128x256xbf16> to vector<128x256xf32>
    %c0_1 = arith.constant 0 : index
    %c0_2 = arith.constant 0 : index
    %2 = vector.load %arg2[%c0_1, %c0_2] : memref<1x256xf32, #tpu.memory_space<vmem>>, vector<1x256xf32>
    %3 = vector.broadcast %2 : vector<1x256xf32> to vector<128x256xf32>
    %4 = arith.mulf %1, %3 : vector<128x256xf32>
    %c0_3 = arith.constant 0 : index
    %c0_4 = arith.constant 0 : index
    %5 = vector.load %arg3[%c0_3, %c0_4] : memref<1x256xf32, #tpu.memory_space<vmem>>, vector<1x256xf32>
    %6 = vector.broadcast %5 : vector<1x256xf32> to vector<128x256xf32>
    %7 = arith.addf %4, %6 : vector<128x256xf32>
    %cst = arith.constant 0.000000e+00 : f32
    %8 = vector.broadcast %cst : f32 to vector<128x256xf32>
    %9 = arith.maximumf %7, %8 : vector<128x256xf32>
    %10 = arith.truncf %9 : vector<128x256xf32> to vector<128x256xbf16>
    %c0_5 = arith.constant 0 : index
    %c0_6 = arith.constant 0 : index
    %11 = vector.load %arg4[%c0_5, %c0_6] : memref<128x256xbf16, #tpu.memory_space<vmem>>, vector<128x256xbf16>
    tpu.vector_store %arg4[%c0_5, %c0_6], %10 {strides = array<i32>} : memref<128x256xbf16, #tpu.memory_space<vmem>>, vector<128x256xbf16>,
    return
  }
  func.func @transform_0(%arg0: i32) -> (i32, i32) {
    %c0_i32 = arith.constant 0 : i32
    %c0_i32_0 = arith.constant 0 : i32
    return %arg0, %c0_i32 : i32, i32
  }
  func.func @transform_1(%arg0: i32) -> (i32, i32) {
    %c0_i32 = arith.constant 0 : i32
    %c0_i32_0 = arith.constant 0 : i32
    %c0_i32_1 = arith.constant 0 : i32
    return %c0_i32, %c0_i32_0 : i32, i32
  }
  func.func @transform_2(%arg0: i32) -> (i32, i32) {
    %c0_i32 = arith.constant 0 : i32
    %c0_i32_0 = arith.constant 0 : i32
    %c0_i32_1 = arith.constant 0 : i32
    return %c0_i32, %c0_i32_0 : i32, i32
  }
  func.func @transform_3(%arg0: i32) -> (i32, i32) {
    %c0_i32 = arith.constant 0 : i32
    %c0_i32_0 = arith.constant 0 : i32
    return %arg0, %c0_i32 : i32, i32
  }
}

module attributes {stable_mosaic.version = 11 : i64} {
  func.func @_mm_stats_kernel(%arg0: i32, %arg1: i32, %arg2: i32, %arg3: memref<1x128x1024xbf16, #tpu.memory_space<vmem>>, %arg4: memref<1x1024x128xbf16, #tpu.memory_space<vmem>>, %arg5: memref<1x128x128xbf16, #tpu.memory_space<vmem>>, %arg6: memref<1x1x2x128xf32, #tpu.memory_space<vmem>>) attributes {dimension_semantics = [#tpu.dimension_semantics<parallel>, #tpu.dimension_semantics<parallel>, #tpu.dimension_semantics<parallel>], iteration_bounds = array<i64: 4, 1, 1>, scalar_prefetch = 0 : i64, scratch_operands = 0 : i64, tpu.core_type = #tpu.core_type<tc>, window_params = [{transform_indices = @transform_0, window_bounds = array<i64: 1, 128, 1024>}, {transform_indices = @transform_1, window_bounds = array<i64: 1, 1024, 128>}, {transform_indices = @transform_2, window_bounds = array<i64: 1, 128, 128>}, {transform_indices = @transform_3, window_bounds = array<i64: 1, 1, 2, 128>}]} {
    %c0 = arith.constant 0 : index
    %c0_0 = arith.constant 0 : index
    %c0_1 = arith.constant 0 : index
    %0 = vector.load %arg3[%c0, %c0_0, %c0_1] : memref<1x128x1024xbf16, #tpu.memory_space<vmem>>, vector<1x128x1024xbf16>
    %1 = vector.shape_cast %0 : vector<1x128x1024xbf16> to vector<128x1024xbf16>
    %c0_2 = arith.constant 0 : index
    %c0_3 = arith.constant 0 : index
    %c0_4 = arith.constant 0 : index
    %2 = vector.load %arg4[%c0_2, %c0_3, %c0_4] : memref<1x1024x128xbf16, #tpu.memory_space<vmem>>, vector<1x1024x128xbf16>
    %3 = vector.shape_cast %2 : vector<1x1024x128xbf16> to vector<1024x128xbf16>
    %cst = arith.constant dense<0.000000e+00> : vector<128x128xf32>
    %4 = tpu.matmul %1, %3, %cst {dimension_numbers = #tpu.dot_dimension_numbers<[1], [0], [0], [1], [0, 0, 1, 1], [], []>} : vector<128x1024xbf16>, vector<1024x128xbf16>, vector<128x128xf32> -> vector<128x128xf32>
    %cst_5 = arith.constant dense<0.000000e+00> : vector<128xf32>
    %5 = vector.multi_reduction <add>, %4, %cst_5 [0] : vector<128x128xf32> to vector<128xf32>
    %6 = vector.shape_cast %5 : vector<128xf32> to vector<1x128xf32>
    %c0_6 = arith.constant 0 : index
    %c0_7 = arith.constant 0 : index
    %c0_8 = arith.constant 0 : index
    %c0_9 = arith.constant 0 : index
    %7 = vector.load %arg6[%c0_6, %c0_7, %c0_8, %c0_9] : memref<1x1x2x128xf32, #tpu.memory_space<vmem>>, vector<1x1x1x128xf32>
    %8 = vector.shape_cast %7 : vector<1x1x1x128xf32> to vector<1x128xf32>
    %9 = vector.shape_cast %6 : vector<1x128xf32> to vector<1x1x1x128xf32>
    tpu.vector_store %arg6[%c0_6, %c0_7, %c0_8, %c0_9], %9 {strides = array<i32>} : memref<1x1x2x128xf32, #tpu.memory_space<vmem>>, vector<1x1x1x128xf32>,
    %10 = arith.mulf %4, %4 : vector<128x128xf32>
    %cst_10 = arith.constant dense<0.000000e+00> : vector<128xf32>
    %11 = vector.multi_reduction <add>, %10, %cst_10 [0] : vector<128x128xf32> to vector<128xf32>
    %12 = vector.shape_cast %11 : vector<128xf32> to vector<1x128xf32>
    %c0_11 = arith.constant 0 : index
    %c0_12 = arith.constant 0 : index
    %c1 = arith.constant 1 : index
    %c0_13 = arith.constant 0 : index
    %13 = vector.load %arg6[%c0_11, %c0_12, %c1, %c0_13] : memref<1x1x2x128xf32, #tpu.memory_space<vmem>>, vector<1x1x1x128xf32>
    %14 = vector.shape_cast %13 : vector<1x1x1x128xf32> to vector<1x128xf32>
    %15 = vector.shape_cast %12 : vector<1x128xf32> to vector<1x1x1x128xf32>
    tpu.vector_store %arg6[%c0_11, %c0_12, %c1, %c0_13], %15 {strides = array<i32>} : memref<1x1x2x128xf32, #tpu.memory_space<vmem>>, vector<1x1x1x128xf32>,
    %16 = arith.truncf %4 : vector<128x128xf32> to vector<128x128xbf16>
    %c0_14 = arith.constant 0 : index
    %c0_15 = arith.constant 0 : index
    %c0_16 = arith.constant 0 : index
    %17 = vector.load %arg5[%c0_14, %c0_15, %c0_16] : memref<1x128x128xbf16, #tpu.memory_space<vmem>>, vector<1x128x128xbf16>
    %18 = vector.shape_cast %17 : vector<1x128x128xbf16> to vector<128x128xbf16>
    %19 = vector.shape_cast %16 : vector<128x128xbf16> to vector<1x128x128xbf16>
    tpu.vector_store %arg5[%c0_14, %c0_15, %c0_16], %19 {strides = array<i32>} : memref<1x128x128xbf16, #tpu.memory_space<vmem>>, vector<1x128x128xbf16>,
    return
  }
  func.func @transform_0(%arg0: i32, %arg1: i32, %arg2: i32) -> (i32, i32, i32) {
    %c0_i32 = arith.constant 0 : i32
    %c0_i32_0 = arith.constant 0 : i32
    return %arg0, %arg2, %c0_i32 : i32, i32, i32
  }
  func.func @transform_1(%arg0: i32, %arg1: i32, %arg2: i32) -> (i32, i32, i32) {
    %c0_i32 = arith.constant 0 : i32
    %c0_i32_0 = arith.constant 0 : i32
    return %arg0, %c0_i32, %arg1 : i32, i32, i32
  }
  func.func @transform_2(%arg0: i32, %arg1: i32, %arg2: i32) -> (i32, i32, i32) {
    %c0_i32 = arith.constant 0 : i32
    return %arg0, %arg2, %arg1 : i32, i32, i32
  }
  func.func @transform_3(%arg0: i32, %arg1: i32, %arg2: i32) -> (i32, i32, i32, i32) {
    %c0_i32 = arith.constant 0 : i32
    %c0_i32_0 = arith.constant 0 : i32
    return %arg0, %arg2, %c0_i32, %arg1 : i32, i32, i32, i32
  }
}

module attributes {stable_mosaic.version = 11 : i64} {
  func.func @_bn_relu_kernel(%arg0: i32, %arg1: memref<512x128xbf16, #tpu.memory_space<vmem>>, %arg2: memref<1x128xf32, #tpu.memory_space<vmem>>, %arg3: memref<1x128xf32, #tpu.memory_space<vmem>>, %arg4: memref<512x128xbf16, #tpu.memory_space<vmem>>) attributes {dimension_semantics = [#tpu.dimension_semantics<parallel>], iteration_bounds = array<i64: 1>, scalar_prefetch = 0 : i64, scratch_operands = 0 : i64, tpu.core_type = #tpu.core_type<tc>, window_params = [{transform_indices = @transform_0, window_bounds = array<i64: 512, 128>}, {pipeline_mode = #tpu.pipeline_mode<synchronous>, transform_indices = @transform_1, window_bounds = array<i64: 1, 128>}, {pipeline_mode = #tpu.pipeline_mode<synchronous>, transform_indices = @transform_2, window_bounds = array<i64: 1, 128>}, {transform_indices = @transform_3, window_bounds = array<i64: 512, 128>}]} {
    %c0 = arith.constant 0 : index
    %c0_0 = arith.constant 0 : index
    %0 = vector.load %arg1[%c0, %c0_0] : memref<512x128xbf16, #tpu.memory_space<vmem>>, vector<512x128xbf16>
    %1 = arith.extf %0 : vector<512x128xbf16> to vector<512x128xf32>
    %c0_1 = arith.constant 0 : index
    %c0_2 = arith.constant 0 : index
    %2 = vector.load %arg2[%c0_1, %c0_2] : memref<1x128xf32, #tpu.memory_space<vmem>>, vector<1x128xf32>
    %3 = vector.broadcast %2 : vector<1x128xf32> to vector<512x128xf32>
    %4 = arith.mulf %1, %3 : vector<512x128xf32>
    %c0_3 = arith.constant 0 : index
    %c0_4 = arith.constant 0 : index
    %5 = vector.load %arg3[%c0_3, %c0_4] : memref<1x128xf32, #tpu.memory_space<vmem>>, vector<1x128xf32>
    %6 = vector.broadcast %5 : vector<1x128xf32> to vector<512x128xf32>
    %7 = arith.addf %4, %6 : vector<512x128xf32>
    %cst = arith.constant 0.000000e+00 : f32
    %8 = vector.broadcast %cst : f32 to vector<512x128xf32>
    %9 = arith.maximumf %7, %8 : vector<512x128xf32>
    %10 = arith.truncf %9 : vector<512x128xf32> to vector<512x128xbf16>
    %c0_5 = arith.constant 0 : index
    %c0_6 = arith.constant 0 : index
    %11 = vector.load %arg4[%c0_5, %c0_6] : memref<512x128xbf16, #tpu.memory_space<vmem>>, vector<512x128xbf16>
    tpu.vector_store %arg4[%c0_5, %c0_6], %10 {strides = array<i32>} : memref<512x128xbf16, #tpu.memory_space<vmem>>, vector<512x128xbf16>,
    return
  }
  func.func @transform_0(%arg0: i32) -> (i32, i32) {
    %c0_i32 = arith.constant 0 : i32
    %c0_i32_0 = arith.constant 0 : i32
    return %arg0, %c0_i32 : i32, i32
  }
  func.func @transform_1(%arg0: i32) -> (i32, i32) {
    %c0_i32 = arith.constant 0 : i32
    %c0_i32_0 = arith.constant 0 : i32
    %c0_i32_1 = arith.constant 0 : i32
    return %c0_i32, %c0_i32_0 : i32, i32
  }
  func.func @transform_2(%arg0: i32) -> (i32, i32) {
    %c0_i32 = arith.constant 0 : i32
    %c0_i32_0 = arith.constant 0 : i32
    %c0_i32_1 = arith.constant 0 : i32
    return %c0_i32, %c0_i32_0 : i32, i32
  }
  func.func @transform_3(%arg0: i32) -> (i32, i32) {
    %c0_i32 = arith.constant 0 : i32
    %c0_i32_0 = arith.constant 0 : i32
    return %arg0, %c0_i32 : i32, i32
  }
}

module attributes {stable_mosaic.version = 11 : i64} {
  func.func @_mm_stats_kernel(%arg0: i32, %arg1: i32, %arg2: i32, %arg3: memref<1x512x512xbf16, #tpu.memory_space<vmem>>, %arg4: memref<1x512x64xbf16, #tpu.memory_space<vmem>>, %arg5: memref<1x512x64xbf16, #tpu.memory_space<vmem>>, %arg6: memref<1x1x2x64xf32, #tpu.memory_space<vmem>>) attributes {dimension_semantics = [#tpu.dimension_semantics<parallel>, #tpu.dimension_semantics<parallel>, #tpu.dimension_semantics<parallel>], iteration_bounds = array<i64: 4, 1, 1>, scalar_prefetch = 0 : i64, scratch_operands = 0 : i64, tpu.core_type = #tpu.core_type<tc>, window_params = [{transform_indices = @transform_0, window_bounds = array<i64: 1, 512, 512>}, {transform_indices = @transform_1, window_bounds = array<i64: 1, 512, 64>}, {transform_indices = @transform_2, window_bounds = array<i64: 1, 512, 64>}, {transform_indices = @transform_3, window_bounds = array<i64: 1, 1, 2, 64>}]} {
    %c0 = arith.constant 0 : index
    %c0_0 = arith.constant 0 : index
    %c0_1 = arith.constant 0 : index
    %0 = vector.load %arg3[%c0, %c0_0, %c0_1] : memref<1x512x512xbf16, #tpu.memory_space<vmem>>, vector<1x512x512xbf16>
    %1 = vector.shape_cast %0 : vector<1x512x512xbf16> to vector<512x512xbf16>
    %c0_2 = arith.constant 0 : index
    %c0_3 = arith.constant 0 : index
    %c0_4 = arith.constant 0 : index
    %2 = vector.load %arg4[%c0_2, %c0_3, %c0_4] : memref<1x512x64xbf16, #tpu.memory_space<vmem>>, vector<1x512x64xbf16>
    %3 = vector.shape_cast %2 : vector<1x512x64xbf16> to vector<512x64xbf16>
    %cst = arith.constant dense<0.000000e+00> : vector<512x64xf32>
    %4 = tpu.matmul %1, %3, %cst {dimension_numbers = #tpu.dot_dimension_numbers<[1], [0], [0], [1], [0, 0, 1, 1], [], []>} : vector<512x512xbf16>, vector<512x64xbf16>, vector<512x64xf32> -> vector<512x64xf32>
    %cst_5 = arith.constant dense<0.000000e+00> : vector<64xf32>
    %5 = vector.multi_reduction <add>, %4, %cst_5 [0] : vector<512x64xf32> to vector<64xf32>
    %6 = vector.shape_cast %5 : vector<64xf32> to vector<1x64xf32>
    %c0_6 = arith.constant 0 : index
    %c0_7 = arith.constant 0 : index
    %c0_8 = arith.constant 0 : index
    %c0_9 = arith.constant 0 : index
    %7 = vector.load %arg6[%c0_6, %c0_7, %c0_8, %c0_9] : memref<1x1x2x64xf32, #tpu.memory_space<vmem>>, vector<1x1x1x64xf32>
    %8 = vector.shape_cast %7 : vector<1x1x1x64xf32> to vector<1x64xf32>
    %9 = vector.shape_cast %6 : vector<1x64xf32> to vector<1x1x1x64xf32>
    tpu.vector_store %arg6[%c0_6, %c0_7, %c0_8, %c0_9], %9 {strides = array<i32>} : memref<1x1x2x64xf32, #tpu.memory_space<vmem>>, vector<1x1x1x64xf32>,
    %10 = arith.mulf %4, %4 : vector<512x64xf32>
    %cst_10 = arith.constant dense<0.000000e+00> : vector<64xf32>
    %11 = vector.multi_reduction <add>, %10, %cst_10 [0] : vector<512x64xf32> to vector<64xf32>
    %12 = vector.shape_cast %11 : vector<64xf32> to vector<1x64xf32>
    %c0_11 = arith.constant 0 : index
    %c0_12 = arith.constant 0 : index
    %c1 = arith.constant 1 : index
    %c0_13 = arith.constant 0 : index
    %13 = vector.load %arg6[%c0_11, %c0_12, %c1, %c0_13] : memref<1x1x2x64xf32, #tpu.memory_space<vmem>>, vector<1x1x1x64xf32>
    %14 = vector.shape_cast %13 : vector<1x1x1x64xf32> to vector<1x64xf32>
    %15 = vector.shape_cast %12 : vector<1x64xf32> to vector<1x1x1x64xf32>
    tpu.vector_store %arg6[%c0_11, %c0_12, %c1, %c0_13], %15 {strides = array<i32>} : memref<1x1x2x64xf32, #tpu.memory_space<vmem>>, vector<1x1x1x64xf32>,
    %16 = arith.truncf %4 : vector<512x64xf32> to vector<512x64xbf16>
    %c0_14 = arith.constant 0 : index
    %c0_15 = arith.constant 0 : index
    %c0_16 = arith.constant 0 : index
    %17 = vector.load %arg5[%c0_14, %c0_15, %c0_16] : memref<1x512x64xbf16, #tpu.memory_space<vmem>>, vector<1x512x64xbf16>
    %18 = vector.shape_cast %17 : vector<1x512x64xbf16> to vector<512x64xbf16>
    %19 = vector.shape_cast %16 : vector<512x64xbf16> to vector<1x512x64xbf16>
    tpu.vector_store %arg5[%c0_14, %c0_15, %c0_16], %19 {strides = array<i32>} : memref<1x512x64xbf16, #tpu.memory_space<vmem>>, vector<1x512x64xbf16>,
    return
  }
  func.func @transform_0(%arg0: i32, %arg1: i32, %arg2: i32) -> (i32, i32, i32) {
    %c0_i32 = arith.constant 0 : i32
    %c0_i32_0 = arith.constant 0 : i32
    return %arg0, %arg2, %c0_i32 : i32, i32, i32
  }
  func.func @transform_1(%arg0: i32, %arg1: i32, %arg2: i32) -> (i32, i32, i32) {
    %c0_i32 = arith.constant 0 : i32
    %c0_i32_0 = arith.constant 0 : i32
    return %arg0, %c0_i32, %arg1 : i32, i32, i32
  }
  func.func @transform_2(%arg0: i32, %arg1: i32, %arg2: i32) -> (i32, i32, i32) {
    %c0_i32 = arith.constant 0 : i32
    return %arg0, %arg2, %arg1 : i32, i32, i32
  }
  func.func @transform_3(%arg0: i32, %arg1: i32, %arg2: i32) -> (i32, i32, i32, i32) {
    %c0_i32 = arith.constant 0 : i32
    %c0_i32_0 = arith.constant 0 : i32
    return %arg0, %arg2, %c0_i32, %arg1 : i32, i32, i32, i32
  }
}

module attributes {stable_mosaic.version = 11 : i64} {
  func.func @_bn_relu_kernel(%arg0: i32, %arg1: memref<1024x128xbf16, #tpu.memory_space<vmem>>, %arg2: memref<1x128xf32, #tpu.memory_space<vmem>>, %arg3: memref<1x128xf32, #tpu.memory_space<vmem>>, %arg4: memref<1024x128xbf16, #tpu.memory_space<vmem>>) attributes {dimension_semantics = [#tpu.dimension_semantics<parallel>], iteration_bounds = array<i64: 1>, scalar_prefetch = 0 : i64, scratch_operands = 0 : i64, tpu.core_type = #tpu.core_type<tc>, window_params = [{transform_indices = @transform_0, window_bounds = array<i64: 1024, 128>}, {pipeline_mode = #tpu.pipeline_mode<synchronous>, transform_indices = @transform_1, window_bounds = array<i64: 1, 128>}, {pipeline_mode = #tpu.pipeline_mode<synchronous>, transform_indices = @transform_2, window_bounds = array<i64: 1, 128>}, {transform_indices = @transform_3, window_bounds = array<i64: 1024, 128>}]} {
    %c0 = arith.constant 0 : index
    %c0_0 = arith.constant 0 : index
    %0 = vector.load %arg1[%c0, %c0_0] : memref<1024x128xbf16, #tpu.memory_space<vmem>>, vector<1024x128xbf16>
    %1 = arith.extf %0 : vector<1024x128xbf16> to vector<1024x128xf32>
    %c0_1 = arith.constant 0 : index
    %c0_2 = arith.constant 0 : index
    %2 = vector.load %arg2[%c0_1, %c0_2] : memref<1x128xf32, #tpu.memory_space<vmem>>, vector<1x128xf32>
    %3 = vector.broadcast %2 : vector<1x128xf32> to vector<1024x128xf32>
    %4 = arith.mulf %1, %3 : vector<1024x128xf32>
    %c0_3 = arith.constant 0 : index
    %c0_4 = arith.constant 0 : index
    %5 = vector.load %arg3[%c0_3, %c0_4] : memref<1x128xf32, #tpu.memory_space<vmem>>, vector<1x128xf32>
    %6 = vector.broadcast %5 : vector<1x128xf32> to vector<1024x128xf32>
    %7 = arith.addf %4, %6 : vector<1024x128xf32>
    %cst = arith.constant 0.000000e+00 : f32
    %8 = vector.broadcast %cst : f32 to vector<1024x128xf32>
    %9 = arith.maximumf %7, %8 : vector<1024x128xf32>
    %10 = arith.truncf %9 : vector<1024x128xf32> to vector<1024x128xbf16>
    %c0_5 = arith.constant 0 : index
    %c0_6 = arith.constant 0 : index
    %11 = vector.load %arg4[%c0_5, %c0_6] : memref<1024x128xbf16, #tpu.memory_space<vmem>>, vector<1024x128xbf16>
    tpu.vector_store %arg4[%c0_5, %c0_6], %10 {strides = array<i32>} : memref<1024x128xbf16, #tpu.memory_space<vmem>>, vector<1024x128xbf16>,
    return
  }
  func.func @transform_0(%arg0: i32) -> (i32, i32) {
    %c0_i32 = arith.constant 0 : i32
    %c0_i32_0 = arith.constant 0 : i32
    return %arg0, %c0_i32 : i32, i32
  }
  func.func @transform_1(%arg0: i32) -> (i32, i32) {
    %c0_i32 = arith.constant 0 : i32
    %c0_i32_0 = arith.constant 0 : i32
    %c0_i32_1 = arith.constant 0 : i32
    return %c0_i32, %c0_i32_0 : i32, i32
  }
  func.func @transform_2(%arg0: i32) -> (i32, i32) {
    %c0_i32 = arith.constant 0 : i32
    %c0_i32_0 = arith.constant 0 : i32
    %c0_i32_1 = arith.constant 0 : i32
    return %c0_i32, %c0_i32_0 : i32, i32
  }
  func.func @transform_3(%arg0: i32) -> (i32, i32) {
    %c0_i32 = arith.constant 0 : i32
    %c0_i32_0 = arith.constant 0 : i32
    return %arg0, %c0_i32 : i32, i32
  }
}

module attributes {stable_mosaic.version = 11 : i64} {
  func.func @_mm_tanh_kernel(%arg0: i32, %arg1: i32, %arg2: i32, %arg3: memref<1x512x256xbf16, #tpu.memory_space<vmem>>, %arg4: memref<1x256x3xbf16, #tpu.memory_space<vmem>>, %arg5: memref<1x512x3xf32, #tpu.memory_space<vmem>>) attributes {dimension_semantics = [#tpu.dimension_semantics<parallel>, #tpu.dimension_semantics<parallel>, #tpu.dimension_semantics<parallel>], iteration_bounds = array<i64: 4, 1, 4>, scalar_prefetch = 0 : i64, scratch_operands = 0 : i64, tpu.core_type = #tpu.core_type<tc>, window_params = [{transform_indices = @transform_0, window_bounds = array<i64: 1, 512, 256>}, {transform_indices = @transform_1, window_bounds = array<i64: 1, 256, 3>}, {transform_indices = @transform_2, window_bounds = array<i64: 1, 512, 3>}]} {
    %c0 = arith.constant 0 : index
    %c0_0 = arith.constant 0 : index
    %c0_1 = arith.constant 0 : index
    %0 = vector.load %arg3[%c0, %c0_0, %c0_1] : memref<1x512x256xbf16, #tpu.memory_space<vmem>>, vector<1x512x256xbf16>
    %1 = vector.shape_cast %0 : vector<1x512x256xbf16> to vector<512x256xbf16>
    %c0_2 = arith.constant 0 : index
    %c0_3 = arith.constant 0 : index
    %c0_4 = arith.constant 0 : index
    %2 = vector.load %arg4[%c0_2, %c0_3, %c0_4] : memref<1x256x3xbf16, #tpu.memory_space<vmem>>, vector<1x256x3xbf16>
    %3 = vector.shape_cast %2 : vector<1x256x3xbf16> to vector<256x3xbf16>
    %cst = arith.constant dense<0.000000e+00> : vector<512x3xf32>
    %4 = tpu.matmul %1, %3, %cst {dimension_numbers = #tpu.dot_dimension_numbers<[1], [0], [0], [1], [0, 0, 1, 1], [], []>} : vector<512x256xbf16>, vector<256x3xbf16>, vector<512x3xf32> -> vector<512x3xf32>
    %5 = math.tanh %4 : vector<512x3xf32>
    %c0_5 = arith.constant 0 : index
    %c0_6 = arith.constant 0 : index
    %c0_7 = arith.constant 0 : index
    %6 = vector.load %arg5[%c0_5, %c0_6, %c0_7] : memref<1x512x3xf32, #tpu.memory_space<vmem>>, vector<1x512x3xf32>
    %7 = vector.shape_cast %6 : vector<1x512x3xf32> to vector<512x3xf32>
    %8 = vector.shape_cast %5 : vector<512x3xf32> to vector<1x512x3xf32>
    tpu.vector_store %arg5[%c0_5, %c0_6, %c0_7], %8 {strides = array<i32>} : memref<1x512x3xf32, #tpu.memory_space<vmem>>, vector<1x512x3xf32>,
    return
  }
  func.func @transform_0(%arg0: i32, %arg1: i32, %arg2: i32) -> (i32, i32, i32) {
    %c0_i32 = arith.constant 0 : i32
    %c0_i32_0 = arith.constant 0 : i32
    return %arg0, %arg2, %c0_i32 : i32, i32, i32
  }
  func.func @transform_1(%arg0: i32, %arg1: i32, %arg2: i32) -> (i32, i32, i32) {
    %c0_i32 = arith.constant 0 : i32
    %c0_i32_0 = arith.constant 0 : i32
    return %arg0, %c0_i32, %arg1 : i32, i32, i32
  }
  func.func @transform_2(%arg0: i32, %arg1: i32, %arg2: i32) -> (i32, i32, i32) {
    %c0_i32 = arith.constant 0 : i32
    return %arg0, %arg2, %arg1 : i32, i32, i32
  }
}

</mosaic_0001>

<llo_original>
// kernel: generator_forward.10
$region0: #{generator_forward.10}
  #allocation0 [shape = 'u32[]', space=smem, size = 0x4, offset = 0x4, fixed_abs, tag = 'smem constant byte address 0x4 - core index']
  #allocation1 [shape = 'u32[144,128]{1,0:T(1,128)}', space=vmem, size = 0x12000, scoped, tag = 'internal scratch']
  %s0 = inlined_call_operand.vmem [shape: bf16[32,512], index: 0, kind: input, shape index: {}]
  %s1 = inlined_call_operand.vmem [shape: f32[1,512], index: 1, kind: input, shape index: {}]
  %s2 = inlined_call_operand.vmem [shape: f32[1,512], index: 2, kind: input, shape index: {}]
  %s3 = inlined_call_operand.vmem [shape: bf16[32,512], index: 3, kind: output, shape index: {}]
  %s4 = sld [smem:[#allocation0]]
  $region22: #{generator_forward.10} parent=0
    _
  %s6 = ssub.s32 1, %s4
  %s7 = scalar_select 0, %s6, %s4
  // Predicated region
  $region2: #{generator_forward.10} parent=0 // pred_check
    _
  $region3: #{generator_forward.10} parent=0 // pred_check_branch
    %9 = sbr.rel (0) target = $region5
  $region4: #{generator_forward.10} parent=0 // pred_region
    _
  $region5: #{generator_forward.10} parent=0 // pred_fallthru
    _
  // Predicated region
  $region6: #{generator_forward.10} parent=0 // pred_check
    _
  $region7: #{generator_forward.10} parent=0 // pred_check_branch
    %11 = sbr.rel (0) target = $region9
  $region8: #{generator_forward.10} parent=0 // pred_region
    _
  $region9: #{generator_forward.10} parent=0 // pred_fallthru
    _
  // Predicated region
  $region10: #{generator_forward.10} parent=0 // pred_check
    _
  $region11: #{generator_forward.10} parent=0 // pred_check_branch
    %13 = sbr.rel (0) target = $region13
  $region12: #{generator_forward.10} parent=0 // pred_region
    _
  $region13: #{generator_forward.10} parent=0 // pred_fallthru
    _
  %v14 = vld [vmem:[%s0] sm:$0xff]
  %v15 = vld [vmem:[%s0 + $0x8] sm:$0xff]
  %v16 = vld [vmem:[%s0 + $0x10] sm:$0xff]
  %v17 = vld [vmem:[%s0 + $0x18] sm:$0xff]
  %v18 = vld [vmem:[%s0 + $0x20] sm:$0xff]
  %v19 = vld [vmem:[%s0 + $0x28] sm:$0xff]
  %v20 = vld [vmem:[%s0 + $0x30] sm:$0xff]
  %v21 = vld [vmem:[%s0 + $0x38] sm:$0xff]
  %v22 = vunpack.c.l.bf16 %v14
  %v23 = vunpack.c.h.bf16 %v14
  %v24 = vunpack.c.l.bf16 %v15
  %v25 = vunpack.c.h.bf16 %v15
  %v26 = vunpack.c.l.bf16 %v16
  %v27 = vunpack.c.h.bf16 %v16
  %v28 = vunpack.c.l.bf16 %v17
  %v29 = vunpack.c.h.bf16 %v17
  %v30 = vunpack.c.l.bf16 %v18
  %v31 = vunpack.c.h.bf16 %v18
  %v32 = vunpack.c.l.bf16 %v19
  %v33 = vunpack.c.h.bf16 %v19
  %v34 = vunpack.c.l.bf16 %v20
  %v35 = vunpack.c.h.bf16 %v20
  %v36 = vunpack.c.l.bf16 %v21
  %v37 = vunpack.c.h.bf16 %v21
  %v38 = vld [vmem:[%s1] sm:$0xf]
  %v40 = vlaneseq
  %v41 = vshrl.u32 %v40, 7
  %v42 = vsub.s32 0, %v41
  %v43 = vrot.slane %v38, %v42
  %v44 = vlaneseq
  %v45 = vshrl.u32 %v44, 7
  %v46 = vsub.s32 1, %v45
  %v47 = vrot.slane %v38, %v46
  %v48 = vlaneseq
  %v49 = vshrl.u32 %v48, 7
  %v50 = vsub.s32 2, %v49
  %v51 = vrot.slane %v38, %v50
  %v52 = vlaneseq
  %v53 = vshrl.u32 %v52, 7
  %v54 = vsub.s32 3, %v53
  %v55 = vrot.slane %v38, %v54
  %v60 = vmul.f32 %v22, %v43
  %v61 = vmul.f32 %v23, %v47
  %v62 = vmul.f32 %v24, %v51
  %v63 = vmul.f32 %v25, %v55
  %v64 = vmul.f32 %v26, %v43
  %v65 = vmul.f32 %v27, %v47
  %v66 = vmul.f32 %v28, %v51
  %v67 = vmul.f32 %v29, %v55
  %v68 = vmul.f32 %v30, %v43
  %v69 = vmul.f32 %v31, %v47
  %v70 = vmul.f32 %v32, %v51
  %v71 = vmul.f32 %v33, %v55
  %v72 = vmul.f32 %v34, %v43
  %v73 = vmul.f32 %v35, %v47
  %v74 = vmul.f32 %v36, %v51
  %v75 = vmul.f32 %v37, %v55
  %v76 = vld [vmem:[%s2] sm:$0xf]
  %v78 = vlaneseq
  %v79 = vshrl.u32 %v78, 7
  %v80 = vsub.s32 0, %v79
  %v81 = vrot.slane %v76, %v80
  %v82 = vlaneseq
  %v83 = vshrl.u32 %v82, 7
  %v84 = vsub.s32 1, %v83
  %v85 = vrot.slane %v76, %v84
  %v86 = vlaneseq
  %v87 = vshrl.u32 %v86, 7
  %v88 = vsub.s32 2, %v87
  %v89 = vrot.slane %v76, %v88
  %v90 = vlaneseq
  %v91 = vshrl.u32 %v90, 7
  %v92 = vsub.s32 3, %v91
  %v93 = vrot.slane %v76, %v92
  %v98 = vadd.f32 %v60, %v81
  %v99 = vadd.f32 %v61, %v85
  %v100 = vadd.f32 %v62, %v89
  %v101 = vadd.f32 %v63, %v93
  %v102 = vadd.f32 %v64, %v81
  %v103 = vadd.f32 %v65, %v85
  %v104 = vadd.f32 %v66, %v89
  %v105 = vadd.f32 %v67, %v93
  %v106 = vadd.f32 %v68, %v81
  %v107 = vadd.f32 %v69, %v85
  %v108 = vadd.f32 %v70, %v89
  %v109 = vadd.f32 %v71, %v93
  %v110 = vadd.f32 %v72, %v81
  %v111 = vadd.f32 %v73, %v85
  %v112 = vadd.f32 %v74, %v89
  %v113 = vadd.f32 %v75, %v93
  %v114 = vmax.f32 %v98, 0.0
  %v115 = vmax.f32 %v99, 0.0
  %v116 = vmax.f32 %v100, 0.0
  %v117 = vmax.f32 %v101, 0.0
  %v118 = vmax.f32 %v102, 0.0
  %v119 = vmax.f32 %v103, 0.0
  %v120 = vmax.f32 %v104, 0.0
  %v121 = vmax.f32 %v105, 0.0
  %v122 = vmax.f32 %v106, 0.0
  %v123 = vmax.f32 %v107, 0.0
  %v124 = vmax.f32 %v108, 0.0
  %v125 = vmax.f32 %v109, 0.0
  %v126 = vmax.f32 %v110, 0.0
  %v127 = vmax.f32 %v111, 0.0
  %v128 = vmax.f32 %v112, 0.0
  %v129 = vmax.f32 %v113, 0.0
  %v130 = vpack.c.bf16 %v118, %v114
  %v131 = vpack.c.bf16 %v119, %v115
  %v132 = vpack.c.bf16 %v120, %v116
  %v133 = vpack.c.bf16 %v121, %v117
  %v134 = vpack.c.bf16 %v126, %v122
  %v135 = vpack.c.bf16 %v127, %v123
  %v136 = vpack.c.bf16 %v128, %v124
  %v137 = vpack.c.bf16 %v129, %v125
  %v146 = vunpack.c.l.b16 %v130
  %v147 = vunpack.c.l.b16 %v131
  %v148 = vunpack.c.l.b16 %v132
  %v149 = vunpack.c.l.b16 %v133
  %v150 = vunpack.c.h.b16 %v130
  %v151 = vunpack.c.h.b16 %v131
  %v152 = vunpack.c.h.b16 %v132
  %v153 = vunpack.c.h.b16 %v133
  %v154 = vunpack.c.l.b16 %v134
  %v155 = vunpack.c.l.b16 %v135
  %v156 = vunpack.c.l.b16 %v136
  %v157 = vunpack.c.l.b16 %v137
  %v158 = vunpack.c.h.b16 %v134
  %v159 = vunpack.c.h.b16 %v135
  %v160 = vunpack.c.h.b16 %v136
  %v161 = vunpack.c.h.b16 %v137
  %v162 = vpack.c.b16 %v147, %v146
  %v163 = vpack.c.b16 %v149, %v148
  %v164 = vpack.c.b16 %v151, %v150
  %v165 = vpack.c.b16 %v153, %v152
  %v166 = vpack.c.b16 %v155, %v154
  %v167 = vpack.c.b16 %v157, %v156
  %v168 = vpack.c.b16 %v159, %v158
  %v169 = vpack.c.b16 %v161, %v160
  %178 = vst [vmem:[%s3] sm:$0xff] %v162
  %179 = vst [vmem:[%s3 + $0x8] sm:$0xff] %v163
  %180 = vst [vmem:[%s3 + $0x10] sm:$0xff] %v164
  %181 = vst [vmem:[%s3 + $0x18] sm:$0xff] %v165
  %182 = vst [vmem:[%s3 + $0x20] sm:$0xff] %v166
  %183 = vst [vmem:[%s3 + $0x28] sm:$0xff] %v167
  %184 = vst [vmem:[%s3 + $0x30] sm:$0xff] %v168
  %185 = vst [vmem:[%s3 + $0x38] sm:$0xff] %v169
  // Predicated region
  $region14: #{generator_forward.10} parent=0 // pred_check
    _
  $region15: #{generator_forward.10} parent=0 // pred_check_branch
    %187 = sbr.rel (0) target = $region17
  $region16: #{generator_forward.10} parent=0 // pred_region
    _
  $region17: #{generator_forward.10} parent=0 // pred_fallthru
    _
  // Predicated region
  $region18: #{generator_forward.10} parent=0 // pred_check
    _
  $region19: #{generator_forward.10} parent=0 // pred_check_branch
    %189 = sbr.rel (0) target = $region21
  $region20: #{generator_forward.10} parent=0 // pred_region
    _
  $region21: #{generator_forward.10} parent=0 // pred_fallthru
    _

// kernel: generator_forward.9
$region0: #{generator_forward.9}
  #allocation0 [shape = 'u32[]', space=smem, size = 0x4, offset = 0x4, fixed_abs, tag = 'smem constant byte address 0x4 - core index']
  #allocation1 [shape = 'u32[144,128]{1,0:T(1,128)}', space=vmem, size = 0x12000, scoped, tag = 'internal scratch']
  %s0 = inlined_call_operand.vmem [shape: bf16[1,2,100], index: 0, kind: input, shape index: {}]
  %s1 = inlined_call_operand.hbm [shape: bf16[1,100,8192], index: 1, kind: input, shape index: {}]
  %s2 = inlined_call_operand.vmem [shape: bf16[1,2,8192], index: 2, kind: output, shape index: {0}]
  %s3 = inlined_call_operand.vmem [shape: f32[1,1,2,8192], index: 3, kind: output, shape index: {1}]
  %4 = xla_tuple %s2, %s3
  %s5 = sld [smem:[#allocation0]]
  $region53: #{generator_forward.9} parent=0
    _
  %s7 = ssub.s32 1, %s5
  %s8 = scalar_select 0, %s7, %s5
  $region1: #{generator_forward.9} parent=0
    #allocation2 [shape = 'u8[212992]{0}', space=vmem, size = 0x34000, scoped, tag = 'input window, operand 1']
    #allocation3 [shape = 's32[2]{0}', space=sflag, size = 0x8, scoped, tag = 'scoped memory for generator_forward.9']
    %9 = vsyncpa [#allocation3], 0
    %s10 = scalar_lea.sflag [#allocation3], 1
    %11 = vsyncpa %s10, 0
    loop: start=0, step=1, limit=18
    $region2: #{generator_forward.9} parent=1 // loop_pre_header
      _
    $region3: #{generator_forward.9} parent=1 // loop_header
      %s13 = sphi 0, %s17
      %p14 = scmp.ge.s32.totalorder %s13, 18
      %s20 = sphi 0, %s39
      %s21 = sphi 0, %s35
      %s22 = sphi 0, %s31
      %s23 = sphi 0, %s20
      %s24 = sphi 0, %s21
      %s25 = sphi 0, %s22
      %s26 = sphi 0, %s23
      %s27 = sphi 0, %s24
      %s28 = sphi 0, %s25
      %s44 = sphi 0, %s46
      %s47 = sphi 0, %s44
      %s48 = sphi 0, %s47
      %s64 = sphi 0, %s48
      %s72 = sphi 0, %s74
      %s75 = sphi 0, %s72
      %s76 = sphi 0, %s75
      %s92 = sphi 0, %s76
      %s102 = sphi 0, %s104
      %s105 = sphi 0, %s102
      %s106 = sphi 0, %s105
      %s122 = sphi 0, %s106
      %s132 = sphi 0, %s134
      %s135 = sphi 0, %s132
      %s136 = sphi 0, %s135
      %s152 = sphi 0, %s136
    $region4: #{generator_forward.9} parent=1 // loop_header_branch
      %16 = sbr.rel (%p14) target = $region8
    $region5: #{generator_forward.9} parent=1 // loop_body
      %s18 = ssub.s32 %s13, 1
      %s19 = ssub.s32 %s13, 2
      %s29 = sadd.s32 1, %s22
      %p30 = scmp.ge.s32.totalorder %s29, 1
      %s31 = scalar_select %p30, 0, %s29
      %s32 = sadd.s32 1, %s21
      %s33 = scalar_select %p30, %s32, %s21
      %p34 = scmp.ge.s32.totalorder %s33, 16
      %s35 = scalar_select %p34, 0, %s33
      %s36 = sadd.s32 1, %s20
      %s37 = scalar_select %p34, %s36, %s20
      %p38 = scmp.ge.s32.totalorder %s37, 1
      %s39 = scalar_select %p38, 0, %s37
      %s40 = ssub.s32 %s20, %s39
      %s41 = ssub.s32 %s22, %s31
      %s42 = sor.u32 %s40, %s41
      %p43 = scmp.eq.s32.totalorder %s42, 0
      %s45 = sadd.s32 %s44, 1
      %s46 = scalar_select %p43, %s44, %s45
      %p49 = pneg %p43
      %p50 = scmp.eq.s32.totalorder %s13, 15
      %p51 = por %p49, %p50
      %p52 = scmp.ne.s32.totalorder %s44, %s47
      %p53 = scmp.eq.s32.totalorder %s13, 0
      %p54 = por %p52, %p53
      %p55 = scmp.ne.s32.totalorder %s44, %s47
      %p56 = scmp.eq.s32.totalorder %s18, 15
      %p57 = por %p55, %p56
      %p58 = scmp.ne.s32.totalorder %s47, %s48
      %p59 = scmp.eq.s32.totalorder %s18, 0
      %p60 = por %p58, %p59
      %p61 = scmp.ne.s32.totalorder %s47, %s48
      %p62 = scmp.eq.s32.totalorder %s19, 15
      %p63 = por %p61, %p62
      %p65 = scmp.ne.s32.totalorder %s48, %s64
      %p66 = scmp.eq.s32.totalorder %s19, 0
      %p67 = por %p65, %p66
      %s68 = ssub.s32 %s20, %s39
      %s69 = ssub.s32 %s21, %s35
      %s70 = sor.u32 %s68, %s69
      %p71 = scmp.eq.s32.totalorder %s70, 0
      %s73 = sadd.s32 %s72, 1
      %s74 = scalar_select %p71, %s72, %s73
      %p77 = pneg %p71
      %p78 = scmp.eq.s32.totalorder %s13, 15
      %p79 = por %p77, %p78
      %p80 = scmp.ne.s32.totalorder %s72, %s75
      %p81 = scmp.eq.s32.totalorder %s13, 0
      %p82 = por %p80, %p81
      %p83 = scmp.ne.s32.totalorder %s72, %s75
      %p84 = scmp.eq.s32.totalorder %s18, 15
      %p85 = por %p83, %p84
      %p86 = scmp.ne.s32.totalorder %s75, %s76
      %p87 = scmp.eq.s32.totalorder %s18, 0
      %p88 = por %p86, %p87
      %p89 = scmp.ne.s32.totalorder %s75, %s76
      %p90 = scmp.eq.s32.totalorder %s19, 15
      %p91 = por %p89, %p90
      %p93 = scmp.ne.s32.totalorder %s76, %s92
      %p94 = scmp.eq.s32.totalorder %s19, 0
      %p95 = por %p93, %p94
      %s96 = ssub.s32 %s20, %s39
      %s97 = ssub.s32 %s22, %s31
      %s98 = sor.u32 %s96, %s97
      %s99 = ssub.s32 %s21, %s35
      %s100 = sor.u32 %s98, %s99
      %p101 = scmp.eq.s32.totalorder %s100, 0
      %s103 = sadd.s32 %s102, 1
      %s104 = scalar_select %p101, %s102, %s103
      %p107 = pneg %p101
      %p108 = scmp.eq.s32.totalorder %s13, 15
      %p109 = por %p107, %p108
      %p110 = scmp.ne.s32.totalorder %s102, %s105
      %p111 = scmp.eq.s32.totalorder %s13, 0
      %p112 = por %p110, %p111
      %p113 = scmp.ne.s32.totalorder %s102, %s105
      %p114 = scmp.eq.s32.totalorder %s18, 15
      %p115 = por %p113, %p114
      %p116 = scmp.ne.s32.totalorder %s105, %s106
      %p117 = scmp.eq.s32.totalorder %s18, 0
      %p118 = por %p116, %p117
      %p119 = scmp.ne.s32.totalorder %s105, %s106
      %p120 = scmp.eq.s32.totalorder %s19, 15
      %p121 = por %p119, %p120
      %p123 = scmp.ne.s32.totalorder %s106, %s122
      %p124 = scmp.eq.s32.totalorder %s19, 0
      %p125 = por %p123, %p124
      %s126 = ssub.s32 %s20, %s39
      %s127 = ssub.s32 %s22, %s31
      %s128 = sor.u32 %s126, %s127
      %s129 = ssub.s32 %s21, %s35
      %s130 = sor.u32 %s128, %s129
      %p131 = scmp.eq.s32.totalorder %s130, 0
      %s133 = sadd.s32 %s132, 1
      %s134 = scalar_select %p131, %s132, %s133
      %p137 = pneg %p131
      %p138 = scmp.eq.s32.totalorder %s13, 15
      %p139 = por %p137, %p138
      %p140 = scmp.ne.s32.totalorder %s132, %s135
      %p141 = scmp.eq.s32.totalorder %s13, 0
      %p142 = por %p140, %p141
      %p143 = scmp.ne.s32.totalorder %s132, %s135
      %p144 = scmp.eq.s32.totalorder %s18, 15
      %p145 = por %p143, %p144
      %p146 = scmp.ne.s32.totalorder %s135, %s136
      %p147 = scmp.eq.s32.totalorder %s18, 0
      %p148 = por %p146, %p147
      %p149 = scmp.ne.s32.totalorder %s135, %s136
      %p150 = scmp.eq.s32.totalorder %s19, 15
      %p151 = por %p149, %p150
      %p153 = scmp.ne.s32.totalorder %s136, %s152
      %p154 = scmp.eq.s32.totalorder %s19, 0
      %p155 = por %p153, %p154
      %p156 = scmp.le.s32.totalorder 1, %s13
      %p157 = scmp.lt.s32.totalorder %s13, 17
      %p158 = pnand %p156, %p157
      %p159 = pneg %p158
      // Predicated region
      $region9: #{generator_forward.9} parent=5 // pred_check
        _
      $region10: #{generator_forward.9} parent=5 // pred_check_branch
        %161 = sbr.rel (%p158) target = $region12
      $region11: #{generator_forward.9} parent=5 // pred_region
        %s162 = ssub.s32 %s13, 1
        // Predicated region
        $region13: #{generator_forward.9} parent=11 // pred_check
          %p163 = pneg %p60
        $region14: #{generator_forward.9} parent=11 // pred_check_branch
          %165 = sbr.rel (%p163) target = $region16
        $region15: #{generator_forward.9} parent=11 // pred_region
          %p166 = scmp.lt.s32.totalorder %s23, 0
          %s167 = scalar_select %p166, %s23, 0
          %p168 = scmp.lt.s32.totalorder %s25, 0
          %s169 = scalar_select %p168, %s25, 0
          %s170 = sadd.s32 %s169, %s167
          %s171 = scalar_lea.vmem %s0, %s170
        $region16: #{generator_forward.9} parent=11 // pred_fallthru
          _
      $region12: #{generator_forward.9} parent=5 // pred_fallthru
        _
      %p172 = scmp.lt.s32.totalorder %s13, 16
      // Predicated region
      $region17: #{generator_forward.9} parent=5 // pred_check
        %p173 = pneg %p172
      $region18: #{generator_forward.9} parent=5 // pred_check_branch
        %175 = sbr.rel (%p173) target = $region20
      $region19: #{generator_forward.9} parent=5 // pred_region
        // Predicated region
        $region21: #{generator_forward.9} parent=19 // pred_check
          %p176 = pneg %p82
        $region22: #{generator_forward.9} parent=19 // pred_check_branch
          %178 = sbr.rel (%p176) target = $region24
        $region23: #{generator_forward.9} parent=19 // pred_region
          %s179 = sand.u32 %s72, 1
          %s180 = scalar_lea.sflag [#allocation3], %s179
          %s181 = sand.u32 %s72, 1
          %s182 = smul.addr %s181, 208
          %s183 = scalar_lea.vmem [#allocation2], %s182
          %s184 = smul.u32 4, %s21
          %s186 = ssub.s32 3328, 3328
          %187 = vsyncadd %s180, %s186
          %s188 = smul.addr %s20, 832
          %s189 = sadd.s32 %s184, %s188
          %s190 = smul.addr %s189, 64
          %s191 = scalar_lea.hbm %s1, %s190
          %s192 = sshll.u32 %s183, 4
          %s193 = int_to_ptr.vmem [resolvable:$true] %s192
          %198 = dma.hbm_to_vmem [thread:$0]  %s191, 3328, %s193, %s180, 4096, 256, 16
        $region24: #{generator_forward.9} parent=19 // pred_fallthru
          _
      $region20: #{generator_forward.9} parent=5 // pred_fallthru
        _
      %p199 = scmp.le.s32.totalorder 1, %s13
      %p200 = scmp.lt.s32.totalorder %s13, 17
      %p201 = pnand %p199, %p200
      %p202 = pneg %p201
      // Predicated region
      $region25: #{generator_forward.9} parent=5 // pred_check
        _
      $region26: #{generator_forward.9} parent=5 // pred_check_branch
        %204 = sbr.rel (%p201) target = $region28
      $region27: #{generator_forward.9} parent=5 // pred_region
        %s205 = ssub.s32 %s13, 1
        %s206 = sand.u32 %s75, 1
        %s207 = scalar_lea.sflag [#allocation3], %s206
        %s208 = sand.u32 %s75, 1
        %s209 = smul.addr %s208, 208
        %s210 = scalar_lea.vmem [#allocation2], %s209
        // Predicated region
        $region29: #{generator_forward.9} parent=27 // pred_check
          %p211 = pneg %p88
        $region30: #{generator_forward.9} parent=27 // pred_check_branch
          %213 = sbr.rel (%p211) target = $region32
        $region31: #{generator_forward.9} parent=27 // pred_region
          %214 = dma.done %s207, 3328
        $region32: #{generator_forward.9} parent=27 // pred_fallthru
          _
        %p215 = scmp.lt.s32.totalorder %s23, 0
        %s216 = scalar_select %p215, %s23, 0
        %p217 = scmp.lt.s32.totalorder %s25, 0
        %s218 = scalar_select %p217, %s25, 0
        %s219 = sadd.s32 %s218, %s216
        %s220 = scalar_lea.vmem %s0, %s219
        %p221 = pneg %p60
        %p222 = pneg %p57
        %s223 = sand.u32 %s75, 1
        %s224 = scalar_lea.sflag [#allocation3], %s223
        %s225 = sand.u32 %s75, 1
        %s226 = smul.addr %s225, 208
        %s227 = scalar_lea.vmem [#allocation2], %s226
        %p228 = pneg %p88
        %p229 = pneg %p85
        %p230 = pneg %p118
        %p231 = pneg %p115
        %s232 = smul.u32 4, %s24
        %p233 = scmp.lt.s32.totalorder %s23, 0
        %s234 = scalar_select %p233, %s23, 0
        %p235 = scmp.lt.s32.totalorder %s25, 0
        %s236 = scalar_select %p235, %s25, 0
        %p237 = scmp.lt.s32.totalorder %s232, 63
        %s238 = scalar_select %p237, %s232, 63
        %s239 = smul.addr %s236, 64
        %s240 = sadd.s32 %s238, %s239
        %s241 = smul.addr %s234, 64
        %s242 = sadd.s32 %s240, %s241
        %s243 = scalar_lea.vmem %s2, %s242
        %p244 = pneg %p148
        %p245 = pneg %p145
        %s246 = smul.u32 4, %s24
        %p247 = scmp.lt.s32.totalorder %s23, 0
        %s248 = scalar_select %p247, %s23, 0
        %p249 = scmp.lt.s32.totalorder %s25, 0
        %s250 = scalar_select %p249, %s25, 0
        %p251 = scmp.lt.s32.totalorder %s246, 63
        %s252 = scalar_select %p251, %s246, 63
        %s253 = smul.addr %s250, 64
        %s254 = sadd.s32 %s252, %s253
        %s255 = smul.addr %s248, 64
        %s256 = sadd.s32 %s254, %s255
        %s257 = smul.addr %s256, 2
        %s258 = scalar_lea.vmem %s3, %s257
        %p259 = scmp.lt.s32.totalorder %s23, 0
        %s260 = scalar_select %p259, %s23, 0
        %p261 = scmp.lt.s32.totalorder %s25, 0
        %s262 = scalar_select %p261, %s25, 0
        %s263 = sadd.s32 %s262, %s260
        %s264 = scalar_lea.vmem %s0, %s263
        %s265 = smul.u32 4, %s24
        %s266 = smul.u32 4, %s24
        %p267 = scmp.lt.s32.totalorder %s23, 0
        %s268 = scalar_select %p267, %s23, 0
        %p269 = scmp.lt.s32.totalorder %s25, 0
        %s270 = scalar_select %p269, %s25, 0
        %p271 = scmp.lt.s32.totalorder %s266, 63
        %s272 = scalar_select %p271, %s266, 63
        %s273 = smul.addr %s270, 64
        %s274 = sadd.s32 %s272, %s273
        %s275 = smul.addr %s268, 64
        %s276 = sadd.s32 %s274, %s275
        %s277 = scalar_lea.vmem %s2, %s276
        %s278 = smul.u32 4, %s24
        %s279 = smul.u32 4, %s24
        %p280 = scmp.lt.s32.totalorder %s23, 0
        %s281 = scalar_select %p280, %s23, 0
        %p282 = scmp.lt.s32.totalorder %s25, 0
        %s283 = scalar_select %p282, %s25, 0
        %p284 = scmp.lt.s32.totalorder %s279, 63
        %s285 = scalar_select %p284, %s279, 63
        %s286 = smul.addr %s283, 64
        %s287 = sadd.s32 %s285, %s286
        %s288 = smul.addr %s281, 64
        %s289 = sadd.s32 %s287, %s288
        %s290 = smul.addr %s289, 2
        %s291 = scalar_lea.vmem %s3, %s290
        %s292 = smul.u32 4, %s24
        %v294 = vld [vmem:[%s264] sm:$0x1]
        %v295 = vld [vmem:[%s210] sm:$0xff]
        %v296 = vld [vmem:[%s210 + $0x8] sm:$0xff]
        %v297 = vld [vmem:[%s210 + $0x10] sm:$0xff]
        %v298 = vld [vmem:[%s210 + $0x18] sm:$0xff]
        %v299 = vld [vmem:[%s210 + $0x20] sm:$0xff]
        %v300 = vld [vmem:[%s210 + $0x28] sm:$0xff]
        %v301 = vld [vmem:[%s210 + $0x30] sm:$0xff]
        %v302 = vld [vmem:[%s210 + $0x38] sm:$0xff]
        %v303 = vld [vmem:[%s210 + $0x40] sm:$0xff]
        %v304 = vld [vmem:[%s210 + $0x48] sm:$0xff]
        %v305 = vld [vmem:[%s210 + $0x50] sm:$0xff]
        %v306 = vld [vmem:[%s210 + $0x58] sm:$0xff]
        %v307 = vld [vmem:[%s210 + $0x60] sm:$0xff]
        %v308 = vld [vmem:[%s210 + $0x68] sm:$0xff]
        %v309 = vld [vmem:[%s210 + $0x70] sm:$0xff]
        %v310 = vld [vmem:[%s210 + $0x78] sm:$0xff]
        %v311 = vld [vmem:[%s210 + $0x80] sm:$0xff]
        %v312 = vld [vmem:[%s210 + $0x88] sm:$0xff]
        %v313 = vld [vmem:[%s210 + $0x90] sm:$0xff]
        %v314 = vld [vmem:[%s210 + $0x98] sm:$0xff]
        %v315 = vld [vmem:[%s210 + $0xa0] sm:$0xff]
        %v316 = vld [vmem:[%s210 + $0xa8] sm:$0xff]
        %v317 = vld [vmem:[%s210 + $0xb0] sm:$0xff]
        %v318 = vld [vmem:[%s210 + $0xb8] sm:$0xff]
        %v319 = vld [vmem:[%s210 + $0xc0] sm:$0x33]
        %v320 = vld [vmem:[%s210 + $0xc8] sm:$0x33]
        %v347 = vunpack.c.l.b16 %v295
        %v348 = vunpack.c.h.b16 %v295
        %v349 = vunpack.c.l.b16 %v296
        %v350 = vunpack.c.h.b16 %v296
        %v351 = vunpack.c.l.b16 %v297
        %v352 = vunpack.c.h.b16 %v297
        %v353 = vunpack.c.l.b16 %v298
        %v354 = vunpack.c.h.b16 %v298
        %v355 = vunpack.c.l.b16 %v299
        %v356 = vunpack.c.h.b16 %v299
        %v357 = vunpack.c.l.b16 %v300
        %v358 = vunpack.c.h.b16 %v300
        %v359 = vunpack.c.l.b16 %v301
        %v360 = vunpack.c.h.b16 %v301
        %v361 = vunpack.c.l.b16 %v302
        %v362 = vunpack.c.h.b16 %v302
        %v363 = vunpack.c.l.b16 %v303
        %v364 = vunpack.c.h.b16 %v303
        %v365 = vunpack.c.l.b16 %v304
        %v366 = vunpack.c.h.b16 %v304
        %v367 = vunpack.c.l.b16 %v305
        %v368 = vunpack.c.h.b16 %v305
        %v369 = vunpack.c.l.b16 %v306
        %v370 = vunpack.c.h.b16 %v306
        %v371 = vunpack.c.l.b16 %v307
        %v372 = vunpack.c.h.b16 %v307
        %v373 = vunpack.c.l.b16 %v308
        %v374 = vunpack.c.h.b16 %v308
        %v375 = vunpack.c.l.b16 %v309
        %v376 = vunpack.c.h.b16 %v309
        %v377 = vunpack.c.l.b16 %v310
        %v378 = vunpack.c.h.b16 %v310
        %v379 = vunpack.c.l.b16 %v311
        %v380 = vunpack.c.h.b16 %v311
        %v381 = vunpack.c.l.b16 %v312
        %v382 = vunpack.c.h.b16 %v312
        %v383 = vunpack.c.l.b16 %v313
        %v384 = vunpack.c.h.b16 %v313
        %v385 = vunpack.c.l.b16 %v314
        %v386 = vunpack.c.h.b16 %v314
        %v387 = vunpack.c.l.b16 %v315
        %v388 = vunpack.c.h.b16 %v315
        %v389 = vunpack.c.l.b16 %v316
        %v390 = vunpack.c.h.b16 %v316
        %v391 = vunpack.c.l.b16 %v317
        %v392 = vunpack.c.h.b16 %v317
        %v393 = vunpack.c.l.b16 %v318
        %v394 = vunpack.c.h.b16 %v318
        %v395 = vunpack.c.l.b16 %v319
        %v396 = vunpack.c.h.b16 %v319
        %v397 = vunpack.c.l.b16 %v320
        %v398 = vunpack.c.h.b16 %v320
        %v399 = vpack.c.b16 %v351, %v347
        %v400 = vpack.c.b16 %v352, %v348
        %v401 = vpack.c.b16 %v353, %v349
        %v402 = vpack.c.b16 %v354, %v350
        %v403 = vpack.c.b16 %v359, %v355
        %v404 = vpack.c.b16 %v360, %v356
        %v405 = vpack.c.b16 %v361, %v357
        %v406 = vpack.c.b16 %v362, %v358
        %v407 = vpack.c.b16 %v367, %v363
        %v408 = vpack.c.b16 %v368, %v364
        %v409 = vpack.c.b16 %v369, %v365
        %v410 = vpack.c.b16 %v370, %v366
        %v411 = vpack.c.b16 %v375, %v371
        %v412 = vpack.c.b16 %v376, %v372
        %v413 = vpack.c.b16 %v377, %v373
        %v414 = vpack.c.b16 %v378, %v374
        %v415 = vpack.c.b16 %v383, %v379
        %v416 = vpack.c.b16 %v384, %v380
        %v417 = vpack.c.b16 %v385, %v381
        %v418 = vpack.c.b16 %v386, %v382
        %v419 = vpack.c.b16 %v391, %v387
        %v420 = vpack.c.b16 %v392, %v388
        %v421 = vpack.c.b16 %v393, %v389
        %v422 = vpack.c.b16 %v394, %v390
        %v423 = vpack.c.b16 %v395, %v395
        %v424 = vpack.c.b16 %v396, %v396
        %v425 = vpack.c.b16 %v397, %v397
        %v426 = vpack.c.b16 %v398, %v398
        %vm451 = vcmask 818176
        %v453 = vsel %vm451, %v294, 0
        %vm455 = vcmask 1041408
        %v457 = vsel %vm455, %v423, 0
        %v460 = vsel %vm455, %v424, 0
        %v463 = vsel %vm455, %v425, 0
        %v466 = vsel %vm455, %v426, 0
        %468 = vmatprep.subr.bf16.mxu0 %v400
        %469 = vmatpush1.bf16.msra.mxu0 %v399
        %470 = vmatprep.subr.bf16.mxu0 %v404
        %471 = vmatpush1.bf16.msra.mxu0 %v403
        %472 = vmatprep.subr.bf16.mxu0 %v408
        %473 = vmatpush1.bf16.msra.mxu0 %v407
        %474 = vmatprep.subr.bf16.mxu0 %v412
        %475 = vmatpush1.bf16.msra.mxu0 %v411
        %476 = vmatprep.subr.bf16.mxu0 %v416
        %477 = vmatpush1.bf16.msra.mxu0 %v415
        %478 = vmatprep.subr.bf16.mxu0 %v420
        %479 = vmatpush1.bf16.msra.mxu0 %v419
        %480 = vmatprep.subr.bf16.mxu0 %v460
        %481 = vmatpush1.bf16.msra.mxu0 %v457
        %482 = vmatprep.subr.bf16.mxu0 0
        %483 = vmatpush1.bf16.msra.mxu0 0
        %484 = vmatprep.subr.bf16.mxu0 0
        %485 = vmatpush1.bf16.msra.mxu0 0
        %486 = vmatprep.subr.bf16.mxu0 0
        %487 = vmatpush1.bf16.msra.mxu0 0
        %488 = vmatprep.subr.bf16.mxu0 0
        %489 = vmatpush1.bf16.msra.mxu0 0
        %490 = vmatprep.subr.bf16.mxu0 0
        %491 = vmatpush1.bf16.msra.mxu0 0
        %492 = vmatprep.subr.bf16.mxu0 0
        %493 = vmatpush1.bf16.msra.mxu0 0
        %494 = vmatprep.subr.bf16.mxu0 0
        %495 = vmatpush1.bf16.msra.mxu0 0
        %496 = vmatprep.subr.bf16.mxu0 0
        %497 = vmatpush1.bf16.msra.mxu0 0
        %498 = vmatprep.subr.bf16.mxu0 0
        %499 = vmatpush1.bf16.msra.mxu0 0
        %500 = vmatprep.mubr.bf16.mxu0 0
        %501 = vmatmul.mubr.bf16.gmra.mrb[0].mxu0 %v453
        %v502 = vpop.f32.mrb[0].mxu0
        %v503 = vadd.f32 0.0, %v502
        %v504 = vpop.f32.mrb[0].mxu0
        %v505 = vadd.f32 0.0, %v504
        %v506 = vpop.f32.mrb[0].mxu0
        %v507 = vpop.f32.mrb[0].mxu0
        %508 = vdwg.mxu0
        %509 = vmatprep.subr.bf16.mxu0 %v402
        %510 = vmatpush1.bf16.msra.mxu0 %v401
        %511 = vmatprep.subr.bf16.mxu0 %v406
        %512 = vmatpush1.bf16.msra.mxu0 %v405
        %513 = vmatprep.subr.bf16.mxu0 %v410
        %514 = vmatpush1.bf16.msra.mxu0 %v409
        %515 = vmatprep.subr.bf16.mxu0 %v414
        %516 = vmatpush1.bf16.msra.mxu0 %v413
        %517 = vmatprep.subr.bf16.mxu0 %v418
        %518 = vmatpush1.bf16.msra.mxu0 %v417
        %519 = vmatprep.subr.bf16.mxu0 %v422
        %520 = vmatpush1.bf16.msra.mxu0 %v421
        %521 = vmatprep.subr.bf16.mxu0 %v466
        %522 = vmatpush1.bf16.msra.mxu0 %v463
        %523 = vmatprep.subr.bf16.mxu0 0
        %524 = vmatpush1.bf16.msra.mxu0 0
        %525 = vmatprep.subr.bf16.mxu0 0
        %526 = vmatpush1.bf16.msra.mxu0 0
        %527 = vmatprep.subr.bf16.mxu0 0
        %528 = vmatpush1.bf16.msra.mxu0 0
        %529 = vmatprep.subr.bf16.mxu0 0
        %530 = vmatpush1.bf16.msra.mxu0 0
        %531 = vmatprep.subr.bf16.mxu0 0
        %532 = vmatpush1.bf16.msra.mxu0 0
        %533 = vmatprep.subr.bf16.mxu0 0
        %534 = vmatpush1.bf16.msra.mxu0 0
        %535 = vmatprep.subr.bf16.mxu0 0
        %536 = vmatpush1.bf16.msra.mxu0 0
        %537 = vmatprep.subr.bf16.mxu0 0
        %538 = vmatpush1.bf16.msra.mxu0 0
        %539 = vmatprep.subr.bf16.mxu0 0
        %540 = vmatpush1.bf16.msra.mxu0 0
        %541 = vmatprep.mubr.bf16.mxu0 0
        %542 = vmatmul.mubr.bf16.gmra.mrb[0].mxu0 %v453
        %v543 = vpop.f32.mrb[0].mxu0
        %v544 = vadd.f32 0.0, %v543
        %v545 = vpop.f32.mrb[0].mxu0
        %v546 = vadd.f32 0.0, %v545
        %v547 = vpop.f32.mrb[0].mxu0
        %v548 = vpop.f32.mrb[0].mxu0
        %549 = vdwg.mxu0
        %v550 = vsel %vm455, %v503, 0.0
        %v551 = vrot.slane %v550, 4
        %v552 = vadd.f32 %v550, %v551
        %v553 = vrot.slane %v552, 2
        %v554 = vadd.f32 %v552, %v553
        %v555 = vrot.slane %v554, 1
        %v556 = vadd.f32 %v554, %v555
        %v557 = vsel %vm455, %v505, 0.0
        %v558 = vrot.slane %v557, 4
        %v559 = vadd.f32 %v557, %v558
        %v560 = vrot.slane %v559, 2
        %v561 = vadd.f32 %v559, %v560
        %v562 = vrot.slane %v561, 1
        %v563 = vadd.f32 %v561, %v562
        %v564 = vsel %vm455, %v544, 0.0
        %v565 = vrot.slane %v564, 4
        %v566 = vadd.f32 %v564, %v565
        %v567 = vrot.slane %v566, 2
        %v568 = vadd.f32 %v566, %v567
        %v569 = vrot.slane %v568, 1
        %v570 = vadd.f32 %v568, %v569
        %v571 = vsel %vm455, %v546, 0.0
        %v572 = vrot.slane %v571, 4
        %v573 = vadd.f32 %v571, %v572
        %v574 = vrot.slane %v573, 2
        %v575 = vadd.f32 %v573, %v574
        %v576 = vrot.slane %v575, 1
        %v577 = vadd.f32 %v575, %v576
        %v582 = vcombine.low %v556, %v563
        %v583 = vcombine.low %v570, %v577
        %v585 = vunpack.c.l.s4 1966171168
        %v586 = vunpack.c.0.s8 %v585
        %v587 = vlaneseq
        %v588 = vshrl.u32 %v587, 7
        %v589 = vsub.s32 %v586, %v588
        %v590 = vrot.slane %v582, %v589
        %v592 = vunpack.c.l.s4 1966171168
        %v593 = vunpack.c.0.s8 %v592
        %v594 = vlaneseq
        %v595 = vshrl.u32 %v594, 7
        %v596 = vsub.s32 %v593, %v595
        %v597 = vrot.slane %v583, %v596
        %v598 = vcombine.low %v590, %v597
        %v600 = vunpack.c.l.s4 1966171168
        %v601 = vunpack.c.0.s8 %v600
        %v602 = vlaneseq
        %v603 = vshrl.u32 %v602, 7
        %v604 = vsub.s32 %v601, %v603
        %v605 = vrot.slane %v598, %v604
        %v607 = vlaneseq
        %vm608 = vcmp.ge.s32.totalorder %v607, 0
        %vm609 = vcmp.lt.s32.totalorder %v607, 512
        %vm610 = vmand %vm608, %vm609
        %611 = vst.msk [vmem:[%s291] ss:$2 sm:$0xf] %vm610, %v605
        %v612 = vmul.f32 %v503, %v503
        %v613 = vmul.f32 %v505, %v505
        %v614 = vmul.f32 %v544, %v544
        %v615 = vmul.f32 %v546, %v546
        %v616 = vsel %vm455, %v612, 0.0
        %v617 = vrot.slane %v616, 4
        %v618 = vadd.f32 %v616, %v617
        %v619 = vrot.slane %v618, 2
        %v620 = vadd.f32 %v618, %v619
        %v621 = vrot.slane %v620, 1
        %v622 = vadd.f32 %v620, %v621
        %v623 = vsel %vm455, %v613, 0.0
        %v624 = vrot.slane %v623, 4
        %v625 = vadd.f32 %v623, %v624
        %v626 = vrot.slane %v625, 2
        %v627 = vadd.f32 %v625, %v626
        %v628 = vrot.slane %v627, 1
        %v629 = vadd.f32 %v627, %v628
        %v630 = vsel %vm455, %v614, 0.0
        %v631 = vrot.slane %v630, 4
        %v632 = vadd.f32 %v630, %v631
        %v633 = vrot.slane %v632, 2
        %v634 = vadd.f32 %v632, %v633
        %v635 = vrot.slane %v634, 1
        %v636 = vadd.f32 %v634, %v635
        %v637 = vsel %vm455, %v615, 0.0
        %v638 = vrot.slane %v637, 4
        %v639 = vadd.f32 %v637, %v638
        %v640 = vrot.slane %v639, 2
        %v641 = vadd.f32 %v639, %v640
        %v642 = vrot.slane %v641, 1
        %v643 = vadd.f32 %v641, %v642
        %v648 = vcombine.low %v622, %v629
        %v649 = vcombine.low %v636, %v643
        %v651 = vunpack.c.l.s4 1966171168
        %v652 = vunpack.c.0.s8 %v651
        %v653 = vlaneseq
        %v654 = vshrl.u32 %v653, 7
        %v655 = vsub.s32 %v652, %v654
        %v656 = vrot.slane %v648, %v655
        %v658 = vunpack.c.l.s4 1966171168
        %v659 = vunpack.c.0.s8 %v658
        %v660 = vlaneseq
        %v661 = vshrl.u32 %v660, 7
        %v662 = vsub.s32 %v659, %v661
        %v663 = vrot.slane %v649, %v662
        %v664 = vcombine.low %v656, %v663
        %v666 = vunpack.c.l.s4 1966171168
        %v667 = vunpack.c.0.s8 %v666
        %v668 = vlaneseq
        %v669 = vshrl.u32 %v668, 7
        %v670 = vsub.s32 %v667, %v669
        %v671 = vrot.slane %v664, %v670
        %s673 = scalar_lea.vmem %s291, 1
        %674 = vst.msk [vmem:[%s673] ss:$2 sm:$0xf] %vm610, %v671
        %v675 = vpack.c.bf16 %v503, %v503
        %v676 = vpack.c.bf16 %v505, %v505
        %v677 = vpack.c.bf16 %v544, %v544
        %v678 = vpack.c.bf16 %v546, %v546
        %v683 = vcombine.low %v675, %v676
        %v684 = vcombine.low %v677, %v678
        %v686 = vunpack.c.l.s4 1966171168
        %v687 = vunpack.c.0.s8 %v686
        %v688 = vlaneseq
        %v689 = vshrl.u32 %v688, 7
        %v690 = vsub.s32 %v687, %v689
        %v691 = vrot.slane %v683, %v690
        %v693 = vunpack.c.l.s4 1966171168
        %v694 = vunpack.c.0.s8 %v693
        %v695 = vlaneseq
        %v696 = vshrl.u32 %v695, 7
        %v697 = vsub.s32 %v694, %v696
        %v698 = vrot.slane %v684, %v697
        %v699 = vcombine.low %v691, %v698
        %v701 = vunpack.c.l.s4 1966171168
        %v702 = vunpack.c.0.s8 %v701
        %v703 = vlaneseq
        %v704 = vshrl.u32 %v703, 7
        %v705 = vsub.s32 %v702, %v704
        %v706 = vrot.slane %v699, %v705
        %708 = vst [vmem:[%s277] sm:$0xf] %v706
        %s709 = smul.u32 4, %s24
        %p710 = scmp.lt.s32.totalorder %s23, 0
        %s711 = scalar_select %p710, %s23, 0
        %p712 = scmp.lt.s32.totalorder %s25, 0
        %s713 = scalar_select %p712, %s25, 0
        %p714 = scmp.lt.s32.totalorder %s709, 63
        %s715 = scalar_select %p714, %s709, 63
        %s716 = smul.addr %s713, 64
        %s717 = sadd.s32 %s715, %s716
        %s718 = smul.addr %s711, 64
        %s719 = sadd.s32 %s717, %s718
        %s720 = scalar_lea.vmem %s2, %s719
        %s721 = smul.u32 4, %s24
        %p722 = scmp.lt.s32.totalorder %s23, 0
        %s723 = scalar_select %p722, %s23, 0
        %p724 = scmp.lt.s32.totalorder %s25, 0
        %s725 = scalar_select %p724, %s25, 0
        %p726 = scmp.lt.s32.totalorder %s721, 63
        %s727 = scalar_select %p726, %s721, 63
        %s728 = smul.addr %s725, 64
        %s729 = sadd.s32 %s727, %s728
        %s730 = smul.addr %s723, 64
        %s731 = sadd.s32 %s729, %s730
        %s732 = smul.addr %s731, 2
        %s733 = scalar_lea.vmem %s3, %s732
        // Predicated region
        $region33: #{generator_forward.9} parent=27 // pred_check
          %p734 = pneg %p115
        $region34: #{generator_forward.9} parent=27 // pred_check_branch
          %736 = sbr.rel (%p734) target = $region36
        $region35: #{generator_forward.9} parent=27 // pred_region
          %s737 = smul.u32 4, %s24
        $region36: #{generator_forward.9} parent=27 // pred_fallthru
          _
        // Predicated region
        $region37: #{generator_forward.9} parent=27 // pred_check
          %p738 = pneg %p145
        $region38: #{generator_forward.9} parent=27 // pred_check_branch
          %740 = sbr.rel (%p738) target = $region40
        $region39: #{generator_forward.9} parent=27 // pred_region
          %s741 = smul.u32 4, %s24
        $region40: #{generator_forward.9} parent=27 // pred_fallthru
          _
      $region28: #{generator_forward.9} parent=5 // pred_fallthru
        _
      %p742 = scmp.le.s32.totalorder 2, %s13
      // Predicated region
      $region41: #{generator_forward.9} parent=5 // pred_check
        %p743 = pneg %p742
      $region42: #{generator_forward.9} parent=5 // pred_check_branch
        %745 = sbr.rel (%p743) target = $region44
      $region43: #{generator_forward.9} parent=5 // pred_region
        %s746 = ssub.s32 %s13, 2
        // Predicated region
        $region45: #{generator_forward.9} parent=43 // pred_check
          %p747 = pneg %p121
        $region46: #{generator_forward.9} parent=43 // pred_check_branch
          %749 = sbr.rel (%p747) target = $region48
        $region47: #{generator_forward.9} parent=43 // pred_region
          %s750 = smul.u32 4, %s27
          %p751 = scmp.lt.s32.totalorder %s26, 0
          %s752 = scalar_select %p751, %s26, 0
          %p753 = scmp.lt.s32.totalorder %s28, 0
          %s754 = scalar_select %p753, %s28, 0
          %p755 = scmp.lt.s32.totalorder %s750, 63
          %s756 = scalar_select %p755, %s750, 63
          %s757 = smul.addr %s754, 64
          %s758 = sadd.s32 %s756, %s757
          %s759 = smul.addr %s752, 64
          %s760 = sadd.s32 %s758, %s759
          %s761 = scalar_lea.vmem %s2, %s760
        $region48: #{generator_forward.9} parent=43 // pred_fallthru
          _
        // Predicated region
        $region49: #{generator_forward.9} parent=43 // pred_check
          %p762 = pneg %p151
        $region50: #{generator_forward.9} parent=43 // pred_check_branch
          %764 = sbr.rel (%p762) target = $region52
        $region51: #{generator_forward.9} parent=43 // pred_region
          %s765 = smul.u32 4, %s27
          %p766 = scmp.lt.s32.totalorder %s26, 0
          %s767 = scalar_select %p766, %s26, 0
          %p768 = scmp.lt.s32.totalorder %s28, 0
          %s769 = scalar_select %p768, %s28, 0
          %p770 = scmp.lt.s32.totalorder %s765, 63
          %s771 = scalar_select %p770, %s765, 63
          %s772 = smul.addr %s769, 64
          %s773 = sadd.s32 %s771, %s772
          %s774 = smul.addr %s767, 64
          %s775 = sadd.s32 %s773, %s774
          %s776 = smul.addr %s775, 2
          %s777 = scalar_lea.vmem %s3, %s776
        $region52: #{generator_forward.9} parent=43 // pred_fallthru
          _
      $region44: #{generator_forward.9} parent=5 // pred_fallthru
        _
    $region6: #{generator_forward.9} parent=1 // loop_footer
      %s17 = sadd.s32 1, %s13
    $region7: #{generator_forward.9} parent=1 // loop_footer_branch
      %12 = sbr.rel target = $region3
    $region8: #{generator_forward.9} parent=1 // loop_exit
      _
    %778 = vsyncpa [#allocation3], 1
    %s779 = scalar_lea.sflag [#allocation3], 1
    %780 = vsyncpa %s779, 1

// kernel: generator_forward.12
$region0: #{generator_forward.12}
  #allocation0 [shape = 'u32[]', space=smem, size = 0x4, offset = 0x4, fixed_abs, tag = 'smem constant byte address 0x4 - core index']
  #allocation1 [shape = 'u32[144,128]{1,0:T(1,128)}', space=vmem, size = 0x12000, scoped, tag = 'internal scratch']
  %s0 = inlined_call_operand.vmem [shape: bf16[128,256], index: 0, kind: input, shape index: {}]
  %s1 = inlined_call_operand.vmem [shape: f32[1,256], index: 1, kind: input, shape index: {}]
  %s2 = inlined_call_operand.vmem [shape: f32[1,256], index: 2, kind: input, shape index: {}]
  %s3 = inlined_call_operand.vmem [shape: bf16[128,256], index: 3, kind: output, shape index: {}]
  %s4 = sld [smem:[#allocation0]]
  $region22: #{generator_forward.12} parent=0
    _
  %s6 = ssub.s32 1, %s4
  %s7 = scalar_select 0, %s6, %s4
  // Predicated region
  $region2: #{generator_forward.12} parent=0 // pred_check
    _
  $region3: #{generator_forward.12} parent=0 // pred_check_branch
    %9 = sbr.rel (0) target = $region5
  $region4: #{generator_forward.12} parent=0 // pred_region
    _
  $region5: #{generator_forward.12} parent=0 // pred_fallthru
    _
  // Predicated region
  $region6: #{generator_forward.12} parent=0 // pred_check
    _
  $region7: #{generator_forward.12} parent=0 // pred_check_branch
    %11 = sbr.rel (0) target = $region9
  $region8: #{generator_forward.12} parent=0 // pred_region
    _
  $region9: #{generator_forward.12} parent=0 // pred_fallthru
    _
  // Predicated region
  $region10: #{generator_forward.12} parent=0 // pred_check
    _
  $region11: #{generator_forward.12} parent=0 // pred_check_branch
    %13 = sbr.rel (0) target = $region13
  $region12: #{generator_forward.12} parent=0 // pred_region
    _
  $region13: #{generator_forward.12} parent=0 // pred_fallthru
    _
  %v14 = vld [vmem:[%s0] sm:$0xff]
  %v15 = vld [vmem:[%s0 + $0x8] sm:$0xff]
  %v16 = vld [vmem:[%s0 + $0x10] sm:$0xff]
  %v17 = vld [vmem:[%s0 + $0x18] sm:$0xff]
  %v18 = vld [vmem:[%s0 + $0x20] sm:$0xff]
  %v19 = vld [vmem:[%s0 + $0x28] sm:$0xff]
  %v20 = vld [vmem:[%s0 + $0x30] sm:$0xff]
  %v21 = vld [vmem:[%s0 + $0x38] sm:$0xff]
  %v22 = vld [vmem:[%s0 + $0x40] sm:$0xff]
  %v23 = vld [vmem:[%s0 + $0x48] sm:$0xff]
  %v24 = vld [vmem:[%s0 + $0x50] sm:$0xff]
  %v25 = vld [vmem:[%s0 + $0x58] sm:$0xff]
  %v26 = vld [vmem:[%s0 + $0x60] sm:$0xff]
  %v27 = vld [vmem:[%s0 + $0x68] sm:$0xff]
  %v28 = vld [vmem:[%s0 + $0x70] sm:$0xff]
  %v29 = vld [vmem:[%s0 + $0x78] sm:$0xff]
  %v30 = vunpack.c.l.bf16 %v14
  %v31 = vunpack.c.h.bf16 %v14
  %v32 = vunpack.c.l.bf16 %v15
  %v33 = vunpack.c.h.bf16 %v15
  %v34 = vunpack.c.l.bf16 %v16
  %v35 = vunpack.c.h.bf16 %v16
  %v36 = vunpack.c.l.bf16 %v17
  %v37 = vunpack.c.h.bf16 %v17
  %v38 = vunpack.c.l.bf16 %v18
  %v39 = vunpack.c.h.bf16 %v18
  %v40 = vunpack.c.l.bf16 %v19
  %v41 = vunpack.c.h.bf16 %v19
  %v42 = vunpack.c.l.bf16 %v20
  %v43 = vunpack.c.h.bf16 %v20
  %v44 = vunpack.c.l.bf16 %v21
  %v45 = vunpack.c.h.bf16 %v21
  %v46 = vunpack.c.l.bf16 %v22
  %v47 = vunpack.c.h.bf16 %v22
  %v48 = vunpack.c.l.bf16 %v23
  %v49 = vunpack.c.h.bf16 %v23
  %v50 = vunpack.c.l.bf16 %v24
  %v51 = vunpack.c.h.bf16 %v24
  %v52 = vunpack.c.l.bf16 %v25
  %v53 = vunpack.c.h.bf16 %v25
  %v54 = vunpack.c.l.bf16 %v26
  %v55 = vunpack.c.h.bf16 %v26
  %v56 = vunpack.c.l.bf16 %v27
  %v57 = vunpack.c.h.bf16 %v27
  %v58 = vunpack.c.l.bf16 %v28
  %v59 = vunpack.c.h.bf16 %v28
  %v60 = vunpack.c.l.bf16 %v29
  %v61 = vunpack.c.h.bf16 %v29
  %v62 = vld [vmem:[%s1] sm:$0x3]
  %v64 = vlaneseq
  %v65 = vshrl.u32 %v64, 7
  %v66 = vsub.s32 0, %v65
  %v67 = vrot.slane %v62, %v66
  %v68 = vlaneseq
  %v69 = vshrl.u32 %v68, 7
  %v70 = vsub.s32 1, %v69
  %v71 = vrot.slane %v62, %v70
  %v74 = vmul.f32 %v30, %v67
  %v75 = vmul.f32 %v31, %v71
  %v76 = vmul.f32 %v32, %v67
  %v77 = vmul.f32 %v33, %v71
  %v78 = vmul.f32 %v34, %v67
  %v79 = vmul.f32 %v35, %v71
  %v80 = vmul.f32 %v36, %v67
  %v81 = vmul.f32 %v37, %v71
  %v82 = vmul.f32 %v38, %v67
  %v83 = vmul.f32 %v39, %v71
  %v84 = vmul.f32 %v40, %v67
  %v85 = vmul.f32 %v41, %v71
  %v86 = vmul.f32 %v42, %v67
  %v87 = vmul.f32 %v43, %v71
  %v88 = vmul.f32 %v44, %v67
  %v89 = vmul.f32 %v45, %v71
  %v90 = vmul.f32 %v46, %v67
  %v91 = vmul.f32 %v47, %v71
  %v92 = vmul.f32 %v48, %v67
  %v93 = vmul.f32 %v49, %v71
  %v94 = vmul.f32 %v50, %v67
  %v95 = vmul.f32 %v51, %v71
  %v96 = vmul.f32 %v52, %v67
  %v97 = vmul.f32 %v53, %v71
  %v98 = vmul.f32 %v54, %v67
  %v99 = vmul.f32 %v55, %v71
  %v100 = vmul.f32 %v56, %v67
  %v101 = vmul.f32 %v57, %v71
  %v102 = vmul.f32 %v58, %v67
  %v103 = vmul.f32 %v59, %v71
  %v104 = vmul.f32 %v60, %v67
  %v105 = vmul.f32 %v61, %v71
  %v106 = vld [vmem:[%s2] sm:$0x3]
  %v108 = vlaneseq
  %v109 = vshrl.u32 %v108, 7
  %v110 = vsub.s32 0, %v109
  %v111 = vrot.slane %v106, %v110
  %v112 = vlaneseq
  %v113 = vshrl.u32 %v112, 7
  %v114 = vsub.s32 1, %v113
  %v115 = vrot.slane %v106, %v114
  %v118 = vadd.f32 %v74, %v111
  %v119 = vadd.f32 %v75, %v115
  %v120 = vadd.f32 %v76, %v111
  %v121 = vadd.f32 %v77, %v115
  %v122 = vadd.f32 %v78, %v111
  %v123 = vadd.f32 %v79, %v115
  %v124 = vadd.f32 %v80, %v111
  %v125 = vadd.f32 %v81, %v115
  %v126 = vadd.f32 %v82, %v111
  %v127 = vadd.f32 %v83, %v115
  %v128 = vadd.f32 %v84, %v111
  %v129 = vadd.f32 %v85, %v115
  %v130 = vadd.f32 %v86, %v111
  %v131 = vadd.f32 %v87, %v115
  %v132 = vadd.f32 %v88, %v111
  %v133 = vadd.f32 %v89, %v115
  %v134 = vadd.f32 %v90, %v111
  %v135 = vadd.f32 %v91, %v115
  %v136 = vadd.f32 %v92, %v111
  %v137 = vadd.f32 %v93, %v115
  %v138 = vadd.f32 %v94, %v111
  %v139 = vadd.f32 %v95, %v115
  %v140 = vadd.f32 %v96, %v111
  %v141 = vadd.f32 %v97, %v115
  %v142 = vadd.f32 %v98, %v111
  %v143 = vadd.f32 %v99, %v115
  %v144 = vadd.f32 %v100, %v111
  %v145 = vadd.f32 %v101, %v115
  %v146 = vadd.f32 %v102, %v111
  %v147 = vadd.f32 %v103, %v115
  %v148 = vadd.f32 %v104, %v111
  %v149 = vadd.f32 %v105, %v115
  %v150 = vmax.f32 %v118, 0.0
  %v151 = vmax.f32 %v119, 0.0
  %v152 = vmax.f32 %v120, 0.0
  %v153 = vmax.f32 %v121, 0.0
  %v154 = vmax.f32 %v122, 0.0
  %v155 = vmax.f32 %v123, 0.0
  %v156 = vmax.f32 %v124, 0.0
  %v157 = vmax.f32 %v125, 0.0
  %v158 = vmax.f32 %v126, 0.0
  %v159 = vmax.f32 %v127, 0.0
  %v160 = vmax.f32 %v128, 0.0
  %v161 = vmax.f32 %v129, 0.0
  %v162 = vmax.f32 %v130, 0.0
  %v163 = vmax.f32 %v131, 0.0
  %v164 = vmax.f32 %v132, 0.0
  %v165 = vmax.f32 %v133, 0.0
  %v166 = vmax.f32 %v134, 0.0
  %v167 = vmax.f32 %v135, 0.0
  %v168 = vmax.f32 %v136, 0.0
  %v169 = vmax.f32 %v137, 0.0
  %v170 = vmax.f32 %v138, 0.0
  %v171 = vmax.f32 %v139, 0.0
  %v172 = vmax.f32 %v140, 0.0
  %v173 = vmax.f32 %v141, 0.0
  %v174 = vmax.f32 %v142, 0.0
  %v175 = vmax.f32 %v143, 0.0
  %v176 = vmax.f32 %v144, 0.0
  %v177 = vmax.f32 %v145, 0.0
  %v178 = vmax.f32 %v146, 0.0
  %v179 = vmax.f32 %v147, 0.0
  %v180 = vmax.f32 %v148, 0.0
  %v181 = vmax.f32 %v149, 0.0
  %v182 = vpack.c.bf16 %v152, %v150
  %v183 = vpack.c.bf16 %v153, %v151
  %v184 = vpack.c.bf16 %v156, %v154
  %v185 = vpack.c.bf16 %v157, %v155
  %v186 = vpack.c.bf16 %v160, %v158
  %v187 = vpack.c.bf16 %v161, %v159
  %v188 = vpack.c.bf16 %v164, %v162
  %v189 = vpack.c.bf16 %v165, %v163
  %v190 = vpack.c.bf16 %v168, %v166
  %v191 = vpack.c.bf16 %v169, %v167
  %v192 = vpack.c.bf16 %v172, %v170
  %v193 = vpack.c.bf16 %v173, %v171
  %v194 = vpack.c.bf16 %v176, %v174
  %v195 = vpack.c.bf16 %v177, %v175
  %v196 = vpack.c.bf16 %v180, %v178
  %v197 = vpack.c.bf16 %v181, %v179
  %v214 = vunpack.c.l.b16 %v182
  %v215 = vunpack.c.l.b16 %v183
  %v216 = vunpack.c.h.b16 %v182
  %v217 = vunpack.c.h.b16 %v183
  %v218 = vunpack.c.l.b16 %v184
  %v219 = vunpack.c.l.b16 %v185
  %v220 = vunpack.c.h.b16 %v184
  %v221 = vunpack.c.h.b16 %v185
  %v222 = vunpack.c.l.b16 %v186
  %v223 = vunpack.c.l.b16 %v187
  %v224 = vunpack.c.h.b16 %v186
  %v225 = vunpack.c.h.b16 %v187
  %v226 = vunpack.c.l.b16 %v188
  %v227 = vunpack.c.l.b16 %v189
  %v228 = vunpack.c.h.b16 %v188
  %v229 = vunpack.c.h.b16 %v189
  %v230 = vunpack.c.l.b16 %v190
  %v231 = vunpack.c.l.b16 %v191
  %v232 = vunpack.c.h.b16 %v190
  %v233 = vunpack.c.h.b16 %v191
  %v234 = vunpack.c.l.b16 %v192
  %v235 = vunpack.c.l.b16 %v193
  %v236 = vunpack.c.h.b16 %v192
  %v237 = vunpack.c.h.b16 %v193
  %v238 = vunpack.c.l.b16 %v194
  %v239 = vunpack.c.l.b16 %v195
  %v240 = vunpack.c.h.b16 %v194
  %v241 = vunpack.c.h.b16 %v195
  %v242 = vunpack.c.l.b16 %v196
  %v243 = vunpack.c.l.b16 %v197
  %v244 = vunpack.c.h.b16 %v196
  %v245 = vunpack.c.h.b16 %v197
  %v246 = vpack.c.b16 %v215, %v214
  %v247 = vpack.c.b16 %v217, %v216
  %v248 = vpack.c.b16 %v219, %v218
  %v249 = vpack.c.b16 %v221, %v220
  %v250 = vpack.c.b16 %v223, %v222
  %v251 = vpack.c.b16 %v225, %v224
  %v252 = vpack.c.b16 %v227, %v226
  %v253 = vpack.c.b16 %v229, %v228
  %v254 = vpack.c.b16 %v231, %v230
  %v255 = vpack.c.b16 %v233, %v232
  %v256 = vpack.c.b16 %v235, %v234
  %v257 = vpack.c.b16 %v237, %v236
  %v258 = vpack.c.b16 %v239, %v238
  %v259 = vpack.c.b16 %v241, %v240
  %v260 = vpack.c.b16 %v243, %v242
  %v261 = vpack.c.b16 %v245, %v244
  %278 = vst [vmem:[%s3] sm:$0xff] %v246
  %279 = vst [vmem:[%s3 + $0x8] sm:$0xff] %v247
  %280 = vst [vmem:[%s3 + $0x10] sm:$0xff] %v248
  %281 = vst [vmem:[%s3 + $0x18] sm:$0xff] %v249
  %282 = vst [vmem:[%s3 + $0x20] sm:$0xff] %v250
  %283 = vst [vmem:[%s3 + $0x28] sm:$0xff] %v251
  %284 = vst [vmem:[%s3 + $0x30] sm:$0xff] %v252
  %285 = vst [vmem:[%s3 + $0x38] sm:$0xff] %v253
  %286 = vst [vmem:[%s3 + $0x40] sm:$0xff] %v254
  %287 = vst [vmem:[%s3 + $0x48] sm:$0xff] %v255
  %288 = vst [vmem:[%s3 + $0x50] sm:$0xff] %v256
  %289 = vst [vmem:[%s3 + $0x58] sm:$0xff] %v257
  %290 = vst [vmem:[%s3 + $0x60] sm:$0xff] %v258
  %291 = vst [vmem:[%s3 + $0x68] sm:$0xff] %v259
  %292 = vst [vmem:[%s3 + $0x70] sm:$0xff] %v260
  %293 = vst [vmem:[%s3 + $0x78] sm:$0xff] %v261
  // Predicated region
  $region14: #{generator_forward.12} parent=0 // pred_check
    _
  $region15: #{generator_forward.12} parent=0 // pred_check_branch
    %295 = sbr.rel (0) target = $region17
  $region16: #{generator_forward.12} parent=0 // pred_region
    _
  $region17: #{generator_forward.12} parent=0 // pred_fallthru
    _
  // Predicated region
  $region18: #{generator_forward.12} parent=0 // pred_check
    _
  $region19: #{generator_forward.12} parent=0 // pred_check_branch
    %297 = sbr.rel (0) target = $region21
  $region20: #{generator_forward.12} parent=0 // pred_region
    _
  $region21: #{generator_forward.12} parent=0 // pred_fallthru
    _

// kernel: generator_forward.11
$region0: #{generator_forward.11}
  #allocation0 [shape = 'u32[]', space=smem, size = 0x4, offset = 0x4, fixed_abs, tag = 'smem constant byte address 0x4 - core index']
  #allocation1 [shape = 'u32[144,128]{1,0:T(1,128)}', space=vmem, size = 0x12000, scoped, tag = 'internal scratch']
  %s0 = inlined_call_operand.vmem [shape: bf16[4,32,2048], index: 0, kind: input, shape index: {}]
  %s1 = inlined_call_operand.vmem [shape: bf16[4,2048,256], index: 1, kind: input, shape index: {}]
  %s2 = inlined_call_operand.vmem [shape: bf16[4,32,256], index: 2, kind: output, shape index: {0}]
  %s3 = inlined_call_operand.vmem [shape: f32[4,1,2,256], index: 3, kind: output, shape index: {1}]
  %4 = xla_tuple %s2, %s3
  %s5 = sld [smem:[#allocation0]]
  $region49: #{generator_forward.11} parent=0
    _
  %s7 = ssub.s32 1, %s5
  %s8 = scalar_select 0, %s7, %s5
  loop: start=0, step=1, limit=6
  $region2: #{generator_forward.11} parent=0 // loop_pre_header
    _
  $region3: #{generator_forward.11} parent=0 // loop_header
    %s10 = sphi 0, %s14
    %p11 = scmp.ge.s32.totalorder %s10, 6
    %s17 = sphi 0, %s36
    %s18 = sphi 0, %s32
    %s19 = sphi 0, %s28
    %s20 = sphi 0, %s17
    %s21 = sphi 0, %s18
    %s22 = sphi 0, %s19
    %s23 = sphi 0, %s20
    %s24 = sphi 0, %s21
    %s25 = sphi 0, %s22
    %s41 = sphi 0, %s43
    %s44 = sphi 0, %s41
    %s45 = sphi 0, %s44
    %s61 = sphi 0, %s45
    %s69 = sphi 0, %s71
    %s72 = sphi 0, %s69
    %s73 = sphi 0, %s72
    %s89 = sphi 0, %s73
    %s99 = sphi 0, %s101
    %s102 = sphi 0, %s99
    %s103 = sphi 0, %s102
    %s119 = sphi 0, %s103
    %s129 = sphi 0, %s131
    %s132 = sphi 0, %s129
    %s133 = sphi 0, %s132
    %s149 = sphi 0, %s133
  $region4: #{generator_forward.11} parent=0 // loop_header_branch
    %13 = sbr.rel (%p11) target = $region8
  $region5: #{generator_forward.11} parent=0 // loop_body
    %s15 = ssub.s32 %s10, 1
    %s16 = ssub.s32 %s10, 2
    %s26 = sadd.s32 1, %s19
    %p27 = scmp.ge.s32.totalorder %s26, 1
    %s28 = scalar_select %p27, 0, %s26
    %s29 = sadd.s32 1, %s18
    %s30 = scalar_select %p27, %s29, %s18
    %p31 = scmp.ge.s32.totalorder %s30, 1
    %s32 = scalar_select %p31, 0, %s30
    %s33 = sadd.s32 1, %s17
    %s34 = scalar_select %p31, %s33, %s17
    %p35 = scmp.ge.s32.totalorder %s34, 4
    %s36 = scalar_select %p35, 0, %s34
    %s37 = ssub.s32 %s17, %s36
    %s38 = ssub.s32 %s19, %s28
    %s39 = sor.u32 %s37, %s38
    %p40 = scmp.eq.s32.totalorder %s39, 0
    %s42 = sadd.s32 %s41, 1
    %s43 = scalar_select %p40, %s41, %s42
    %p46 = pneg %p40
    %p47 = scmp.eq.s32.totalorder %s10, 3
    %p48 = por %p46, %p47
    %p49 = scmp.ne.s32.totalorder %s41, %s44
    %p50 = scmp.eq.s32.totalorder %s10, 0
    %p51 = por %p49, %p50
    %p52 = scmp.ne.s32.totalorder %s41, %s44
    %p53 = scmp.eq.s32.totalorder %s15, 3
    %p54 = por %p52, %p53
    %p55 = scmp.ne.s32.totalorder %s44, %s45
    %p56 = scmp.eq.s32.totalorder %s15, 0
    %p57 = por %p55, %p56
    %p58 = scmp.ne.s32.totalorder %s44, %s45
    %p59 = scmp.eq.s32.totalorder %s16, 3
    %p60 = por %p58, %p59
    %p62 = scmp.ne.s32.totalorder %s45, %s61
    %p63 = scmp.eq.s32.totalorder %s16, 0
    %p64 = por %p62, %p63
    %s65 = ssub.s32 %s17, %s36
    %s66 = ssub.s32 %s18, %s32
    %s67 = sor.u32 %s65, %s66
    %p68 = scmp.eq.s32.totalorder %s67, 0
    %s70 = sadd.s32 %s69, 1
    %s71 = scalar_select %p68, %s69, %s70
    %p74 = pneg %p68
    %p75 = scmp.eq.s32.totalorder %s10, 3
    %p76 = por %p74, %p75
    %p77 = scmp.ne.s32.totalorder %s69, %s72
    %p78 = scmp.eq.s32.totalorder %s10, 0
    %p79 = por %p77, %p78
    %p80 = scmp.ne.s32.totalorder %s69, %s72
    %p81 = scmp.eq.s32.totalorder %s15, 3
    %p82 = por %p80, %p81
    %p83 = scmp.ne.s32.totalorder %s72, %s73
    %p84 = scmp.eq.s32.totalorder %s15, 0
    %p85 = por %p83, %p84
    %p86 = scmp.ne.s32.totalorder %s72, %s73
    %p87 = scmp.eq.s32.totalorder %s16, 3
    %p88 = por %p86, %p87
    %p90 = scmp.ne.s32.totalorder %s73, %s89
    %p91 = scmp.eq.s32.totalorder %s16, 0
    %p92 = por %p90, %p91
    %s93 = ssub.s32 %s17, %s36
    %s94 = ssub.s32 %s19, %s28
    %s95 = sor.u32 %s93, %s94
    %s96 = ssub.s32 %s18, %s32
    %s97 = sor.u32 %s95, %s96
    %p98 = scmp.eq.s32.totalorder %s97, 0
    %s100 = sadd.s32 %s99, 1
    %s101 = scalar_select %p98, %s99, %s100
    %p104 = pneg %p98
    %p105 = scmp.eq.s32.totalorder %s10, 3
    %p106 = por %p104, %p105
    %p107 = scmp.ne.s32.totalorder %s99, %s102
    %p108 = scmp.eq.s32.totalorder %s10, 0
    %p109 = por %p107, %p108
    %p110 = scmp.ne.s32.totalorder %s99, %s102
    %p111 = scmp.eq.s32.totalorder %s15, 3
    %p112 = por %p110, %p111
    %p113 = scmp.ne.s32.totalorder %s102, %s103
    %p114 = scmp.eq.s32.totalorder %s15, 0
    %p115 = por %p113, %p114
    %p116 = scmp.ne.s32.totalorder %s102, %s103
    %p117 = scmp.eq.s32.totalorder %s16, 3
    %p118 = por %p116, %p117
    %p120 = scmp.ne.s32.totalorder %s103, %s119
    %p121 = scmp.eq.s32.totalorder %s16, 0
    %p122 = por %p120, %p121
    %s123 = ssub.s32 %s17, %s36
    %s124 = ssub.s32 %s19, %s28
    %s125 = sor.u32 %s123, %s124
    %s126 = ssub.s32 %s18, %s32
    %s127 = sor.u32 %s125, %s126
    %p128 = scmp.eq.s32.totalorder %s127, 0
    %s130 = sadd.s32 %s129, 1
    %s131 = scalar_select %p128, %s129, %s130
    %p134 = pneg %p128
    %p135 = scmp.eq.s32.totalorder %s10, 3
    %p136 = por %p134, %p135
    %p137 = scmp.ne.s32.totalorder %s129, %s132
    %p138 = scmp.eq.s32.totalorder %s10, 0
    %p139 = por %p137, %p138
    %p140 = scmp.ne.s32.totalorder %s129, %s132
    %p141 = scmp.eq.s32.totalorder %s15, 3
    %p142 = por %p140, %p141
    %p143 = scmp.ne.s32.totalorder %s132, %s133
    %p144 = scmp.eq.s32.totalorder %s15, 0
    %p145 = por %p143, %p144
    %p146 = scmp.ne.s32.totalorder %s132, %s133
    %p147 = scmp.eq.s32.totalorder %s16, 3
    %p148 = por %p146, %p147
    %p150 = scmp.ne.s32.totalorder %s133, %s149
    %p151 = scmp.eq.s32.totalorder %s16, 0
    %p152 = por %p150, %p151
    %p153 = scmp.le.s32.totalorder 1, %s10
    %p154 = scmp.lt.s32.totalorder %s10, 5
    %p155 = pnand %p153, %p154
    %p156 = pneg %p155
    // Predicated region
    $region9: #{generator_forward.11} parent=5 // pred_check
      _
    $region10: #{generator_forward.11} parent=5 // pred_check_branch
      %158 = sbr.rel (%p155) target = $region12
    $region11: #{generator_forward.11} parent=5 // pred_region
      %s159 = ssub.s32 %s10, 1
    $region12: #{generator_forward.11} parent=5 // pred_fallthru
      _
    %p160 = scmp.lt.s32.totalorder %s10, 4
    // Predicated region
    $region13: #{generator_forward.11} parent=5 // pred_check
      %p161 = pneg %p160
    $region14: #{generator_forward.11} parent=5 // pred_check_branch
      %163 = sbr.rel (%p161) target = $region16
    $region15: #{generator_forward.11} parent=5 // pred_region
      // Predicated region
      $region17: #{generator_forward.11} parent=15 // pred_check
        %p164 = pneg %p51
      $region18: #{generator_forward.11} parent=15 // pred_check_branch
        %166 = sbr.rel (%p164) target = $region20
      $region19: #{generator_forward.11} parent=15 // pred_region
        %s167 = smul.u32 4, %s19
        %p168 = scmp.lt.s32.totalorder %s17, 3
        %s169 = scalar_select %p168, %s17, 3
        %p170 = scmp.lt.s32.totalorder %s167, 3
        %s171 = scalar_select %p170, %s167, 3
        %s172 = smul.addr %s171, 16
        %s173 = smul.addr %s169, 64
        %s174 = sadd.s32 %s172, %s173
        %s175 = smul.addr %s174, 4
        %s176 = scalar_lea.vmem %s0, %s175
        %s177 = smul.u32 4, %s19
      $region20: #{generator_forward.11} parent=15 // pred_fallthru
        _
      // Predicated region
      $region21: #{generator_forward.11} parent=15 // pred_check
        %p178 = pneg %p79
      $region22: #{generator_forward.11} parent=15 // pred_check_branch
        %180 = sbr.rel (%p178) target = $region24
      $region23: #{generator_forward.11} parent=15 // pred_region
        %s181 = smul.u32 2, %s18
        %p182 = scmp.lt.s32.totalorder %s17, 3
        %s183 = scalar_select %p182, %s17, 3
        %p184 = scmp.lt.s32.totalorder %s181, 1
        %s185 = scalar_select %p184, %s181, 1
        %s186 = smul.addr %s183, 512
        %s187 = sadd.s32 %s185, %s186
        %s188 = smul.addr %s187, 4
        %s189 = scalar_lea.vmem %s1, %s188
        %s190 = smul.u32 2, %s18
      $region24: #{generator_forward.11} parent=15 // pred_fallthru
        _
    $region16: #{generator_forward.11} parent=5 // pred_fallthru
      _
    %p191 = scmp.le.s32.totalorder 1, %s10
    %p192 = scmp.lt.s32.totalorder %s10, 5
    %p193 = pnand %p191, %p192
    %p194 = pneg %p193
    // Predicated region
    $region25: #{generator_forward.11} parent=5 // pred_check
      _
    $region26: #{generator_forward.11} parent=5 // pred_check_branch
      %196 = sbr.rel (%p193) target = $region28
    $region27: #{generator_forward.11} parent=5 // pred_region
      %s197 = ssub.s32 %s10, 1
      %s198 = smul.u32 4, %s22
      %p199 = scmp.lt.s32.totalorder %s20, 3
      %s200 = scalar_select %p199, %s20, 3
      %p201 = scmp.lt.s32.totalorder %s198, 3
      %s202 = scalar_select %p201, %s198, 3
      %s203 = smul.addr %s202, 16
      %s204 = smul.addr %s200, 64
      %s205 = sadd.s32 %s203, %s204
      %s206 = smul.addr %s205, 4
      %s207 = scalar_lea.vmem %s0, %s206
      %p208 = pneg %p57
      %p209 = pneg %p54
      %s210 = smul.u32 2, %s21
      %p211 = scmp.lt.s32.totalorder %s20, 3
      %s212 = scalar_select %p211, %s20, 3
      %p213 = scmp.lt.s32.totalorder %s210, 1
      %s214 = scalar_select %p213, %s210, 1
      %s215 = smul.addr %s212, 512
      %s216 = sadd.s32 %s214, %s215
      %s217 = smul.addr %s216, 4
      %s218 = scalar_lea.vmem %s1, %s217
      %p219 = pneg %p85
      %p220 = pneg %p82
      %p221 = pneg %p115
      %p222 = pneg %p112
      %s223 = smul.u32 4, %s22
      %s224 = smul.u32 2, %s21
      %p225 = scmp.lt.s32.totalorder %s20, 3
      %s226 = scalar_select %p225, %s20, 3
      %p227 = scmp.lt.s32.totalorder %s223, 3
      %s228 = scalar_select %p227, %s223, 3
      %p229 = scmp.lt.s32.totalorder %s224, 1
      %s230 = scalar_select %p229, %s224, 1
      %s231 = smul.addr %s228, 2
      %s232 = sadd.s32 %s230, %s231
      %s233 = smul.addr %s226, 8
      %s234 = sadd.s32 %s232, %s233
      %s235 = smul.addr %s234, 4
      %s236 = scalar_lea.vmem %s2, %s235
      %p237 = pneg %p145
      %p238 = pneg %p142
      %s239 = smul.u32 2, %s21
      %p240 = scmp.lt.s32.totalorder %s20, 3
      %s241 = scalar_select %p240, %s20, 3
      %p242 = scmp.lt.s32.totalorder %s22, 0
      %s243 = scalar_select %p242, %s22, 0
      %p244 = scmp.lt.s32.totalorder %s239, 1
      %s245 = scalar_select %p244, %s239, 1
      %s246 = smul.addr %s243, 2
      %s247 = sadd.s32 %s245, %s246
      %s248 = smul.addr %s241, 2
      %s249 = sadd.s32 %s247, %s248
      %s250 = smul.addr %s249, 2
      %s251 = scalar_lea.vmem %s3, %s250
      %s252 = smul.u32 4, %s22
      %p253 = scmp.lt.s32.totalorder %s20, 3
      %s254 = scalar_select %p253, %s20, 3
      %p255 = scmp.lt.s32.totalorder %s252, 3
      %s256 = scalar_select %p255, %s252, 3
      %s257 = smul.addr %s256, 16
      %s258 = smul.addr %s254, 64
      %s259 = sadd.s32 %s257, %s258
      %s260 = smul.addr %s259, 4
      %s261 = scalar_lea.vmem %s0, %s260
      %s262 = smul.u32 4, %s22
      %s263 = smul.u32 2, %s21
      %p264 = scmp.lt.s32.totalorder %s20, 3
      %s265 = scalar_select %p264, %s20, 3
      %p266 = scmp.lt.s32.totalorder %s263, 1
      %s267 = scalar_select %p266, %s263, 1
      %s268 = smul.addr %s265, 512
      %s269 = sadd.s32 %s267, %s268
      %s270 = smul.addr %s269, 4
      %s271 = scalar_lea.vmem %s1, %s270
      %s272 = smul.u32 2, %s21
      %s273 = smul.u32 4, %s22
      %s274 = smul.u32 2, %s21
      %p275 = scmp.lt.s32.totalorder %s20, 3
      %s276 = scalar_select %p275, %s20, 3
      %p277 = scmp.lt.s32.totalorder %s273, 3
      %s278 = scalar_select %p277, %s273, 3
      %p279 = scmp.lt.s32.totalorder %s274, 1
      %s280 = scalar_select %p279, %s274, 1
      %s281 = smul.addr %s278, 2
      %s282 = sadd.s32 %s280, %s281
      %s283 = smul.addr %s276, 8
      %s284 = sadd.s32 %s282, %s283
      %s285 = smul.addr %s284, 4
      %s286 = scalar_lea.vmem %s2, %s285
      %s287 = smul.u32 4, %s22
      %s288 = smul.u32 2, %s21
      %s289 = smul.u32 2, %s21
      %p290 = scmp.lt.s32.totalorder %s20, 3
      %s291 = scalar_select %p290, %s20, 3
      %p292 = scmp.lt.s32.totalorder %s22, 0
      %s293 = scalar_select %p292, %s22, 0
      %p294 = scmp.lt.s32.totalorder %s289, 1
      %s295 = scalar_select %p294, %s289, 1
      %s296 = smul.addr %s293, 2
      %s297 = sadd.s32 %s295, %s296
      %s298 = smul.addr %s291, 2
      %s299 = sadd.s32 %s297, %s298
      %s300 = smul.addr %s299, 2
      %s301 = scalar_lea.vmem %s3, %s300
      %s302 = smul.u32 2, %s21
      %v303 = vld [vmem:[%s261] sm:$0xff]
      %v304 = vld [vmem:[%s261 + $0x8] sm:$0xff]
      %v305 = vld [vmem:[%s261 + $0x10] sm:$0xff]
      %v306 = vld [vmem:[%s261 + $0x18] sm:$0xff]
      %v307 = vld [vmem:[%s261 + $0x20] sm:$0xff]
      %v308 = vld [vmem:[%s261 + $0x28] sm:$0xff]
      %v309 = vld [vmem:[%s261 + $0x30] sm:$0xff]
      %v310 = vld [vmem:[%s261 + $0x38] sm:$0xff]
      %v311 = vld [vmem:[%s261 + $0x40] sm:$0xff]
      %v312 = vld [vmem:[%s261 + $0x48] sm:$0xff]
      %v313 = vld [vmem:[%s261 + $0x50] sm:$0xff]
      %v314 = vld [vmem:[%s261 + $0x58] sm:$0xff]
      %v315 = vld [vmem:[%s261 + $0x60] sm:$0xff]
      %v316 = vld [vmem:[%s261 + $0x68] sm:$0xff]
      %v317 = vld [vmem:[%s261 + $0x70] sm:$0xff]
      %v318 = vld [vmem:[%s261 + $0x78] sm:$0xff]
      %v319 = vld [vmem:[%s261 + $0x80] sm:$0xff]
      %v320 = vld [vmem:[%s261 + $0x88] sm:$0xff]
      %v321 = vld [vmem:[%s261 + $0x90] sm:$0xff]
      %v322 = vld [vmem:[%s261 + $0x98] sm:$0xff]
      %v323 = vld [vmem:[%s261 + $0xa0] sm:$0xff]
      %v324 = vld [vmem:[%s261 + $0xa8] sm:$0xff]
      %v325 = vld [vmem:[%s261 + $0xb0] sm:$0xff]
      %v326 = vld [vmem:[%s261 + $0xb8] sm:$0xff]
      %v327 = vld [vmem:[%s261 + $0xc0] sm:$0xff]
      %v328 = vld [vmem:[%s261 + $0xc8] sm:$0xff]
      %v329 = vld [vmem:[%s261 + $0xd0] sm:$0xff]
      %v330 = vld [vmem:[%s261 + $0xd8] sm:$0xff]
      %v331 = vld [vmem:[%s261 + $0xe0] sm:$0xff]
      %v332 = vld [vmem:[%s261 + $0xe8] sm:$0xff]
      %v333 = vld [vmem:[%s261 + $0xf0] sm:$0xff]
      %v334 = vld [vmem:[%s261 + $0xf8] sm:$0xff]
      %v335 = vld [vmem:[%s271] sm:$0xff]
      %v336 = vld [vmem:[%s271 + $0x8] sm:$0xff]
      %v337 = vld [vmem:[%s271 + $0x10] sm:$0xff]
      %v338 = vld [vmem:[%s271 + $0x18] sm:$0xff]
      %v339 = vld [vmem:[%s271 + $0x20] sm:$0xff]
      %v340 = vld [vmem:[%s271 + $0x28] sm:$0xff]
      %v341 = vld [vmem:[%s271 + $0x30] sm:$0xff]
      %v342 = vld [vmem:[%s271 + $0x38] sm:$0xff]
      %v343 = vld [vmem:[%s271 + $0x40] sm:$0xff]
      %v344 = vld [vmem:[%s271 + $0x48] sm:$0xff]
      %v345 = vld [vmem:[%s271 + $0x50] sm:$0xff]
      %v346 = vld [vmem:[%s271 + $0x58] sm:$0xff]
      %v347 = vld [vmem:[%s271 + $0x60] sm:$0xff]
      %v348 = vld [vmem:[%s271 + $0x68] sm:$0xff]
      %v349 = vld [vmem:[%s271 + $0x70] sm:$0xff]
      %v350 = vld [vmem:[%s271 + $0x78] sm:$0xff]
      %v351 = vld [vmem:[%s271 + $0x80] sm:$0xff]
      %v352 = vld [vmem:[%s271 + $0x88] sm:$0xff]
      %v353 = vld [vmem:[%s271 + $0x90] sm:$0xff]
      %v354 = vld [vmem:[%s271 + $0x98] sm:$0xff]
      %v355 = vld [vmem:[%s271 + $0xa0] sm:$0xff]
      %v356 = vld [vmem:[%s271 + $0xa8] sm:$0xff]
      %v357 = vld [vmem:[%s271 + $0xb0] sm:$0xff]
      %v358 = vld [vmem:[%s271 + $0xb8] sm:$0xff]
      %v359 = vld [vmem:[%s271 + $0xc0] sm:$0xff]
      %v360 = vld [vmem:[%s271 + $0xc8] sm:$0xff]
      %v361 = vld [vmem:[%s271 + $0xd0] sm:$0xff]
      %v362 = vld [vmem:[%s271 + $0xd8] sm:$0xff]
      %v363 = vld [vmem:[%s271 + $0xe0] sm:$0xff]
      %v364 = vld [vmem:[%s271 + $0xe8] sm:$0xff]
      %v365 = vld [vmem:[%s271 + $0xf0] sm:$0xff]
      %v366 = vld [vmem:[%s271 + $0xf8] sm:$0xff]
      %v367 = vld [vmem:[%s271 + $0x100] sm:$0xff]
      %v368 = vld [vmem:[%s271 + $0x108] sm:$0xff]
      %v369 = vld [vmem:[%s271 + $0x110] sm:$0xff]
      %v370 = vld [vmem:[%s271 + $0x118] sm:$0xff]
      %v371 = vld [vmem:[%s271 + $0x120] sm:$0xff]
      %v372 = vld [vmem:[%s271 + $0x128] sm:$0xff]
      %v373 = vld [vmem:[%s271 + $0x130] sm:$0xff]
      %v374 = vld [vmem:[%s271 + $0x138] sm:$0xff]
      %v375 = vld [vmem:[%s271 + $0x140] sm:$0xff]
      %v376 = vld [vmem:[%s271 + $0x148] sm:$0xff]
      %v377 = vld [vmem:[%s271 + $0x150] sm:$0xff]
      %v378 = vld [vmem:[%s271 + $0x158] sm:$0xff]
      %v379 = vld [vmem:[%s271 + $0x160] sm:$0xff]
      %v380 = vld [vmem:[%s271 + $0x168] sm:$0xff]
      %v381 = vld [vmem:[%s271 + $0x170] sm:$0xff]
      %v382 = vld [vmem:[%s271 + $0x178] sm:$0xff]
      %v383 = vld [vmem:[%s271 + $0x180] sm:$0xff]
      %v384 = vld [vmem:[%s271 + $0x188] sm:$0xff]
      %v385 = vld [vmem:[%s271 + $0x190] sm:$0xff]
      %v386 = vld [vmem:[%s271 + $0x198] sm:$0xff]
      %v387 = vld [vmem:[%s271 + $0x1a0] sm:$0xff]
      %v388 = vld [vmem:[%s271 + $0x1a8] sm:$0xff]
      %v389 = vld [vmem:[%s271 + $0x1b0] sm:$0xff]
      %v390 = vld [vmem:[%s271 + $0x1b8] sm:$0xff]
      %v391 = vld [vmem:[%s271 + $0x1c0] sm:$0xff]
      %v392 = vld [vmem:[%s271 + $0x1c8] sm:$0xff]
      %v393 = vld [vmem:[%s271 + $0x1d0] sm:$0xff]
      %v394 = vld [vmem:[%s271 + $0x1d8] sm:$0xff]
      %v395 = vld [vmem:[%s271 + $0x1e0] sm:$0xff]
      %v396 = vld [vmem:[%s271 + $0x1e8] sm:$0xff]
      %v397 = vld [vmem:[%s271 + $0x1f0] sm:$0xff]
      %v398 = vld [vmem:[%s271 + $0x1f8] sm:$0xff]
      %v399 = vld [vmem:[%s271 + $0x200] sm:$0xff]
      %v400 = vld [vmem:[%s271 + $0x208] sm:$0xff]
      %v401 = vld [vmem:[%s271 + $0x210] sm:$0xff]
      %v402 = vld [vmem:[%s271 + $0x218] sm:$0xff]
      %v403 = vld [vmem:[%s271 + $0x220] sm:$0xff]
      %v404 = vld [vmem:[%s271 + $0x228] sm:$0xff]
      %v405 = vld [vmem:[%s271 + $0x230] sm:$0xff]
      %v406 = vld [vmem:[%s271 + $0x238] sm:$0xff]
      %v407 = vld [vmem:[%s271 + $0x240] sm:$0xff]
      %v408 = vld [vmem:[%s271 + $0x248] sm:$0xff]
      %v409 = vld [vmem:[%s271 + $0x250] sm:$0xff]
      %v410 = vld [vmem:[%s271 + $0x258] sm:$0xff]
      %v411 = vld [vmem:[%s271 + $0x260] sm:$0xff]
      %v412 = vld [vmem:[%s271 + $0x268] sm:$0xff]
      %v413 = vld [vmem:[%s271 + $0x270] sm:$0xff]
      %v414 = vld [vmem:[%s271 + $0x278] sm:$0xff]
      %v415 = vld [vmem:[%s271 + $0x280] sm:$0xff]
      %v416 = vld [vmem:[%s271 + $0x288] sm:$0xff]
      %v417 = vld [vmem:[%s271 + $0x290] sm:$0xff]
      %v418 = vld [vmem:[%s271 + $0x298] sm:$0xff]
      %v419 = vld [vmem:[%s271 + $0x2a0] sm:$0xff]
      %v420 = vld [vmem:[%s271 + $0x2a8] sm:$0xff]
      %v421 = vld [vmem:[%s271 + $0x2b0] sm:$0xff]
      %v422 = vld [vmem:[%s271 + $0x2b8] sm:$0xff]
      %v423 = vld [vmem:[%s271 + $0x2c0] sm:$0xff]
      %v424 = vld [vmem:[%s271 + $0x2c8] sm:$0xff]
      %v425 = vld [vmem:[%s271 + $0x2d0] sm:$0xff]
      %v426 = vld [vmem:[%s271 + $0x2d8] sm:$0xff]
      %v427 = vld [vmem:[%s271 + $0x2e0] sm:$0xff]
      %v428 = vld [vmem:[%s271 + $0x2e8] sm:$0xff]
      %v429 = vld [vmem:[%s271 + $0x2f0] sm:$0xff]
      %v430 = vld [vmem:[%s271 + $0x2f8] sm:$0xff]
      %v431 = vld [vmem:[%s271 + $0x300] sm:$0xff]
      %v432 = vld [vmem:[%s271 + $0x308] sm:$0xff]
      %v433 = vld [vmem:[%s271 + $0x310] sm:$0xff]
      %v434 = vld [vmem:[%s271 + $0x318] sm:$0xff]
      %v435 = vld [vmem:[%s271 + $0x320] sm:$0xff]
      %v436 = vld [vmem:[%s271 + $0x328] sm:$0xff]
      %v437 = vld [vmem:[%s271 + $0x330] sm:$0xff]
      %v438 = vld [vmem:[%s271 + $0x338] sm:$0xff]
      %v439 = vld [vmem:[%s271 + $0x340] sm:$0xff]
      %v440 = vld [vmem:[%s271 + $0x348] sm:$0xff]
      %v441 = vld [vmem:[%s271 + $0x350] sm:$0xff]
      %v442 = vld [vmem:[%s271 + $0x358] sm:$0xff]
      %v443 = vld [vmem:[%s271 + $0x360] sm:$0xff]
      %v444 = vld [vmem:[%s271 + $0x368] sm:$0xff]
      %v445 = vld [vmem:[%s271 + $0x370] sm:$0xff]
      %v446 = vld [vmem:[%s271 + $0x378] sm:$0xff]
      %v447 = vld [vmem:[%s271 + $0x380] sm:$0xff]
      %v448 = vld [vmem:[%s271 + $0x388] sm:$0xff]
      %v449 = vld [vmem:[%s271 + $0x390] sm:$0xff]
      %v450 = vld [vmem:[%s271 + $0x398] sm:$0xff]
      %v451 = vld [vmem:[%s271 + $0x3a0] sm:$0xff]
      %v452 = vld [vmem:[%s271 + $0x3a8] sm:$0xff]
      %v453 = vld [vmem:[%s271 + $0x3b0] sm:$0xff]
      %v454 = vld [vmem:[%s271 + $0x3b8] sm:$0xff]
      %v455 = vld [vmem:[%s271 + $0x3c0] sm:$0xff]
      %v456 = vld [vmem:[%s271 + $0x3c8] sm:$0xff]
      %v457 = vld [vmem:[%s271 + $0x3d0] sm:$0xff]
      %v458 = vld [vmem:[%s271 + $0x3d8] sm:$0xff]
      %v459 = vld [vmem:[%s271 + $0x3e0] sm:$0xff]
      %v460 = vld [vmem:[%s271 + $0x3e8] sm:$0xff]
      %v461 = vld [vmem:[%s271 + $0x3f0] sm:$0xff]
      %v462 = vld [vmem:[%s271 + $0x3f8] sm:$0xff]
      %v463 = vld [vmem:[%s271 + $0x400] sm:$0xff]
      %v464 = vld [vmem:[%s271 + $0x408] sm:$0xff]
      %v465 = vld [vmem:[%s271 + $0x410] sm:$0xff]
      %v466 = vld [vmem:[%s271 + $0x418] sm:$0xff]
      %v467 = vld [vmem:[%s271 + $0x420] sm:$0xff]
      %v468 = vld [vmem:[%s271 + $0x428] sm:$0xff]
      %v469 = vld [vmem:[%s271 + $0x430] sm:$0xff]
      %v470 = vld [vmem:[%s271 + $0x438] sm:$0xff]
      %v471 = vld [vmem:[%s271 + $0x440] sm:$0xff]
      %v472 = vld [vmem:[%s271 + $0x448] sm:$0xff]
      %v473 = vld [vmem:[%s271 + $0x450] sm:$0xff]
      %v474 = vld [vmem:[%s271 + $0x458] sm:$0xff]
      %v475 = vld [vmem:[%s271 + $0x460] sm:$0xff]
      %v476 = vld [vmem:[%s271 + $0x468] sm:$0xff]
      %v477 = vld [vmem:[%s271 + $0x470] sm:$0xff]
      %v478 = vld [vmem:[%s271 + $0x478] sm:$0xff]
      %v479 = vld [vmem:[%s271 + $0x480] sm:$0xff]
      %v480 = vld [vmem:[%s271 + $0x488] sm:$0xff]
      %v481 = vld [vmem:[%s271 + $0x490] sm:$0xff]
      %v482 = vld [vmem:[%s271 + $0x498] sm:$0xff]
      %v483 = vld [vmem:[%s271 + $0x4a0] sm:$0xff]
      %v484 = vld [vmem:[%s271 + $0x4a8] sm:$0xff]
      %v485 = vld [vmem:[%s271 + $0x4b0] sm:$0xff]
      %v486 = vld [vmem:[%s271 + $0x4b8] sm:$0xff]
      %v487 = vld [vmem:[%s271 + $0x4c0] sm:$0xff]
      %v488 = vld [vmem:[%s271 + $0x4c8] sm:$0xff]
      %v489 = vld [vmem:[%s271 + $0x4d0] sm:$0xff]
      %v490 = vld [vmem:[%s271 + $0x4d8] sm:$0xff]
      %v491 = vld [vmem:[%s271 + $0x4e0] sm:$0xff]
      %v492 = vld [vmem:[%s271 + $0x4e8] sm:$0xff]
      %v493 = vld [vmem:[%s271 + $0x4f0] sm:$0xff]
      %v494 = vld [vmem:[%s271 + $0x4f8] sm:$0xff]
      %v495 = vld [vmem:[%s271 + $0x500] sm:$0xff]
      %v496 = vld [vmem:[%s271 + $0x508] sm:$0xff]
      %v497 = vld [vmem:[%s271 + $0x510] sm:$0xff]
      %v498 = vld [vmem:[%s271 + $0x518] sm:$0xff]
      %v499 = vld [vmem:[%s271 + $0x520] sm:$0xff]
      %v500 = vld [vmem:[%s271 + $0x528] sm:$0xff]
      %v501 = vld [vmem:[%s271 + $0x530] sm:$0xff]
      %v502 = vld [vmem:[%s271 + $0x538] sm:$0xff]
      %v503 = vld [vmem:[%s271 + $0x540] sm:$0xff]
      %v504 = vld [vmem:[%s271 + $0x548] sm:$0xff]
      %v505 = vld [vmem:[%s271 + $0x550] sm:$0xff]
      %v506 = vld [vmem:[%s271 + $0x558] sm:$0xff]
      %v507 = vld [vmem:[%s271 + $0x560] sm:$0xff]
      %v508 = vld [vmem:[%s271 + $0x568] sm:$0xff]
      %v509 = vld [vmem:[%s271 + $0x570] sm:$0xff]
      %v510 = vld [vmem:[%s271 + $0x578] sm:$0xff]
      %v511 = vld [vmem:[%s271 + $0x580] sm:$0xff]
      %v512 = vld [vmem:[%s271 + $0x588] sm:$0xff]
      %v513 = vld [vmem:[%s271 + $0x590] sm:$0xff]
      %v514 = vld [vmem:[%s271 + $0x598] sm:$0xff]
      %v515 = vld [vmem:[%s271 + $0x5a0] sm:$0xff]
      %v516 = vld [vmem:[%s271 + $0x5a8] sm:$0xff]
      %v517 = vld [vmem:[%s271 + $0x5b0] sm:$0xff]
      %v518 = vld [vmem:[%s271 + $0x5b8] sm:$0xff]
      %v519 = vld [vmem:[%s271 + $0x5c0] sm:$0xff]
      %v520 = vld [vmem:[%s271 + $0x5c8] sm:$0xff]
      %v521 = vld [vmem:[%s271 + $0x5d0] sm:$0xff]
      %v522 = vld [vmem:[%s271 + $0x5d8] sm:$0xff]
      %v523 = vld [vmem:[%s271 + $0x5e0] sm:$0xff]
      %v524 = vld [vmem:[%s271 + $0x5e8] sm:$0xff]
      %v525 = vld [vmem:[%s271 + $0x5f0] sm:$0xff]
      %v526 = vld [vmem:[%s271 + $0x5f8] sm:$0xff]
      %v527 = vld [vmem:[%s271 + $0x600] sm:$0xff]
      %v528 = vld [vmem:[%s271 + $0x608] sm:$0xff]
      %v529 = vld [vmem:[%s271 + $0x610] sm:$0xff]
      %v530 = vld [vmem:[%s271 + $0x618] sm:$0xff]
      %v531 = vld [vmem:[%s271 + $0x620] sm:$0xff]
      %v532 = vld [vmem:[%s271 + $0x628] sm:$0xff]
      %v533 = vld [vmem:[%s271 + $0x630] sm:$0xff]
      %v534 = vld [vmem:[%s271 + $0x638] sm:$0xff]
      %v535 = vld [vmem:[%s271 + $0x640] sm:$0xff]
      %v536 = vld [vmem:[%s271 + $0x648] sm:$0xff]
      %v537 = vld [vmem:[%s271 + $0x650] sm:$0xff]
      %v538 = vld [vmem:[%s271 + $0x658] sm:$0xff]
      %v539 = vld [vmem:[%s271 + $0x660] sm:$0xff]
      %v540 = vld [vmem:[%s271 + $0x668] sm:$0xff]
      %v541 = vld [vmem:[%s271 + $0x670] sm:$0xff]
      %v542 = vld [vmem:[%s271 + $0x678] sm:$0xff]
      %v543 = vld [vmem:[%s271 + $0x680] sm:$0xff]
      %v544 = vld [vmem:[%s271 + $0x688] sm:$0xff]
      %v545 = vld [vmem:[%s271 + $0x690] sm:$0xff]
      %v546 = vld [vmem:[%s271 + $0x698] sm:$0xff]
      %v547 = vld [vmem:[%s271 + $0x6a0] sm:$0xff]
      %v548 = vld [vmem:[%s271 + $0x6a8] sm:$0xff]
      %v549 = vld [vmem:[%s271 + $0x6b0] sm:$0xff]
      %v550 = vld [vmem:[%s271 + $0x6b8] sm:$0xff]
      %v551 = vld [vmem:[%s271 + $0x6c0] sm:$0xff]
      %v552 = vld [vmem:[%s271 + $0x6c8] sm:$0xff]
      %v553 = vld [vmem:[%s271 + $0x6d0] sm:$0xff]
      %v554 = vld [vmem:[%s271 + $0x6d8] sm:$0xff]
      %v555 = vld [vmem:[%s271 + $0x6e0] sm:$0xff]
      %v556 = vld [vmem:[%s271 + $0x6e8] sm:$0xff]
      %v557 = vld [vmem:[%s271 + $0x6f0] sm:$0xff]
      %v558 = vld [vmem:[%s271 + $0x6f8] sm:$0xff]
      %v559 = vld [vmem:[%s271 + $0x700] sm:$0xff]
      %v560 = vld [vmem:[%s271 + $0x708] sm:$0xff]
      %v561 = vld [vmem:[%s271 + $0x710] sm:$0xff]
      %v562 = vld [vmem:[%s271 + $0x718] sm:$0xff]
      %v563 = vld [vmem:[%s271 + $0x720] sm:$0xff]
      %v564 = vld [vmem:[%s271 + $0x728] sm:$0xff]
      %v565 = vld [vmem:[%s271 + $0x730] sm:$0xff]
      %v566 = vld [vmem:[%s271 + $0x738] sm:$0xff]
      %v567 = vld [vmem:[%s271 + $0x740] sm:$0xff]
      %v568 = vld [vmem:[%s271 + $0x748] sm:$0xff]
      %v569 = vld [vmem:[%s271 + $0x750] sm:$0xff]
      %v570 = vld [vmem:[%s271 + $0x758] sm:$0xff]
      %v571 = vld [vmem:[%s271 + $0x760] sm:$0xff]
      %v572 = vld [vmem:[%s271 + $0x768] sm:$0xff]
      %v573 = vld [vmem:[%s271 + $0x770] sm:$0xff]
      %v574 = vld [vmem:[%s271 + $0x778] sm:$0xff]
      %v575 = vld [vmem:[%s271 + $0x780] sm:$0xff]
      %v576 = vld [vmem:[%s271 + $0x788] sm:$0xff]
      %v577 = vld [vmem:[%s271 + $0x790] sm:$0xff]
      %v578 = vld [vmem:[%s271 + $0x798] sm:$0xff]
      %v579 = vld [vmem:[%s271 + $0x7a0] sm:$0xff]
      %v580 = vld [vmem:[%s271 + $0x7a8] sm:$0xff]
      %v581 = vld [vmem:[%s271 + $0x7b0] sm:$0xff]
      %v582 = vld [vmem:[%s271 + $0x7b8] sm:$0xff]
      %v583 = vld [vmem:[%s271 + $0x7c0] sm:$0xff]
      %v584 = vld [vmem:[%s271 + $0x7c8] sm:$0xff]
      %v585 = vld [vmem:[%s271 + $0x7d0] sm:$0xff]
      %v586 = vld [vmem:[%s271 + $0x7d8] sm:$0xff]
      %v587 = vld [vmem:[%s271 + $0x7e0] sm:$0xff]
      %v588 = vld [vmem:[%s271 + $0x7e8] sm:$0xff]
      %v589 = vld [vmem:[%s271 + $0x7f0] sm:$0xff]
      %v590 = vld [vmem:[%s271 + $0x7f8] sm:$0xff]
      %v623 = vunpack.c.l.b16 %v303
      %v624 = vunpack.c.h.b16 %v303
      %v625 = vunpack.c.l.b16 %v304
      %v626 = vunpack.c.h.b16 %v304
      %v627 = vunpack.c.l.b16 %v305
      %v628 = vunpack.c.h.b16 %v305
      %v629 = vunpack.c.l.b16 %v306
      %v630 = vunpack.c.h.b16 %v306
      %v631 = vunpack.c.l.b16 %v307
      %v632 = vunpack.c.h.b16 %v307
      %v633 = vunpack.c.l.b16 %v308
      %v634 = vunpack.c.h.b16 %v308
      %v635 = vunpack.c.l.b16 %v309
      %v636 = vunpack.c.h.b16 %v309
      %v637 = vunpack.c.l.b16 %v310
      %v638 = vunpack.c.h.b16 %v310
      %v639 = vunpack.c.l.b16 %v311
      %v640 = vunpack.c.h.b16 %v311
      %v641 = vunpack.c.l.b16 %v312
      %v642 = vunpack.c.h.b16 %v312
      %v643 = vunpack.c.l.b16 %v313
      %v644 = vunpack.c.h.b16 %v313
      %v645 = vunpack.c.l.b16 %v314
      %v646 = vunpack.c.h.b16 %v314
      %v647 = vunpack.c.l.b16 %v315
      %v648 = vunpack.c.h.b16 %v315
      %v649 = vunpack.c.l.b16 %v316
      %v650 = vunpack.c.h.b16 %v316
      %v651 = vunpack.c.l.b16 %v317
      %v652 = vunpack.c.h.b16 %v317
      %v653 = vunpack.c.l.b16 %v318
      %v654 = vunpack.c.h.b16 %v318
      %v655 = vunpack.c.l.b16 %v319
      %v656 = vunpack.c.h.b16 %v319
      %v657 = vunpack.c.l.b16 %v320
      %v658 = vunpack.c.h.b16 %v320
      %v659 = vunpack.c.l.b16 %v321
      %v660 = vunpack.c.h.b16 %v321
      %v661 = vunpack.c.l.b16 %v322
      %v662 = vunpack.c.h.b16 %v322
      %v663 = vunpack.c.l.b16 %v323
      %v664 = vunpack.c.h.b16 %v323
      %v665 = vunpack.c.l.b16 %v324
      %v666 = vunpack.c.h.b16 %v324
      %v667 = vunpack.c.l.b16 %v325
      %v668 = vunpack.c.h.b16 %v325
      %v669 = vunpack.c.l.b16 %v326
      %v670 = vunpack.c.h.b16 %v326
      %v671 = vunpack.c.l.b16 %v327
      %v672 = vunpack.c.h.b16 %v327
      %v673 = vunpack.c.l.b16 %v328
      %v674 = vunpack.c.h.b16 %v328
      %v675 = vunpack.c.l.b16 %v329
      %v676 = vunpack.c.h.b16 %v329
      %v677 = vunpack.c.l.b16 %v330
      %v678 = vunpack.c.h.b16 %v330
      %v679 = vunpack.c.l.b16 %v331
      %v680 = vunpack.c.h.b16 %v331
      %v681 = vunpack.c.l.b16 %v332
      %v682 = vunpack.c.h.b16 %v332
      %v683 = vunpack.c.l.b16 %v333
      %v684 = vunpack.c.h.b16 %v333
      %v685 = vunpack.c.l.b16 %v334
      %v686 = vunpack.c.h.b16 %v334
      %v687 = vpack.c.b16 %v639, %v623
      %v688 = vpack.c.b16 %v640, %v624
      %v689 = vpack.c.b16 %v641, %v625
      %v690 = vpack.c.b16 %v642, %v626
      %v691 = vpack.c.b16 %v643, %v627
      %v692 = vpack.c.b16 %v644, %v628
      %v693 = vpack.c.b16 %v645, %v629
      %v694 = vpack.c.b16 %v646, %v630
      %v695 = vpack.c.b16 %v647, %v631
      %v696 = vpack.c.b16 %v648, %v632
      %v697 = vpack.c.b16 %v649, %v633
      %v698 = vpack.c.b16 %v650, %v634
      %v699 = vpack.c.b16 %v651, %v635
      %v700 = vpack.c.b16 %v652, %v636
      %v701 = vpack.c.b16 %v653, %v637
      %v702 = vpack.c.b16 %v654, %v638
      %v703 = vpack.c.b16 %v671, %v655
      %v704 = vpack.c.b16 %v672, %v656
      %v705 = vpack.c.b16 %v673, %v657
      %v706 = vpack.c.b16 %v674, %v658
      %v707 = vpack.c.b16 %v675, %v659
      %v708 = vpack.c.b16 %v676, %v660
      %v709 = vpack.c.b16 %v677, %v661
      %v710 = vpack.c.b16 %v678, %v662
      %v711 = vpack.c.b16 %v679, %v663
      %v712 = vpack.c.b16 %v680, %v664
      %v713 = vpack.c.b16 %v681, %v665
      %v714 = vpack.c.b16 %v682, %v666
      %v715 = vpack.c.b16 %v683, %v667
      %v716 = vpack.c.b16 %v684, %v668
      %v717 = vpack.c.b16 %v685, %v669
      %v718 = vpack.c.b16 %v686, %v670
      %v1007 = vunpack.c.l.b16 %v335
      %v1008 = vunpack.c.h.b16 %v335
      %v1009 = vunpack.c.l.b16 %v336
      %v1010 = vunpack.c.h.b16 %v336
      %v1011 = vunpack.c.l.b16 %v337
      %v1012 = vunpack.c.h.b16 %v337
      %v1013 = vunpack.c.l.b16 %v338
      %v1014 = vunpack.c.h.b16 %v338
      %v1015 = vunpack.c.l.b16 %v339
      %v1016 = vunpack.c.h.b16 %v339
      %v1017 = vunpack.c.l.b16 %v340
      %v1018 = vunpack.c.h.b16 %v340
      %v1019 = vunpack.c.l.b16 %v341
      %v1020 = vunpack.c.h.b16 %v341
      %v1021 = vunpack.c.l.b16 %v342
      %v1022 = vunpack.c.h.b16 %v342
      %v1023 = vunpack.c.l.b16 %v343
      %v1024 = vunpack.c.h.b16 %v343
      %v1025 = vunpack.c.l.b16 %v344
      %v1026 = vunpack.c.h.b16 %v344
      %v1027 = vunpack.c.l.b16 %v345
      %v1028 = vunpack.c.h.b16 %v345
      %v1029 = vunpack.c.l.b16 %v346
      %v1030 = vunpack.c.h.b16 %v346
      %v1031 = vunpack.c.l.b16 %v347
      %v1032 = vunpack.c.h.b16 %v347
      %v1033 = vunpack.c.l.b16 %v348
      %v1034 = vunpack.c.h.b16 %v348
      %v1035 = vunpack.c.l.b16 %v349
      %v1036 = vunpack.c.h.b16 %v349
      %v1037 = vunpack.c.l.b16 %v350
      %v1038 = vunpack.c.h.b16 %v350
      %v1039 = vunpack.c.l.b16 %v351
      %v1040 = vunpack.c.h.b16 %v351
      %v1041 = vunpack.c.l.b16 %v352
      %v1042 = vunpack.c.h.b16 %v352
      %v1043 = vunpack.c.l.b16 %v353
      %v1044 = vunpack.c.h.b16 %v353
      %v1045 = vunpack.c.l.b16 %v354
      %v1046 = vunpack.c.h.b16 %v354
      %v1047 = vunpack.c.l.b16 %v355
      %v1048 = vunpack.c.h.b16 %v355
      %v1049 = vunpack.c.l.b16 %v356
      %v1050 = vunpack.c.h.b16 %v356
      %v1051 = vunpack.c.l.b16 %v357
      %v1052 = vunpack.c.h.b16 %v357
      %v1053 = vunpack.c.l.b16 %v358
      %v1054 = vunpack.c.h.b16 %v358
      %v1055 = vunpack.c.l.b16 %v359
      %v1056 = vunpack.c.h.b16 %v359
      %v1057 = vunpack.c.l.b16 %v360
      %v1058 = vunpack.c.h.b16 %v360
      %v1059 = vunpack.c.l.b16 %v361
      %v1060 = vunpack.c.h.b16 %v361
      %v1061 = vunpack.c.l.b16 %v362
      %v1062 = vunpack.c.h.b16 %v362
      %v1063 = vunpack.c.l.b16 %v363
      %v1064 = vunpack.c.h.b16 %v363
      %v1065 = vunpack.c.l.b16 %v364
      %v1066 = vunpack.c.h.b16 %v364
      %v1067 = vunpack.c.l.b16 %v365
      %v1068 = vunpack.c.h.b16 %v365
      %v1069 = vunpack.c.l.b16 %v366
      %v1070 = vunpack.c.h.b16 %v366
      %v1071 = vunpack.c.l.b16 %v367
      %v1072 = vunpack.c.h.b16 %v367
      %v1073 = vunpack.c.l.b16 %v368
      %v1074 = vunpack.c.h.b16 %v368
      %v1075 = vunpack.c.l.b16 %v369
      %v1076 = vunpack.c.h.b16 %v369
      %v1077 = vunpack.c.l.b16 %v370
      %v1078 = vunpack.c.h.b16 %v370
      %v1079 = vunpack.c.l.b16 %v371
      %v1080 = vunpack.c.h.b16 %v371
      %v1081 = vunpack.c.l.b16 %v372
      %v1082 = vunpack.c.h.b16 %v372
      %v1083 = vunpack.c.l.b16 %v373
      %v1084 = vunpack.c.h.b16 %v373
      %v1085 = vunpack.c.l.b16 %v374
      %v1086 = vunpack.c.h.b16 %v374
      %v1087 = vunpack.c.l.b16 %v375
      %v1088 = vunpack.c.h.b16 %v375
      %v1089 = vunpack.c.l.b16 %v376
      %v1090 = vunpack.c.h.b16 %v376
      %v1091 = vunpack.c.l.b16 %v377
      %v1092 = vunpack.c.h.b16 %v377
      %v1093 = vunpack.c.l.b16 %v378
      %v1094 = vunpack.c.h.b16 %v378
      %v1095 = vunpack.c.l.b16 %v379
      %v1096 = vunpack.c.h.b16 %v379
      %v1097 = vunpack.c.l.b16 %v380
      %v1098 = vunpack.c.h.b16 %v380
      %v1099 = vunpack.c.l.b16 %v381
      %v1100 = vunpack.c.h.b16 %v381
      %v1101 = vunpack.c.l.b16 %v382
      %v1102 = vunpack.c.h.b16 %v382
      %v1103 = vunpack.c.l.b16 %v383
      %v1104 = vunpack.c.h.b16 %v383
      %v1105 = vunpack.c.l.b16 %v384
      %v1106 = vunpack.c.h.b16 %v384
      %v1107 = vunpack.c.l.b16 %v385
      %v1108 = vunpack.c.h.b16 %v385
      %v1109 = vunpack.c.l.b16 %v386
      %v1110 = vunpack.c.h.b16 %v386
      %v1111 = vunpack.c.l.b16 %v387
      %v1112 = vunpack.c.h.b16 %v387
      %v1113 = vunpack.c.l.b16 %v388
      %v1114 = vunpack.c.h.b16 %v388
      %v1115 = vunpack.c.l.b16 %v389
      %v1116 = vunpack.c.h.b16 %v389
      %v1117 = vunpack.c.l.b16 %v390
      %v1118 = vunpack.c.h.b16 %v390
      %v1119 = vunpack.c.l.b16 %v391
      %v1120 = vunpack.c.h.b16 %v391
      %v1121 = vunpack.c.l.b16 %v392
      %v1122 = vunpack.c.h.b16 %v392
      %v1123 = vunpack.c.l.b16 %v393
      %v1124 = vunpack.c.h.b16 %v393
      %v1125 = vunpack.c.l.b16 %v394
      %v1126 = vunpack.c.h.b16 %v394
      %v1127 = vunpack.c.l.b16 %v395
      %v1128 = vunpack.c.h.b16 %v395
      %v1129 = vunpack.c.l.b16 %v396
      %v1130 = vunpack.c.h.b16 %v396
      %v1131 = vunpack.c.l.b16 %v397
      %v1132 = vunpack.c.h.b16 %v397
      %v1133 = vunpack.c.l.b16 %v398
      %v1134 = vunpack.c.h.b16 %v398
      %v1135 = vunpack.c.l.b16 %v399
      %v1136 = vunpack.c.h.b16 %v399
      %v1137 = vunpack.c.l.b16 %v400
      %v1138 = vunpack.c.h.b16 %v400
      %v1139 = vunpack.c.l.b16 %v401
      %v1140 = vunpack.c.h.b16 %v401
      %v1141 = vunpack.c.l.b16 %v402
      %v1142 = vunpack.c.h.b16 %v402
      %v1143 = vunpack.c.l.b16 %v403
      %v1144 = vunpack.c.h.b16 %v403
      %v1145 = vunpack.c.l.b16 %v404
      %v1146 = vunpack.c.h.b16 %v404
      %v1147 = vunpack.c.l.b16 %v405
      %v1148 = vunpack.c.h.b16 %v405
      %v1149 = vunpack.c.l.b16 %v406
      %v1150 = vunpack.c.h.b16 %v406
      %v1151 = vunpack.c.l.b16 %v407
      %v1152 = vunpack.c.h.b16 %v407
      %v1153 = vunpack.c.l.b16 %v408
      %v1154 = vunpack.c.h.b16 %v408
      %v1155 = vunpack.c.l.b16 %v409
      %v1156 = vunpack.c.h.b16 %v409
      %v1157 = vunpack.c.l.b16 %v410
      %v1158 = vunpack.c.h.b16 %v410
      %v1159 = vunpack.c.l.b16 %v411
      %v1160 = vunpack.c.h.b16 %v411
      %v1161 = vunpack.c.l.b16 %v412
      %v1162 = vunpack.c.h.b16 %v412
      %v1163 = vunpack.c.l.b16 %v413
      %v1164 = vunpack.c.h.b16 %v413
      %v1165 = vunpack.c.l.b16 %v414
      %v1166 = vunpack.c.h.b16 %v414
      %v1167 = vunpack.c.l.b16 %v415
      %v1168 = vunpack.c.h.b16 %v415
      %v1169 = vunpack.c.l.b16 %v416
      %v1170 = vunpack.c.h.b16 %v416
      %v1171 = vunpack.c.l.b16 %v417
      %v1172 = vunpack.c.h.b16 %v417
      %v1173 = vunpack.c.l.b16 %v418
      %v1174 = vunpack.c.h.b16 %v418
      %v1175 = vunpack.c.l.b16 %v419
      %v1176 = vunpack.c.h.b16 %v419
      %v1177 = vunpack.c.l.b16 %v420
      %v1178 = vunpack.c.h.b16 %v420
      %v1179 = vunpack.c.l.b16 %v421
      %v1180 = vunpack.c.h.b16 %v421
      %v1181 = vunpack.c.l.b16 %v422
      %v1182 = vunpack.c.h.b16 %v422
      %v1183 = vunpack.c.l.b16 %v423
      %v1184 = vunpack.c.h.b16 %v423
      %v1185 = vunpack.c.l.b16 %v424
      %v1186 = vunpack.c.h.b16 %v424
      %v1187 = vunpack.c.l.b16 %v425
      %v1188 = vunpack.c.h.b16 %v425
      %v1189 = vunpack.c.l.b16 %v426
      %v1190 = vunpack.c.h.b16 %v426
      %v1191 = vunpack.c.l.b16 %v427
      %v1192 = vunpack.c.h.b16 %v427
      %v1193 = vunpack.c.l.b16 %v428
      %v1194 = vunpack.c.h.b16 %v428
      %v1195 = vunpack.c.l.b16 %v429
      %v1196 = vunpack.c.h.b16 %v429
      %v1197 = vunpack.c.l.b16 %v430
      %v1198 = vunpack.c.h.b16 %v430
      %v1199 = vunpack.c.l.b16 %v431
      %v1200 = vunpack.c.h.b16 %v431
      %v1201 = vunpack.c.l.b16 %v432
      %v1202 = vunpack.c.h.b16 %v432
      %v1203 = vunpack.c.l.b16 %v433
      %v1204 = vunpack.c.h.b16 %v433
      %v1205 = vunpack.c.l.b16 %v434
      %v1206 = vunpack.c.h.b16 %v434
      %v1207 = vunpack.c.l.b16 %v435
      %v1208 = vunpack.c.h.b16 %v435
      %v1209 = vunpack.c.l.b16 %v436
      %v1210 = vunpack.c.h.b16 %v436
      %v1211 = vunpack.c.l.b16 %v437
      %v1212 = vunpack.c.h.b16 %v437
      %v1213 = vunpack.c.l.b16 %v438
      %v1214 = vunpack.c.h.b16 %v438
      %v1215 = vunpack.c.l.b16 %v439
      %v1216 = vunpack.c.h.b16 %v439
      %v1217 = vunpack.c.l.b16 %v440
      %v1218 = vunpack.c.h.b16 %v440
      %v1219 = vunpack.c.l.b16 %v441
      %v1220 = vunpack.c.h.b16 %v441
      %v1221 = vunpack.c.l.b16 %v442
      %v1222 = vunpack.c.h.b16 %v442
      %v1223 = vunpack.c.l.b16 %v443
      %v1224 = vunpack.c.h.b16 %v443
      %v1225 = vunpack.c.l.b16 %v444
      %v1226 = vunpack.c.h.b16 %v444
      %v1227 = vunpack.c.l.b16 %v445
      %v1228 = vunpack.c.h.b16 %v445
      %v1229 = vunpack.c.l.b16 %v446
      %v1230 = vunpack.c.h.b16 %v446
      %v1231 = vunpack.c.l.b16 %v447
      %v1232 = vunpack.c.h.b16 %v447
      %v1233 = vunpack.c.l.b16 %v448
      %v1234 = vunpack.c.h.b16 %v448
      %v1235 = vunpack.c.l.b16 %v449
      %v1236 = vunpack.c.h.b16 %v449
      %v1237 = vunpack.c.l.b16 %v450
      %v1238 = vunpack.c.h.b16 %v450
      %v1239 = vunpack.c.l.b16 %v451
      %v1240 = vunpack.c.h.b16 %v451
      %v1241 = vunpack.c.l.b16 %v452
      %v1242 = vunpack.c.h.b16 %v452
      %v1243 = vunpack.c.l.b16 %v453
      %v1244 = vunpack.c.h.b16 %v453
      %v1245 = vunpack.c.l.b16 %v454
      %v1246 = vunpack.c.h.b16 %v454
      %v1247 = vunpack.c.l.b16 %v455
      %v1248 = vunpack.c.h.b16 %v455
      %v1249 = vunpack.c.l.b16 %v456
      %v1250 = vunpack.c.h.b16 %v456
      %v1251 = vunpack.c.l.b16 %v457
      %v1252 = vunpack.c.h.b16 %v457
      %v1253 = vunpack.c.l.b16 %v458
      %v1254 = vunpack.c.h.b16 %v458
      %v1255 = vunpack.c.l.b16 %v459
      %v1256 = vunpack.c.h.b16 %v459
      %v1257 = vunpack.c.l.b16 %v460
      %v1258 = vunpack.c.h.b16 %v460
      %v1259 = vunpack.c.l.b16 %v461
      %v1260 = vunpack.c.h.b16 %v461
      %v1261 = vunpack.c.l.b16 %v462
      %v1262 = vunpack.c.h.b16 %v462
      %v1263 = vunpack.c.l.b16 %v463
      %v1264 = vunpack.c.h.b16 %v463
      %v1265 = vunpack.c.l.b16 %v464
      %v1266 = vunpack.c.h.b16 %v464
      %v1267 = vunpack.c.l.b16 %v465
      %v1268 = vunpack.c.h.b16 %v465
      %v1269 = vunpack.c.l.b16 %v466
      %v1270 = vunpack.c.h.b16 %v466
      %v1271 = vunpack.c.l.b16 %v467
      %v1272 = vunpack.c.h.b16 %v467
      %v1273 = vunpack.c.l.b16 %v468
      %v1274 = vunpack.c.h.b16 %v468
      %v1275 = vunpack.c.l.b16 %v469
      %v1276 = vunpack.c.h.b16 %v469
      %v1277 = vunpack.c.l.b16 %v470
      %v1278 = vunpack.c.h.b16 %v470
      %v1279 = vunpack.c.l.b16 %v471
      %v1280 = vunpack.c.h.b16 %v471
      %v1281 = vunpack.c.l.b16 %v472
      %v1282 = vunpack.c.h.b16 %v472
      %v1283 = vunpack.c.l.b16 %v473
      %v1284 = vunpack.c.h.b16 %v473
      %v1285 = vunpack.c.l.b16 %v474
      %v1286 = vunpack.c.h.b16 %v474
      %v1287 = vunpack.c.l.b16 %v475
      %v1288 = vunpack.c.h.b16 %v475
      %v1289 = vunpack.c.l.b16 %v476
      %v1290 = vunpack.c.h.b16 %v476
      %v1291 = vunpack.c.l.b16 %v477
      %v1292 = vunpack.c.h.b16 %v477
      %v1293 = vunpack.c.l.b16 %v478
      %v1294 = vunpack.c.h.b16 %v478
      %v1295 = vunpack.c.l.b16 %v479
      %v1296 = vunpack.c.h.b16 %v479
      %v1297 = vunpack.c.l.b16 %v480
      %v1298 = vunpack.c.h.b16 %v480
      %v1299 = vunpack.c.l.b16 %v481
      %v1300 = vunpack.c.h.b16 %v481
      %v1301 = vunpack.c.l.b16 %v482
      %v1302 = vunpack.c.h.b16 %v482
      %v1303 = vunpack.c.l.b16 %v483
      %v1304 = vunpack.c.h.b16 %v483
      %v1305 = vunpack.c.l.b16 %v484
      %v1306 = vunpack.c.h.b16 %v484
      %v1307 = vunpack.c.l.b16 %v485
      %v1308 = vunpack.c.h.b16 %v485
      %v1309 = vunpack.c.l.b16 %v486
      %v1310 = vunpack.c.h.b16 %v486
      %v1311 = vunpack.c.l.b16 %v487
      %v1312 = vunpack.c.h.b16 %v487
      %v1313 = vunpack.c.l.b16 %v488
      %v1314 = vunpack.c.h.b16 %v488
      %v1315 = vunpack.c.l.b16 %v489
      %v1316 = vunpack.c.h.b16 %v489
      %v1317 = vunpack.c.l.b16 %v490
      %v1318 = vunpack.c.h.b16 %v490
      %v1319 = vunpack.c.l.b16 %v491
      %v1320 = vunpack.c.h.b16 %v491
      %v1321 = vunpack.c.l.b16 %v492
      %v1322 = vunpack.c.h.b16 %v492
      %v1323 = vunpack.c.l.b16 %v493
      %v1324 = vunpack.c.h.b16 %v493
      %v1325 = vunpack.c.l.b16 %v494
      %v1326 = vunpack.c.h.b16 %v494
      %v1327 = vunpack.c.l.b16 %v495
      %v1328 = vunpack.c.h.b16 %v495
      %v1329 = vunpack.c.l.b16 %v496
      %v1330 = vunpack.c.h.b16 %v496
      %v1331 = vunpack.c.l.b16 %v497
      %v1332 = vunpack.c.h.b16 %v497
      %v1333 = vunpack.c.l.b16 %v498
      %v1334 = vunpack.c.h.b16 %v498
      %v1335 = vunpack.c.l.b16 %v499
      %v1336 = vunpack.c.h.b16 %v499
      %v1337 = vunpack.c.l.b16 %v500
      %v1338 = vunpack.c.h.b16 %v500
      %v1339 = vunpack.c.l.b16 %v501
      %v1340 = vunpack.c.h.b16 %v501
      %v1341 = vunpack.c.l.b16 %v502
      %v1342 = vunpack.c.h.b16 %v502
      %v1343 = vunpack.c.l.b16 %v503
      %v1344 = vunpack.c.h.b16 %v503
      %v1345 = vunpack.c.l.b16 %v504
      %v1346 = vunpack.c.h.b16 %v504
      %v1347 = vunpack.c.l.b16 %v505
      %v1348 = vunpack.c.h.b16 %v505
      %v1349 = vunpack.c.l.b16 %v506
      %v1350 = vunpack.c.h.b16 %v506
      %v1351 = vunpack.c.l.b16 %v507
      %v1352 = vunpack.c.h.b16 %v507
      %v1353 = vunpack.c.l.b16 %v508
      %v1354 = vunpack.c.h.b16 %v508
      %v1355 = vunpack.c.l.b16 %v509
      %v1356 = vunpack.c.h.b16 %v509
      %v1357 = vunpack.c.l.b16 %v510
      %v1358 = vunpack.c.h.b16 %v510
      %v1359 = vunpack.c.l.b16 %v511
      %v1360 = vunpack.c.h.b16 %v511
      %v1361 = vunpack.c.l.b16 %v512
      %v1362 = vunpack.c.h.b16 %v512
      %v1363 = vunpack.c.l.b16 %v513
      %v1364 = vunpack.c.h.b16 %v513
      %v1365 = vunpack.c.l.b16 %v514
      %v1366 = vunpack.c.h.b16 %v514
      %v1367 = vunpack.c.l.b16 %v515
      %v1368 = vunpack.c.h.b16 %v515
      %v1369 = vunpack.c.l.b16 %v516
      %v1370 = vunpack.c.h.b16 %v516
      %v1371 = vunpack.c.l.b16 %v517
      %v1372 = vunpack.c.h.b16 %v517
      %v1373 = vunpack.c.l.b16 %v518
      %v1374 = vunpack.c.h.b16 %v518
      %v1375 = vunpack.c.l.b16 %v519
      %v1376 = vunpack.c.h.b16 %v519
      %v1377 = vunpack.c.l.b16 %v520
      %v1378 = vunpack.c.h.b16 %v520
      %v1379 = vunpack.c.l.b16 %v521
      %v1380 = vunpack.c.h.b16 %v521
      %v1381 = vunpack.c.l.b16 %v522
      %v1382 = vunpack.c.h.b16 %v522
      %v1383 = vunpack.c.l.b16 %v523
      %v1384 = vunpack.c.h.b16 %v523
      %v1385 = vunpack.c.l.b16 %v524
      %v1386 = vunpack.c.h.b16 %v524
      %v1387 = vunpack.c.l.b16 %v525
      %v1388 = vunpack.c.h.b16 %v525
      %v1389 = vunpack.c.l.b16 %v526
      %v1390 = vunpack.c.h.b16 %v526
      %v1391 = vunpack.c.l.b16 %v527
      %v1392 = vunpack.c.h.b16 %v527
      %v1393 = vunpack.c.l.b16 %v528
      %v1394 = vunpack.c.h.b16 %v528
      %v1395 = vunpack.c.l.b16 %v529
      %v1396 = vunpack.c.h.b16 %v529
      %v1397 = vunpack.c.l.b16 %v530
      %v1398 = vunpack.c.h.b16 %v530
      %v1399 = vunpack.c.l.b16 %v531
      %v1400 = vunpack.c.h.b16 %v531
      %v1401 = vunpack.c.l.b16 %v532
      %v1402 = vunpack.c.h.b16 %v532
      %v1403 = vunpack.c.l.b16 %v533
      %v1404 = vunpack.c.h.b16 %v533
      %v1405 = vunpack.c.l.b16 %v534
      %v1406 = vunpack.c.h.b16 %v534
      %v1407 = vunpack.c.l.b16 %v535
      %v1408 = vunpack.c.h.b16 %v535
      %v1409 = vunpack.c.l.b16 %v536
      %v1410 = vunpack.c.h.b16 %v536
      %v1411 = vunpack.c.l.b16 %v537
      %v1412 = vunpack.c.h.b16 %v537
      %v1413 = vunpack.c.l.b16 %v538
      %v1414 = vunpack.c.h.b16 %v538
      %v1415 = vunpack.c.l.b16 %v539
      %v1416 = vunpack.c.h.b16 %v539
      %v1417 = vunpack.c.l.b16 %v540
      %v1418 = vunpack.c.h.b16 %v540
      %v1419 = vunpack.c.l.b16 %v541
      %v1420 = vunpack.c.h.b16 %v541
      %v1421 = vunpack.c.l.b16 %v542
      %v1422 = vunpack.c.h.b16 %v542
      %v1423 = vunpack.c.l.b16 %v543
      %v1424 = vunpack.c.h.b16 %v543
      %v1425 = vunpack.c.l.b16 %v544
      %v1426 = vunpack.c.h.b16 %v544
      %v1427 = vunpack.c.l.b16 %v545
      %v1428 = vunpack.c.h.b16 %v545
      %v1429 = vunpack.c.l.b16 %v546
      %v1430 = vunpack.c.h.b16 %v546
      %v1431 = vunpack.c.l.b16 %v547
      %v1432 = vunpack.c.h.b16 %v547
      %v1433 = vunpack.c.l.b16 %v548
      %v1434 = vunpack.c.h.b16 %v548
      %v1435 = vunpack.c.l.b16 %v549
      %v1436 = vunpack.c.h.b16 %v549
      %v1437 = vunpack.c.l.b16 %v550
      %v1438 = vunpack.c.h.b16 %v550
      %v1439 = vunpack.c.l.b16 %v551
      %v1440 = vunpack.c.h.b16 %v551
      %v1441 = vunpack.c.l.b16 %v552
      %v1442 = vunpack.c.h.b16 %v552
      %v1443 = vunpack.c.l.b16 %v553
      %v1444 = vunpack.c.h.b16 %v553
      %v1445 = vunpack.c.l.b16 %v554
      %v1446 = vunpack.c.h.b16 %v554
      %v1447 = vunpack.c.l.b16 %v555
      %v1448 = vunpack.c.h.b16 %v555
      %v1449 = vunpack.c.l.b16 %v556
      %v1450 = vunpack.c.h.b16 %v556
      %v1451 = vunpack.c.l.b16 %v557
      %v1452 = vunpack.c.h.b16 %v557
      %v1453 = vunpack.c.l.b16 %v558
      %v1454 = vunpack.c.h.b16 %v558
      %v1455 = vunpack.c.l.b16 %v559
      %v1456 = vunpack.c.h.b16 %v559
      %v1457 = vunpack.c.l.b16 %v560
      %v1458 = vunpack.c.h.b16 %v560
      %v1459 = vunpack.c.l.b16 %v561
      %v1460 = vunpack.c.h.b16 %v561
      %v1461 = vunpack.c.l.b16 %v562
      %v1462 = vunpack.c.h.b16 %v562
      %v1463 = vunpack.c.l.b16 %v563
      %v1464 = vunpack.c.h.b16 %v563
      %v1465 = vunpack.c.l.b16 %v564
      %v1466 = vunpack.c.h.b16 %v564
      %v1467 = vunpack.c.l.b16 %v565
      %v1468 = vunpack.c.h.b16 %v565
      %v1469 = vunpack.c.l.b16 %v566
      %v1470 = vunpack.c.h.b16 %v566
      %v1471 = vunpack.c.l.b16 %v567
      %v1472 = vunpack.c.h.b16 %v567
      %v1473 = vunpack.c.l.b16 %v568
      %v1474 = vunpack.c.h.b16 %v568
      %v1475 = vunpack.c.l.b16 %v569
      %v1476 = vunpack.c.h.b16 %v569
      %v1477 = vunpack.c.l.b16 %v570
      %v1478 = vunpack.c.h.b16 %v570
      %v1479 = vunpack.c.l.b16 %v571
      %v1480 = vunpack.c.h.b16 %v571
      %v1481 = vunpack.c.l.b16 %v572
      %v1482 = vunpack.c.h.b16 %v572
      %v1483 = vunpack.c.l.b16 %v573
      %v1484 = vunpack.c.h.b16 %v573
      %v1485 = vunpack.c.l.b16 %v574
      %v1486 = vunpack.c.h.b16 %v574
      %v1487 = vunpack.c.l.b16 %v575
      %v1488 = vunpack.c.h.b16 %v575
      %v1489 = vunpack.c.l.b16 %v576
      %v1490 = vunpack.c.h.b16 %v576
      %v1491 = vunpack.c.l.b16 %v577
      %v1492 = vunpack.c.h.b16 %v577
      %v1493 = vunpack.c.l.b16 %v578
      %v1494 = vunpack.c.h.b16 %v578
      %v1495 = vunpack.c.l.b16 %v579
      %v1496 = vunpack.c.h.b16 %v579
      %v1497 = vunpack.c.l.b16 %v580
      %v1498 = vunpack.c.h.b16 %v580
      %v1499 = vunpack.c.l.b16 %v581
      %v1500 = vunpack.c.h.b16 %v581
      %v1501 = vunpack.c.l.b16 %v582
      %v1502 = vunpack.c.h.b16 %v582
      %v1503 = vunpack.c.l.b16 %v583
      %v1504 = vunpack.c.h.b16 %v583
      %v1505 = vunpack.c.l.b16 %v584
      %v1506 = vunpack.c.h.b16 %v584
      %v1507 = vunpack.c.l.b16 %v585
      %v1508 = vunpack.c.h.b16 %v585
      %v1509 = vunpack.c.l.b16 %v586
      %v1510 = vunpack.c.h.b16 %v586
      %v1511 = vunpack.c.l.b16 %v587
      %v1512 = vunpack.c.h.b16 %v587
      %v1513 = vunpack.c.l.b16 %v588
      %v1514 = vunpack.c.h.b16 %v588
      %v1515 = vunpack.c.l.b16 %v589
      %v1516 = vunpack.c.h.b16 %v589
      %v1517 = vunpack.c.l.b16 %v590
      %v1518 = vunpack.c.h.b16 %v590
      %v1519 = vpack.c.b16 %v1009, %v1007
      %v1520 = vpack.c.b16 %v1010, %v1008
      %v1521 = vpack.c.b16 %v1013, %v1011
      %v1522 = vpack.c.b16 %v1014, %v1012
      %v1523 = vpack.c.b16 %v1017, %v1015
      %v1524 = vpack.c.b16 %v1018, %v1016
      %v1525 = vpack.c.b16 %v1021, %v1019
      %v1526 = vpack.c.b16 %v1022, %v1020
      %v1527 = vpack.c.b16 %v1025, %v1023
      %v1528 = vpack.c.b16 %v1026, %v1024
      %v1529 = vpack.c.b16 %v1029, %v1027
      %v1530 = vpack.c.b16 %v1030, %v1028
      %v1531 = vpack.c.b16 %v1033, %v1031
      %v1532 = vpack.c.b16 %v1034, %v1032
      %v1533 = vpack.c.b16 %v1037, %v1035
      %v1534 = vpack.c.b16 %v1038, %v1036
      %v1535 = vpack.c.b16 %v1041, %v1039
      %v1536 = vpack.c.b16 %v1042, %v1040
      %v1537 = vpack.c.b16 %v1045, %v1043
      %v1538 = vpack.c.b16 %v1046, %v1044
      %v1539 = vpack.c.b16 %v1049, %v1047
      %v1540 = vpack.c.b16 %v1050, %v1048
      %v1541 = vpack.c.b16 %v1053, %v1051
      %v1542 = vpack.c.b16 %v1054, %v1052
      %v1543 = vpack.c.b16 %v1057, %v1055
      %v1544 = vpack.c.b16 %v1058, %v1056
      %v1545 = vpack.c.b16 %v1061, %v1059
      %v1546 = vpack.c.b16 %v1062, %v1060
      %v1547 = vpack.c.b16 %v1065, %v1063
      %v1548 = vpack.c.b16 %v1066, %v1064
      %v1549 = vpack.c.b16 %v1069, %v1067
      %v1550 = vpack.c.b16 %v1070, %v1068
      %v1551 = vpack.c.b16 %v1073, %v1071
      %v1552 = vpack.c.b16 %v1074, %v1072
      %v1553 = vpack.c.b16 %v1077, %v1075
      %v1554 = vpack.c.b16 %v1078, %v1076
      %v1555 = vpack.c.b16 %v1081, %v1079
      %v1556 = vpack.c.b16 %v1082, %v1080
      %v1557 = vpack.c.b16 %v1085, %v1083
      %v1558 = vpack.c.b16 %v1086, %v1084
      %v1559 = vpack.c.b16 %v1089, %v1087
      %v1560 = vpack.c.b16 %v1090, %v1088
      %v1561 = vpack.c.b16 %v1093, %v1091
      %v1562 = vpack.c.b16 %v1094, %v1092
      %v1563 = vpack.c.b16 %v1097, %v1095
      %v1564 = vpack.c.b16 %v1098, %v1096
      %v1565 = vpack.c.b16 %v1101, %v1099
      %v1566 = vpack.c.b16 %v1102, %v1100
      %v1567 = vpack.c.b16 %v1105, %v1103
      %v1568 = vpack.c.b16 %v1106, %v1104
      %v1569 = vpack.c.b16 %v1109, %v1107
      %v1570 = vpack.c.b16 %v1110, %v1108
      %v1571 = vpack.c.b16 %v1113, %v1111
      %v1572 = vpack.c.b16 %v1114, %v1112
      %v1573 = vpack.c.b16 %v1117, %v1115
      %v1574 = vpack.c.b16 %v1118, %v1116
      %v1575 = vpack.c.b16 %v1121, %v1119
      %v1576 = vpack.c.b16 %v1122, %v1120
      %v1577 = vpack.c.b16 %v1125, %v1123
      %v1578 = vpack.c.b16 %v1126, %v1124
      %v1579 = vpack.c.b16 %v1129, %v1127
      %v1580 = vpack.c.b16 %v1130, %v1128
      %v1581 = vpack.c.b16 %v1133, %v1131
      %v1582 = vpack.c.b16 %v1134, %v1132
      %v1583 = vpack.c.b16 %v1137, %v1135
      %v1584 = vpack.c.b16 %v1138, %v1136
      %v1585 = vpack.c.b16 %v1141, %v1139
      %v1586 = vpack.c.b16 %v1142, %v1140
      %v1587 = vpack.c.b16 %v1145, %v1143
      %v1588 = vpack.c.b16 %v1146, %v1144
      %v1589 = vpack.c.b16 %v1149, %v1147
      %v1590 = vpack.c.b16 %v1150, %v1148
      %v1591 = vpack.c.b16 %v1153, %v1151
      %v1592 = vpack.c.b16 %v1154, %v1152
      %v1593 = vpack.c.b16 %v1157, %v1155
      %v1594 = vpack.c.b16 %v1158, %v1156
      %v1595 = vpack.c.b16 %v1161, %v1159
      %v1596 = vpack.c.b16 %v1162, %v1160
      %v1597 = vpack.c.b16 %v1165, %v1163
      %v1598 = vpack.c.b16 %v1166, %v1164
      %v1599 = vpack.c.b16 %v1169, %v1167
      %v1600 = vpack.c.b16 %v1170, %v1168
      %v1601 = vpack.c.b16 %v1173, %v1171
      %v1602 = vpack.c.b16 %v1174, %v1172
      %v1603 = vpack.c.b16 %v1177, %v1175
      %v1604 = vpack.c.b16 %v1178, %v1176
      %v1605 = vpack.c.b16 %v1181, %v1179
      %v1606 = vpack.c.b16 %v1182, %v1180
      %v1607 = vpack.c.b16 %v1185, %v1183
      %v1608 = vpack.c.b16 %v1186, %v1184
      %v1609 = vpack.c.b16 %v1189, %v1187
      %v1610 = vpack.c.b16 %v1190, %v1188
      %v1611 = vpack.c.b16 %v1193, %v1191
      %v1612 = vpack.c.b16 %v1194, %v1192
      %v1613 = vpack.c.b16 %v1197, %v1195
      %v1614 = vpack.c.b16 %v1198, %v1196
      %v1615 = vpack.c.b16 %v1201, %v1199
      %v1616 = vpack.c.b16 %v1202, %v1200
      %v1617 = vpack.c.b16 %v1205, %v1203
      %v1618 = vpack.c.b16 %v1206, %v1204
      %v1619 = vpack.c.b16 %v1209, %v1207
      %v1620 = vpack.c.b16 %v1210, %v1208
      %v1621 = vpack.c.b16 %v1213, %v1211
      %v1622 = vpack.c.b16 %v1214, %v1212
      %v1623 = vpack.c.b16 %v1217, %v1215
      %v1624 = vpack.c.b16 %v1218, %v1216
      %v1625 = vpack.c.b16 %v1221, %v1219
      %v1626 = vpack.c.b16 %v1222, %v1220
      %v1627 = vpack.c.b16 %v1225, %v1223
      %v1628 = vpack.c.b16 %v1226, %v1224
      %v1629 = vpack.c.b16 %v1229, %v1227
      %v1630 = vpack.c.b16 %v1230, %v1228
      %v1631 = vpack.c.b16 %v1233, %v1231
      %v1632 = vpack.c.b16 %v1234, %v1232
      %v1633 = vpack.c.b16 %v1237, %v1235
      %v1634 = vpack.c.b16 %v1238, %v1236
      %v1635 = vpack.c.b16 %v1241, %v1239
      %v1636 = vpack.c.b16 %v1242, %v1240
      %v1637 = vpack.c.b16 %v1245, %v1243
      %v1638 = vpack.c.b16 %v1246, %v1244
      %v1639 = vpack.c.b16 %v1249, %v1247
      %v1640 = vpack.c.b16 %v1250, %v1248
      %v1641 = vpack.c.b16 %v1253, %v1251
      %v1642 = vpack.c.b16 %v1254, %v1252
      %v1643 = vpack.c.b16 %v1257, %v1255
      %v1644 = vpack.c.b16 %v1258, %v1256
      %v1645 = vpack.c.b16 %v1261, %v1259
      %v1646 = vpack.c.b16 %v1262, %v1260
      %v1647 = vpack.c.b16 %v1265, %v1263
      %v1648 = vpack.c.b16 %v1266, %v1264
      %v1649 = vpack.c.b16 %v1269, %v1267
      %v1650 = vpack.c.b16 %v1270, %v1268
      %v1651 = vpack.c.b16 %v1273, %v1271
      %v1652 = vpack.c.b16 %v1274, %v1272
      %v1653 = vpack.c.b16 %v1277, %v1275
      %v1654 = vpack.c.b16 %v1278, %v1276
      %v1655 = vpack.c.b16 %v1281, %v1279
      %v1656 = vpack.c.b16 %v1282, %v1280
      %v1657 = vpack.c.b16 %v1285, %v1283
      %v1658 = vpack.c.b16 %v1286, %v1284
      %v1659 = vpack.c.b16 %v1289, %v1287
      %v1660 = vpack.c.b16 %v1290, %v1288
      %v1661 = vpack.c.b16 %v1293, %v1291
      %v1662 = vpack.c.b16 %v1294, %v1292
      %v1663 = vpack.c.b16 %v1297, %v1295
      %v1664 = vpack.c.b16 %v1298, %v1296
      %v1665 = vpack.c.b16 %v1301, %v1299
      %v1666 = vpack.c.b16 %v1302, %v1300
      %v1667 = vpack.c.b16 %v1305, %v1303
      %v1668 = vpack.c.b16 %v1306, %v1304
      %v1669 = vpack.c.b16 %v1309, %v1307
      %v1670 = vpack.c.b16 %v1310, %v1308
      %v1671 = vpack.c.b16 %v1313, %v1311
      %v1672 = vpack.c.b16 %v1314, %v1312
      %v1673 = vpack.c.b16 %v1317, %v1315
      %v1674 = vpack.c.b16 %v1318, %v1316
      %v1675 = vpack.c.b16 %v1321, %v1319
      %v1676 = vpack.c.b16 %v1322, %v1320
      %v1677 = vpack.c.b16 %v1325, %v1323
      %v1678 = vpack.c.b16 %v1326, %v1324
      %v1679 = vpack.c.b16 %v1329, %v1327
      %v1680 = vpack.c.b16 %v1330, %v1328
      %v1681 = vpack.c.b16 %v1333, %v1331
      %v1682 = vpack.c.b16 %v1334, %v1332
      %v1683 = vpack.c.b16 %v1337, %v1335
      %v1684 = vpack.c.b16 %v1338, %v1336
      %v1685 = vpack.c.b16 %v1341, %v1339
      %v1686 = vpack.c.b16 %v1342, %v1340
      %v1687 = vpack.c.b16 %v1345, %v1343
      %v1688 = vpack.c.b16 %v1346, %v1344
      %v1689 = vpack.c.b16 %v1349, %v1347
      %v1690 = vpack.c.b16 %v1350, %v1348
      %v1691 = vpack.c.b16 %v1353, %v1351
      %v1692 = vpack.c.b16 %v1354, %v1352
      %v1693 = vpack.c.b16 %v1357, %v1355
      %v1694 = vpack.c.b16 %v1358, %v1356
      %v1695 = vpack.c.b16 %v1361, %v1359
      %v1696 = vpack.c.b16 %v1362, %v1360
      %v1697 = vpack.c.b16 %v1365, %v1363
      %v1698 = vpack.c.b16 %v1366, %v1364
      %v1699 = vpack.c.b16 %v1369, %v1367
      %v1700 = vpack.c.b16 %v1370, %v1368
      %v1701 = vpack.c.b16 %v1373, %v1371
      %v1702 = vpack.c.b16 %v1374, %v1372
      %v1703 = vpack.c.b16 %v1377, %v1375
      %v1704 = vpack.c.b16 %v1378, %v1376
      %v1705 = vpack.c.b16 %v1381, %v1379
      %v1706 = vpack.c.b16 %v1382, %v1380
      %v1707 = vpack.c.b16 %v1385, %v1383
      %v1708 = vpack.c.b16 %v1386, %v1384
      %v1709 = vpack.c.b16 %v1389, %v1387
      %v1710 = vpack.c.b16 %v1390, %v1388
      %v1711 = vpack.c.b16 %v1393, %v1391
      %v1712 = vpack.c.b16 %v1394, %v1392
      %v1713 = vpack.c.b16 %v1397, %v1395
      %v1714 = vpack.c.b16 %v1398, %v1396
      %v1715 = vpack.c.b16 %v1401, %v1399
      %v1716 = vpack.c.b16 %v1402, %v1400
      %v1717 = vpack.c.b16 %v1405, %v1403
      %v1718 = vpack.c.b16 %v1406, %v1404
      %v1719 = vpack.c.b16 %v1409, %v1407
      %v1720 = vpack.c.b16 %v1410, %v1408
      %v1721 = vpack.c.b16 %v1413, %v1411
      %v1722 = vpack.c.b16 %v1414, %v1412
      %v1723 = vpack.c.b16 %v1417, %v1415
      %v1724 = vpack.c.b16 %v1418, %v1416
      %v1725 = vpack.c.b16 %v1421, %v1419
      %v1726 = vpack.c.b16 %v1422, %v1420
      %v1727 = vpack.c.b16 %v1425, %v1423
      %v1728 = vpack.c.b16 %v1426, %v1424
      %v1729 = vpack.c.b16 %v1429, %v1427
      %v1730 = vpack.c.b16 %v1430, %v1428
      %v1731 = vpack.c.b16 %v1433, %v1431
      %v1732 = vpack.c.b16 %v1434, %v1432
      %v1733 = vpack.c.b16 %v1437, %v1435
      %v1734 = vpack.c.b16 %v1438, %v1436
      %v1735 = vpack.c.b16 %v1441, %v1439
      %v1736 = vpack.c.b16 %v1442, %v1440
      %v1737 = vpack.c.b16 %v1445, %v1443
      %v1738 = vpack.c.b16 %v1446, %v1444
      %v1739 = vpack.c.b16 %v1449, %v1447
      %v1740 = vpack.c.b16 %v1450, %v1448
      %v1741 = vpack.c.b16 %v1453, %v1451
      %v1742 = vpack.c.b16 %v1454, %v1452
      %v1743 = vpack.c.b16 %v1457, %v1455
      %v1744 = vpack.c.b16 %v1458, %v1456
      %v1745 = vpack.c.b16 %v1461, %v1459
      %v1746 = vpack.c.b16 %v1462, %v1460
      %v1747 = vpack.c.b16 %v1465, %v1463
      %v1748 = vpack.c.b16 %v1466, %v1464
      %v1749 = vpack.c.b16 %v1469, %v1467
      %v1750 = vpack.c.b16 %v1470, %v1468
      %v1751 = vpack.c.b16 %v1473, %v1471
      %v1752 = vpack.c.b16 %v1474, %v1472
      %v1753 = vpack.c.b16 %v1477, %v1475
      %v1754 = vpack.c.b16 %v1478, %v1476
      %v1755 = vpack.c.b16 %v1481, %v1479
      %v1756 = vpack.c.b16 %v1482, %v1480
      %v1757 = vpack.c.b16 %v1485, %v1483
      %v1758 = vpack.c.b16 %v1486, %v1484
      %v1759 = vpack.c.b16 %v1489, %v1487
      %v1760 = vpack.c.b16 %v1490, %v1488
      %v1761 = vpack.c.b16 %v1493, %v1491
      %v1762 = vpack.c.b16 %v1494, %v1492
      %v1763 = vpack.c.b16 %v1497, %v1495
      %v1764 = vpack.c.b16 %v1498, %v1496
      %v1765 = vpack.c.b16 %v1501, %v1499
      %v1766 = vpack.c.b16 %v1502, %v1500
      %v1767 = vpack.c.b16 %v1505, %v1503
      %v1768 = vpack.c.b16 %v1506, %v1504
      %v1769 = vpack.c.b16 %v1509, %v1507
      %v1770 = vpack.c.b16 %v1510, %v1508
      %v1771 = vpack.c.b16 %v1513, %v1511
      %v1772 = vpack.c.b16 %v1514, %v1512
      %v1773 = vpack.c.b16 %v1517, %v1515
      %v1774 = vpack.c.b16 %v1518, %v1516
      %2031 = vmatprep.subr.bf16.mxu0 %v1520
      %2032 = vmatpush1.bf16.msra.mxu0 %v1519
      %2033 = vmatprep.subr.bf16.mxu0 %v1522
      %2034 = vmatpush1.bf16.msra.mxu0 %v1521
      %2035 = vmatprep.subr.bf16.mxu0 %v1524
      %2036 = vmatpush1.bf16.msra.mxu0 %v1523
      %2037 = vmatprep.subr.bf16.mxu0 %v1526
      %2038 = vmatpush1.bf16.msra.mxu0 %v1525
      %2039 = vmatprep.subr.bf16.mxu0 %v1528
      %2040 = vmatpush1.bf16.msra.mxu0 %v1527
      %2041 = vmatprep.subr.bf16.mxu0 %v1530
      %2042 = vmatpush1.bf16.msra.mxu0 %v1529
      %2043 = vmatprep.subr.bf16.mxu0 %v1532
      %2044 = vmatpush1.bf16.msra.mxu0 %v1531
      %2045 = vmatprep.subr.bf16.mxu0 %v1534
      %2046 = vmatpush1.bf16.msra.mxu0 %v1533
      %2047 = vmatprep.subr.bf16.mxu0 %v1536
      %2048 = vmatpush1.bf16.msra.mxu0 %v1535
      %2049 = vmatprep.subr.bf16.mxu0 %v1538
      %2050 = vmatpush1.bf16.msra.mxu0 %v1537
      %2051 = vmatprep.subr.bf16.mxu0 %v1540
      %2052 = vmatpush1.bf16.msra.mxu0 %v1539
      %2053 = vmatprep.subr.bf16.mxu0 %v1542
      %2054 = vmatpush1.bf16.msra.mxu0 %v1541
      %2055 = vmatprep.subr.bf16.mxu0 %v1544
      %2056 = vmatpush1.bf16.msra.mxu0 %v1543
      %2057 = vmatprep.subr.bf16.mxu0 %v1546
      %2058 = vmatpush1.bf16.msra.mxu0 %v1545
      %2059 = vmatprep.subr.bf16.mxu0 %v1548
      %2060 = vmatpush1.bf16.msra.mxu0 %v1547
      %2061 = vmatprep.subr.bf16.mxu0 %v1550
      %2062 = vmatpush1.bf16.msra.mxu0 %v1549
      %2063 = vmatprep.mubr.bf16.mxu0 %v688
      %2064 = vmatmul.mubr.bf16.gmra.mrb[0].mxu0 %v687
      %v2065 = vpop.f32.mrb[0].mxu0
      %v2066 = vadd.f32 0.0, %v2065
      %v2067 = vpop.f32.mrb[0].mxu0
      %v2068 = vadd.f32 0.0, %v2067
      %v2069 = vpop.f32.mrb[0].mxu0
      %v2070 = vadd.f32 0.0, %v2069
      %v2071 = vpop.f32.mrb[0].mxu0
      %v2072 = vadd.f32 0.0, %v2071
      %2073 = vmatprep.mubr.bf16.mxu0 %v704
      %2074 = vmatmul.mubr.bf16.gmra.mrb[0].mxu0 %v703
      %v2075 = vpop.f32.mrb[0].mxu0
      %v2076 = vadd.f32 0.0, %v2075
      %v2077 = vpop.f32.mrb[0].mxu0
      %v2078 = vadd.f32 0.0, %v2077
      %v2079 = vpop.f32.mrb[0].mxu0
      %v2080 = vadd.f32 0.0, %v2079
      %v2081 = vpop.f32.mrb[0].mxu0
      %v2082 = vadd.f32 0.0, %v2081
      %2083 = vdwg.mxu0
      %2084 = vmatprep.subr.bf16.mxu0 %v1552
      %2085 = vmatpush1.bf16.msra.mxu0 %v1551
      %2086 = vmatprep.subr.bf16.mxu0 %v1554
      %2087 = vmatpush1.bf16.msra.mxu0 %v1553
      %2088 = vmatprep.subr.bf16.mxu0 %v1556
      %2089 = vmatpush1.bf16.msra.mxu0 %v1555
      %2090 = vmatprep.subr.bf16.mxu0 %v1558
      %2091 = vmatpush1.bf16.msra.mxu0 %v1557
      %2092 = vmatprep.subr.bf16.mxu0 %v1560
      %2093 = vmatpush1.bf16.msra.mxu0 %v1559
      %2094 = vmatprep.subr.bf16.mxu0 %v1562
      %2095 = vmatpush1.bf16.msra.mxu0 %v1561
      %2096 = vmatprep.subr.bf16.mxu0 %v1564
      %2097 = vmatpush1.bf16.msra.mxu0 %v1563
      %2098 = vmatprep.subr.bf16.mxu0 %v1566
      %2099 = vmatpush1.bf16.msra.mxu0 %v1565
      %2100 = vmatprep.subr.bf16.mxu0 %v1568
      %2101 = vmatpush1.bf16.msra.mxu0 %v1567
      %2102 = vmatprep.subr.bf16.mxu0 %v1570
      %2103 = vmatpush1.bf16.msra.mxu0 %v1569
      %2104 = vmatprep.subr.bf16.mxu0 %v1572
      %2105 = vmatpush1.bf16.msra.mxu0 %v1571
      %2106 = vmatprep.subr.bf16.mxu0 %v1574
      %2107 = vmatpush1.bf16.msra.mxu0 %v1573
      %2108 = vmatprep.subr.bf16.mxu0 %v1576
      %2109 = vmatpush1.bf16.msra.mxu0 %v1575
      %2110 = vmatprep.subr.bf16.mxu0 %v1578
      %2111 = vmatpush1.bf16.msra.mxu0 %v1577
      %2112 = vmatprep.subr.bf16.mxu0 %v1580
      %2113 = vmatpush1.bf16.msra.mxu0 %v1579
      %2114 = vmatprep.subr.bf16.mxu0 %v1582
      %2115 = vmatpush1.bf16.msra.mxu0 %v1581
      %2116 = vmatprep.mubr.bf16.mxu0 %v690
      %2117 = vmatmul.mubr.bf16.gmra.mrb[0].mxu0 %v689
      %v2118 = vpop.f32.mrb[0].mxu0
      %v2119 = vadd.f32 %v2066, %v2118
      %v2120 = vpop.f32.mrb[0].mxu0
      %v2121 = vadd.f32 %v2068, %v2120
      %v2122 = vpop.f32.mrb[0].mxu0
      %v2123 = vadd.f32 %v2070, %v2122
      %v2124 = vpop.f32.mrb[0].mxu0
      %v2125 = vadd.f32 %v2072, %v2124
      %2126 = vmatprep.mubr.bf16.mxu0 %v706
      %2127 = vmatmul.mubr.bf16.gmra.mrb[0].mxu0 %v705
      %v2128 = vpop.f32.mrb[0].mxu0
      %v2129 = vadd.f32 %v2076, %v2128
      %v2130 = vpop.f32.mrb[0].mxu0
      %v2131 = vadd.f32 %v2078, %v2130
      %v2132 = vpop.f32.mrb[0].mxu0
      %v2133 = vadd.f32 %v2080, %v2132
      %v2134 = vpop.f32.mrb[0].mxu0
      %v2135 = vadd.f32 %v2082, %v2134
      %2136 = vdwg.mxu0
      %2137 = vmatprep.subr.bf16.mxu0 %v1584
      %2138 = vmatpush1.bf16.msra.mxu0 %v1583
      %2139 = vmatprep.subr.bf16.mxu0 %v1586
      %2140 = vmatpush1.bf16.msra.mxu0 %v1585
      %2141 = vmatprep.subr.bf16.mxu0 %v1588
      %2142 = vmatpush1.bf16.msra.mxu0 %v1587
      %2143 = vmatprep.subr.bf16.mxu0 %v1590
      %2144 = vmatpush1.bf16.msra.mxu0 %v1589
      %2145 = vmatprep.subr.bf16.mxu0 %v1592
      %2146 = vmatpush1.bf16.msra.mxu0 %v1591
      %2147 = vmatprep.subr.bf16.mxu0 %v1594
      %2148 = vmatpush1.bf16.msra.mxu0 %v1593
      %2149 = vmatprep.subr.bf16.mxu0 %v1596
      %2150 = vmatpush1.bf16.msra.mxu0 %v1595
      %2151 = vmatprep.subr.bf16.mxu0 %v1598
      %2152 = vmatpush1.bf16.msra.mxu0 %v1597
      %2153 = vmatprep.subr.bf16.mxu0 %v1600
      %2154 = vmatpush1.bf16.msra.mxu0 %v1599
      %2155 = vmatprep.subr.bf16.mxu0 %v1602
      %2156 = vmatpush1.bf16.msra.mxu0 %v1601
      %2157 = vmatprep.subr.bf16.mxu0 %v1604
      %2158 = vmatpush1.bf16.msra.mxu0 %v1603
      %2159 = vmatprep.subr.bf16.mxu0 %v1606
      %2160 = vmatpush1.bf16.msra.mxu0 %v1605
      %2161 = vmatprep.subr.bf16.mxu0 %v1608
      %2162 = vmatpush1.bf16.msra.mxu0 %v1607
      %2163 = vmatprep.subr.bf16.mxu0 %v1610
      %2164 = vmatpush1.bf16.msra.mxu0 %v1609
      %2165 = vmatprep.subr.bf16.mxu0 %v1612
      %2166 = vmatpush1.bf16.msra.mxu0 %v1611
      %2167 = vmatprep.subr.bf16.mxu0 %v1614
      %2168 = vmatpush1.bf16.msra.mxu0 %v1613
      %2169 = vmatprep.mubr.bf16.mxu0 %v692
      %2170 = vmatmul.mubr.bf16.gmra.mrb[0].mxu0 %v691
      %v2171 = vpop.f32.mrb[0].mxu0
      %v2172 = vadd.f32 %v2119, %v2171
      %v2173 = vpop.f32.mrb[0].mxu0
      %v2174 = vadd.f32 %v2121, %v2173
      %v2175 = vpop.f32.mrb[0].mxu0
      %v2176 = vadd.f32 %v2123, %v2175
      %v2177 = vpop.f32.mrb[0].mxu0
      %v2178 = vadd.f32 %v2125, %v2177
      %2179 = vmatprep.mubr.bf16.mxu0 %v708
      %2180 = vmatmul.mubr.bf16.gmra.mrb[0].mxu0 %v707
      %v2181 = vpop.f32.mrb[0].mxu0
      %v2182 = vadd.f32 %v2129, %v2181
      %v2183 = vpop.f32.mrb[0].mxu0
      %v2184 = vadd.f32 %v2131, %v2183
      %v2185 = vpop.f32.mrb[0].mxu0
      %v2186 = vadd.f32 %v2133, %v2185
      %v2187 = vpop.f32.mrb[0].mxu0
      %v2188 = vadd.f32 %v2135, %v2187
      %2189 = vdwg.mxu0
      %2190 = vmatprep.subr.bf16.mxu0 %v1616
      %2191 = vmatpush1.bf16.msra.mxu0 %v1615
      %2192 = vmatprep.subr.bf16.mxu0 %v1618
      %2193 = vmatpush1.bf16.msra.mxu0 %v1617
      %2194 = vmatprep.subr.bf16.mxu0 %v1620
      %2195 = vmatpush1.bf16.msra.mxu0 %v1619
      %2196 = vmatprep.subr.bf16.mxu0 %v1622
      %2197 = vmatpush1.bf16.msra.mxu0 %v1621
      %2198 = vmatprep.subr.bf16.mxu0 %v1624
      %2199 = vmatpush1.bf16.msra.mxu0 %v1623
      %2200 = vmatprep.subr.bf16.mxu0 %v1626
      %2201 = vmatpush1.bf16.msra.mxu0 %v1625
      %2202 = vmatprep.subr.bf16.mxu0 %v1628
      %2203 = vmatpush1.bf16.msra.mxu0 %v1627
      %2204 = vmatprep.subr.bf16.mxu0 %v1630
      %2205 = vmatpush1.bf16.msra.mxu0 %v1629
      %2206 = vmatprep.subr.bf16.mxu0 %v1632
      %2207 = vmatpush1.bf16.msra.mxu0 %v1631
      %2208 = vmatprep.subr.bf16.mxu0 %v1634
      %2209 = vmatpush1.bf16.msra.mxu0 %v1633
      %2210 = vmatprep.subr.bf16.mxu0 %v1636
      %2211 = vmatpush1.bf16.msra.mxu0 %v1635
      %2212 = vmatprep.subr.bf16.mxu0 %v1638
      %2213 = vmatpush1.bf16.msra.mxu0 %v1637
      %2214 = vmatprep.subr.bf16.mxu0 %v1640
      %2215 = vmatpush1.bf16.msra.mxu0 %v1639
      %2216 = vmatprep.subr.bf16.mxu0 %v1642
      %2217 = vmatpush1.bf16.msra.mxu0 %v1641
      %2218 = vmatprep.subr.bf16.mxu0 %v1644
      %2219 = vmatpush1.bf16.msra.mxu0 %v1643
      %2220 = vmatprep.subr.bf16.mxu0 %v1646
      %2221 = vmatpush1.bf16.msra.mxu0 %v1645
      %2222 = vmatprep.mubr.bf16.mxu0 %v694
      %2223 = vmatmul.mubr.bf16.gmra.mrb[0].mxu0 %v693
      %v2224 = vpop.f32.mrb[0].mxu0
      %v2225 = vadd.f32 %v2172, %v2224
      %v2226 = vpop.f32.mrb[0].mxu0
      %v2227 = vadd.f32 %v2174, %v2226
      %v2228 = vpop.f32.mrb[0].mxu0
      %v2229 = vadd.f32 %v2176, %v2228
      %v2230 = vpop.f32.mrb[0].mxu0
      %v2231 = vadd.f32 %v2178, %v2230
      %2232 = vmatprep.mubr.bf16.mxu0 %v710
      %2233 = vmatmul.mubr.bf16.gmra.mrb[0].mxu0 %v709
      %v2234 = vpop.f32.mrb[0].mxu0
      %v2235 = vadd.f32 %v2182, %v2234
      %v2236 = vpop.f32.mrb[0].mxu0
      %v2237 = vadd.f32 %v2184, %v2236
      %v2238 = vpop.f32.mrb[0].mxu0
      %v2239 = vadd.f32 %v2186, %v2238
      %v2240 = vpop.f32.mrb[0].mxu0
      %v2241 = vadd.f32 %v2188, %v2240
      %2242 = vdwg.mxu0
      %2243 = vmatprep.subr.bf16.mxu0 %v1648
      %2244 = vmatpush1.bf16.msra.mxu0 %v1647
      %2245 = vmatprep.subr.bf16.mxu0 %v1650
      %2246 = vmatpush1.bf16.msra.mxu0 %v1649
      %2247 = vmatprep.subr.bf16.mxu0 %v1652
      %2248 = vmatpush1.bf16.msra.mxu0 %v1651
      %2249 = vmatprep.subr.bf16.mxu0 %v1654
      %2250 = vmatpush1.bf16.msra.mxu0 %v1653
      %2251 = vmatprep.subr.bf16.mxu0 %v1656
      %2252 = vmatpush1.bf16.msra.mxu0 %v1655
      %2253 = vmatprep.subr.bf16.mxu0 %v1658
      %2254 = vmatpush1.bf16.msra.mxu0 %v1657
      %2255 = vmatprep.subr.bf16.mxu0 %v1660
      %2256 = vmatpush1.bf16.msra.mxu0 %v1659
      %2257 = vmatprep.subr.bf16.mxu0 %v1662
      %2258 = vmatpush1.bf16.msra.mxu0 %v1661
      %2259 = vmatprep.subr.bf16.mxu0 %v1664
      %2260 = vmatpush1.bf16.msra.mxu0 %v1663
      %2261 = vmatprep.subr.bf16.mxu0 %v1666
      %2262 = vmatpush1.bf16.msra.mxu0 %v1665
      %2263 = vmatprep.subr.bf16.mxu0 %v1668
      %2264 = vmatpush1.bf16.msra.mxu0 %v1667
      %2265 = vmatprep.subr.bf16.mxu0 %v1670
      %2266 = vmatpush1.bf16.msra.mxu0 %v1669
      %2267 = vmatprep.subr.bf16.mxu0 %v1672
      %2268 = vmatpush1.bf16.msra.mxu0 %v1671
      %2269 = vmatprep.subr.bf16.mxu0 %v1674
      %2270 = vmatpush1.bf16.msra.mxu0 %v1673
      %2271 = vmatprep.subr.bf16.mxu0 %v1676
      %2272 = vmatpush1.bf16.msra.mxu0 %v1675
      %2273 = vmatprep.subr.bf16.mxu0 %v1678
      %2274 = vmatpush1.bf16.msra.mxu0 %v1677
      %2275 = vmatprep.mubr.bf16.mxu0 %v696
      %2276 = vmatmul.mubr.bf16.gmra.mrb[0].mxu0 %v695
      %v2277 = vpop.f32.mrb[0].mxu0
      %v2278 = vadd.f32 %v2225, %v2277
      %v2279 = vpop.f32.mrb[0].mxu0
      %v2280 = vadd.f32 %v2227, %v2279
      %v2281 = vpop.f32.mrb[0].mxu0
      %v2282 = vadd.f32 %v2229, %v2281
      %v2283 = vpop.f32.mrb[0].mxu0
      %v2284 = vadd.f32 %v2231, %v2283
      %2285 = vmatprep.mubr.bf16.mxu0 %v712
      %2286 = vmatmul.mubr.bf16.gmra.mrb[0].mxu0 %v711
      %v2287 = vpop.f32.mrb[0].mxu0
      %v2288 = vadd.f32 %v2235, %v2287
      %v2289 = vpop.f32.mrb[0].mxu0
      %v2290 = vadd.f32 %v2237, %v2289
      %v2291 = vpop.f32.mrb[0].mxu0
      %v2292 = vadd.f32 %v2239, %v2291
      %v2293 = vpop.f32.mrb[0].mxu0
      %v2294 = vadd.f32 %v2241, %v2293
      %2295 = vdwg.mxu0
      %2296 = vmatprep.subr.bf16.mxu0 %v1680
      %2297 = vmatpush1.bf16.msra.mxu0 %v1679
      %2298 = vmatprep.subr.bf16.mxu0 %v1682
      %2299 = vmatpush1.bf16.msra.mxu0 %v1681
      %2300 = vmatprep.subr.bf16.mxu0 %v1684
      %2301 = vmatpush1.bf16.msra.mxu0 %v1683
      %2302 = vmatprep.subr.bf16.mxu0 %v1686
      %2303 = vmatpush1.bf16.msra.mxu0 %v1685
      %2304 = vmatprep.subr.bf16.mxu0 %v1688
      %2305 = vmatpush1.bf16.msra.mxu0 %v1687
      %2306 = vmatprep.subr.bf16.mxu0 %v1690
      %2307 = vmatpush1.bf16.msra.mxu0 %v1689
      %2308 = vmatprep.subr.bf16.mxu0 %v1692
      %2309 = vmatpush1.bf16.msra.mxu0 %v1691
      %2310 = vmatprep.subr.bf16.mxu0 %v1694
      %2311 = vmatpush1.bf16.msra.mxu0 %v1693
      %2312 = vmatprep.subr.bf16.mxu0 %v1696
      %2313 = vmatpush1.bf16.msra.mxu0 %v1695
      %2314 = vmatprep.subr.bf16.mxu0 %v1698
      %2315 = vmatpush1.bf16.msra.mxu0 %v1697
      %2316 = vmatprep.subr.bf16.mxu0 %v1700
      %2317 = vmatpush1.bf16.msra.mxu0 %v1699
      %2318 = vmatprep.subr.bf16.mxu0 %v1702
      %2319 = vmatpush1.bf16.msra.mxu0 %v1701
      %2320 = vmatprep.subr.bf16.mxu0 %v1704
      %2321 = vmatpush1.bf16.msra.mxu0 %v1703
      %2322 = vmatprep.subr.bf16.mxu0 %v1706
      %2323 = vmatpush1.bf16.msra.mxu0 %v1705
      %2324 = vmatprep.subr.bf16.mxu0 %v1708
      %2325 = vmatpush1.bf16.msra.mxu0 %v1707
      %2326 = vmatprep.subr.bf16.mxu0 %v1710
      %2327 = vmatpush1.bf16.msra.mxu0 %v1709
      %2328 = vmatprep.mubr.bf16.mxu0 %v698
      %2329 = vmatmul.mubr.bf16.gmra.mrb[0].mxu0 %v697
      %v2330 = vpop.f32.mrb[0].mxu0
      %v2331 = vadd.f32 %v2278, %v2330
      %v2332 = vpop.f32.mrb[0].mxu0
      %v2333 = vadd.f32 %v2280, %v2332
      %v2334 = vpop.f32.mrb[0].mxu0
      %v2335 = vadd.f32 %v2282, %v2334
      %v2336 = vpop.f32.mrb[0].mxu0
      %v2337 = vadd.f32 %v2284, %v2336
      %2338 = vmatprep.mubr.bf16.mxu0 %v714
      %2339 = vmatmul.mubr.bf16.gmra.mrb[0].mxu0 %v713
      %v2340 = vpop.f32.mrb[0].mxu0
      %v2341 = vadd.f32 %v2288, %v2340
      %v2342 = vpop.f32.mrb[0].mxu0
      %v2343 = vadd.f32 %v2290, %v2342
      %v2344 = vpop.f32.mrb[0].mxu0
      %v2345 = vadd.f32 %v2292, %v2344
      %v2346 = vpop.f32.mrb[0].mxu0
      %v2347 = vadd.f32 %v2294, %v2346
      %2348 = vdwg.mxu0
      %2349 = vmatprep.subr.bf16.mxu0 %v1712
      %2350 = vmatpush1.bf16.msra.mxu0 %v1711
      %2351 = vmatprep.subr.bf16.mxu0 %v1714
      %2352 = vmatpush1.bf16.msra.mxu0 %v1713
      %2353 = vmatprep.subr.bf16.mxu0 %v1716
      %2354 = vmatpush1.bf16.msra.mxu0 %v1715
      %2355 = vmatprep.subr.bf16.mxu0 %v1718
      %2356 = vmatpush1.bf16.msra.mxu0 %v1717
      %2357 = vmatprep.subr.bf16.mxu0 %v1720
      %2358 = vmatpush1.bf16.msra.mxu0 %v1719
      %2359 = vmatprep.subr.bf16.mxu0 %v1722
      %2360 = vmatpush1.bf16.msra.mxu0 %v1721
      %2361 = vmatprep.subr.bf16.mxu0 %v1724
      %2362 = vmatpush1.bf16.msra.mxu0 %v1723
      %2363 = vmatprep.subr.bf16.mxu0 %v1726
      %2364 = vmatpush1.bf16.msra.mxu0 %v1725
      %2365 = vmatprep.subr.bf16.mxu0 %v1728
      %2366 = vmatpush1.bf16.msra.mxu0 %v1727
      %2367 = vmatprep.subr.bf16.mxu0 %v1730
      %2368 = vmatpush1.bf16.msra.mxu0 %v1729
      %2369 = vmatprep.subr.bf16.mxu0 %v1732
      %2370 = vmatpush1.bf16.msra.mxu0 %v1731
      %2371 = vmatprep.subr.bf16.mxu0 %v1734
      %2372 = vmatpush1.bf16.msra.mxu0 %v1733
      %2373 = vmatprep.subr.bf16.mxu0 %v1736
      %2374 = vmatpush1.bf16.msra.mxu0 %v1735
      %2375 = vmatprep.subr.bf16.mxu0 %v1738
      %2376 = vmatpush1.bf16.msra.mxu0 %v1737
      %2377 = vmatprep.subr.bf16.mxu0 %v1740
      %2378 = vmatpush1.bf16.msra.mxu0 %v1739
      %2379 = vmatprep.subr.bf16.mxu0 %v1742
      %2380 = vmatpush1.bf16.msra.mxu0 %v1741
      %2381 = vmatprep.mubr.bf16.mxu0 %v700
      %2382 = vmatmul.mubr.bf16.gmra.mrb[0].mxu0 %v699
      %v2383 = vpop.f32.mrb[0].mxu0
      %v2384 = vadd.f32 %v2331, %v2383
      %v2385 = vpop.f32.mrb[0].mxu0
      %v2386 = vadd.f32 %v2333, %v2385
      %v2387 = vpop.f32.mrb[0].mxu0
      %v2388 = vadd.f32 %v2335, %v2387
      %v2389 = vpop.f32.mrb[0].mxu0
      %v2390 = vadd.f32 %v2337, %v2389
      %2391 = vmatprep.mubr.bf16.mxu0 %v716
      %2392 = vmatmul.mubr.bf16.gmra.mrb[0].mxu0 %v715
      %v2393 = vpop.f32.mrb[0].mxu0
      %v2394 = vadd.f32 %v2341, %v2393
      %v2395 = vpop.f32.mrb[0].mxu0
      %v2396 = vadd.f32 %v2343, %v2395
      %v2397 = vpop.f32.mrb[0].mxu0
      %v2398 = vadd.f32 %v2345, %v2397
      %v2399 = vpop.f32.mrb[0].mxu0
      %v2400 = vadd.f32 %v2347, %v2399
      %2401 = vdwg.mxu0
      %2402 = vmatprep.subr.bf16.mxu0 %v1744
      %2403 = vmatpush1.bf16.msra.mxu0 %v1743
      %2404 = vmatprep.subr.bf16.mxu0 %v1746
      %2405 = vmatpush1.bf16.msra.mxu0 %v1745
      %2406 = vmatprep.subr.bf16.mxu0 %v1748
      %2407 = vmatpush1.bf16.msra.mxu0 %v1747
      %2408 = vmatprep.subr.bf16.mxu0 %v1750
      %2409 = vmatpush1.bf16.msra.mxu0 %v1749
      %2410 = vmatprep.subr.bf16.mxu0 %v1752
      %2411 = vmatpush1.bf16.msra.mxu0 %v1751
      %2412 = vmatprep.subr.bf16.mxu0 %v1754
      %2413 = vmatpush1.bf16.msra.mxu0 %v1753
      %2414 = vmatprep.subr.bf16.mxu0 %v1756
      %2415 = vmatpush1.bf16.msra.mxu0 %v1755
      %2416 = vmatprep.subr.bf16.mxu0 %v1758
      %2417 = vmatpush1.bf16.msra.mxu0 %v1757
      %2418 = vmatprep.subr.bf16.mxu0 %v1760
      %2419 = vmatpush1.bf16.msra.mxu0 %v1759
      %2420 = vmatprep.subr.bf16.mxu0 %v1762
      %2421 = vmatpush1.bf16.msra.mxu0 %v1761
      %2422 = vmatprep.subr.bf16.mxu0 %v1764
      %2423 = vmatpush1.bf16.msra.mxu0 %v1763
      %2424 = vmatprep.subr.bf16.mxu0 %v1766
      %2425 = vmatpush1.bf16.msra.mxu0 %v1765
      %2426 = vmatprep.subr.bf16.mxu0 %v1768
      %2427 = vmatpush1.bf16.msra.mxu0 %v1767
      %2428 = vmatprep.subr.bf16.mxu0 %v1770
      %2429 = vmatpush1.bf16.msra.mxu0 %v1769
      %2430 = vmatprep.subr.bf16.mxu0 %v1772
      %2431 = vmatpush1.bf16.msra.mxu0 %v1771
      %2432 = vmatprep.subr.bf16.mxu0 %v1774
      %2433 = vmatpush1.bf16.msra.mxu0 %v1773
      %2434 = vmatprep.mubr.bf16.mxu0 %v702
      %2435 = vmatmul.mubr.bf16.gmra.mrb[0].mxu0 %v701
      %v2436 = vpop.f32.mrb[0].mxu0
      %v2437 = vadd.f32 %v2384, %v2436
      %v2438 = vpop.f32.mrb[0].mxu0
      %v2439 = vadd.f32 %v2386, %v2438
      %v2440 = vpop.f32.mrb[0].mxu0
      %v2441 = vadd.f32 %v2388, %v2440
      %v2442 = vpop.f32.mrb[0].mxu0
      %v2443 = vadd.f32 %v2390, %v2442
      %2444 = vmatprep.mubr.bf16.mxu0 %v718
      %2445 = vmatmul.mubr.bf16.gmra.mrb[0].mxu0 %v717
      %v2446 = vpop.f32.mrb[0].mxu0
      %v2447 = vadd.f32 %v2394, %v2446
      %v2448 = vpop.f32.mrb[0].mxu0
      %v2449 = vadd.f32 %v2396, %v2448
      %v2450 = vpop.f32.mrb[0].mxu0
      %v2451 = vadd.f32 %v2398, %v2450
      %v2452 = vpop.f32.mrb[0].mxu0
      %v2453 = vadd.f32 %v2400, %v2452
      %2454 = vdwg.mxu0
      %v2455 = vadd.f32 %v2437, %v2441
      %v2456 = vadd.f32 %v2455, %v2447
      %v2457 = vadd.f32 %v2456, %v2451
      %v2458 = vrot.slane %v2457, 4
      %v2459 = vadd.f32 %v2457, %v2458
      %v2460 = vrot.slane %v2459, 2
      %v2461 = vadd.f32 %v2459, %v2460
      %v2462 = vrot.slane %v2461, 1
      %v2463 = vadd.f32 %v2461, %v2462
      %v2464 = vadd.f32 %v2439, %v2443
      %v2465 = vadd.f32 %v2464, %v2449
      %v2466 = vadd.f32 %v2465, %v2453
      %v2467 = vrot.slane %v2466, 4
      %v2468 = vadd.f32 %v2466, %v2467
      %v2469 = vrot.slane %v2468, 2
      %v2470 = vadd.f32 %v2468, %v2469
      %v2471 = vrot.slane %v2470, 1
      %v2472 = vadd.f32 %v2470, %v2471
      %v2475 = vcombine.low %v2463, %v2472
      %v2477 = vunpack.c.l.s4 1966171168
      %v2478 = vunpack.c.0.s8 %v2477
      %v2479 = vlaneseq
      %v2480 = vshrl.u32 %v2479, 7
      %v2481 = vsub.s32 %v2478, %v2480
      %v2482 = vrot.slane %v2475, %v2481
      %v2484 = vunpack.c.l.s4 1966171168
      %v2485 = vunpack.c.0.s8 %v2484
      %v2486 = vlaneseq
      %v2487 = vshrl.u32 %v2486, 7
      %v2488 = vsub.s32 %v2485, %v2487
      %v2489 = vrot.slane %v2482, %v2488
      %v2491 = vlaneseq
      %vm2492 = vcmp.ge.s32.totalorder %v2491, 0
      %vm2493 = vcmp.lt.s32.totalorder %v2491, 256
      %vm2494 = vmand %vm2492, %vm2493
      %2495 = vst.msk [vmem:[%s301] ss:$2 sm:$0x3] %vm2494, %v2489
      %v2496 = vmul.f32 %v2437, %v2437
      %v2497 = vmul.f32 %v2439, %v2439
      %v2498 = vmul.f32 %v2441, %v2441
      %v2499 = vmul.f32 %v2443, %v2443
      %v2500 = vmul.f32 %v2447, %v2447
      %v2501 = vmul.f32 %v2449, %v2449
      %v2502 = vmul.f32 %v2451, %v2451
      %v2503 = vmul.f32 %v2453, %v2453
      %v2504 = vadd.f32 %v2496, %v2498
      %v2505 = vadd.f32 %v2504, %v2500
      %v2506 = vadd.f32 %v2505, %v2502
      %v2507 = vrot.slane %v2506, 4
      %v2508 = vadd.f32 %v2506, %v2507
      %v2509 = vrot.slane %v2508, 2
      %v2510 = vadd.f32 %v2508, %v2509
      %v2511 = vrot.slane %v2510, 1
      %v2512 = vadd.f32 %v2510, %v2511
      %v2513 = vadd.f32 %v2497, %v2499
      %v2514 = vadd.f32 %v2513, %v2501
      %v2515 = vadd.f32 %v2514, %v2503
      %v2516 = vrot.slane %v2515, 4
      %v2517 = vadd.f32 %v2515, %v2516
      %v2518 = vrot.slane %v2517, 2
      %v2519 = vadd.f32 %v2517, %v2518
      %v2520 = vrot.slane %v2519, 1
      %v2521 = vadd.f32 %v2519, %v2520
      %v2524 = vcombine.low %v2512, %v2521
      %v2526 = vunpack.c.l.s4 1966171168
      %v2527 = vunpack.c.0.s8 %v2526
      %v2528 = vlaneseq
      %v2529 = vshrl.u32 %v2528, 7
      %v2530 = vsub.s32 %v2527, %v2529
      %v2531 = vrot.slane %v2524, %v2530
      %v2533 = vunpack.c.l.s4 1966171168
      %v2534 = vunpack.c.0.s8 %v2533
      %v2535 = vlaneseq
      %v2536 = vshrl.u32 %v2535, 7
      %v2537 = vsub.s32 %v2534, %v2536
      %v2538 = vrot.slane %v2531, %v2537
      %s2540 = scalar_lea.vmem %s301, 1
      %2541 = vst.msk [vmem:[%s2540] ss:$2 sm:$0x3] %vm2494, %v2538
      %v2542 = vpack.c.bf16 %v2441, %v2437
      %v2543 = vpack.c.bf16 %v2443, %v2439
      %v2544 = vpack.c.bf16 %v2451, %v2447
      %v2545 = vpack.c.bf16 %v2453, %v2449
      %v2550 = vunpack.c.l.b16 %v2542
      %v2551 = vunpack.c.l.b16 %v2543
      %v2552 = vunpack.c.h.b16 %v2542
      %v2553 = vunpack.c.h.b16 %v2543
      %v2554 = vunpack.c.l.b16 %v2544
      %v2555 = vunpack.c.l.b16 %v2545
      %v2556 = vunpack.c.h.b16 %v2544
      %v2557 = vunpack.c.h.b16 %v2545
      %v2558 = vpack.c.b16 %v2551, %v2550
      %v2559 = vpack.c.b16 %v2553, %v2552
      %v2560 = vpack.c.b16 %v2555, %v2554
      %v2561 = vpack.c.b16 %v2557, %v2556
      %2566 = vst [vmem:[%s286] sm:$0xff] %v2558
      %2567 = vst [vmem:[%s286 + $0x8] sm:$0xff] %v2559
      %2568 = vst [vmem:[%s286 + $0x10] sm:$0xff] %v2560
      %2569 = vst [vmem:[%s286 + $0x18] sm:$0xff] %v2561
      %s2570 = smul.u32 4, %s22
      %s2571 = smul.u32 2, %s21
      %p2572 = scmp.lt.s32.totalorder %s20, 3
      %s2573 = scalar_select %p2572, %s20, 3
      %p2574 = scmp.lt.s32.totalorder %s2570, 3
      %s2575 = scalar_select %p2574, %s2570, 3
      %p2576 = scmp.lt.s32.totalorder %s2571, 1
      %s2577 = scalar_select %p2576, %s2571, 1
      %s2578 = smul.addr %s2575, 2
      %s2579 = sadd.s32 %s2577, %s2578
      %s2580 = smul.addr %s2573, 8
      %s2581 = sadd.s32 %s2579, %s2580
      %s2582 = smul.addr %s2581, 4
      %s2583 = scalar_lea.vmem %s2, %s2582
      %s2584 = smul.u32 2, %s21
      %p2585 = scmp.lt.s32.totalorder %s20, 3
      %s2586 = scalar_select %p2585, %s20, 3
      %p2587 = scmp.lt.s32.totalorder %s22, 0
      %s2588 = scalar_select %p2587, %s22, 0
      %p2589 = scmp.lt.s32.totalorder %s2584, 1
      %s2590 = scalar_select %p2589, %s2584, 1
      %s2591 = smul.addr %s2588, 2
      %s2592 = sadd.s32 %s2590, %s2591
      %s2593 = smul.addr %s2586, 2
      %s2594 = sadd.s32 %s2592, %s2593
      %s2595 = smul.addr %s2594, 2
      %s2596 = scalar_lea.vmem %s3, %s2595
      // Predicated region
      $region29: #{generator_forward.11} parent=27 // pred_check
        %p2597 = pneg %p112
      $region30: #{generator_forward.11} parent=27 // pred_check_branch
        %2599 = sbr.rel (%p2597) target = $region32
      $region31: #{generator_forward.11} parent=27 // pred_region
        %s2600 = smul.u32 4, %s22
        %s2601 = smul.u32 2, %s21
      $region32: #{generator_forward.11} parent=27 // pred_fallthru
        _
      // Predicated region
      $region33: #{generator_forward.11} parent=27 // pred_check
        %p2602 = pneg %p142
      $region34: #{generator_forward.11} parent=27 // pred_check_branch
        %2604 = sbr.rel (%p2602) target = $region36
      $region35: #{generator_forward.11} parent=27 // pred_region
        %s2605 = smul.u32 2, %s21
      $region36: #{generator_forward.11} parent=27 // pred_fallthru
        _
    $region28: #{generator_forward.11} parent=5 // pred_fallthru
      _
    %p2606 = scmp.le.s32.totalorder 2, %s10
    // Predicated region
    $region37: #{generator_forward.11} parent=5 // pred_check
      %p2607 = pneg %p2606
    $region38: #{generator_forward.11} parent=5 // pred_check_branch
      %2609 = sbr.rel (%p2607) target = $region40
    $region39: #{generator_forward.11} parent=5 // pred_region
      %s2610 = ssub.s32 %s10, 2
      // Predicated region
      $region41: #{generator_forward.11} parent=39 // pred_check
        %p2611 = pneg %p118
      $region42: #{generator_forward.11} parent=39 // pred_check_branch
        %2613 = sbr.rel (%p2611) target = $region44
      $region43: #{generator_forward.11} parent=39 // pred_region
        %s2614 = smul.u32 4, %s25
        %s2615 = smul.u32 2, %s24
        %p2616 = scmp.lt.s32.totalorder %s23, 3
        %s2617 = scalar_select %p2616, %s23, 3
        %p2618 = scmp.lt.s32.totalorder %s2614, 3
        %s2619 = scalar_select %p2618, %s2614, 3
        %p2620 = scmp.lt.s32.totalorder %s2615, 1
        %s2621 = scalar_select %p2620, %s2615, 1
        %s2622 = smul.addr %s2619, 2
        %s2623 = sadd.s32 %s2621, %s2622
        %s2624 = smul.addr %s2617, 8
        %s2625 = sadd.s32 %s2623, %s2624
        %s2626 = smul.addr %s2625, 4
        %s2627 = scalar_lea.vmem %s2, %s2626
      $region44: #{generator_forward.11} parent=39 // pred_fallthru
        _
      // Predicated region
      $region45: #{generator_forward.11} parent=39 // pred_check
        %p2628 = pneg %p148
      $region46: #{generator_forward.11} parent=39 // pred_check_branch
        %2630 = sbr.rel (%p2628) target = $region48
      $region47: #{generator_forward.11} parent=39 // pred_region
        %s2631 = smul.u32 2, %s24
        %p2632 = scmp.lt.s32.totalorder %s23, 3
        %s2633 = scalar_select %p2632, %s23, 3
        %p2634 = scmp.lt.s32.totalorder %s25, 0
        %s2635 = scalar_select %p2634, %s25, 0
        %p2636 = scmp.lt.s32.totalorder %s2631, 1
        %s2637 = scalar_select %p2636, %s2631, 1
        %s2638 = smul.addr %s2635, 2
        %s2639 = sadd.s32 %s2637, %s2638
        %s2640 = smul.addr %s2633, 2
        %s2641 = sadd.s32 %s2639, %s2640
        %s2642 = smul.addr %s2641, 2
        %s2643 = scalar_lea.vmem %s3, %s2642
      $region48: #{generator_forward.11} parent=39 // pred_fallthru
        _
    $region40: #{generator_forward.11} parent=5 // pred_fallthru
      _
  $region6: #{generator_forward.11} parent=0 // loop_footer
    %s14 = sadd.s32 1, %s10
  $region7: #{generator_forward.11} parent=0 // loop_footer_branch
    %9 = sbr.rel target = $region3
  $region8: #{generator_forward.11} parent=0 // loop_exit
    _

// kernel: generator_forward.13
$region0: #{generator_forward.13}
  #allocation0 [shape = 'u32[]', space=smem, size = 0x4, offset = 0x4, fixed_abs, tag = 'smem constant byte address 0x4 - core index']
  #allocation1 [shape = 'u32[144,128]{1,0:T(1,128)}', space=vmem, size = 0x12000, scoped, tag = 'internal scratch']
  %s0 = inlined_call_operand.vmem [shape: bf16[4,128,1024], index: 0, kind: input, shape index: {}]
  %s1 = inlined_call_operand.vmem [shape: bf16[4,1024,128], index: 1, kind: input, shape index: {}]
  %s2 = inlined_call_operand.vmem [shape: bf16[4,128,128], index: 2, kind: output, shape index: {0}]
  %s3 = inlined_call_operand.vmem [shape: f32[4,1,2,128], index: 3, kind: output, shape index: {1}]
  %4 = xla_tuple %s2, %s3
  %s5 = sld [smem:[#allocation0]]
  $region49: #{generator_forward.13} parent=0
    _
  %s7 = ssub.s32 1, %s5
  %s8 = scalar_select 0, %s7, %s5
  loop: start=0, step=1, limit=6
  $region2: #{generator_forward.13} parent=0 // loop_pre_header
    _
  $region3: #{generator_forward.13} parent=0 // loop_header
    %s10 = sphi 0, %s14
    %p11 = scmp.ge.s32.totalorder %s10, 6
    %s17 = sphi 0, %s36
    %s18 = sphi 0, %s32
    %s19 = sphi 0, %s28
    %s20 = sphi 0, %s17
    %s21 = sphi 0, %s18
    %s22 = sphi 0, %s19
    %s23 = sphi 0, %s20
    %s24 = sphi 0, %s21
    %s25 = sphi 0, %s22
    %s41 = sphi 0, %s43
    %s44 = sphi 0, %s41
    %s45 = sphi 0, %s44
    %s61 = sphi 0, %s45
    %s69 = sphi 0, %s71
    %s72 = sphi 0, %s69
    %s73 = sphi 0, %s72
    %s89 = sphi 0, %s73
    %s99 = sphi 0, %s101
    %s102 = sphi 0, %s99
    %s103 = sphi 0, %s102
    %s119 = sphi 0, %s103
    %s129 = sphi 0, %s131
    %s132 = sphi 0, %s129
    %s133 = sphi 0, %s132
    %s149 = sphi 0, %s133
  $region4: #{generator_forward.13} parent=0 // loop_header_branch
    %13 = sbr.rel (%p11) target = $region8
  $region5: #{generator_forward.13} parent=0 // loop_body
    %s15 = ssub.s32 %s10, 1
    %s16 = ssub.s32 %s10, 2
    %s26 = sadd.s32 1, %s19
    %p27 = scmp.ge.s32.totalorder %s26, 1
    %s28 = scalar_select %p27, 0, %s26
    %s29 = sadd.s32 1, %s18
    %s30 = scalar_select %p27, %s29, %s18
    %p31 = scmp.ge.s32.totalorder %s30, 1
    %s32 = scalar_select %p31, 0, %s30
    %s33 = sadd.s32 1, %s17
    %s34 = scalar_select %p31, %s33, %s17
    %p35 = scmp.ge.s32.totalorder %s34, 4
    %s36 = scalar_select %p35, 0, %s34
    %s37 = ssub.s32 %s17, %s36
    %s38 = ssub.s32 %s19, %s28
    %s39 = sor.u32 %s37, %s38
    %p40 = scmp.eq.s32.totalorder %s39, 0
    %s42 = sadd.s32 %s41, 1
    %s43 = scalar_select %p40, %s41, %s42
    %p46 = pneg %p40
    %p47 = scmp.eq.s32.totalorder %s10, 3
    %p48 = por %p46, %p47
    %p49 = scmp.ne.s32.totalorder %s41, %s44
    %p50 = scmp.eq.s32.totalorder %s10, 0
    %p51 = por %p49, %p50
    %p52 = scmp.ne.s32.totalorder %s41, %s44
    %p53 = scmp.eq.s32.totalorder %s15, 3
    %p54 = por %p52, %p53
    %p55 = scmp.ne.s32.totalorder %s44, %s45
    %p56 = scmp.eq.s32.totalorder %s15, 0
    %p57 = por %p55, %p56
    %p58 = scmp.ne.s32.totalorder %s44, %s45
    %p59 = scmp.eq.s32.totalorder %s16, 3
    %p60 = por %p58, %p59
    %p62 = scmp.ne.s32.totalorder %s45, %s61
    %p63 = scmp.eq.s32.totalorder %s16, 0
    %p64 = por %p62, %p63
    %s65 = ssub.s32 %s17, %s36
    %s66 = ssub.s32 %s18, %s32
    %s67 = sor.u32 %s65, %s66
    %p68 = scmp.eq.s32.totalorder %s67, 0
    %s70 = sadd.s32 %s69, 1
    %s71 = scalar_select %p68, %s69, %s70
    %p74 = pneg %p68
    %p75 = scmp.eq.s32.totalorder %s10, 3
    %p76 = por %p74, %p75
    %p77 = scmp.ne.s32.totalorder %s69, %s72
    %p78 = scmp.eq.s32.totalorder %s10, 0
    %p79 = por %p77, %p78
    %p80 = scmp.ne.s32.totalorder %s69, %s72
    %p81 = scmp.eq.s32.totalorder %s15, 3
    %p82 = por %p80, %p81
    %p83 = scmp.ne.s32.totalorder %s72, %s73
    %p84 = scmp.eq.s32.totalorder %s15, 0
    %p85 = por %p83, %p84
    %p86 = scmp.ne.s32.totalorder %s72, %s73
    %p87 = scmp.eq.s32.totalorder %s16, 3
    %p88 = por %p86, %p87
    %p90 = scmp.ne.s32.totalorder %s73, %s89
    %p91 = scmp.eq.s32.totalorder %s16, 0
    %p92 = por %p90, %p91
    %s93 = ssub.s32 %s17, %s36
    %s94 = ssub.s32 %s19, %s28
    %s95 = sor.u32 %s93, %s94
    %s96 = ssub.s32 %s18, %s32
    %s97 = sor.u32 %s95, %s96
    %p98 = scmp.eq.s32.totalorder %s97, 0
    %s100 = sadd.s32 %s99, 1
    %s101 = scalar_select %p98, %s99, %s100
    %p104 = pneg %p98
    %p105 = scmp.eq.s32.totalorder %s10, 3
    %p106 = por %p104, %p105
    %p107 = scmp.ne.s32.totalorder %s99, %s102
    %p108 = scmp.eq.s32.totalorder %s10, 0
    %p109 = por %p107, %p108
    %p110 = scmp.ne.s32.totalorder %s99, %s102
    %p111 = scmp.eq.s32.totalorder %s15, 3
    %p112 = por %p110, %p111
    %p113 = scmp.ne.s32.totalorder %s102, %s103
    %p114 = scmp.eq.s32.totalorder %s15, 0
    %p115 = por %p113, %p114
    %p116 = scmp.ne.s32.totalorder %s102, %s103
    %p117 = scmp.eq.s32.totalorder %s16, 3
    %p118 = por %p116, %p117
    %p120 = scmp.ne.s32.totalorder %s103, %s119
    %p121 = scmp.eq.s32.totalorder %s16, 0
    %p122 = por %p120, %p121
    %s123 = ssub.s32 %s17, %s36
    %s124 = ssub.s32 %s19, %s28
    %s125 = sor.u32 %s123, %s124
    %s126 = ssub.s32 %s18, %s32
    %s127 = sor.u32 %s125, %s126
    %p128 = scmp.eq.s32.totalorder %s127, 0
    %s130 = sadd.s32 %s129, 1
    %s131 = scalar_select %p128, %s129, %s130
    %p134 = pneg %p128
    %p135 = scmp.eq.s32.totalorder %s10, 3
    %p136 = por %p134, %p135
    %p137 = scmp.ne.s32.totalorder %s129, %s132
    %p138 = scmp.eq.s32.totalorder %s10, 0
    %p139 = por %p137, %p138
    %p140 = scmp.ne.s32.totalorder %s129, %s132
    %p141 = scmp.eq.s32.totalorder %s15, 3
    %p142 = por %p140, %p141
    %p143 = scmp.ne.s32.totalorder %s132, %s133
    %p144 = scmp.eq.s32.totalorder %s15, 0
    %p145 = por %p143, %p144
    %p146 = scmp.ne.s32.totalorder %s132, %s133
    %p147 = scmp.eq.s32.totalorder %s16, 3
    %p148 = por %p146, %p147
    %p150 = scmp.ne.s32.totalorder %s133, %s149
    %p151 = scmp.eq.s32.totalorder %s16, 0
    %p152 = por %p150, %p151
    %p153 = scmp.le.s32.totalorder 1, %s10
    %p154 = scmp.lt.s32.totalorder %s10, 5
    %p155 = pnand %p153, %p154
    %p156 = pneg %p155
    // Predicated region
    $region9: #{generator_forward.13} parent=5 // pred_check
      _
    $region10: #{generator_forward.13} parent=5 // pred_check_branch
      %158 = sbr.rel (%p155) target = $region12
    $region11: #{generator_forward.13} parent=5 // pred_region
      %s159 = ssub.s32 %s10, 1
    $region12: #{generator_forward.13} parent=5 // pred_fallthru
      _
    %p160 = scmp.lt.s32.totalorder %s10, 4
    // Predicated region
    $region13: #{generator_forward.13} parent=5 // pred_check
      %p161 = pneg %p160
    $region14: #{generator_forward.13} parent=5 // pred_check_branch
      %163 = sbr.rel (%p161) target = $region16
    $region15: #{generator_forward.13} parent=5 // pred_region
      // Predicated region
      $region17: #{generator_forward.13} parent=15 // pred_check
        %p164 = pneg %p51
      $region18: #{generator_forward.13} parent=15 // pred_check_branch
        %166 = sbr.rel (%p164) target = $region20
      $region19: #{generator_forward.13} parent=15 // pred_region
        %s167 = smul.u32 16, %s19
        %p168 = scmp.lt.s32.totalorder %s17, 3
        %s169 = scalar_select %p168, %s17, 3
        %p170 = scmp.lt.s32.totalorder %s167, 15
        %s171 = scalar_select %p170, %s167, 15
        %s172 = smul.addr %s171, 8
        %s173 = smul.addr %s169, 128
        %s174 = sadd.s32 %s172, %s173
        %s175 = smul.addr %s174, 4
        %s176 = scalar_lea.vmem %s0, %s175
        %s177 = smul.u32 16, %s19
      $region20: #{generator_forward.13} parent=15 // pred_fallthru
        _
      // Predicated region
      $region21: #{generator_forward.13} parent=15 // pred_check
        %p178 = pneg %p79
      $region22: #{generator_forward.13} parent=15 // pred_check_branch
        %180 = sbr.rel (%p178) target = $region24
      $region23: #{generator_forward.13} parent=15 // pred_region
        %p181 = scmp.lt.s32.totalorder %s17, 3
        %s182 = scalar_select %p181, %s17, 3
        %p183 = scmp.lt.s32.totalorder %s18, 0
        %s184 = scalar_select %p183, %s18, 0
        %s185 = smul.addr %s182, 128
        %s186 = sadd.s32 %s184, %s185
        %s187 = smul.addr %s186, 4
        %s188 = scalar_lea.vmem %s1, %s187
      $region24: #{generator_forward.13} parent=15 // pred_fallthru
        _
    $region16: #{generator_forward.13} parent=5 // pred_fallthru
      _
    %p189 = scmp.le.s32.totalorder 1, %s10
    %p190 = scmp.lt.s32.totalorder %s10, 5
    %p191 = pnand %p189, %p190
    %p192 = pneg %p191
    // Predicated region
    $region25: #{generator_forward.13} parent=5 // pred_check
      _
    $region26: #{generator_forward.13} parent=5 // pred_check_branch
      %194 = sbr.rel (%p191) target = $region28
    $region27: #{generator_forward.13} parent=5 // pred_region
      %s195 = ssub.s32 %s10, 1
      %s196 = smul.u32 16, %s22
      %p197 = scmp.lt.s32.totalorder %s20, 3
      %s198 = scalar_select %p197, %s20, 3
      %p199 = scmp.lt.s32.totalorder %s196, 15
      %s200 = scalar_select %p199, %s196, 15
      %s201 = smul.addr %s200, 8
      %s202 = smul.addr %s198, 128
      %s203 = sadd.s32 %s201, %s202
      %s204 = smul.addr %s203, 4
      %s205 = scalar_lea.vmem %s0, %s204
      %p206 = pneg %p57
      %p207 = pneg %p54
      %p208 = scmp.lt.s32.totalorder %s20, 3
      %s209 = scalar_select %p208, %s20, 3
      %p210 = scmp.lt.s32.totalorder %s21, 0
      %s211 = scalar_select %p210, %s21, 0
      %s212 = smul.addr %s209, 128
      %s213 = sadd.s32 %s211, %s212
      %s214 = smul.addr %s213, 4
      %s215 = scalar_lea.vmem %s1, %s214
      %p216 = pneg %p85
      %p217 = pneg %p82
      %p218 = pneg %p115
      %p219 = pneg %p112
      %s220 = smul.u32 16, %s22
      %p221 = scmp.lt.s32.totalorder %s20, 3
      %s222 = scalar_select %p221, %s20, 3
      %p223 = scmp.lt.s32.totalorder %s220, 15
      %s224 = scalar_select %p223, %s220, 15
      %p225 = scmp.lt.s32.totalorder %s21, 0
      %s226 = scalar_select %p225, %s21, 0
      %s227 = sadd.s32 %s226, %s224
      %s228 = smul.addr %s222, 16
      %s229 = sadd.s32 %s227, %s228
      %s230 = smul.addr %s229, 4
      %s231 = scalar_lea.vmem %s2, %s230
      %p232 = pneg %p145
      %p233 = pneg %p142
      %p234 = scmp.lt.s32.totalorder %s20, 3
      %s235 = scalar_select %p234, %s20, 3
      %p236 = scmp.lt.s32.totalorder %s22, 0
      %s237 = scalar_select %p236, %s22, 0
      %p238 = scmp.lt.s32.totalorder %s21, 0
      %s239 = scalar_select %p238, %s21, 0
      %s240 = sadd.s32 %s239, %s237
      %s241 = sadd.s32 %s240, %s235
      %s242 = smul.addr %s241, 2
      %s243 = scalar_lea.vmem %s3, %s242
      %s244 = smul.u32 16, %s22
      %p245 = scmp.lt.s32.totalorder %s20, 3
      %s246 = scalar_select %p245, %s20, 3
      %p247 = scmp.lt.s32.totalorder %s244, 15
      %s248 = scalar_select %p247, %s244, 15
      %s249 = smul.addr %s248, 8
      %s250 = smul.addr %s246, 128
      %s251 = sadd.s32 %s249, %s250
      %s252 = smul.addr %s251, 4
      %s253 = scalar_lea.vmem %s0, %s252
      %s254 = smul.u32 16, %s22
      %p255 = scmp.lt.s32.totalorder %s20, 3
      %s256 = scalar_select %p255, %s20, 3
      %p257 = scmp.lt.s32.totalorder %s21, 0
      %s258 = scalar_select %p257, %s21, 0
      %s259 = smul.addr %s256, 128
      %s260 = sadd.s32 %s258, %s259
      %s261 = smul.addr %s260, 4
      %s262 = scalar_lea.vmem %s1, %s261
      %s263 = smul.u32 16, %s22
      %p264 = scmp.lt.s32.totalorder %s20, 3
      %s265 = scalar_select %p264, %s20, 3
      %p266 = scmp.lt.s32.totalorder %s263, 15
      %s267 = scalar_select %p266, %s263, 15
      %p268 = scmp.lt.s32.totalorder %s21, 0
      %s269 = scalar_select %p268, %s21, 0
      %s270 = sadd.s32 %s269, %s267
      %s271 = smul.addr %s265, 16
      %s272 = sadd.s32 %s270, %s271
      %s273 = smul.addr %s272, 4
      %s274 = scalar_lea.vmem %s2, %s273
      %s275 = smul.u32 16, %s22
      %p276 = scmp.lt.s32.totalorder %s20, 3
      %s277 = scalar_select %p276, %s20, 3
      %p278 = scmp.lt.s32.totalorder %s22, 0
      %s279 = scalar_select %p278, %s22, 0
      %p280 = scmp.lt.s32.totalorder %s21, 0
      %s281 = scalar_select %p280, %s21, 0
      %s282 = sadd.s32 %s281, %s279
      %s283 = sadd.s32 %s282, %s277
      %s284 = smul.addr %s283, 2
      %s285 = scalar_lea.vmem %s3, %s284
      %v287 = vld [vmem:[%s253] sm:$0xff]
      %v288 = vld [vmem:[%s253 + $0x8] sm:$0xff]
      %v289 = vld [vmem:[%s253 + $0x10] sm:$0xff]
      %v290 = vld [vmem:[%s253 + $0x18] sm:$0xff]
      %v291 = vld [vmem:[%s253 + $0x20] sm:$0xff]
      %v292 = vld [vmem:[%s253 + $0x28] sm:$0xff]
      %v293 = vld [vmem:[%s253 + $0x30] sm:$0xff]
      %v294 = vld [vmem:[%s253 + $0x38] sm:$0xff]
      %v295 = vld [vmem:[%s253 + $0x40] sm:$0xff]
      %v296 = vld [vmem:[%s253 + $0x48] sm:$0xff]
      %v297 = vld [vmem:[%s253 + $0x50] sm:$0xff]
      %v298 = vld [vmem:[%s253 + $0x58] sm:$0xff]
      %v299 = vld [vmem:[%s253 + $0x60] sm:$0xff]
      %v300 = vld [vmem:[%s253 + $0x68] sm:$0xff]
      %v301 = vld [vmem:[%s253 + $0x70] sm:$0xff]
      %v302 = vld [vmem:[%s253 + $0x78] sm:$0xff]
      %v303 = vld [vmem:[%s253 + $0x80] sm:$0xff]
      %v304 = vld [vmem:[%s253 + $0x88] sm:$0xff]
      %v305 = vld [vmem:[%s253 + $0x90] sm:$0xff]
      %v306 = vld [vmem:[%s253 + $0x98] sm:$0xff]
      %v307 = vld [vmem:[%s253 + $0xa0] sm:$0xff]
      %v308 = vld [vmem:[%s253 + $0xa8] sm:$0xff]
      %v309 = vld [vmem:[%s253 + $0xb0] sm:$0xff]
      %v310 = vld [vmem:[%s253 + $0xb8] sm:$0xff]
      %v311 = vld [vmem:[%s253 + $0xc0] sm:$0xff]
      %v312 = vld [vmem:[%s253 + $0xc8] sm:$0xff]
      %v313 = vld [vmem:[%s253 + $0xd0] sm:$0xff]
      %v314 = vld [vmem:[%s253 + $0xd8] sm:$0xff]
      %v315 = vld [vmem:[%s253 + $0xe0] sm:$0xff]
      %v316 = vld [vmem:[%s253 + $0xe8] sm:$0xff]
      %v317 = vld [vmem:[%s253 + $0xf0] sm:$0xff]
      %v318 = vld [vmem:[%s253 + $0xf8] sm:$0xff]
      %v319 = vld [vmem:[%s253 + $0x100] sm:$0xff]
      %v320 = vld [vmem:[%s253 + $0x108] sm:$0xff]
      %v321 = vld [vmem:[%s253 + $0x110] sm:$0xff]
      %v322 = vld [vmem:[%s253 + $0x118] sm:$0xff]
      %v323 = vld [vmem:[%s253 + $0x120] sm:$0xff]
      %v324 = vld [vmem:[%s253 + $0x128] sm:$0xff]
      %v325 = vld [vmem:[%s253 + $0x130] sm:$0xff]
      %v326 = vld [vmem:[%s253 + $0x138] sm:$0xff]
      %v327 = vld [vmem:[%s253 + $0x140] sm:$0xff]
      %v328 = vld [vmem:[%s253 + $0x148] sm:$0xff]
      %v329 = vld [vmem:[%s253 + $0x150] sm:$0xff]
      %v330 = vld [vmem:[%s253 + $0x158] sm:$0xff]
      %v331 = vld [vmem:[%s253 + $0x160] sm:$0xff]
      %v332 = vld [vmem:[%s253 + $0x168] sm:$0xff]
      %v333 = vld [vmem:[%s253 + $0x170] sm:$0xff]
      %v334 = vld [vmem:[%s253 + $0x178] sm:$0xff]
      %v335 = vld [vmem:[%s253 + $0x180] sm:$0xff]
      %v336 = vld [vmem:[%s253 + $0x188] sm:$0xff]
      %v337 = vld [vmem:[%s253 + $0x190] sm:$0xff]
      %v338 = vld [vmem:[%s253 + $0x198] sm:$0xff]
      %v339 = vld [vmem:[%s253 + $0x1a0] sm:$0xff]
      %v340 = vld [vmem:[%s253 + $0x1a8] sm:$0xff]
      %v341 = vld [vmem:[%s253 + $0x1b0] sm:$0xff]
      %v342 = vld [vmem:[%s253 + $0x1b8] sm:$0xff]
      %v343 = vld [vmem:[%s253 + $0x1c0] sm:$0xff]
      %v344 = vld [vmem:[%s253 + $0x1c8] sm:$0xff]
      %v345 = vld [vmem:[%s253 + $0x1d0] sm:$0xff]
      %v346 = vld [vmem:[%s253 + $0x1d8] sm:$0xff]
      %v347 = vld [vmem:[%s253 + $0x1e0] sm:$0xff]
      %v348 = vld [vmem:[%s253 + $0x1e8] sm:$0xff]
      %v349 = vld [vmem:[%s253 + $0x1f0] sm:$0xff]
      %v350 = vld [vmem:[%s253 + $0x1f8] sm:$0xff]
      %v351 = vld [vmem:[%s262] sm:$0xf]
      %v352 = vld [vmem:[%s262 + $0x4] sm:$0xf]
      %v353 = vld [vmem:[%s262 + $0x8] sm:$0xf]
      %v354 = vld [vmem:[%s262 + $0xc] sm:$0xf]
      %v355 = vld [vmem:[%s262 + $0x10] sm:$0xf]
      %v356 = vld [vmem:[%s262 + $0x14] sm:$0xf]
      %v357 = vld [vmem:[%s262 + $0x18] sm:$0xf]
      %v358 = vld [vmem:[%s262 + $0x1c] sm:$0xf]
      %v359 = vld [vmem:[%s262 + $0x20] sm:$0xf]
      %v360 = vld [vmem:[%s262 + $0x24] sm:$0xf]
      %v361 = vld [vmem:[%s262 + $0x28] sm:$0xf]
      %v362 = vld [vmem:[%s262 + $0x2c] sm:$0xf]
      %v363 = vld [vmem:[%s262 + $0x30] sm:$0xf]
      %v364 = vld [vmem:[%s262 + $0x34] sm:$0xf]
      %v365 = vld [vmem:[%s262 + $0x38] sm:$0xf]
      %v366 = vld [vmem:[%s262 + $0x3c] sm:$0xf]
      %v367 = vld [vmem:[%s262 + $0x40] sm:$0xf]
      %v368 = vld [vmem:[%s262 + $0x44] sm:$0xf]
      %v369 = vld [vmem:[%s262 + $0x48] sm:$0xf]
      %v370 = vld [vmem:[%s262 + $0x4c] sm:$0xf]
      %v371 = vld [vmem:[%s262 + $0x50] sm:$0xf]
      %v372 = vld [vmem:[%s262 + $0x54] sm:$0xf]
      %v373 = vld [vmem:[%s262 + $0x58] sm:$0xf]
      %v374 = vld [vmem:[%s262 + $0x5c] sm:$0xf]
      %v375 = vld [vmem:[%s262 + $0x60] sm:$0xf]
      %v376 = vld [vmem:[%s262 + $0x64] sm:$0xf]
      %v377 = vld [vmem:[%s262 + $0x68] sm:$0xf]
      %v378 = vld [vmem:[%s262 + $0x6c] sm:$0xf]
      %v379 = vld [vmem:[%s262 + $0x70] sm:$0xf]
      %v380 = vld [vmem:[%s262 + $0x74] sm:$0xf]
      %v381 = vld [vmem:[%s262 + $0x78] sm:$0xf]
      %v382 = vld [vmem:[%s262 + $0x7c] sm:$0xf]
      %v383 = vld [vmem:[%s262 + $0x80] sm:$0xf]
      %v384 = vld [vmem:[%s262 + $0x84] sm:$0xf]
      %v385 = vld [vmem:[%s262 + $0x88] sm:$0xf]
      %v386 = vld [vmem:[%s262 + $0x8c] sm:$0xf]
      %v387 = vld [vmem:[%s262 + $0x90] sm:$0xf]
      %v388 = vld [vmem:[%s262 + $0x94] sm:$0xf]
      %v389 = vld [vmem:[%s262 + $0x98] sm:$0xf]
      %v390 = vld [vmem:[%s262 + $0x9c] sm:$0xf]
      %v391 = vld [vmem:[%s262 + $0xa0] sm:$0xf]
      %v392 = vld [vmem:[%s262 + $0xa4] sm:$0xf]
      %v393 = vld [vmem:[%s262 + $0xa8] sm:$0xf]
      %v394 = vld [vmem:[%s262 + $0xac] sm:$0xf]
      %v395 = vld [vmem:[%s262 + $0xb0] sm:$0xf]
      %v396 = vld [vmem:[%s262 + $0xb4] sm:$0xf]
      %v397 = vld [vmem:[%s262 + $0xb8] sm:$0xf]
      %v398 = vld [vmem:[%s262 + $0xbc] sm:$0xf]
      %v399 = vld [vmem:[%s262 + $0xc0] sm:$0xf]
      %v400 = vld [vmem:[%s262 + $0xc4] sm:$0xf]
      %v401 = vld [vmem:[%s262 + $0xc8] sm:$0xf]
      %v402 = vld [vmem:[%s262 + $0xcc] sm:$0xf]
      %v403 = vld [vmem:[%s262 + $0xd0] sm:$0xf]
      %v404 = vld [vmem:[%s262 + $0xd4] sm:$0xf]
      %v405 = vld [vmem:[%s262 + $0xd8] sm:$0xf]
      %v406 = vld [vmem:[%s262 + $0xdc] sm:$0xf]
      %v407 = vld [vmem:[%s262 + $0xe0] sm:$0xf]
      %v408 = vld [vmem:[%s262 + $0xe4] sm:$0xf]
      %v409 = vld [vmem:[%s262 + $0xe8] sm:$0xf]
      %v410 = vld [vmem:[%s262 + $0xec] sm:$0xf]
      %v411 = vld [vmem:[%s262 + $0xf0] sm:$0xf]
      %v412 = vld [vmem:[%s262 + $0xf4] sm:$0xf]
      %v413 = vld [vmem:[%s262 + $0xf8] sm:$0xf]
      %v414 = vld [vmem:[%s262 + $0xfc] sm:$0xf]
      %v415 = vld [vmem:[%s262 + $0x100] sm:$0xf]
      %v416 = vld [vmem:[%s262 + $0x104] sm:$0xf]
      %v417 = vld [vmem:[%s262 + $0x108] sm:$0xf]
      %v418 = vld [vmem:[%s262 + $0x10c] sm:$0xf]
      %v419 = vld [vmem:[%s262 + $0x110] sm:$0xf]
      %v420 = vld [vmem:[%s262 + $0x114] sm:$0xf]
      %v421 = vld [vmem:[%s262 + $0x118] sm:$0xf]
      %v422 = vld [vmem:[%s262 + $0x11c] sm:$0xf]
      %v423 = vld [vmem:[%s262 + $0x120] sm:$0xf]
      %v424 = vld [vmem:[%s262 + $0x124] sm:$0xf]
      %v425 = vld [vmem:[%s262 + $0x128] sm:$0xf]
      %v426 = vld [vmem:[%s262 + $0x12c] sm:$0xf]
      %v427 = vld [vmem:[%s262 + $0x130] sm:$0xf]
      %v428 = vld [vmem:[%s262 + $0x134] sm:$0xf]
      %v429 = vld [vmem:[%s262 + $0x138] sm:$0xf]
      %v430 = vld [vmem:[%s262 + $0x13c] sm:$0xf]
      %v431 = vld [vmem:[%s262 + $0x140] sm:$0xf]
      %v432 = vld [vmem:[%s262 + $0x144] sm:$0xf]
      %v433 = vld [vmem:[%s262 + $0x148] sm:$0xf]
      %v434 = vld [vmem:[%s262 + $0x14c] sm:$0xf]
      %v435 = vld [vmem:[%s262 + $0x150] sm:$0xf]
      %v436 = vld [vmem:[%s262 + $0x154] sm:$0xf]
      %v437 = vld [vmem:[%s262 + $0x158] sm:$0xf]
      %v438 = vld [vmem:[%s262 + $0x15c] sm:$0xf]
      %v439 = vld [vmem:[%s262 + $0x160] sm:$0xf]
      %v440 = vld [vmem:[%s262 + $0x164] sm:$0xf]
      %v441 = vld [vmem:[%s262 + $0x168] sm:$0xf]
      %v442 = vld [vmem:[%s262 + $0x16c] sm:$0xf]
      %v443 = vld [vmem:[%s262 + $0x170] sm:$0xf]
      %v444 = vld [vmem:[%s262 + $0x174] sm:$0xf]
      %v445 = vld [vmem:[%s262 + $0x178] sm:$0xf]
      %v446 = vld [vmem:[%s262 + $0x17c] sm:$0xf]
      %v447 = vld [vmem:[%s262 + $0x180] sm:$0xf]
      %v448 = vld [vmem:[%s262 + $0x184] sm:$0xf]
      %v449 = vld [vmem:[%s262 + $0x188] sm:$0xf]
      %v450 = vld [vmem:[%s262 + $0x18c] sm:$0xf]
      %v451 = vld [vmem:[%s262 + $0x190] sm:$0xf]
      %v452 = vld [vmem:[%s262 + $0x194] sm:$0xf]
      %v453 = vld [vmem:[%s262 + $0x198] sm:$0xf]
      %v454 = vld [vmem:[%s262 + $0x19c] sm:$0xf]
      %v455 = vld [vmem:[%s262 + $0x1a0] sm:$0xf]
      %v456 = vld [vmem:[%s262 + $0x1a4] sm:$0xf]
      %v457 = vld [vmem:[%s262 + $0x1a8] sm:$0xf]
      %v458 = vld [vmem:[%s262 + $0x1ac] sm:$0xf]
      %v459 = vld [vmem:[%s262 + $0x1b0] sm:$0xf]
      %v460 = vld [vmem:[%s262 + $0x1b4] sm:$0xf]
      %v461 = vld [vmem:[%s262 + $0x1b8] sm:$0xf]
      %v462 = vld [vmem:[%s262 + $0x1bc] sm:$0xf]
      %v463 = vld [vmem:[%s262 + $0x1c0] sm:$0xf]
      %v464 = vld [vmem:[%s262 + $0x1c4] sm:$0xf]
      %v465 = vld [vmem:[%s262 + $0x1c8] sm:$0xf]
      %v466 = vld [vmem:[%s262 + $0x1cc] sm:$0xf]
      %v467 = vld [vmem:[%s262 + $0x1d0] sm:$0xf]
      %v468 = vld [vmem:[%s262 + $0x1d4] sm:$0xf]
      %v469 = vld [vmem:[%s262 + $0x1d8] sm:$0xf]
      %v470 = vld [vmem:[%s262 + $0x1dc] sm:$0xf]
      %v471 = vld [vmem:[%s262 + $0x1e0] sm:$0xf]
      %v472 = vld [vmem:[%s262 + $0x1e4] sm:$0xf]
      %v473 = vld [vmem:[%s262 + $0x1e8] sm:$0xf]
      %v474 = vld [vmem:[%s262 + $0x1ec] sm:$0xf]
      %v475 = vld [vmem:[%s262 + $0x1f0] sm:$0xf]
      %v476 = vld [vmem:[%s262 + $0x1f4] sm:$0xf]
      %v477 = vld [vmem:[%s262 + $0x1f8] sm:$0xf]
      %v478 = vld [vmem:[%s262 + $0x1fc] sm:$0xf]
      %v543 = vunpack.c.l.b16 %v287
      %v544 = vunpack.c.h.b16 %v287
      %v545 = vunpack.c.l.b16 %v288
      %v546 = vunpack.c.h.b16 %v288
      %v547 = vunpack.c.l.b16 %v289
      %v548 = vunpack.c.h.b16 %v289
      %v549 = vunpack.c.l.b16 %v290
      %v550 = vunpack.c.h.b16 %v290
      %v551 = vunpack.c.l.b16 %v291
      %v552 = vunpack.c.h.b16 %v291
      %v553 = vunpack.c.l.b16 %v292
      %v554 = vunpack.c.h.b16 %v292
      %v555 = vunpack.c.l.b16 %v293
      %v556 = vunpack.c.h.b16 %v293
      %v557 = vunpack.c.l.b16 %v294
      %v558 = vunpack.c.h.b16 %v294
      %v559 = vunpack.c.l.b16 %v295
      %v560 = vunpack.c.h.b16 %v295
      %v561 = vunpack.c.l.b16 %v296
      %v562 = vunpack.c.h.b16 %v296
      %v563 = vunpack.c.l.b16 %v297
      %v564 = vunpack.c.h.b16 %v297
      %v565 = vunpack.c.l.b16 %v298
      %v566 = vunpack.c.h.b16 %v298
      %v567 = vunpack.c.l.b16 %v299
      %v568 = vunpack.c.h.b16 %v299
      %v569 = vunpack.c.l.b16 %v300
      %v570 = vunpack.c.h.b16 %v300
      %v571 = vunpack.c.l.b16 %v301
      %v572 = vunpack.c.h.b16 %v301
      %v573 = vunpack.c.l.b16 %v302
      %v574 = vunpack.c.h.b16 %v302
      %v575 = vunpack.c.l.b16 %v303
      %v576 = vunpack.c.h.b16 %v303
      %v577 = vunpack.c.l.b16 %v304
      %v578 = vunpack.c.h.b16 %v304
      %v579 = vunpack.c.l.b16 %v305
      %v580 = vunpack.c.h.b16 %v305
      %v581 = vunpack.c.l.b16 %v306
      %v582 = vunpack.c.h.b16 %v306
      %v583 = vunpack.c.l.b16 %v307
      %v584 = vunpack.c.h.b16 %v307
      %v585 = vunpack.c.l.b16 %v308
      %v586 = vunpack.c.h.b16 %v308
      %v587 = vunpack.c.l.b16 %v309
      %v588 = vunpack.c.h.b16 %v309
      %v589 = vunpack.c.l.b16 %v310
      %v590 = vunpack.c.h.b16 %v310
      %v591 = vunpack.c.l.b16 %v311
      %v592 = vunpack.c.h.b16 %v311
      %v593 = vunpack.c.l.b16 %v312
      %v594 = vunpack.c.h.b16 %v312
      %v595 = vunpack.c.l.b16 %v313
      %v596 = vunpack.c.h.b16 %v313
      %v597 = vunpack.c.l.b16 %v314
      %v598 = vunpack.c.h.b16 %v314
      %v599 = vunpack.c.l.b16 %v315
      %v600 = vunpack.c.h.b16 %v315
      %v601 = vunpack.c.l.b16 %v316
      %v602 = vunpack.c.h.b16 %v316
      %v603 = vunpack.c.l.b16 %v317
      %v604 = vunpack.c.h.b16 %v317
      %v605 = vunpack.c.l.b16 %v318
      %v606 = vunpack.c.h.b16 %v318
      %v607 = vunpack.c.l.b16 %v319
      %v608 = vunpack.c.h.b16 %v319
      %v609 = vunpack.c.l.b16 %v320
      %v610 = vunpack.c.h.b16 %v320
      %v611 = vunpack.c.l.b16 %v321
      %v612 = vunpack.c.h.b16 %v321
      %v613 = vunpack.c.l.b16 %v322
      %v614 = vunpack.c.h.b16 %v322
      %v615 = vunpack.c.l.b16 %v323
      %v616 = vunpack.c.h.b16 %v323
      %v617 = vunpack.c.l.b16 %v324
      %v618 = vunpack.c.h.b16 %v324
      %v619 = vunpack.c.l.b16 %v325
      %v620 = vunpack.c.h.b16 %v325
      %v621 = vunpack.c.l.b16 %v326
      %v622 = vunpack.c.h.b16 %v326
      %v623 = vunpack.c.l.b16 %v327
      %v624 = vunpack.c.h.b16 %v327
      %v625 = vunpack.c.l.b16 %v328
      %v626 = vunpack.c.h.b16 %v328
      %v627 = vunpack.c.l.b16 %v329
      %v628 = vunpack.c.h.b16 %v329
      %v629 = vunpack.c.l.b16 %v330
      %v630 = vunpack.c.h.b16 %v330
      %v631 = vunpack.c.l.b16 %v331
      %v632 = vunpack.c.h.b16 %v331
      %v633 = vunpack.c.l.b16 %v332
      %v634 = vunpack.c.h.b16 %v332
      %v635 = vunpack.c.l.b16 %v333
      %v636 = vunpack.c.h.b16 %v333
      %v637 = vunpack.c.l.b16 %v334
      %v638 = vunpack.c.h.b16 %v334
      %v639 = vunpack.c.l.b16 %v335
      %v640 = vunpack.c.h.b16 %v335
      %v641 = vunpack.c.l.b16 %v336
      %v642 = vunpack.c.h.b16 %v336
      %v643 = vunpack.c.l.b16 %v337
      %v644 = vunpack.c.h.b16 %v337
      %v645 = vunpack.c.l.b16 %v338
      %v646 = vunpack.c.h.b16 %v338
      %v647 = vunpack.c.l.b16 %v339
      %v648 = vunpack.c.h.b16 %v339
      %v649 = vunpack.c.l.b16 %v340
      %v650 = vunpack.c.h.b16 %v340
      %v651 = vunpack.c.l.b16 %v341
      %v652 = vunpack.c.h.b16 %v341
      %v653 = vunpack.c.l.b16 %v342
      %v654 = vunpack.c.h.b16 %v342
      %v655 = vunpack.c.l.b16 %v343
      %v656 = vunpack.c.h.b16 %v343
      %v657 = vunpack.c.l.b16 %v344
      %v658 = vunpack.c.h.b16 %v344
      %v659 = vunpack.c.l.b16 %v345
      %v660 = vunpack.c.h.b16 %v345
      %v661 = vunpack.c.l.b16 %v346
      %v662 = vunpack.c.h.b16 %v346
      %v663 = vunpack.c.l.b16 %v347
      %v664 = vunpack.c.h.b16 %v347
      %v665 = vunpack.c.l.b16 %v348
      %v666 = vunpack.c.h.b16 %v348
      %v667 = vunpack.c.l.b16 %v349
      %v668 = vunpack.c.h.b16 %v349
      %v669 = vunpack.c.l.b16 %v350
      %v670 = vunpack.c.h.b16 %v350
      %v671 = vpack.c.b16 %v551, %v543
      %v672 = vpack.c.b16 %v552, %v544
      %v673 = vpack.c.b16 %v553, %v545
      %v674 = vpack.c.b16 %v554, %v546
      %v675 = vpack.c.b16 %v555, %v547
      %v676 = vpack.c.b16 %v556, %v548
      %v677 = vpack.c.b16 %v557, %v549
      %v678 = vpack.c.b16 %v558, %v550
      %v679 = vpack.c.b16 %v567, %v559
      %v680 = vpack.c.b16 %v568, %v560
      %v681 = vpack.c.b16 %v569, %v561
      %v682 = vpack.c.b16 %v570, %v562
      %v683 = vpack.c.b16 %v571, %v563
      %v684 = vpack.c.b16 %v572, %v564
      %v685 = vpack.c.b16 %v573, %v565
      %v686 = vpack.c.b16 %v574, %v566
      %v687 = vpack.c.b16 %v583, %v575
      %v688 = vpack.c.b16 %v584, %v576
      %v689 = vpack.c.b16 %v585, %v577
      %v690 = vpack.c.b16 %v586, %v578
      %v691 = vpack.c.b16 %v587, %v579
      %v692 = vpack.c.b16 %v588, %v580
      %v693 = vpack.c.b16 %v589, %v581
      %v694 = vpack.c.b16 %v590, %v582
      %v695 = vpack.c.b16 %v599, %v591
      %v696 = vpack.c.b16 %v600, %v592
      %v697 = vpack.c.b16 %v601, %v593
      %v698 = vpack.c.b16 %v602, %v594
      %v699 = vpack.c.b16 %v603, %v595
      %v700 = vpack.c.b16 %v604, %v596
      %v701 = vpack.c.b16 %v605, %v597
      %v702 = vpack.c.b16 %v606, %v598
      %v703 = vpack.c.b16 %v615, %v607
      %v704 = vpack.c.b16 %v616, %v608
      %v705 = vpack.c.b16 %v617, %v609
      %v706 = vpack.c.b16 %v618, %v610
      %v707 = vpack.c.b16 %v619, %v611
      %v708 = vpack.c.b16 %v620, %v612
      %v709 = vpack.c.b16 %v621, %v613
      %v710 = vpack.c.b16 %v622, %v614
      %v711 = vpack.c.b16 %v631, %v623
      %v712 = vpack.c.b16 %v632, %v624
      %v713 = vpack.c.b16 %v633, %v625
      %v714 = vpack.c.b16 %v634, %v626
      %v715 = vpack.c.b16 %v635, %v627
      %v716 = vpack.c.b16 %v636, %v628
      %v717 = vpack.c.b16 %v637, %v629
      %v718 = vpack.c.b16 %v638, %v630
      %v719 = vpack.c.b16 %v647, %v639
      %v720 = vpack.c.b16 %v648, %v640
      %v721 = vpack.c.b16 %v649, %v641
      %v722 = vpack.c.b16 %v650, %v642
      %v723 = vpack.c.b16 %v651, %v643
      %v724 = vpack.c.b16 %v652, %v644
      %v725 = vpack.c.b16 %v653, %v645
      %v726 = vpack.c.b16 %v654, %v646
      %v727 = vpack.c.b16 %v663, %v655
      %v728 = vpack.c.b16 %v664, %v656
      %v729 = vpack.c.b16 %v665, %v657
      %v730 = vpack.c.b16 %v666, %v658
      %v731 = vpack.c.b16 %v667, %v659
      %v732 = vpack.c.b16 %v668, %v660
      %v733 = vpack.c.b16 %v669, %v661
      %v734 = vpack.c.b16 %v670, %v662
      %v927 = vunpack.c.l.b16 %v351
      %v928 = vunpack.c.l.b16 %v352
      %v929 = vunpack.c.l.b16 %v353
      %v930 = vunpack.c.l.b16 %v354
      %v931 = vunpack.c.l.b16 %v355
      %v932 = vunpack.c.l.b16 %v356
      %v933 = vunpack.c.l.b16 %v357
      %v934 = vunpack.c.l.b16 %v358
      %v935 = vunpack.c.l.b16 %v359
      %v936 = vunpack.c.l.b16 %v360
      %v937 = vunpack.c.l.b16 %v361
      %v938 = vunpack.c.l.b16 %v362
      %v939 = vunpack.c.l.b16 %v363
      %v940 = vunpack.c.l.b16 %v364
      %v941 = vunpack.c.l.b16 %v365
      %v942 = vunpack.c.l.b16 %v366
      %v943 = vunpack.c.l.b16 %v367
      %v944 = vunpack.c.l.b16 %v368
      %v945 = vunpack.c.l.b16 %v369
      %v946 = vunpack.c.l.b16 %v370
      %v947 = vunpack.c.l.b16 %v371
      %v948 = vunpack.c.l.b16 %v372
      %v949 = vunpack.c.l.b16 %v373
      %v950 = vunpack.c.l.b16 %v374
      %v951 = vunpack.c.l.b16 %v375
      %v952 = vunpack.c.l.b16 %v376
      %v953 = vunpack.c.l.b16 %v377
      %v954 = vunpack.c.l.b16 %v378
      %v955 = vunpack.c.l.b16 %v379
      %v956 = vunpack.c.l.b16 %v380
      %v957 = vunpack.c.l.b16 %v381
      %v958 = vunpack.c.l.b16 %v382
      %v959 = vunpack.c.l.b16 %v383
      %v960 = vunpack.c.l.b16 %v384
      %v961 = vunpack.c.l.b16 %v385
      %v962 = vunpack.c.l.b16 %v386
      %v963 = vunpack.c.l.b16 %v387
      %v964 = vunpack.c.l.b16 %v388
      %v965 = vunpack.c.l.b16 %v389
      %v966 = vunpack.c.l.b16 %v390
      %v967 = vunpack.c.l.b16 %v391
      %v968 = vunpack.c.l.b16 %v392
      %v969 = vunpack.c.l.b16 %v393
      %v970 = vunpack.c.l.b16 %v394
      %v971 = vunpack.c.l.b16 %v395
      %v972 = vunpack.c.l.b16 %v396
      %v973 = vunpack.c.l.b16 %v397
      %v974 = vunpack.c.l.b16 %v398
      %v975 = vunpack.c.l.b16 %v399
      %v976 = vunpack.c.l.b16 %v400
      %v977 = vunpack.c.l.b16 %v401
      %v978 = vunpack.c.l.b16 %v402
      %v979 = vunpack.c.l.b16 %v403
      %v980 = vunpack.c.l.b16 %v404
      %v981 = vunpack.c.l.b16 %v405
      %v982 = vunpack.c.l.b16 %v406
      %v983 = vunpack.c.l.b16 %v407
      %v984 = vunpack.c.l.b16 %v408
      %v985 = vunpack.c.l.b16 %v409
      %v986 = vunpack.c.l.b16 %v410
      %v987 = vunpack.c.l.b16 %v411
      %v988 = vunpack.c.l.b16 %v412
      %v989 = vunpack.c.l.b16 %v413
      %v990 = vunpack.c.l.b16 %v414
      %v991 = vunpack.c.l.b16 %v415
      %v992 = vunpack.c.l.b16 %v416
      %v993 = vunpack.c.l.b16 %v417
      %v994 = vunpack.c.l.b16 %v418
      %v995 = vunpack.c.l.b16 %v419
      %v996 = vunpack.c.l.b16 %v420
      %v997 = vunpack.c.l.b16 %v421
      %v998 = vunpack.c.l.b16 %v422
      %v999 = vunpack.c.l.b16 %v423
      %v1000 = vunpack.c.l.b16 %v424
      %v1001 = vunpack.c.l.b16 %v425
      %v1002 = vunpack.c.l.b16 %v426
      %v1003 = vunpack.c.l.b16 %v427
      %v1004 = vunpack.c.l.b16 %v428
      %v1005 = vunpack.c.l.b16 %v429
      %v1006 = vunpack.c.l.b16 %v430
      %v1007 = vunpack.c.l.b16 %v431
      %v1008 = vunpack.c.l.b16 %v432
      %v1009 = vunpack.c.l.b16 %v433
      %v1010 = vunpack.c.l.b16 %v434
      %v1011 = vunpack.c.l.b16 %v435
      %v1012 = vunpack.c.l.b16 %v436
      %v1013 = vunpack.c.l.b16 %v437
      %v1014 = vunpack.c.l.b16 %v438
      %v1015 = vunpack.c.l.b16 %v439
      %v1016 = vunpack.c.l.b16 %v440
      %v1017 = vunpack.c.l.b16 %v441
      %v1018 = vunpack.c.l.b16 %v442
      %v1019 = vunpack.c.l.b16 %v443
      %v1020 = vunpack.c.l.b16 %v444
      %v1021 = vunpack.c.l.b16 %v445
      %v1022 = vunpack.c.l.b16 %v446
      %v1023 = vunpack.c.l.b16 %v447
      %v1024 = vunpack.c.l.b16 %v448
      %v1025 = vunpack.c.l.b16 %v449
      %v1026 = vunpack.c.l.b16 %v450
      %v1027 = vunpack.c.l.b16 %v451
      %v1028 = vunpack.c.l.b16 %v452
      %v1029 = vunpack.c.l.b16 %v453
      %v1030 = vunpack.c.l.b16 %v454
      %v1031 = vunpack.c.l.b16 %v455
      %v1032 = vunpack.c.l.b16 %v456
      %v1033 = vunpack.c.l.b16 %v457
      %v1034 = vunpack.c.l.b16 %v458
      %v1035 = vunpack.c.l.b16 %v459
      %v1036 = vunpack.c.l.b16 %v460
      %v1037 = vunpack.c.l.b16 %v461
      %v1038 = vunpack.c.l.b16 %v462
      %v1039 = vunpack.c.l.b16 %v463
      %v1040 = vunpack.c.l.b16 %v464
      %v1041 = vunpack.c.l.b16 %v465
      %v1042 = vunpack.c.l.b16 %v466
      %v1043 = vunpack.c.l.b16 %v467
      %v1044 = vunpack.c.l.b16 %v468
      %v1045 = vunpack.c.l.b16 %v469
      %v1046 = vunpack.c.l.b16 %v470
      %v1047 = vunpack.c.l.b16 %v471
      %v1048 = vunpack.c.l.b16 %v472
      %v1049 = vunpack.c.l.b16 %v473
      %v1050 = vunpack.c.l.b16 %v474
      %v1051 = vunpack.c.l.b16 %v475
      %v1052 = vunpack.c.l.b16 %v476
      %v1053 = vunpack.c.l.b16 %v477
      %v1054 = vunpack.c.l.b16 %v478
      %v1055 = vpack.c.b16 %v928, %v927
      %v1056 = vpack.c.b16 %v930, %v929
      %v1057 = vpack.c.b16 %v932, %v931
      %v1058 = vpack.c.b16 %v934, %v933
      %v1059 = vpack.c.b16 %v936, %v935
      %v1060 = vpack.c.b16 %v938, %v937
      %v1061 = vpack.c.b16 %v940, %v939
      %v1062 = vpack.c.b16 %v942, %v941
      %v1063 = vpack.c.b16 %v944, %v943
      %v1064 = vpack.c.b16 %v946, %v945
      %v1065 = vpack.c.b16 %v948, %v947
      %v1066 = vpack.c.b16 %v950, %v949
      %v1067 = vpack.c.b16 %v952, %v951
      %v1068 = vpack.c.b16 %v954, %v953
      %v1069 = vpack.c.b16 %v956, %v955
      %v1070 = vpack.c.b16 %v958, %v957
      %v1071 = vpack.c.b16 %v960, %v959
      %v1072 = vpack.c.b16 %v962, %v961
      %v1073 = vpack.c.b16 %v964, %v963
      %v1074 = vpack.c.b16 %v966, %v965
      %v1075 = vpack.c.b16 %v968, %v967
      %v1076 = vpack.c.b16 %v970, %v969
      %v1077 = vpack.c.b16 %v972, %v971
      %v1078 = vpack.c.b16 %v974, %v973
      %v1079 = vpack.c.b16 %v976, %v975
      %v1080 = vpack.c.b16 %v978, %v977
      %v1081 = vpack.c.b16 %v980, %v979
      %v1082 = vpack.c.b16 %v982, %v981
      %v1083 = vpack.c.b16 %v984, %v983
      %v1084 = vpack.c.b16 %v986, %v985
      %v1085 = vpack.c.b16 %v988, %v987
      %v1086 = vpack.c.b16 %v990, %v989
      %v1087 = vpack.c.b16 %v992, %v991
      %v1088 = vpack.c.b16 %v994, %v993
      %v1089 = vpack.c.b16 %v996, %v995
      %v1090 = vpack.c.b16 %v998, %v997
      %v1091 = vpack.c.b16 %v1000, %v999
      %v1092 = vpack.c.b16 %v1002, %v1001
      %v1093 = vpack.c.b16 %v1004, %v1003
      %v1094 = vpack.c.b16 %v1006, %v1005
      %v1095 = vpack.c.b16 %v1008, %v1007
      %v1096 = vpack.c.b16 %v1010, %v1009
      %v1097 = vpack.c.b16 %v1012, %v1011
      %v1098 = vpack.c.b16 %v1014, %v1013
      %v1099 = vpack.c.b16 %v1016, %v1015
      %v1100 = vpack.c.b16 %v1018, %v1017
      %v1101 = vpack.c.b16 %v1020, %v1019
      %v1102 = vpack.c.b16 %v1022, %v1021
      %v1103 = vpack.c.b16 %v1024, %v1023
      %v1104 = vpack.c.b16 %v1026, %v1025
      %v1105 = vpack.c.b16 %v1028, %v1027
      %v1106 = vpack.c.b16 %v1030, %v1029
      %v1107 = vpack.c.b16 %v1032, %v1031
      %v1108 = vpack.c.b16 %v1034, %v1033
      %v1109 = vpack.c.b16 %v1036, %v1035
      %v1110 = vpack.c.b16 %v1038, %v1037
      %v1111 = vpack.c.b16 %v1040, %v1039
      %v1112 = vpack.c.b16 %v1042, %v1041
      %v1113 = vpack.c.b16 %v1044, %v1043
      %v1114 = vpack.c.b16 %v1046, %v1045
      %v1115 = vpack.c.b16 %v1048, %v1047
      %v1116 = vpack.c.b16 %v1050, %v1049
      %v1117 = vpack.c.b16 %v1052, %v1051
      %v1118 = vpack.c.b16 %v1054, %v1053
      %1183 = vmatprep.subr.bf16.mxu0 0
      %1184 = vmatpush1.bf16.msra.mxu0 %v1055
      %1185 = vmatprep.subr.bf16.mxu0 0
      %1186 = vmatpush1.bf16.msra.mxu0 %v1056
      %1187 = vmatprep.subr.bf16.mxu0 0
      %1188 = vmatpush1.bf16.msra.mxu0 %v1057
      %1189 = vmatprep.subr.bf16.mxu0 0
      %1190 = vmatpush1.bf16.msra.mxu0 %v1058
      %1191 = vmatprep.subr.bf16.mxu0 0
      %1192 = vmatpush1.bf16.msra.mxu0 %v1059
      %1193 = vmatprep.subr.bf16.mxu0 0
      %1194 = vmatpush1.bf16.msra.mxu0 %v1060
      %1195 = vmatprep.subr.bf16.mxu0 0
      %1196 = vmatpush1.bf16.msra.mxu0 %v1061
      %1197 = vmatprep.subr.bf16.mxu0 0
      %1198 = vmatpush1.bf16.msra.mxu0 %v1062
      %1199 = vmatprep.subr.bf16.mxu0 0
      %1200 = vmatpush1.bf16.msra.mxu0 %v1063
      %1201 = vmatprep.subr.bf16.mxu0 0
      %1202 = vmatpush1.bf16.msra.mxu0 %v1064
      %1203 = vmatprep.subr.bf16.mxu0 0
      %1204 = vmatpush1.bf16.msra.mxu0 %v1065
      %1205 = vmatprep.subr.bf16.mxu0 0
      %1206 = vmatpush1.bf16.msra.mxu0 %v1066
      %1207 = vmatprep.subr.bf16.mxu0 0
      %1208 = vmatpush1.bf16.msra.mxu0 %v1067
      %1209 = vmatprep.subr.bf16.mxu0 0
      %1210 = vmatpush1.bf16.msra.mxu0 %v1068
      %1211 = vmatprep.subr.bf16.mxu0 0
      %1212 = vmatpush1.bf16.msra.mxu0 %v1069
      %1213 = vmatprep.subr.bf16.mxu0 0
      %1214 = vmatpush1.bf16.msra.mxu0 %v1070
      %1215 = vmatprep.mubr.bf16.mxu0 %v672
      %1216 = vmatmul.mubr.bf16.gmra.mrb[0].mxu0 %v671
      %v1217 = vpop.f32.mrb[0].mxu0
      %v1218 = vadd.f32 0.0, %v1217
      %v1219 = vpop.f32.mrb[0].mxu0
      %v1220 = vpop.f32.mrb[0].mxu0
      %v1221 = vadd.f32 0.0, %v1220
      %v1222 = vpop.f32.mrb[0].mxu0
      %1223 = vmatprep.mubr.bf16.mxu0 %v680
      %1224 = vmatmul.mubr.bf16.gmra.mrb[0].mxu0 %v679
      %v1225 = vpop.f32.mrb[0].mxu0
      %v1226 = vadd.f32 0.0, %v1225
      %v1227 = vpop.f32.mrb[0].mxu0
      %v1228 = vpop.f32.mrb[0].mxu0
      %v1229 = vadd.f32 0.0, %v1228
      %v1230 = vpop.f32.mrb[0].mxu0
      %1231 = vmatprep.mubr.bf16.mxu0 %v688
      %1232 = vmatmul.mubr.bf16.gmra.mrb[0].mxu0 %v687
      %v1233 = vpop.f32.mrb[0].mxu0
      %v1234 = vadd.f32 0.0, %v1233
      %v1235 = vpop.f32.mrb[0].mxu0
      %v1236 = vpop.f32.mrb[0].mxu0
      %v1237 = vadd.f32 0.0, %v1236
      %v1238 = vpop.f32.mrb[0].mxu0
      %1239 = vmatprep.mubr.bf16.mxu0 %v696
      %1240 = vmatmul.mubr.bf16.gmra.mrb[0].mxu0 %v695
      %v1241 = vpop.f32.mrb[0].mxu0
      %v1242 = vadd.f32 0.0, %v1241
      %v1243 = vpop.f32.mrb[0].mxu0
      %v1244 = vpop.f32.mrb[0].mxu0
      %v1245 = vadd.f32 0.0, %v1244
      %v1246 = vpop.f32.mrb[0].mxu0
      %1247 = vmatprep.mubr.bf16.mxu0 %v704
      %1248 = vmatmul.mubr.bf16.gmra.mrb[0].mxu0 %v703
      %v1249 = vpop.f32.mrb[0].mxu0
      %v1250 = vadd.f32 0.0, %v1249
      %v1251 = vpop.f32.mrb[0].mxu0
      %v1252 = vpop.f32.mrb[0].mxu0
      %v1253 = vadd.f32 0.0, %v1252
      %v1254 = vpop.f32.mrb[0].mxu0
      %1255 = vmatprep.mubr.bf16.mxu0 %v712
      %1256 = vmatmul.mubr.bf16.gmra.mrb[0].mxu0 %v711
      %v1257 = vpop.f32.mrb[0].mxu0
      %v1258 = vadd.f32 0.0, %v1257
      %v1259 = vpop.f32.mrb[0].mxu0
      %v1260 = vpop.f32.mrb[0].mxu0
      %v1261 = vadd.f32 0.0, %v1260
      %v1262 = vpop.f32.mrb[0].mxu0
      %1263 = vmatprep.mubr.bf16.mxu0 %v720
      %1264 = vmatmul.mubr.bf16.gmra.mrb[0].mxu0 %v719
      %v1265 = vpop.f32.mrb[0].mxu0
      %v1266 = vadd.f32 0.0, %v1265
      %v1267 = vpop.f32.mrb[0].mxu0
      %v1268 = vpop.f32.mrb[0].mxu0
      %v1269 = vadd.f32 0.0, %v1268
      %v1270 = vpop.f32.mrb[0].mxu0
      %1271 = vmatprep.mubr.bf16.mxu0 %v728
      %1272 = vmatmul.mubr.bf16.gmra.mrb[0].mxu0 %v727
      %v1273 = vpop.f32.mrb[0].mxu0
      %v1274 = vadd.f32 0.0, %v1273
      %v1275 = vpop.f32.mrb[0].mxu0
      %v1276 = vpop.f32.mrb[0].mxu0
      %v1277 = vadd.f32 0.0, %v1276
      %v1278 = vpop.f32.mrb[0].mxu0
      %1279 = vdwg.mxu0
      %1280 = vmatprep.subr.bf16.mxu0 0
      %1281 = vmatpush1.bf16.msra.mxu0 %v1071
      %1282 = vmatprep.subr.bf16.mxu0 0
      %1283 = vmatpush1.bf16.msra.mxu0 %v1072
      %1284 = vmatprep.subr.bf16.mxu0 0
      %1285 = vmatpush1.bf16.msra.mxu0 %v1073
      %1286 = vmatprep.subr.bf16.mxu0 0
      %1287 = vmatpush1.bf16.msra.mxu0 %v1074
      %1288 = vmatprep.subr.bf16.mxu0 0
      %1289 = vmatpush1.bf16.msra.mxu0 %v1075
      %1290 = vmatprep.subr.bf16.mxu0 0
      %1291 = vmatpush1.bf16.msra.mxu0 %v1076
      %1292 = vmatprep.subr.bf16.mxu0 0
      %1293 = vmatpush1.bf16.msra.mxu0 %v1077
      %1294 = vmatprep.subr.bf16.mxu0 0
      %1295 = vmatpush1.bf16.msra.mxu0 %v1078
      %1296 = vmatprep.subr.bf16.mxu0 0
      %1297 = vmatpush1.bf16.msra.mxu0 %v1079
      %1298 = vmatprep.subr.bf16.mxu0 0
      %1299 = vmatpush1.bf16.msra.mxu0 %v1080
      %1300 = vmatprep.subr.bf16.mxu0 0
      %1301 = vmatpush1.bf16.msra.mxu0 %v1081
      %1302 = vmatprep.subr.bf16.mxu0 0
      %1303 = vmatpush1.bf16.msra.mxu0 %v1082
      %1304 = vmatprep.subr.bf16.mxu0 0
      %1305 = vmatpush1.bf16.msra.mxu0 %v1083
      %1306 = vmatprep.subr.bf16.mxu0 0
      %1307 = vmatpush1.bf16.msra.mxu0 %v1084
      %1308 = vmatprep.subr.bf16.mxu0 0
      %1309 = vmatpush1.bf16.msra.mxu0 %v1085
      %1310 = vmatprep.subr.bf16.mxu0 0
      %1311 = vmatpush1.bf16.msra.mxu0 %v1086
      %1312 = vmatprep.mubr.bf16.mxu0 %v674
      %1313 = vmatmul.mubr.bf16.gmra.mrb[0].mxu0 %v673
      %v1314 = vpop.f32.mrb[0].mxu0
      %v1315 = vadd.f32 %v1218, %v1314
      %v1316 = vpop.f32.mrb[0].mxu0
      %v1317 = vpop.f32.mrb[0].mxu0
      %v1318 = vadd.f32 %v1221, %v1317
      %v1319 = vpop.f32.mrb[0].mxu0
      %1320 = vmatprep.mubr.bf16.mxu0 %v682
      %1321 = vmatmul.mubr.bf16.gmra.mrb[0].mxu0 %v681
      %v1322 = vpop.f32.mrb[0].mxu0
      %v1323 = vadd.f32 %v1226, %v1322
      %v1324 = vpop.f32.mrb[0].mxu0
      %v1325 = vpop.f32.mrb[0].mxu0
      %v1326 = vadd.f32 %v1229, %v1325
      %v1327 = vpop.f32.mrb[0].mxu0
      %1328 = vmatprep.mubr.bf16.mxu0 %v690
      %1329 = vmatmul.mubr.bf16.gmra.mrb[0].mxu0 %v689
      %v1330 = vpop.f32.mrb[0].mxu0
      %v1331 = vadd.f32 %v1234, %v1330
      %v1332 = vpop.f32.mrb[0].mxu0
      %v1333 = vpop.f32.mrb[0].mxu0
      %v1334 = vadd.f32 %v1237, %v1333
      %v1335 = vpop.f32.mrb[0].mxu0
      %1336 = vmatprep.mubr.bf16.mxu0 %v698
      %1337 = vmatmul.mubr.bf16.gmra.mrb[0].mxu0 %v697
      %v1338 = vpop.f32.mrb[0].mxu0
      %v1339 = vadd.f32 %v1242, %v1338
      %v1340 = vpop.f32.mrb[0].mxu0
      %v1341 = vpop.f32.mrb[0].mxu0
      %v1342 = vadd.f32 %v1245, %v1341
      %v1343 = vpop.f32.mrb[0].mxu0
      %1344 = vmatprep.mubr.bf16.mxu0 %v706
      %1345 = vmatmul.mubr.bf16.gmra.mrb[0].mxu0 %v705
      %v1346 = vpop.f32.mrb[0].mxu0
      %v1347 = vadd.f32 %v1250, %v1346
      %v1348 = vpop.f32.mrb[0].mxu0
      %v1349 = vpop.f32.mrb[0].mxu0
      %v1350 = vadd.f32 %v1253, %v1349
      %v1351 = vpop.f32.mrb[0].mxu0
      %1352 = vmatprep.mubr.bf16.mxu0 %v714
      %1353 = vmatmul.mubr.bf16.gmra.mrb[0].mxu0 %v713
      %v1354 = vpop.f32.mrb[0].mxu0
      %v1355 = vadd.f32 %v1258, %v1354
      %v1356 = vpop.f32.mrb[0].mxu0
      %v1357 = vpop.f32.mrb[0].mxu0
      %v1358 = vadd.f32 %v1261, %v1357
      %v1359 = vpop.f32.mrb[0].mxu0
      %1360 = vmatprep.mubr.bf16.mxu0 %v722
      %1361 = vmatmul.mubr.bf16.gmra.mrb[0].mxu0 %v721
      %v1362 = vpop.f32.mrb[0].mxu0
      %v1363 = vadd.f32 %v1266, %v1362
      %v1364 = vpop.f32.mrb[0].mxu0
      %v1365 = vpop.f32.mrb[0].mxu0
      %v1366 = vadd.f32 %v1269, %v1365
      %v1367 = vpop.f32.mrb[0].mxu0
      %1368 = vmatprep.mubr.bf16.mxu0 %v730
      %1369 = vmatmul.mubr.bf16.gmra.mrb[0].mxu0 %v729
      %v1370 = vpop.f32.mrb[0].mxu0
      %v1371 = vadd.f32 %v1274, %v1370
      %v1372 = vpop.f32.mrb[0].mxu0
      %v1373 = vpop.f32.mrb[0].mxu0
      %v1374 = vadd.f32 %v1277, %v1373
      %v1375 = vpop.f32.mrb[0].mxu0
      %1376 = vdwg.mxu0
      %1377 = vmatprep.subr.bf16.mxu0 0
      %1378 = vmatpush1.bf16.msra.mxu0 %v1087
      %1379 = vmatprep.subr.bf16.mxu0 0
      %1380 = vmatpush1.bf16.msra.mxu0 %v1088
      %1381 = vmatprep.subr.bf16.mxu0 0
      %1382 = vmatpush1.bf16.msra.mxu0 %v1089
      %1383 = vmatprep.subr.bf16.mxu0 0
      %1384 = vmatpush1.bf16.msra.mxu0 %v1090
      %1385 = vmatprep.subr.bf16.mxu0 0
      %1386 = vmatpush1.bf16.msra.mxu0 %v1091
      %1387 = vmatprep.subr.bf16.mxu0 0
      %1388 = vmatpush1.bf16.msra.mxu0 %v1092
      %1389 = vmatprep.subr.bf16.mxu0 0
      %1390 = vmatpush1.bf16.msra.mxu0 %v1093
      %1391 = vmatprep.subr.bf16.mxu0 0
      %1392 = vmatpush1.bf16.msra.mxu0 %v1094
      %1393 = vmatprep.subr.bf16.mxu0 0
      %1394 = vmatpush1.bf16.msra.mxu0 %v1095
      %1395 = vmatprep.subr.bf16.mxu0 0
      %1396 = vmatpush1.bf16.msra.mxu0 %v1096
      %1397 = vmatprep.subr.bf16.mxu0 0
      %1398 = vmatpush1.bf16.msra.mxu0 %v1097
      %1399 = vmatprep.subr.bf16.mxu0 0
      %1400 = vmatpush1.bf16.msra.mxu0 %v1098
      %1401 = vmatprep.subr.bf16.mxu0 0
      %1402 = vmatpush1.bf16.msra.mxu0 %v1099
      %1403 = vmatprep.subr.bf16.mxu0 0
      %1404 = vmatpush1.bf16.msra.mxu0 %v1100
      %1405 = vmatprep.subr.bf16.mxu0 0
      %1406 = vmatpush1.bf16.msra.mxu0 %v1101
      %1407 = vmatprep.subr.bf16.mxu0 0
      %1408 = vmatpush1.bf16.msra.mxu0 %v1102
      %1409 = vmatprep.mubr.bf16.mxu0 %v676
      %1410 = vmatmul.mubr.bf16.gmra.mrb[0].mxu0 %v675
      %v1411 = vpop.f32.mrb[0].mxu0
      %v1412 = vadd.f32 %v1315, %v1411
      %v1413 = vpop.f32.mrb[0].mxu0
      %v1414 = vpop.f32.mrb[0].mxu0
      %v1415 = vadd.f32 %v1318, %v1414
      %v1416 = vpop.f32.mrb[0].mxu0
      %1417 = vmatprep.mubr.bf16.mxu0 %v684
      %1418 = vmatmul.mubr.bf16.gmra.mrb[0].mxu0 %v683
      %v1419 = vpop.f32.mrb[0].mxu0
      %v1420 = vadd.f32 %v1323, %v1419
      %v1421 = vpop.f32.mrb[0].mxu0
      %v1422 = vpop.f32.mrb[0].mxu0
      %v1423 = vadd.f32 %v1326, %v1422
      %v1424 = vpop.f32.mrb[0].mxu0
      %1425 = vmatprep.mubr.bf16.mxu0 %v692
      %1426 = vmatmul.mubr.bf16.gmra.mrb[0].mxu0 %v691
      %v1427 = vpop.f32.mrb[0].mxu0
      %v1428 = vadd.f32 %v1331, %v1427
      %v1429 = vpop.f32.mrb[0].mxu0
      %v1430 = vpop.f32.mrb[0].mxu0
      %v1431 = vadd.f32 %v1334, %v1430
      %v1432 = vpop.f32.mrb[0].mxu0
      %1433 = vmatprep.mubr.bf16.mxu0 %v700
      %1434 = vmatmul.mubr.bf16.gmra.mrb[0].mxu0 %v699
      %v1435 = vpop.f32.mrb[0].mxu0
      %v1436 = vadd.f32 %v1339, %v1435
      %v1437 = vpop.f32.mrb[0].mxu0
      %v1438 = vpop.f32.mrb[0].mxu0
      %v1439 = vadd.f32 %v1342, %v1438
      %v1440 = vpop.f32.mrb[0].mxu0
      %1441 = vmatprep.mubr.bf16.mxu0 %v708
      %1442 = vmatmul.mubr.bf16.gmra.mrb[0].mxu0 %v707
      %v1443 = vpop.f32.mrb[0].mxu0
      %v1444 = vadd.f32 %v1347, %v1443
      %v1445 = vpop.f32.mrb[0].mxu0
      %v1446 = vpop.f32.mrb[0].mxu0
      %v1447 = vadd.f32 %v1350, %v1446
      %v1448 = vpop.f32.mrb[0].mxu0
      %1449 = vmatprep.mubr.bf16.mxu0 %v716
      %1450 = vmatmul.mubr.bf16.gmra.mrb[0].mxu0 %v715
      %v1451 = vpop.f32.mrb[0].mxu0
      %v1452 = vadd.f32 %v1355, %v1451
      %v1453 = vpop.f32.mrb[0].mxu0
      %v1454 = vpop.f32.mrb[0].mxu0
      %v1455 = vadd.f32 %v1358, %v1454
      %v1456 = vpop.f32.mrb[0].mxu0
      %1457 = vmatprep.mubr.bf16.mxu0 %v724
      %1458 = vmatmul.mubr.bf16.gmra.mrb[0].mxu0 %v723
      %v1459 = vpop.f32.mrb[0].mxu0
      %v1460 = vadd.f32 %v1363, %v1459
      %v1461 = vpop.f32.mrb[0].mxu0
      %v1462 = vpop.f32.mrb[0].mxu0
      %v1463 = vadd.f32 %v1366, %v1462
      %v1464 = vpop.f32.mrb[0].mxu0
      %1465 = vmatprep.mubr.bf16.mxu0 %v732
      %1466 = vmatmul.mubr.bf16.gmra.mrb[0].mxu0 %v731
      %v1467 = vpop.f32.mrb[0].mxu0
      %v1468 = vadd.f32 %v1371, %v1467
      %v1469 = vpop.f32.mrb[0].mxu0
      %v1470 = vpop.f32.mrb[0].mxu0
      %v1471 = vadd.f32 %v1374, %v1470
      %v1472 = vpop.f32.mrb[0].mxu0
      %1473 = vdwg.mxu0
      %1474 = vmatprep.subr.bf16.mxu0 0
      %1475 = vmatpush1.bf16.msra.mxu0 %v1103
      %1476 = vmatprep.subr.bf16.mxu0 0
      %1477 = vmatpush1.bf16.msra.mxu0 %v1104
      %1478 = vmatprep.subr.bf16.mxu0 0
      %1479 = vmatpush1.bf16.msra.mxu0 %v1105
      %1480 = vmatprep.subr.bf16.mxu0 0
      %1481 = vmatpush1.bf16.msra.mxu0 %v1106
      %1482 = vmatprep.subr.bf16.mxu0 0
      %1483 = vmatpush1.bf16.msra.mxu0 %v1107
      %1484 = vmatprep.subr.bf16.mxu0 0
      %1485 = vmatpush1.bf16.msra.mxu0 %v1108
      %1486 = vmatprep.subr.bf16.mxu0 0
      %1487 = vmatpush1.bf16.msra.mxu0 %v1109
      %1488 = vmatprep.subr.bf16.mxu0 0
      %1489 = vmatpush1.bf16.msra.mxu0 %v1110
      %1490 = vmatprep.subr.bf16.mxu0 0
      %1491 = vmatpush1.bf16.msra.mxu0 %v1111
      %1492 = vmatprep.subr.bf16.mxu0 0
      %1493 = vmatpush1.bf16.msra.mxu0 %v1112
      %1494 = vmatprep.subr.bf16.mxu0 0
      %1495 = vmatpush1.bf16.msra.mxu0 %v1113
      %1496 = vmatprep.subr.bf16.mxu0 0
      %1497 = vmatpush1.bf16.msra.mxu0 %v1114
      %1498 = vmatprep.subr.bf16.mxu0 0
      %1499 = vmatpush1.bf16.msra.mxu0 %v1115
      %1500 = vmatprep.subr.bf16.mxu0 0
      %1501 = vmatpush1.bf16.msra.mxu0 %v1116
      %1502 = vmatprep.subr.bf16.mxu0 0
      %1503 = vmatpush1.bf16.msra.mxu0 %v1117
      %1504 = vmatprep.subr.bf16.mxu0 0
      %1505 = vmatpush1.bf16.msra.mxu0 %v1118
      %1506 = vmatprep.mubr.bf16.mxu0 %v678
      %1507 = vmatmul.mubr.bf16.gmra.mrb[0].mxu0 %v677
      %v1508 = vpop.f32.mrb[0].mxu0
      %v1509 = vadd.f32 %v1412, %v1508
      %v1510 = vpop.f32.mrb[0].mxu0
      %v1511 = vpop.f32.mrb[0].mxu0
      %v1512 = vadd.f32 %v1415, %v1511
      %v1513 = vpop.f32.mrb[0].mxu0
      %1514 = vmatprep.mubr.bf16.mxu0 %v686
      %1515 = vmatmul.mubr.bf16.gmra.mrb[0].mxu0 %v685
      %v1516 = vpop.f32.mrb[0].mxu0
      %v1517 = vadd.f32 %v1420, %v1516
      %v1518 = vpop.f32.mrb[0].mxu0
      %v1519 = vpop.f32.mrb[0].mxu0
      %v1520 = vadd.f32 %v1423, %v1519
      %v1521 = vpop.f32.mrb[0].mxu0
      %1522 = vmatprep.mubr.bf16.mxu0 %v694
      %1523 = vmatmul.mubr.bf16.gmra.mrb[0].mxu0 %v693
      %v1524 = vpop.f32.mrb[0].mxu0
      %v1525 = vadd.f32 %v1428, %v1524
      %v1526 = vpop.f32.mrb[0].mxu0
      %v1527 = vpop.f32.mrb[0].mxu0
      %v1528 = vadd.f32 %v1431, %v1527
      %v1529 = vpop.f32.mrb[0].mxu0
      %1530 = vmatprep.mubr.bf16.mxu0 %v702
      %1531 = vmatmul.mubr.bf16.gmra.mrb[0].mxu0 %v701
      %v1532 = vpop.f32.mrb[0].mxu0
      %v1533 = vadd.f32 %v1436, %v1532
      %v1534 = vpop.f32.mrb[0].mxu0
      %v1535 = vpop.f32.mrb[0].mxu0
      %v1536 = vadd.f32 %v1439, %v1535
      %v1537 = vpop.f32.mrb[0].mxu0
      %1538 = vmatprep.mubr.bf16.mxu0 %v710
      %1539 = vmatmul.mubr.bf16.gmra.mrb[0].mxu0 %v709
      %v1540 = vpop.f32.mrb[0].mxu0
      %v1541 = vadd.f32 %v1444, %v1540
      %v1542 = vpop.f32.mrb[0].mxu0
      %v1543 = vpop.f32.mrb[0].mxu0
      %v1544 = vadd.f32 %v1447, %v1543
      %v1545 = vpop.f32.mrb[0].mxu0
      %1546 = vmatprep.mubr.bf16.mxu0 %v718
      %1547 = vmatmul.mubr.bf16.gmra.mrb[0].mxu0 %v717
      %v1548 = vpop.f32.mrb[0].mxu0
      %v1549 = vadd.f32 %v1452, %v1548
      %v1550 = vpop.f32.mrb[0].mxu0
      %v1551 = vpop.f32.mrb[0].mxu0
      %v1552 = vadd.f32 %v1455, %v1551
      %v1553 = vpop.f32.mrb[0].mxu0
      %1554 = vmatprep.mubr.bf16.mxu0 %v726
      %1555 = vmatmul.mubr.bf16.gmra.mrb[0].mxu0 %v725
      %v1556 = vpop.f32.mrb[0].mxu0
      %v1557 = vadd.f32 %v1460, %v1556
      %v1558 = vpop.f32.mrb[0].mxu0
      %v1559 = vpop.f32.mrb[0].mxu0
      %v1560 = vadd.f32 %v1463, %v1559
      %v1561 = vpop.f32.mrb[0].mxu0
      %1562 = vmatprep.mubr.bf16.mxu0 %v734
      %1563 = vmatmul.mubr.bf16.gmra.mrb[0].mxu0 %v733
      %v1564 = vpop.f32.mrb[0].mxu0
      %v1565 = vadd.f32 %v1468, %v1564
      %v1566 = vpop.f32.mrb[0].mxu0
      %v1567 = vpop.f32.mrb[0].mxu0
      %v1568 = vadd.f32 %v1471, %v1567
      %v1569 = vpop.f32.mrb[0].mxu0
      %1570 = vdwg.mxu0
      %v1571 = vadd.f32 %v1509, %v1512
      %v1572 = vadd.f32 %v1571, %v1517
      %v1573 = vadd.f32 %v1572, %v1520
      %v1574 = vadd.f32 %v1573, %v1525
      %v1575 = vadd.f32 %v1574, %v1528
      %v1576 = vadd.f32 %v1575, %v1533
      %v1577 = vadd.f32 %v1576, %v1536
      %v1578 = vadd.f32 %v1577, %v1541
      %v1579 = vadd.f32 %v1578, %v1544
      %v1580 = vadd.f32 %v1579, %v1549
      %v1581 = vadd.f32 %v1580, %v1552
      %v1582 = vadd.f32 %v1581, %v1557
      %v1583 = vadd.f32 %v1582, %v1560
      %v1584 = vadd.f32 %v1583, %v1565
      %v1585 = vadd.f32 %v1584, %v1568
      %v1586 = vrot.slane %v1585, 4
      %v1587 = vadd.f32 %v1585, %v1586
      %v1588 = vrot.slane %v1587, 2
      %v1589 = vadd.f32 %v1587, %v1588
      %v1590 = vrot.slane %v1589, 1
      %v1591 = vadd.f32 %v1589, %v1590
      %1592 = vst [vmem:[%s285] sm:$0x1] %v1591
      %v1593 = vmul.f32 %v1509, %v1509
      %v1594 = vmul.f32 %v1512, %v1512
      %v1595 = vmul.f32 %v1517, %v1517
      %v1596 = vmul.f32 %v1520, %v1520
      %v1597 = vmul.f32 %v1525, %v1525
      %v1598 = vmul.f32 %v1528, %v1528
      %v1599 = vmul.f32 %v1533, %v1533
      %v1600 = vmul.f32 %v1536, %v1536
      %v1601 = vmul.f32 %v1541, %v1541
      %v1602 = vmul.f32 %v1544, %v1544
      %v1603 = vmul.f32 %v1549, %v1549
      %v1604 = vmul.f32 %v1552, %v1552
      %v1605 = vmul.f32 %v1557, %v1557
      %v1606 = vmul.f32 %v1560, %v1560
      %v1607 = vmul.f32 %v1565, %v1565
      %v1608 = vmul.f32 %v1568, %v1568
      %v1609 = vadd.f32 %v1593, %v1594
      %v1610 = vadd.f32 %v1609, %v1595
      %v1611 = vadd.f32 %v1610, %v1596
      %v1612 = vadd.f32 %v1611, %v1597
      %v1613 = vadd.f32 %v1612, %v1598
      %v1614 = vadd.f32 %v1613, %v1599
      %v1615 = vadd.f32 %v1614, %v1600
      %v1616 = vadd.f32 %v1615, %v1601
      %v1617 = vadd.f32 %v1616, %v1602
      %v1618 = vadd.f32 %v1617, %v1603
      %v1619 = vadd.f32 %v1618, %v1604
      %v1620 = vadd.f32 %v1619, %v1605
      %v1621 = vadd.f32 %v1620, %v1606
      %v1622 = vadd.f32 %v1621, %v1607
      %v1623 = vadd.f32 %v1622, %v1608
      %v1624 = vrot.slane %v1623, 4
      %v1625 = vadd.f32 %v1623, %v1624
      %v1626 = vrot.slane %v1625, 2
      %v1627 = vadd.f32 %v1625, %v1626
      %v1628 = vrot.slane %v1627, 1
      %v1629 = vadd.f32 %v1627, %v1628
      %1630 = vst [vmem:[%s285 + $0x1] sm:$0x1] %v1629
      %v1631 = vpack.c.bf16 %v1512, %v1509
      %v1632 = vpack.c.bf16 %v1520, %v1517
      %v1633 = vpack.c.bf16 %v1528, %v1525
      %v1634 = vpack.c.bf16 %v1536, %v1533
      %v1635 = vpack.c.bf16 %v1544, %v1541
      %v1636 = vpack.c.bf16 %v1552, %v1549
      %v1637 = vpack.c.bf16 %v1560, %v1557
      %v1638 = vpack.c.bf16 %v1568, %v1565
      %v1647 = vunpack.c.l.b16 %v1631
      %v1648 = vunpack.c.h.b16 %v1631
      %v1649 = vunpack.c.l.b16 %v1632
      %v1650 = vunpack.c.h.b16 %v1632
      %v1651 = vunpack.c.l.b16 %v1633
      %v1652 = vunpack.c.h.b16 %v1633
      %v1653 = vunpack.c.l.b16 %v1634
      %v1654 = vunpack.c.h.b16 %v1634
      %v1655 = vunpack.c.l.b16 %v1635
      %v1656 = vunpack.c.h.b16 %v1635
      %v1657 = vunpack.c.l.b16 %v1636
      %v1658 = vunpack.c.h.b16 %v1636
      %v1659 = vunpack.c.l.b16 %v1637
      %v1660 = vunpack.c.h.b16 %v1637
      %v1661 = vunpack.c.l.b16 %v1638
      %v1662 = vunpack.c.h.b16 %v1638
      %v1663 = vpack.c.b16 %v1647, %v1647
      %v1664 = vpack.c.b16 %v1648, %v1648
      %v1665 = vpack.c.b16 %v1649, %v1649
      %v1666 = vpack.c.b16 %v1650, %v1650
      %v1667 = vpack.c.b16 %v1651, %v1651
      %v1668 = vpack.c.b16 %v1652, %v1652
      %v1669 = vpack.c.b16 %v1653, %v1653
      %v1670 = vpack.c.b16 %v1654, %v1654
      %v1671 = vpack.c.b16 %v1655, %v1655
      %v1672 = vpack.c.b16 %v1656, %v1656
      %v1673 = vpack.c.b16 %v1657, %v1657
      %v1674 = vpack.c.b16 %v1658, %v1658
      %v1675 = vpack.c.b16 %v1659, %v1659
      %v1676 = vpack.c.b16 %v1660, %v1660
      %v1677 = vpack.c.b16 %v1661, %v1661
      %v1678 = vpack.c.b16 %v1662, %v1662
      %1695 = vst [vmem:[%s274] sm:$0xf] %v1663
      %1696 = vst [vmem:[%s274 + $0x4] sm:$0xf] %v1664
      %1697 = vst [vmem:[%s274 + $0x8] sm:$0xf] %v1665
      %1698 = vst [vmem:[%s274 + $0xc] sm:$0xf] %v1666
      %1699 = vst [vmem:[%s274 + $0x10] sm:$0xf] %v1667
      %1700 = vst [vmem:[%s274 + $0x14] sm:$0xf] %v1668
      %1701 = vst [vmem:[%s274 + $0x18] sm:$0xf] %v1669
      %1702 = vst [vmem:[%s274 + $0x1c] sm:$0xf] %v1670
      %1703 = vst [vmem:[%s274 + $0x20] sm:$0xf] %v1671
      %1704 = vst [vmem:[%s274 + $0x24] sm:$0xf] %v1672
      %1705 = vst [vmem:[%s274 + $0x28] sm:$0xf] %v1673
      %1706 = vst [vmem:[%s274 + $0x2c] sm:$0xf] %v1674
      %1707 = vst [vmem:[%s274 + $0x30] sm:$0xf] %v1675
      %1708 = vst [vmem:[%s274 + $0x34] sm:$0xf] %v1676
      %1709 = vst [vmem:[%s274 + $0x38] sm:$0xf] %v1677
      %1710 = vst [vmem:[%s274 + $0x3c] sm:$0xf] %v1678
      %s1711 = smul.u32 16, %s22
      %p1712 = scmp.lt.s32.totalorder %s20, 3
      %s1713 = scalar_select %p1712, %s20, 3
      %p1714 = scmp.lt.s32.totalorder %s1711, 15
      %s1715 = scalar_select %p1714, %s1711, 15
      %p1716 = scmp.lt.s32.totalorder %s21, 0
      %s1717 = scalar_select %p1716, %s21, 0
      %s1718 = sadd.s32 %s1717, %s1715
      %s1719 = smul.addr %s1713, 16
      %s1720 = sadd.s32 %s1718, %s1719
      %s1721 = smul.addr %s1720, 4
      %s1722 = scalar_lea.vmem %s2, %s1721
      %p1723 = scmp.lt.s32.totalorder %s20, 3
      %s1724 = scalar_select %p1723, %s20, 3
      %p1725 = scmp.lt.s32.totalorder %s22, 0
      %s1726 = scalar_select %p1725, %s22, 0
      %p1727 = scmp.lt.s32.totalorder %s21, 0
      %s1728 = scalar_select %p1727, %s21, 0
      %s1729 = sadd.s32 %s1728, %s1726
      %s1730 = sadd.s32 %s1729, %s1724
      %s1731 = smul.addr %s1730, 2
      %s1732 = scalar_lea.vmem %s3, %s1731
      // Predicated region
      $region29: #{generator_forward.13} parent=27 // pred_check
        %p1733 = pneg %p112
      $region30: #{generator_forward.13} parent=27 // pred_check_branch
        %1735 = sbr.rel (%p1733) target = $region32
      $region31: #{generator_forward.13} parent=27 // pred_region
        %s1736 = smul.u32 16, %s22
      $region32: #{generator_forward.13} parent=27 // pred_fallthru
        _
      // Predicated region
      $region33: #{generator_forward.13} parent=27 // pred_check
        %p1737 = pneg %p142
      $region34: #{generator_forward.13} parent=27 // pred_check_branch
        %1739 = sbr.rel (%p1737) target = $region36
      $region35: #{generator_forward.13} parent=27 // pred_region
        _
      $region36: #{generator_forward.13} parent=27 // pred_fallthru
        _
    $region28: #{generator_forward.13} parent=5 // pred_fallthru
      _
    %p1740 = scmp.le.s32.totalorder 2, %s10
    // Predicated region
    $region37: #{generator_forward.13} parent=5 // pred_check
      %p1741 = pneg %p1740
    $region38: #{generator_forward.13} parent=5 // pred_check_branch
      %1743 = sbr.rel (%p1741) target = $region40
    $region39: #{generator_forward.13} parent=5 // pred_region
      %s1744 = ssub.s32 %s10, 2
      // Predicated region
      $region41: #{generator_forward.13} parent=39 // pred_check
        %p1745 = pneg %p118
      $region42: #{generator_forward.13} parent=39 // pred_check_branch
        %1747 = sbr.rel (%p1745) target = $region44
      $region43: #{generator_forward.13} parent=39 // pred_region
        %s1748 = smul.u32 16, %s25
        %p1749 = scmp.lt.s32.totalorder %s23, 3
        %s1750 = scalar_select %p1749, %s23, 3
        %p1751 = scmp.lt.s32.totalorder %s1748, 15
        %s1752 = scalar_select %p1751, %s1748, 15
        %p1753 = scmp.lt.s32.totalorder %s24, 0
        %s1754 = scalar_select %p1753, %s24, 0
        %s1755 = sadd.s32 %s1754, %s1752
        %s1756 = smul.addr %s1750, 16
        %s1757 = sadd.s32 %s1755, %s1756
        %s1758 = smul.addr %s1757, 4
        %s1759 = scalar_lea.vmem %s2, %s1758
      $region44: #{generator_forward.13} parent=39 // pred_fallthru
        _
      // Predicated region
      $region45: #{generator_forward.13} parent=39 // pred_check
        %p1760 = pneg %p148
      $region46: #{generator_forward.13} parent=39 // pred_check_branch
        %1762 = sbr.rel (%p1760) target = $region48
      $region47: #{generator_forward.13} parent=39 // pred_region
        %p1763 = scmp.lt.s32.totalorder %s23, 3
        %s1764 = scalar_select %p1763, %s23, 3
        %p1765 = scmp.lt.s32.totalorder %s25, 0
        %s1766 = scalar_select %p1765, %s25, 0
        %p1767 = scmp.lt.s32.totalorder %s24, 0
        %s1768 = scalar_select %p1767, %s24, 0
        %s1769 = sadd.s32 %s1768, %s1766
        %s1770 = sadd.s32 %s1769, %s1764
        %s1771 = smul.addr %s1770, 2
        %s1772 = scalar_lea.vmem %s3, %s1771
      $region48: #{generator_forward.13} parent=39 // pred_fallthru
        _
    $region40: #{generator_forward.13} parent=5 // pred_fallthru
      _
  $region6: #{generator_forward.13} parent=0 // loop_footer
    %s14 = sadd.s32 1, %s10
  $region7: #{generator_forward.13} parent=0 // loop_footer_branch
    %9 = sbr.rel target = $region3
  $region8: #{generator_forward.13} parent=0 // loop_exit
    _

// kernel: generator_forward.14
$region0: #{generator_forward.14}
  #allocation0 [shape = 'u32[]', space=smem, size = 0x4, offset = 0x4, fixed_abs, tag = 'smem constant byte address 0x4 - core index']
  #allocation1 [shape = 'u32[144,128]{1,0:T(1,128)}', space=vmem, size = 0x12000, scoped, tag = 'internal scratch']
  %s0 = inlined_call_operand.vmem [shape: bf16[512,128], index: 0, kind: input, shape index: {}]
  %s1 = inlined_call_operand.vmem [shape: f32[1,128], index: 1, kind: input, shape index: {}]
  %s2 = inlined_call_operand.vmem [shape: f32[1,128], index: 2, kind: input, shape index: {}]
  %s3 = inlined_call_operand.vmem [shape: bf16[512,128], index: 3, kind: output, shape index: {}]
  %s4 = sld [smem:[#allocation0]]
  $region22: #{generator_forward.14} parent=0
    _
  %s6 = ssub.s32 1, %s4
  %s7 = scalar_select 0, %s6, %s4
  // Predicated region
  $region2: #{generator_forward.14} parent=0 // pred_check
    _
  $region3: #{generator_forward.14} parent=0 // pred_check_branch
    %9 = sbr.rel (0) target = $region5
  $region4: #{generator_forward.14} parent=0 // pred_region
    _
  $region5: #{generator_forward.14} parent=0 // pred_fallthru
    _
  // Predicated region
  $region6: #{generator_forward.14} parent=0 // pred_check
    _
  $region7: #{generator_forward.14} parent=0 // pred_check_branch
    %11 = sbr.rel (0) target = $region9
  $region8: #{generator_forward.14} parent=0 // pred_region
    _
  $region9: #{generator_forward.14} parent=0 // pred_fallthru
    _
  // Predicated region
  $region10: #{generator_forward.14} parent=0 // pred_check
    _
  $region11: #{generator_forward.14} parent=0 // pred_check_branch
    %13 = sbr.rel (0) target = $region13
  $region12: #{generator_forward.14} parent=0 // pred_region
    _
  $region13: #{generator_forward.14} parent=0 // pred_fallthru
    _
  %v14 = vld [vmem:[%s0] sm:$0xf]
  %v15 = vld [vmem:[%s0 + $0x4] sm:$0xf]
  %v16 = vld [vmem:[%s0 + $0x8] sm:$0xf]
  %v17 = vld [vmem:[%s0 + $0xc] sm:$0xf]
  %v18 = vld [vmem:[%s0 + $0x10] sm:$0xf]
  %v19 = vld [vmem:[%s0 + $0x14] sm:$0xf]
  %v20 = vld [vmem:[%s0 + $0x18] sm:$0xf]
  %v21 = vld [vmem:[%s0 + $0x1c] sm:$0xf]
  %v22 = vld [vmem:[%s0 + $0x20] sm:$0xf]
  %v23 = vld [vmem:[%s0 + $0x24] sm:$0xf]
  %v24 = vld [vmem:[%s0 + $0x28] sm:$0xf]
  %v25 = vld [vmem:[%s0 + $0x2c] sm:$0xf]
  %v26 = vld [vmem:[%s0 + $0x30] sm:$0xf]
  %v27 = vld [vmem:[%s0 + $0x34] sm:$0xf]
  %v28 = vld [vmem:[%s0 + $0x38] sm:$0xf]
  %v29 = vld [vmem:[%s0 + $0x3c] sm:$0xf]
  %v30 = vld [vmem:[%s0 + $0x40] sm:$0xf]
  %v31 = vld [vmem:[%s0 + $0x44] sm:$0xf]
  %v32 = vld [vmem:[%s0 + $0x48] sm:$0xf]
  %v33 = vld [vmem:[%s0 + $0x4c] sm:$0xf]
  %v34 = vld [vmem:[%s0 + $0x50] sm:$0xf]
  %v35 = vld [vmem:[%s0 + $0x54] sm:$0xf]
  %v36 = vld [vmem:[%s0 + $0x58] sm:$0xf]
  %v37 = vld [vmem:[%s0 + $0x5c] sm:$0xf]
  %v38 = vld [vmem:[%s0 + $0x60] sm:$0xf]
  %v39 = vld [vmem:[%s0 + $0x64] sm:$0xf]
  %v40 = vld [vmem:[%s0 + $0x68] sm:$0xf]
  %v41 = vld [vmem:[%s0 + $0x6c] sm:$0xf]
  %v42 = vld [vmem:[%s0 + $0x70] sm:$0xf]
  %v43 = vld [vmem:[%s0 + $0x74] sm:$0xf]
  %v44 = vld [vmem:[%s0 + $0x78] sm:$0xf]
  %v45 = vld [vmem:[%s0 + $0x7c] sm:$0xf]
  %v46 = vld [vmem:[%s0 + $0x80] sm:$0xf]
  %v47 = vld [vmem:[%s0 + $0x84] sm:$0xf]
  %v48 = vld [vmem:[%s0 + $0x88] sm:$0xf]
  %v49 = vld [vmem:[%s0 + $0x8c] sm:$0xf]
  %v50 = vld [vmem:[%s0 + $0x90] sm:$0xf]
  %v51 = vld [vmem:[%s0 + $0x94] sm:$0xf]
  %v52 = vld [vmem:[%s0 + $0x98] sm:$0xf]
  %v53 = vld [vmem:[%s0 + $0x9c] sm:$0xf]
  %v54 = vld [vmem:[%s0 + $0xa0] sm:$0xf]
  %v55 = vld [vmem:[%s0 + $0xa4] sm:$0xf]
  %v56 = vld [vmem:[%s0 + $0xa8] sm:$0xf]
  %v57 = vld [vmem:[%s0 + $0xac] sm:$0xf]
  %v58 = vld [vmem:[%s0 + $0xb0] sm:$0xf]
  %v59 = vld [vmem:[%s0 + $0xb4] sm:$0xf]
  %v60 = vld [vmem:[%s0 + $0xb8] sm:$0xf]
  %v61 = vld [vmem:[%s0 + $0xbc] sm:$0xf]
  %v62 = vld [vmem:[%s0 + $0xc0] sm:$0xf]
  %v63 = vld [vmem:[%s0 + $0xc4] sm:$0xf]
  %v64 = vld [vmem:[%s0 + $0xc8] sm:$0xf]
  %v65 = vld [vmem:[%s0 + $0xcc] sm:$0xf]
  %v66 = vld [vmem:[%s0 + $0xd0] sm:$0xf]
  %v67 = vld [vmem:[%s0 + $0xd4] sm:$0xf]
  %v68 = vld [vmem:[%s0 + $0xd8] sm:$0xf]
  %v69 = vld [vmem:[%s0 + $0xdc] sm:$0xf]
  %v70 = vld [vmem:[%s0 + $0xe0] sm:$0xf]
  %v71 = vld [vmem:[%s0 + $0xe4] sm:$0xf]
  %v72 = vld [vmem:[%s0 + $0xe8] sm:$0xf]
  %v73 = vld [vmem:[%s0 + $0xec] sm:$0xf]
  %v74 = vld [vmem:[%s0 + $0xf0] sm:$0xf]
  %v75 = vld [vmem:[%s0 + $0xf4] sm:$0xf]
  %v76 = vld [vmem:[%s0 + $0xf8] sm:$0xf]
  %v77 = vld [vmem:[%s0 + $0xfc] sm:$0xf]
  %v78 = vunpack.c.l.bf16 %v14
  %v79 = vunpack.c.l.bf16 %v15
  %v80 = vunpack.c.l.bf16 %v16
  %v81 = vunpack.c.l.bf16 %v17
  %v82 = vunpack.c.l.bf16 %v18
  %v83 = vunpack.c.l.bf16 %v19
  %v84 = vunpack.c.l.bf16 %v20
  %v85 = vunpack.c.l.bf16 %v21
  %v86 = vunpack.c.l.bf16 %v22
  %v87 = vunpack.c.l.bf16 %v23
  %v88 = vunpack.c.l.bf16 %v24
  %v89 = vunpack.c.l.bf16 %v25
  %v90 = vunpack.c.l.bf16 %v26
  %v91 = vunpack.c.l.bf16 %v27
  %v92 = vunpack.c.l.bf16 %v28
  %v93 = vunpack.c.l.bf16 %v29
  %v94 = vunpack.c.l.bf16 %v30
  %v95 = vunpack.c.l.bf16 %v31
  %v96 = vunpack.c.l.bf16 %v32
  %v97 = vunpack.c.l.bf16 %v33
  %v98 = vunpack.c.l.bf16 %v34
  %v99 = vunpack.c.l.bf16 %v35
  %v100 = vunpack.c.l.bf16 %v36
  %v101 = vunpack.c.l.bf16 %v37
  %v102 = vunpack.c.l.bf16 %v38
  %v103 = vunpack.c.l.bf16 %v39
  %v104 = vunpack.c.l.bf16 %v40
  %v105 = vunpack.c.l.bf16 %v41
  %v106 = vunpack.c.l.bf16 %v42
  %v107 = vunpack.c.l.bf16 %v43
  %v108 = vunpack.c.l.bf16 %v44
  %v109 = vunpack.c.l.bf16 %v45
  %v110 = vunpack.c.l.bf16 %v46
  %v111 = vunpack.c.l.bf16 %v47
  %v112 = vunpack.c.l.bf16 %v48
  %v113 = vunpack.c.l.bf16 %v49
  %v114 = vunpack.c.l.bf16 %v50
  %v115 = vunpack.c.l.bf16 %v51
  %v116 = vunpack.c.l.bf16 %v52
  %v117 = vunpack.c.l.bf16 %v53
  %v118 = vunpack.c.l.bf16 %v54
  %v119 = vunpack.c.l.bf16 %v55
  %v120 = vunpack.c.l.bf16 %v56
  %v121 = vunpack.c.l.bf16 %v57
  %v122 = vunpack.c.l.bf16 %v58
  %v123 = vunpack.c.l.bf16 %v59
  %v124 = vunpack.c.l.bf16 %v60
  %v125 = vunpack.c.l.bf16 %v61
  %v126 = vunpack.c.l.bf16 %v62
  %v127 = vunpack.c.l.bf16 %v63
  %v128 = vunpack.c.l.bf16 %v64
  %v129 = vunpack.c.l.bf16 %v65
  %v130 = vunpack.c.l.bf16 %v66
  %v131 = vunpack.c.l.bf16 %v67
  %v132 = vunpack.c.l.bf16 %v68
  %v133 = vunpack.c.l.bf16 %v69
  %v134 = vunpack.c.l.bf16 %v70
  %v135 = vunpack.c.l.bf16 %v71
  %v136 = vunpack.c.l.bf16 %v72
  %v137 = vunpack.c.l.bf16 %v73
  %v138 = vunpack.c.l.bf16 %v74
  %v139 = vunpack.c.l.bf16 %v75
  %v140 = vunpack.c.l.bf16 %v76
  %v141 = vunpack.c.l.bf16 %v77
  %v142 = vld [vmem:[%s1] sm:$0x1]
  %v144 = vlaneseq
  %v145 = vshrl.u32 %v144, 7
  %v146 = vsub.s32 0, %v145
  %v147 = vrot.slane %v142, %v146
  %v149 = vmul.f32 %v78, %v147
  %v150 = vmul.f32 %v79, %v147
  %v151 = vmul.f32 %v80, %v147
  %v152 = vmul.f32 %v81, %v147
  %v153 = vmul.f32 %v82, %v147
  %v154 = vmul.f32 %v83, %v147
  %v155 = vmul.f32 %v84, %v147
  %v156 = vmul.f32 %v85, %v147
  %v157 = vmul.f32 %v86, %v147
  %v158 = vmul.f32 %v87, %v147
  %v159 = vmul.f32 %v88, %v147
  %v160 = vmul.f32 %v89, %v147
  %v161 = vmul.f32 %v90, %v147
  %v162 = vmul.f32 %v91, %v147
  %v163 = vmul.f32 %v92, %v147
  %v164 = vmul.f32 %v93, %v147
  %v165 = vmul.f32 %v94, %v147
  %v166 = vmul.f32 %v95, %v147
  %v167 = vmul.f32 %v96, %v147
  %v168 = vmul.f32 %v97, %v147
  %v169 = vmul.f32 %v98, %v147
  %v170 = vmul.f32 %v99, %v147
  %v171 = vmul.f32 %v100, %v147
  %v172 = vmul.f32 %v101, %v147
  %v173 = vmul.f32 %v102, %v147
  %v174 = vmul.f32 %v103, %v147
  %v175 = vmul.f32 %v104, %v147
  %v176 = vmul.f32 %v105, %v147
  %v177 = vmul.f32 %v106, %v147
  %v178 = vmul.f32 %v107, %v147
  %v179 = vmul.f32 %v108, %v147
  %v180 = vmul.f32 %v109, %v147
  %v181 = vmul.f32 %v110, %v147
  %v182 = vmul.f32 %v111, %v147
  %v183 = vmul.f32 %v112, %v147
  %v184 = vmul.f32 %v113, %v147
  %v185 = vmul.f32 %v114, %v147
  %v186 = vmul.f32 %v115, %v147
  %v187 = vmul.f32 %v116, %v147
  %v188 = vmul.f32 %v117, %v147
  %v189 = vmul.f32 %v118, %v147
  %v190 = vmul.f32 %v119, %v147
  %v191 = vmul.f32 %v120, %v147
  %v192 = vmul.f32 %v121, %v147
  %v193 = vmul.f32 %v122, %v147
  %v194 = vmul.f32 %v123, %v147
  %v195 = vmul.f32 %v124, %v147
  %v196 = vmul.f32 %v125, %v147
  %v197 = vmul.f32 %v126, %v147
  %v198 = vmul.f32 %v127, %v147
  %v199 = vmul.f32 %v128, %v147
  %v200 = vmul.f32 %v129, %v147
  %v201 = vmul.f32 %v130, %v147
  %v202 = vmul.f32 %v131, %v147
  %v203 = vmul.f32 %v132, %v147
  %v204 = vmul.f32 %v133, %v147
  %v205 = vmul.f32 %v134, %v147
  %v206 = vmul.f32 %v135, %v147
  %v207 = vmul.f32 %v136, %v147
  %v208 = vmul.f32 %v137, %v147
  %v209 = vmul.f32 %v138, %v147
  %v210 = vmul.f32 %v139, %v147
  %v211 = vmul.f32 %v140, %v147
  %v212 = vmul.f32 %v141, %v147
  %v213 = vld [vmem:[%s2] sm:$0x1]
  %v215 = vlaneseq
  %v216 = vshrl.u32 %v215, 7
  %v217 = vsub.s32 0, %v216
  %v218 = vrot.slane %v213, %v217
  %v220 = vadd.f32 %v149, %v218
  %v221 = vadd.f32 %v150, %v218
  %v222 = vadd.f32 %v151, %v218
  %v223 = vadd.f32 %v152, %v218
  %v224 = vadd.f32 %v153, %v218
  %v225 = vadd.f32 %v154, %v218
  %v226 = vadd.f32 %v155, %v218
  %v227 = vadd.f32 %v156, %v218
  %v228 = vadd.f32 %v157, %v218
  %v229 = vadd.f32 %v158, %v218
  %v230 = vadd.f32 %v159, %v218
  %v231 = vadd.f32 %v160, %v218
  %v232 = vadd.f32 %v161, %v218
  %v233 = vadd.f32 %v162, %v218
  %v234 = vadd.f32 %v163, %v218
  %v235 = vadd.f32 %v164, %v218
  %v236 = vadd.f32 %v165, %v218
  %v237 = vadd.f32 %v166, %v218
  %v238 = vadd.f32 %v167, %v218
  %v239 = vadd.f32 %v168, %v218
  %v240 = vadd.f32 %v169, %v218
  %v241 = vadd.f32 %v170, %v218
  %v242 = vadd.f32 %v171, %v218
  %v243 = vadd.f32 %v172, %v218
  %v244 = vadd.f32 %v173, %v218
  %v245 = vadd.f32 %v174, %v218
  %v246 = vadd.f32 %v175, %v218
  %v247 = vadd.f32 %v176, %v218
  %v248 = vadd.f32 %v177, %v218
  %v249 = vadd.f32 %v178, %v218
  %v250 = vadd.f32 %v179, %v218
  %v251 = vadd.f32 %v180, %v218
  %v252 = vadd.f32 %v181, %v218
  %v253 = vadd.f32 %v182, %v218
  %v254 = vadd.f32 %v183, %v218
  %v255 = vadd.f32 %v184, %v218
  %v256 = vadd.f32 %v185, %v218
  %v257 = vadd.f32 %v186, %v218
  %v258 = vadd.f32 %v187, %v218
  %v259 = vadd.f32 %v188, %v218
  %v260 = vadd.f32 %v189, %v218
  %v261 = vadd.f32 %v190, %v218
  %v262 = vadd.f32 %v191, %v218
  %v263 = vadd.f32 %v192, %v218
  %v264 = vadd.f32 %v193, %v218
  %v265 = vadd.f32 %v194, %v218
  %v266 = vadd.f32 %v195, %v218
  %v267 = vadd.f32 %v196, %v218
  %v268 = vadd.f32 %v197, %v218
  %v269 = vadd.f32 %v198, %v218
  %v270 = vadd.f32 %v199, %v218
  %v271 = vadd.f32 %v200, %v218
  %v272 = vadd.f32 %v201, %v218
  %v273 = vadd.f32 %v202, %v218
  %v274 = vadd.f32 %v203, %v218
  %v275 = vadd.f32 %v204, %v218
  %v276 = vadd.f32 %v205, %v218
  %v277 = vadd.f32 %v206, %v218
  %v278 = vadd.f32 %v207, %v218
  %v279 = vadd.f32 %v208, %v218
  %v280 = vadd.f32 %v209, %v218
  %v281 = vadd.f32 %v210, %v218
  %v282 = vadd.f32 %v211, %v218
  %v283 = vadd.f32 %v212, %v218
  %v284 = vmax.f32 %v220, 0.0
  %v285 = vmax.f32 %v221, 0.0
  %v286 = vmax.f32 %v222, 0.0
  %v287 = vmax.f32 %v223, 0.0
  %v288 = vmax.f32 %v224, 0.0
  %v289 = vmax.f32 %v225, 0.0
  %v290 = vmax.f32 %v226, 0.0
  %v291 = vmax.f32 %v227, 0.0
  %v292 = vmax.f32 %v228, 0.0
  %v293 = vmax.f32 %v229, 0.0
  %v294 = vmax.f32 %v230, 0.0
  %v295 = vmax.f32 %v231, 0.0
  %v296 = vmax.f32 %v232, 0.0
  %v297 = vmax.f32 %v233, 0.0
  %v298 = vmax.f32 %v234, 0.0
  %v299 = vmax.f32 %v235, 0.0
  %v300 = vmax.f32 %v236, 0.0
  %v301 = vmax.f32 %v237, 0.0
  %v302 = vmax.f32 %v238, 0.0
  %v303 = vmax.f32 %v239, 0.0
  %v304 = vmax.f32 %v240, 0.0
  %v305 = vmax.f32 %v241, 0.0
  %v306 = vmax.f32 %v242, 0.0
  %v307 = vmax.f32 %v243, 0.0
  %v308 = vmax.f32 %v244, 0.0
  %v309 = vmax.f32 %v245, 0.0
  %v310 = vmax.f32 %v246, 0.0
  %v311 = vmax.f32 %v247, 0.0
  %v312 = vmax.f32 %v248, 0.0
  %v313 = vmax.f32 %v249, 0.0
  %v314 = vmax.f32 %v250, 0.0
  %v315 = vmax.f32 %v251, 0.0
  %v316 = vmax.f32 %v252, 0.0
  %v317 = vmax.f32 %v253, 0.0
  %v318 = vmax.f32 %v254, 0.0
  %v319 = vmax.f32 %v255, 0.0
  %v320 = vmax.f32 %v256, 0.0
  %v321 = vmax.f32 %v257, 0.0
  %v322 = vmax.f32 %v258, 0.0
  %v323 = vmax.f32 %v259, 0.0
  %v324 = vmax.f32 %v260, 0.0
  %v325 = vmax.f32 %v261, 0.0
  %v326 = vmax.f32 %v262, 0.0
  %v327 = vmax.f32 %v263, 0.0
  %v328 = vmax.f32 %v264, 0.0
  %v329 = vmax.f32 %v265, 0.0
  %v330 = vmax.f32 %v266, 0.0
  %v331 = vmax.f32 %v267, 0.0
  %v332 = vmax.f32 %v268, 0.0
  %v333 = vmax.f32 %v269, 0.0
  %v334 = vmax.f32 %v270, 0.0
  %v335 = vmax.f32 %v271, 0.0
  %v336 = vmax.f32 %v272, 0.0
  %v337 = vmax.f32 %v273, 0.0
  %v338 = vmax.f32 %v274, 0.0
  %v339 = vmax.f32 %v275, 0.0
  %v340 = vmax.f32 %v276, 0.0
  %v341 = vmax.f32 %v277, 0.0
  %v342 = vmax.f32 %v278, 0.0
  %v343 = vmax.f32 %v279, 0.0
  %v344 = vmax.f32 %v280, 0.0
  %v345 = vmax.f32 %v281, 0.0
  %v346 = vmax.f32 %v282, 0.0
  %v347 = vmax.f32 %v283, 0.0
  %v348 = vpack.c.bf16 %v285, %v284
  %v349 = vpack.c.bf16 %v287, %v286
  %v350 = vpack.c.bf16 %v289, %v288
  %v351 = vpack.c.bf16 %v291, %v290
  %v352 = vpack.c.bf16 %v293, %v292
  %v353 = vpack.c.bf16 %v295, %v294
  %v354 = vpack.c.bf16 %v297, %v296
  %v355 = vpack.c.bf16 %v299, %v298
  %v356 = vpack.c.bf16 %v301, %v300
  %v357 = vpack.c.bf16 %v303, %v302
  %v358 = vpack.c.bf16 %v305, %v304
  %v359 = vpack.c.bf16 %v307, %v306
  %v360 = vpack.c.bf16 %v309, %v308
  %v361 = vpack.c.bf16 %v311, %v310
  %v362 = vpack.c.bf16 %v313, %v312
  %v363 = vpack.c.bf16 %v315, %v314
  %v364 = vpack.c.bf16 %v317, %v316
  %v365 = vpack.c.bf16 %v319, %v318
  %v366 = vpack.c.bf16 %v321, %v320
  %v367 = vpack.c.bf16 %v323, %v322
  %v368 = vpack.c.bf16 %v325, %v324
  %v369 = vpack.c.bf16 %v327, %v326
  %v370 = vpack.c.bf16 %v329, %v328
  %v371 = vpack.c.bf16 %v331, %v330
  %v372 = vpack.c.bf16 %v333, %v332
  %v373 = vpack.c.bf16 %v335, %v334
  %v374 = vpack.c.bf16 %v337, %v336
  %v375 = vpack.c.bf16 %v339, %v338
  %v376 = vpack.c.bf16 %v341, %v340
  %v377 = vpack.c.bf16 %v343, %v342
  %v378 = vpack.c.bf16 %v345, %v344
  %v379 = vpack.c.bf16 %v347, %v346
  %v412 = vunpack.c.l.b16 %v348
  %v413 = vunpack.c.h.b16 %v348
  %v414 = vunpack.c.l.b16 %v349
  %v415 = vunpack.c.h.b16 %v349
  %v416 = vunpack.c.l.b16 %v350
  %v417 = vunpack.c.h.b16 %v350
  %v418 = vunpack.c.l.b16 %v351
  %v419 = vunpack.c.h.b16 %v351
  %v420 = vunpack.c.l.b16 %v352
  %v421 = vunpack.c.h.b16 %v352
  %v422 = vunpack.c.l.b16 %v353
  %v423 = vunpack.c.h.b16 %v353
  %v424 = vunpack.c.l.b16 %v354
  %v425 = vunpack.c.h.b16 %v354
  %v426 = vunpack.c.l.b16 %v355
  %v427 = vunpack.c.h.b16 %v355
  %v428 = vunpack.c.l.b16 %v356
  %v429 = vunpack.c.h.b16 %v356
  %v430 = vunpack.c.l.b16 %v357
  %v431 = vunpack.c.h.b16 %v357
  %v432 = vunpack.c.l.b16 %v358
  %v433 = vunpack.c.h.b16 %v358
  %v434 = vunpack.c.l.b16 %v359
  %v435 = vunpack.c.h.b16 %v359
  %v436 = vunpack.c.l.b16 %v360
  %v437 = vunpack.c.h.b16 %v360
  %v438 = vunpack.c.l.b16 %v361
  %v439 = vunpack.c.h.b16 %v361
  %v440 = vunpack.c.l.b16 %v362
  %v441 = vunpack.c.h.b16 %v362
  %v442 = vunpack.c.l.b16 %v363
  %v443 = vunpack.c.h.b16 %v363
  %v444 = vunpack.c.l.b16 %v364
  %v445 = vunpack.c.h.b16 %v364
  %v446 = vunpack.c.l.b16 %v365
  %v447 = vunpack.c.h.b16 %v365
  %v448 = vunpack.c.l.b16 %v366
  %v449 = vunpack.c.h.b16 %v366
  %v450 = vunpack.c.l.b16 %v367
  %v451 = vunpack.c.h.b16 %v367
  %v452 = vunpack.c.l.b16 %v368
  %v453 = vunpack.c.h.b16 %v368
  %v454 = vunpack.c.l.b16 %v369
  %v455 = vunpack.c.h.b16 %v369
  %v456 = vunpack.c.l.b16 %v370
  %v457 = vunpack.c.h.b16 %v370
  %v458 = vunpack.c.l.b16 %v371
  %v459 = vunpack.c.h.b16 %v371
  %v460 = vunpack.c.l.b16 %v372
  %v461 = vunpack.c.h.b16 %v372
  %v462 = vunpack.c.l.b16 %v373
  %v463 = vunpack.c.h.b16 %v373
  %v464 = vunpack.c.l.b16 %v374
  %v465 = vunpack.c.h.b16 %v374
  %v466 = vunpack.c.l.b16 %v375
  %v467 = vunpack.c.h.b16 %v375
  %v468 = vunpack.c.l.b16 %v376
  %v469 = vunpack.c.h.b16 %v376
  %v470 = vunpack.c.l.b16 %v377
  %v471 = vunpack.c.h.b16 %v377
  %v472 = vunpack.c.l.b16 %v378
  %v473 = vunpack.c.h.b16 %v378
  %v474 = vunpack.c.l.b16 %v379
  %v475 = vunpack.c.h.b16 %v379
  %v476 = vpack.c.b16 %v412, %v412
  %v477 = vpack.c.b16 %v413, %v413
  %v478 = vpack.c.b16 %v414, %v414
  %v479 = vpack.c.b16 %v415, %v415
  %v480 = vpack.c.b16 %v416, %v416
  %v481 = vpack.c.b16 %v417, %v417
  %v482 = vpack.c.b16 %v418, %v418
  %v483 = vpack.c.b16 %v419, %v419
  %v484 = vpack.c.b16 %v420, %v420
  %v485 = vpack.c.b16 %v421, %v421
  %v486 = vpack.c.b16 %v422, %v422
  %v487 = vpack.c.b16 %v423, %v423
  %v488 = vpack.c.b16 %v424, %v424
  %v489 = vpack.c.b16 %v425, %v425
  %v490 = vpack.c.b16 %v426, %v426
  %v491 = vpack.c.b16 %v427, %v427
  %v492 = vpack.c.b16 %v428, %v428
  %v493 = vpack.c.b16 %v429, %v429
  %v494 = vpack.c.b16 %v430, %v430
  %v495 = vpack.c.b16 %v431, %v431
  %v496 = vpack.c.b16 %v432, %v432
  %v497 = vpack.c.b16 %v433, %v433
  %v498 = vpack.c.b16 %v434, %v434
  %v499 = vpack.c.b16 %v435, %v435
  %v500 = vpack.c.b16 %v436, %v436
  %v501 = vpack.c.b16 %v437, %v437
  %v502 = vpack.c.b16 %v438, %v438
  %v503 = vpack.c.b16 %v439, %v439
  %v504 = vpack.c.b16 %v440, %v440
  %v505 = vpack.c.b16 %v441, %v441
  %v506 = vpack.c.b16 %v442, %v442
  %v507 = vpack.c.b16 %v443, %v443
  %v508 = vpack.c.b16 %v444, %v444
  %v509 = vpack.c.b16 %v445, %v445
  %v510 = vpack.c.b16 %v446, %v446
  %v511 = vpack.c.b16 %v447, %v447
  %v512 = vpack.c.b16 %v448, %v448
  %v513 = vpack.c.b16 %v449, %v449
  %v514 = vpack.c.b16 %v450, %v450
  %v515 = vpack.c.b16 %v451, %v451
  %v516 = vpack.c.b16 %v452, %v452
  %v517 = vpack.c.b16 %v453, %v453
  %v518 = vpack.c.b16 %v454, %v454
  %v519 = vpack.c.b16 %v455, %v455
  %v520 = vpack.c.b16 %v456, %v456
  %v521 = vpack.c.b16 %v457, %v457
  %v522 = vpack.c.b16 %v458, %v458
  %v523 = vpack.c.b16 %v459, %v459
  %v524 = vpack.c.b16 %v460, %v460
  %v525 = vpack.c.b16 %v461, %v461
  %v526 = vpack.c.b16 %v462, %v462
  %v527 = vpack.c.b16 %v463, %v463
  %v528 = vpack.c.b16 %v464, %v464
  %v529 = vpack.c.b16 %v465, %v465
  %v530 = vpack.c.b16 %v466, %v466
  %v531 = vpack.c.b16 %v467, %v467
  %v532 = vpack.c.b16 %v468, %v468
  %v533 = vpack.c.b16 %v469, %v469
  %v534 = vpack.c.b16 %v470, %v470
  %v535 = vpack.c.b16 %v471, %v471
  %v536 = vpack.c.b16 %v472, %v472
  %v537 = vpack.c.b16 %v473, %v473
  %v538 = vpack.c.b16 %v474, %v474
  %v539 = vpack.c.b16 %v475, %v475
  %604 = vst [vmem:[%s3] sm:$0xf] %v476
  %605 = vst [vmem:[%s3 + $0x4] sm:$0xf] %v477
  %606 = vst [vmem:[%s3 + $0x8] sm:$0xf] %v478
  %607 = vst [vmem:[%s3 + $0xc] sm:$0xf] %v479
  %608 = vst [vmem:[%s3 + $0x10] sm:$0xf] %v480
  %609 = vst [vmem:[%s3 + $0x14] sm:$0xf] %v481
  %610 = vst [vmem:[%s3 + $0x18] sm:$0xf] %v482
  %611 = vst [vmem:[%s3 + $0x1c] sm:$0xf] %v483
  %612 = vst [vmem:[%s3 + $0x20] sm:$0xf] %v484
  %613 = vst [vmem:[%s3 + $0x24] sm:$0xf] %v485
  %614 = vst [vmem:[%s3 + $0x28] sm:$0xf] %v486
  %615 = vst [vmem:[%s3 + $0x2c] sm:$0xf] %v487
  %616 = vst [vmem:[%s3 + $0x30] sm:$0xf] %v488
  %617 = vst [vmem:[%s3 + $0x34] sm:$0xf] %v489
  %618 = vst [vmem:[%s3 + $0x38] sm:$0xf] %v490
  %619 = vst [vmem:[%s3 + $0x3c] sm:$0xf] %v491
  %620 = vst [vmem:[%s3 + $0x40] sm:$0xf] %v492
  %621 = vst [vmem:[%s3 + $0x44] sm:$0xf] %v493
  %622 = vst [vmem:[%s3 + $0x48] sm:$0xf] %v494
  %623 = vst [vmem:[%s3 + $0x4c] sm:$0xf] %v495
  %624 = vst [vmem:[%s3 + $0x50] sm:$0xf] %v496
  %625 = vst [vmem:[%s3 + $0x54] sm:$0xf] %v497
  %626 = vst [vmem:[%s3 + $0x58] sm:$0xf] %v498
  %627 = vst [vmem:[%s3 + $0x5c] sm:$0xf] %v499
  %628 = vst [vmem:[%s3 + $0x60] sm:$0xf] %v500
  %629 = vst [vmem:[%s3 + $0x64] sm:$0xf] %v501
  %630 = vst [vmem:[%s3 + $0x68] sm:$0xf] %v502
  %631 = vst [vmem:[%s3 + $0x6c] sm:$0xf] %v503
  %632 = vst [vmem:[%s3 + $0x70] sm:$0xf] %v504
  %633 = vst [vmem:[%s3 + $0x74] sm:$0xf] %v505
  %634 = vst [vmem:[%s3 + $0x78] sm:$0xf] %v506
  %635 = vst [vmem:[%s3 + $0x7c] sm:$0xf] %v507
  %636 = vst [vmem:[%s3 + $0x80] sm:$0xf] %v508
  %637 = vst [vmem:[%s3 + $0x84] sm:$0xf] %v509
  %638 = vst [vmem:[%s3 + $0x88] sm:$0xf] %v510
  %639 = vst [vmem:[%s3 + $0x8c] sm:$0xf] %v511
  %640 = vst [vmem:[%s3 + $0x90] sm:$0xf] %v512
  %641 = vst [vmem:[%s3 + $0x94] sm:$0xf] %v513
  %642 = vst [vmem:[%s3 + $0x98] sm:$0xf] %v514
  %643 = vst [vmem:[%s3 + $0x9c] sm:$0xf] %v515
  %644 = vst [vmem:[%s3 + $0xa0] sm:$0xf] %v516
  %645 = vst [vmem:[%s3 + $0xa4] sm:$0xf] %v517
  %646 = vst [vmem:[%s3 + $0xa8] sm:$0xf] %v518
  %647 = vst [vmem:[%s3 + $0xac] sm:$0xf] %v519
  %648 = vst [vmem:[%s3 + $0xb0] sm:$0xf] %v520
  %649 = vst [vmem:[%s3 + $0xb4] sm:$0xf] %v521
  %650 = vst [vmem:[%s3 + $0xb8] sm:$0xf] %v522
  %651 = vst [vmem:[%s3 + $0xbc] sm:$0xf] %v523
  %652 = vst [vmem:[%s3 + $0xc0] sm:$0xf] %v524
  %653 = vst [vmem:[%s3 + $0xc4] sm:$0xf] %v525
  %654 = vst [vmem:[%s3 + $0xc8] sm:$0xf] %v526
  %655 = vst [vmem:[%s3 + $0xcc] sm:$0xf] %v527
  %656 = vst [vmem:[%s3 + $0xd0] sm:$0xf] %v528
  %657 = vst [vmem:[%s3 + $0xd4] sm:$0xf] %v529
  %658 = vst [vmem:[%s3 + $0xd8] sm:$0xf] %v530
  %659 = vst [vmem:[%s3 + $0xdc] sm:$0xf] %v531
  %660 = vst [vmem:[%s3 + $0xe0] sm:$0xf] %v532
  %661 = vst [vmem:[%s3 + $0xe4] sm:$0xf] %v533
  %662 = vst [vmem:[%s3 + $0xe8] sm:$0xf] %v534
  %663 = vst [vmem:[%s3 + $0xec] sm:$0xf] %v535
  %664 = vst [vmem:[%s3 + $0xf0] sm:$0xf] %v536
  %665 = vst [vmem:[%s3 + $0xf4] sm:$0xf] %v537
  %666 = vst [vmem:[%s3 + $0xf8] sm:$0xf] %v538
  %667 = vst [vmem:[%s3 + $0xfc] sm:$0xf] %v539
  // Predicated region
  $region14: #{generator_forward.14} parent=0 // pred_check
    _
  $region15: #{generator_forward.14} parent=0 // pred_check_branch
    %669 = sbr.rel (0) target = $region17
  $region16: #{generator_forward.14} parent=0 // pred_region
    _
  $region17: #{generator_forward.14} parent=0 // pred_fallthru
    _
  // Predicated region
  $region18: #{generator_forward.14} parent=0 // pred_check
    _
  $region19: #{generator_forward.14} parent=0 // pred_check_branch
    %671 = sbr.rel (0) target = $region21
  $region20: #{generator_forward.14} parent=0 // pred_region
    _
  $region21: #{generator_forward.14} parent=0 // pred_fallthru
    _

// kernel: generator_forward.15
$region0: #{generator_forward.15}
  #allocation0 [shape = 'u32[]', space=smem, size = 0x4, offset = 0x4, fixed_abs, tag = 'smem constant byte address 0x4 - core index']
  #allocation1 [shape = 'u32[144,128]{1,0:T(1,128)}', space=vmem, size = 0x12000, scoped, tag = 'internal scratch']
  %s0 = inlined_call_operand.vmem [shape: bf16[4,512,512], index: 0, kind: input, shape index: {}]
  %s1 = inlined_call_operand.vmem [shape: bf16[4,512,64], index: 1, kind: input, shape index: {}]
  %s2 = inlined_call_operand.vmem [shape: bf16[4,512,64], index: 2, kind: output, shape index: {0}]
  %s3 = inlined_call_operand.vmem [shape: f32[4,1,2,64], index: 3, kind: output, shape index: {1}]
  %4 = xla_tuple %s2, %s3
  %s5 = sld [smem:[#allocation0]]
  $region49: #{generator_forward.15} parent=0
    _
  %s7 = ssub.s32 1, %s5
  %s8 = scalar_select 0, %s7, %s5
  loop: start=0, step=1, limit=6
  $region2: #{generator_forward.15} parent=0 // loop_pre_header
    _
  $region3: #{generator_forward.15} parent=0 // loop_header
    %s10 = sphi 0, %s14
    %p11 = scmp.ge.s32.totalorder %s10, 6
    %s17 = sphi 0, %s36
    %s18 = sphi 0, %s32
    %s19 = sphi 0, %s28
    %s20 = sphi 0, %s17
    %s21 = sphi 0, %s18
    %s22 = sphi 0, %s19
    %s23 = sphi 0, %s20
    %s24 = sphi 0, %s21
    %s25 = sphi 0, %s22
    %s41 = sphi 0, %s43
    %s44 = sphi 0, %s41
    %s45 = sphi 0, %s44
    %s61 = sphi 0, %s45
    %s69 = sphi 0, %s71
    %s72 = sphi 0, %s69
    %s73 = sphi 0, %s72
    %s89 = sphi 0, %s73
    %s99 = sphi 0, %s101
    %s102 = sphi 0, %s99
    %s103 = sphi 0, %s102
    %s119 = sphi 0, %s103
    %s129 = sphi 0, %s131
    %s132 = sphi 0, %s129
    %s133 = sphi 0, %s132
    %s149 = sphi 0, %s133
  $region4: #{generator_forward.15} parent=0 // loop_header_branch
    %13 = sbr.rel (%p11) target = $region8
  $region5: #{generator_forward.15} parent=0 // loop_body
    %s15 = ssub.s32 %s10, 1
    %s16 = ssub.s32 %s10, 2
    %s26 = sadd.s32 1, %s19
    %p27 = scmp.ge.s32.totalorder %s26, 1
    %s28 = scalar_select %p27, 0, %s26
    %s29 = sadd.s32 1, %s18
    %s30 = scalar_select %p27, %s29, %s18
    %p31 = scmp.ge.s32.totalorder %s30, 1
    %s32 = scalar_select %p31, 0, %s30
    %s33 = sadd.s32 1, %s17
    %s34 = scalar_select %p31, %s33, %s17
    %p35 = scmp.ge.s32.totalorder %s34, 4
    %s36 = scalar_select %p35, 0, %s34
    %s37 = ssub.s32 %s17, %s36
    %s38 = ssub.s32 %s19, %s28
    %s39 = sor.u32 %s37, %s38
    %p40 = scmp.eq.s32.totalorder %s39, 0
    %s42 = sadd.s32 %s41, 1
    %s43 = scalar_select %p40, %s41, %s42
    %p46 = pneg %p40
    %p47 = scmp.eq.s32.totalorder %s10, 3
    %p48 = por %p46, %p47
    %p49 = scmp.ne.s32.totalorder %s41, %s44
    %p50 = scmp.eq.s32.totalorder %s10, 0
    %p51 = por %p49, %p50
    %p52 = scmp.ne.s32.totalorder %s41, %s44
    %p53 = scmp.eq.s32.totalorder %s15, 3
    %p54 = por %p52, %p53
    %p55 = scmp.ne.s32.totalorder %s44, %s45
    %p56 = scmp.eq.s32.totalorder %s15, 0
    %p57 = por %p55, %p56
    %p58 = scmp.ne.s32.totalorder %s44, %s45
    %p59 = scmp.eq.s32.totalorder %s16, 3
    %p60 = por %p58, %p59
    %p62 = scmp.ne.s32.totalorder %s45, %s61
    %p63 = scmp.eq.s32.totalorder %s16, 0
    %p64 = por %p62, %p63
    %s65 = ssub.s32 %s17, %s36
    %s66 = ssub.s32 %s18, %s32
    %s67 = sor.u32 %s65, %s66
    %p68 = scmp.eq.s32.totalorder %s67, 0
    %s70 = sadd.s32 %s69, 1
    %s71 = scalar_select %p68, %s69, %s70
    %p74 = pneg %p68
    %p75 = scmp.eq.s32.totalorder %s10, 3
    %p76 = por %p74, %p75
    %p77 = scmp.ne.s32.totalorder %s69, %s72
    %p78 = scmp.eq.s32.totalorder %s10, 0
    %p79 = por %p77, %p78
    %p80 = scmp.ne.s32.totalorder %s69, %s72
    %p81 = scmp.eq.s32.totalorder %s15, 3
    %p82 = por %p80, %p81
    %p83 = scmp.ne.s32.totalorder %s72, %s73
    %p84 = scmp.eq.s32.totalorder %s15, 0
    %p85 = por %p83, %p84
    %p86 = scmp.ne.s32.totalorder %s72, %s73
    %p87 = scmp.eq.s32.totalorder %s16, 3
    %p88 = por %p86, %p87
    %p90 = scmp.ne.s32.totalorder %s73, %s89
    %p91 = scmp.eq.s32.totalorder %s16, 0
    %p92 = por %p90, %p91
    %s93 = ssub.s32 %s17, %s36
    %s94 = ssub.s32 %s19, %s28
    %s95 = sor.u32 %s93, %s94
    %s96 = ssub.s32 %s18, %s32
    %s97 = sor.u32 %s95, %s96
    %p98 = scmp.eq.s32.totalorder %s97, 0
    %s100 = sadd.s32 %s99, 1
    %s101 = scalar_select %p98, %s99, %s100
    %p104 = pneg %p98
    %p105 = scmp.eq.s32.totalorder %s10, 3
    %p106 = por %p104, %p105
    %p107 = scmp.ne.s32.totalorder %s99, %s102
    %p108 = scmp.eq.s32.totalorder %s10, 0
    %p109 = por %p107, %p108
    %p110 = scmp.ne.s32.totalorder %s99, %s102
    %p111 = scmp.eq.s32.totalorder %s15, 3
    %p112 = por %p110, %p111
    %p113 = scmp.ne.s32.totalorder %s102, %s103
    %p114 = scmp.eq.s32.totalorder %s15, 0
    %p115 = por %p113, %p114
    %p116 = scmp.ne.s32.totalorder %s102, %s103
    %p117 = scmp.eq.s32.totalorder %s16, 3
    %p118 = por %p116, %p117
    %p120 = scmp.ne.s32.totalorder %s103, %s119
    %p121 = scmp.eq.s32.totalorder %s16, 0
    %p122 = por %p120, %p121
    %s123 = ssub.s32 %s17, %s36
    %s124 = ssub.s32 %s19, %s28
    %s125 = sor.u32 %s123, %s124
    %s126 = ssub.s32 %s18, %s32
    %s127 = sor.u32 %s125, %s126
    %p128 = scmp.eq.s32.totalorder %s127, 0
    %s130 = sadd.s32 %s129, 1
    %s131 = scalar_select %p128, %s129, %s130
    %p134 = pneg %p128
    %p135 = scmp.eq.s32.totalorder %s10, 3
    %p136 = por %p134, %p135
    %p137 = scmp.ne.s32.totalorder %s129, %s132
    %p138 = scmp.eq.s32.totalorder %s10, 0
    %p139 = por %p137, %p138
    %p140 = scmp.ne.s32.totalorder %s129, %s132
    %p141 = scmp.eq.s32.totalorder %s15, 3
    %p142 = por %p140, %p141
    %p143 = scmp.ne.s32.totalorder %s132, %s133
    %p144 = scmp.eq.s32.totalorder %s15, 0
    %p145 = por %p143, %p144
    %p146 = scmp.ne.s32.totalorder %s132, %s133
    %p147 = scmp.eq.s32.totalorder %s16, 3
    %p148 = por %p146, %p147
    %p150 = scmp.ne.s32.totalorder %s133, %s149
    %p151 = scmp.eq.s32.totalorder %s16, 0
    %p152 = por %p150, %p151
    %p153 = scmp.le.s32.totalorder 1, %s10
    %p154 = scmp.lt.s32.totalorder %s10, 5
    %p155 = pnand %p153, %p154
    %p156 = pneg %p155
    // Predicated region
    $region9: #{generator_forward.15} parent=5 // pred_check
      _
    $region10: #{generator_forward.15} parent=5 // pred_check_branch
      %158 = sbr.rel (%p155) target = $region12
    $region11: #{generator_forward.15} parent=5 // pred_region
      %s159 = ssub.s32 %s10, 1
    $region12: #{generator_forward.15} parent=5 // pred_fallthru
      _
    %p160 = scmp.lt.s32.totalorder %s10, 4
    // Predicated region
    $region13: #{generator_forward.15} parent=5 // pred_check
      %p161 = pneg %p160
    $region14: #{generator_forward.15} parent=5 // pred_check_branch
      %163 = sbr.rel (%p161) target = $region16
    $region15: #{generator_forward.15} parent=5 // pred_region
      // Predicated region
      $region17: #{generator_forward.15} parent=15 // pred_check
        %p164 = pneg %p51
      $region18: #{generator_forward.15} parent=15 // pred_check_branch
        %166 = sbr.rel (%p164) target = $region20
      $region19: #{generator_forward.15} parent=15 // pred_region
        %s167 = smul.u32 64, %s19
        %p168 = scmp.lt.s32.totalorder %s17, 3
        %s169 = scalar_select %p168, %s17, 3
        %p170 = scmp.lt.s32.totalorder %s167, 63
        %s171 = scalar_select %p170, %s167, 63
        %s172 = smul.addr %s171, 4
        %s173 = smul.addr %s169, 256
        %s174 = sadd.s32 %s172, %s173
        %s175 = smul.addr %s174, 4
        %s176 = scalar_lea.vmem %s0, %s175
        %s177 = smul.u32 64, %s19
      $region20: #{generator_forward.15} parent=15 // pred_fallthru
        _
      // Predicated region
      $region21: #{generator_forward.15} parent=15 // pred_check
        %p178 = pneg %p79
      $region22: #{generator_forward.15} parent=15 // pred_check_branch
        %180 = sbr.rel (%p178) target = $region24
      $region23: #{generator_forward.15} parent=15 // pred_region
        %p181 = scmp.lt.s32.totalorder %s17, 3
        %s182 = scalar_select %p181, %s17, 3
        %p183 = scmp.lt.s32.totalorder %s18, 0
        %s184 = scalar_select %p183, %s18, 0
        %s185 = smul.addr %s182, 64
        %s186 = sadd.s32 %s184, %s185
        %s187 = smul.addr %s186, 4
        %s188 = scalar_lea.vmem %s1, %s187
      $region24: #{generator_forward.15} parent=15 // pred_fallthru
        _
    $region16: #{generator_forward.15} parent=5 // pred_fallthru
      _
    %p189 = scmp.le.s32.totalorder 1, %s10
    %p190 = scmp.lt.s32.totalorder %s10, 5
    %p191 = pnand %p189, %p190
    %p192 = pneg %p191
    // Predicated region
    $region25: #{generator_forward.15} parent=5 // pred_check
      _
    $region26: #{generator_forward.15} parent=5 // pred_check_branch
      %194 = sbr.rel (%p191) target = $region28
    $region27: #{generator_forward.15} parent=5 // pred_region
      %s195 = ssub.s32 %s10, 1
      %s196 = smul.u32 64, %s22
      %p197 = scmp.lt.s32.totalorder %s20, 3
      %s198 = scalar_select %p197, %s20, 3
      %p199 = scmp.lt.s32.totalorder %s196, 63
      %s200 = scalar_select %p199, %s196, 63
      %s201 = smul.addr %s200, 4
      %s202 = smul.addr %s198, 256
      %s203 = sadd.s32 %s201, %s202
      %s204 = smul.addr %s203, 4
      %s205 = scalar_lea.vmem %s0, %s204
      %p206 = pneg %p57
      %p207 = pneg %p54
      %p208 = scmp.lt.s32.totalorder %s20, 3
      %s209 = scalar_select %p208, %s20, 3
      %p210 = scmp.lt.s32.totalorder %s21, 0
      %s211 = scalar_select %p210, %s21, 0
      %s212 = smul.addr %s209, 64
      %s213 = sadd.s32 %s211, %s212
      %s214 = smul.addr %s213, 4
      %s215 = scalar_lea.vmem %s1, %s214
      %p216 = pneg %p85
      %p217 = pneg %p82
      %p218 = pneg %p115
      %p219 = pneg %p112
      %s220 = smul.u32 64, %s22
      %p221 = scmp.lt.s32.totalorder %s20, 3
      %s222 = scalar_select %p221, %s20, 3
      %p223 = scmp.lt.s32.totalorder %s220, 63
      %s224 = scalar_select %p223, %s220, 63
      %p225 = scmp.lt.s32.totalorder %s21, 0
      %s226 = scalar_select %p225, %s21, 0
      %s227 = sadd.s32 %s226, %s224
      %s228 = smul.addr %s222, 64
      %s229 = sadd.s32 %s227, %s228
      %s230 = smul.addr %s229, 4
      %s231 = scalar_lea.vmem %s2, %s230
      %p232 = pneg %p145
      %p233 = pneg %p142
      %p234 = scmp.lt.s32.totalorder %s20, 3
      %s235 = scalar_select %p234, %s20, 3
      %p236 = scmp.lt.s32.totalorder %s22, 0
      %s237 = scalar_select %p236, %s22, 0
      %p238 = scmp.lt.s32.totalorder %s21, 0
      %s239 = scalar_select %p238, %s21, 0
      %s240 = sadd.s32 %s239, %s237
      %s241 = sadd.s32 %s240, %s235
      %s242 = smul.addr %s241, 2
      %s243 = scalar_lea.vmem %s3, %s242
      %s244 = smul.u32 64, %s22
      %p245 = scmp.lt.s32.totalorder %s20, 3
      %s246 = scalar_select %p245, %s20, 3
      %p247 = scmp.lt.s32.totalorder %s244, 63
      %s248 = scalar_select %p247, %s244, 63
      %s249 = smul.addr %s248, 4
      %s250 = smul.addr %s246, 256
      %s251 = sadd.s32 %s249, %s250
      %s252 = smul.addr %s251, 4
      %s253 = scalar_lea.vmem %s0, %s252
      %s254 = smul.u32 64, %s22
      %p255 = scmp.lt.s32.totalorder %s20, 3
      %s256 = scalar_select %p255, %s20, 3
      %p257 = scmp.lt.s32.totalorder %s21, 0
      %s258 = scalar_select %p257, %s21, 0
      %s259 = smul.addr %s256, 64
      %s260 = sadd.s32 %s258, %s259
      %s261 = smul.addr %s260, 4
      %s262 = scalar_lea.vmem %s1, %s261
      %s263 = smul.u32 64, %s22
      %p264 = scmp.lt.s32.totalorder %s20, 3
      %s265 = scalar_select %p264, %s20, 3
      %p266 = scmp.lt.s32.totalorder %s263, 63
      %s267 = scalar_select %p266, %s263, 63
      %p268 = scmp.lt.s32.totalorder %s21, 0
      %s269 = scalar_select %p268, %s21, 0
      %s270 = sadd.s32 %s269, %s267
      %s271 = smul.addr %s265, 64
      %s272 = sadd.s32 %s270, %s271
      %s273 = smul.addr %s272, 4
      %s274 = scalar_lea.vmem %s2, %s273
      %s275 = smul.u32 64, %s22
      %p276 = scmp.lt.s32.totalorder %s20, 3
      %s277 = scalar_select %p276, %s20, 3
      %p278 = scmp.lt.s32.totalorder %s22, 0
      %s279 = scalar_select %p278, %s22, 0
      %p280 = scmp.lt.s32.totalorder %s21, 0
      %s281 = scalar_select %p280, %s21, 0
      %s282 = sadd.s32 %s281, %s279
      %s283 = sadd.s32 %s282, %s277
      %s284 = smul.addr %s283, 2
      %s285 = scalar_lea.vmem %s3, %s284
      %v287 = vld [vmem:[%s253] sm:$0xff]
      %v288 = vld [vmem:[%s253 + $0x8] sm:$0xff]
      %v289 = vld [vmem:[%s253 + $0x10] sm:$0xff]
      %v290 = vld [vmem:[%s253 + $0x18] sm:$0xff]
      %v291 = vld [vmem:[%s253 + $0x20] sm:$0xff]
      %v292 = vld [vmem:[%s253 + $0x28] sm:$0xff]
      %v293 = vld [vmem:[%s253 + $0x30] sm:$0xff]
      %v294 = vld [vmem:[%s253 + $0x38] sm:$0xff]
      %v295 = vld [vmem:[%s253 + $0x40] sm:$0xff]
      %v296 = vld [vmem:[%s253 + $0x48] sm:$0xff]
      %v297 = vld [vmem:[%s253 + $0x50] sm:$0xff]
      %v298 = vld [vmem:[%s253 + $0x58] sm:$0xff]
      %v299 = vld [vmem:[%s253 + $0x60] sm:$0xff]
      %v300 = vld [vmem:[%s253 + $0x68] sm:$0xff]
      %v301 = vld [vmem:[%s253 + $0x70] sm:$0xff]
      %v302 = vld [vmem:[%s253 + $0x78] sm:$0xff]
      %v303 = vld [vmem:[%s253 + $0x80] sm:$0xff]
      %v304 = vld [vmem:[%s253 + $0x88] sm:$0xff]
      %v305 = vld [vmem:[%s253 + $0x90] sm:$0xff]
      %v306 = vld [vmem:[%s253 + $0x98] sm:$0xff]
      %v307 = vld [vmem:[%s253 + $0xa0] sm:$0xff]
      %v308 = vld [vmem:[%s253 + $0xa8] sm:$0xff]
      %v309 = vld [vmem:[%s253 + $0xb0] sm:$0xff]
      %v310 = vld [vmem:[%s253 + $0xb8] sm:$0xff]
      %v311 = vld [vmem:[%s253 + $0xc0] sm:$0xff]
      %v312 = vld [vmem:[%s253 + $0xc8] sm:$0xff]
      %v313 = vld [vmem:[%s253 + $0xd0] sm:$0xff]
      %v314 = vld [vmem:[%s253 + $0xd8] sm:$0xff]
      %v315 = vld [vmem:[%s253 + $0xe0] sm:$0xff]
      %v316 = vld [vmem:[%s253 + $0xe8] sm:$0xff]
      %v317 = vld [vmem:[%s253 + $0xf0] sm:$0xff]
      %v318 = vld [vmem:[%s253 + $0xf8] sm:$0xff]
      %v319 = vld [vmem:[%s253 + $0x100] sm:$0xff]
      %v320 = vld [vmem:[%s253 + $0x108] sm:$0xff]
      %v321 = vld [vmem:[%s253 + $0x110] sm:$0xff]
      %v322 = vld [vmem:[%s253 + $0x118] sm:$0xff]
      %v323 = vld [vmem:[%s253 + $0x120] sm:$0xff]
      %v324 = vld [vmem:[%s253 + $0x128] sm:$0xff]
      %v325 = vld [vmem:[%s253 + $0x130] sm:$0xff]
      %v326 = vld [vmem:[%s253 + $0x138] sm:$0xff]
      %v327 = vld [vmem:[%s253 + $0x140] sm:$0xff]
      %v328 = vld [vmem:[%s253 + $0x148] sm:$0xff]
      %v329 = vld [vmem:[%s253 + $0x150] sm:$0xff]
      %v330 = vld [vmem:[%s253 + $0x158] sm:$0xff]
      %v331 = vld [vmem:[%s253 + $0x160] sm:$0xff]
      %v332 = vld [vmem:[%s253 + $0x168] sm:$0xff]
      %v333 = vld [vmem:[%s253 + $0x170] sm:$0xff]
      %v334 = vld [vmem:[%s253 + $0x178] sm:$0xff]
      %v335 = vld [vmem:[%s253 + $0x180] sm:$0xff]
      %v336 = vld [vmem:[%s253 + $0x188] sm:$0xff]
      %v337 = vld [vmem:[%s253 + $0x190] sm:$0xff]
      %v338 = vld [vmem:[%s253 + $0x198] sm:$0xff]
      %v339 = vld [vmem:[%s253 + $0x1a0] sm:$0xff]
      %v340 = vld [vmem:[%s253 + $0x1a8] sm:$0xff]
      %v341 = vld [vmem:[%s253 + $0x1b0] sm:$0xff]
      %v342 = vld [vmem:[%s253 + $0x1b8] sm:$0xff]
      %v343 = vld [vmem:[%s253 + $0x1c0] sm:$0xff]
      %v344 = vld [vmem:[%s253 + $0x1c8] sm:$0xff]
      %v345 = vld [vmem:[%s253 + $0x1d0] sm:$0xff]
      %v346 = vld [vmem:[%s253 + $0x1d8] sm:$0xff]
      %v347 = vld [vmem:[%s253 + $0x1e0] sm:$0xff]
      %v348 = vld [vmem:[%s253 + $0x1e8] sm:$0xff]
      %v349 = vld [vmem:[%s253 + $0x1f0] sm:$0xff]
      %v350 = vld [vmem:[%s253 + $0x1f8] sm:$0xff]
      %v351 = vld [vmem:[%s253 + $0x200] sm:$0xff]
      %v352 = vld [vmem:[%s253 + $0x208] sm:$0xff]
      %v353 = vld [vmem:[%s253 + $0x210] sm:$0xff]
      %v354 = vld [vmem:[%s253 + $0x218] sm:$0xff]
      %v355 = vld [vmem:[%s253 + $0x220] sm:$0xff]
      %v356 = vld [vmem:[%s253 + $0x228] sm:$0xff]
      %v357 = vld [vmem:[%s253 + $0x230] sm:$0xff]
      %v358 = vld [vmem:[%s253 + $0x238] sm:$0xff]
      %v359 = vld [vmem:[%s253 + $0x240] sm:$0xff]
      %v360 = vld [vmem:[%s253 + $0x248] sm:$0xff]
      %v361 = vld [vmem:[%s253 + $0x250] sm:$0xff]
      %v362 = vld [vmem:[%s253 + $0x258] sm:$0xff]
      %v363 = vld [vmem:[%s253 + $0x260] sm:$0xff]
      %v364 = vld [vmem:[%s253 + $0x268] sm:$0xff]
      %v365 = vld [vmem:[%s253 + $0x270] sm:$0xff]
      %v366 = vld [vmem:[%s253 + $0x278] sm:$0xff]
      %v367 = vld [vmem:[%s253 + $0x280] sm:$0xff]
      %v368 = vld [vmem:[%s253 + $0x288] sm:$0xff]
      %v369 = vld [vmem:[%s253 + $0x290] sm:$0xff]
      %v370 = vld [vmem:[%s253 + $0x298] sm:$0xff]
      %v371 = vld [vmem:[%s253 + $0x2a0] sm:$0xff]
      %v372 = vld [vmem:[%s253 + $0x2a8] sm:$0xff]
      %v373 = vld [vmem:[%s253 + $0x2b0] sm:$0xff]
      %v374 = vld [vmem:[%s253 + $0x2b8] sm:$0xff]
      %v375 = vld [vmem:[%s253 + $0x2c0] sm:$0xff]
      %v376 = vld [vmem:[%s253 + $0x2c8] sm:$0xff]
      %v377 = vld [vmem:[%s253 + $0x2d0] sm:$0xff]
      %v378 = vld [vmem:[%s253 + $0x2d8] sm:$0xff]
      %v379 = vld [vmem:[%s253 + $0x2e0] sm:$0xff]
      %v380 = vld [vmem:[%s253 + $0x2e8] sm:$0xff]
      %v381 = vld [vmem:[%s253 + $0x2f0] sm:$0xff]
      %v382 = vld [vmem:[%s253 + $0x2f8] sm:$0xff]
      %v383 = vld [vmem:[%s253 + $0x300] sm:$0xff]
      %v384 = vld [vmem:[%s253 + $0x308] sm:$0xff]
      %v385 = vld [vmem:[%s253 + $0x310] sm:$0xff]
      %v386 = vld [vmem:[%s253 + $0x318] sm:$0xff]
      %v387 = vld [vmem:[%s253 + $0x320] sm:$0xff]
      %v388 = vld [vmem:[%s253 + $0x328] sm:$0xff]
      %v389 = vld [vmem:[%s253 + $0x330] sm:$0xff]
      %v390 = vld [vmem:[%s253 + $0x338] sm:$0xff]
      %v391 = vld [vmem:[%s253 + $0x340] sm:$0xff]
      %v392 = vld [vmem:[%s253 + $0x348] sm:$0xff]
      %v393 = vld [vmem:[%s253 + $0x350] sm:$0xff]
      %v394 = vld [vmem:[%s253 + $0x358] sm:$0xff]
      %v395 = vld [vmem:[%s253 + $0x360] sm:$0xff]
      %v396 = vld [vmem:[%s253 + $0x368] sm:$0xff]
      %v397 = vld [vmem:[%s253 + $0x370] sm:$0xff]
      %v398 = vld [vmem:[%s253 + $0x378] sm:$0xff]
      %v399 = vld [vmem:[%s253 + $0x380] sm:$0xff]
      %v400 = vld [vmem:[%s253 + $0x388] sm:$0xff]
      %v401 = vld [vmem:[%s253 + $0x390] sm:$0xff]
      %v402 = vld [vmem:[%s253 + $0x398] sm:$0xff]
      %v403 = vld [vmem:[%s253 + $0x3a0] sm:$0xff]
      %v404 = vld [vmem:[%s253 + $0x3a8] sm:$0xff]
      %v405 = vld [vmem:[%s253 + $0x3b0] sm:$0xff]
      %v406 = vld [vmem:[%s253 + $0x3b8] sm:$0xff]
      %v407 = vld [vmem:[%s253 + $0x3c0] sm:$0xff]
      %v408 = vld [vmem:[%s253 + $0x3c8] sm:$0xff]
      %v409 = vld [vmem:[%s253 + $0x3d0] sm:$0xff]
      %v410 = vld [vmem:[%s253 + $0x3d8] sm:$0xff]
      %v411 = vld [vmem:[%s253 + $0x3e0] sm:$0xff]
      %v412 = vld [vmem:[%s253 + $0x3e8] sm:$0xff]
      %v413 = vld [vmem:[%s253 + $0x3f0] sm:$0xff]
      %v414 = vld [vmem:[%s253 + $0x3f8] sm:$0xff]
      %v415 = vld [vmem:[%s262] sm:$0xf]
      %v416 = vld [vmem:[%s262 + $0x4] sm:$0xf]
      %v417 = vld [vmem:[%s262 + $0x8] sm:$0xf]
      %v418 = vld [vmem:[%s262 + $0xc] sm:$0xf]
      %v419 = vld [vmem:[%s262 + $0x10] sm:$0xf]
      %v420 = vld [vmem:[%s262 + $0x14] sm:$0xf]
      %v421 = vld [vmem:[%s262 + $0x18] sm:$0xf]
      %v422 = vld [vmem:[%s262 + $0x1c] sm:$0xf]
      %v423 = vld [vmem:[%s262 + $0x20] sm:$0xf]
      %v424 = vld [vmem:[%s262 + $0x24] sm:$0xf]
      %v425 = vld [vmem:[%s262 + $0x28] sm:$0xf]
      %v426 = vld [vmem:[%s262 + $0x2c] sm:$0xf]
      %v427 = vld [vmem:[%s262 + $0x30] sm:$0xf]
      %v428 = vld [vmem:[%s262 + $0x34] sm:$0xf]
      %v429 = vld [vmem:[%s262 + $0x38] sm:$0xf]
      %v430 = vld [vmem:[%s262 + $0x3c] sm:$0xf]
      %v431 = vld [vmem:[%s262 + $0x40] sm:$0xf]
      %v432 = vld [vmem:[%s262 + $0x44] sm:$0xf]
      %v433 = vld [vmem:[%s262 + $0x48] sm:$0xf]
      %v434 = vld [vmem:[%s262 + $0x4c] sm:$0xf]
      %v435 = vld [vmem:[%s262 + $0x50] sm:$0xf]
      %v436 = vld [vmem:[%s262 + $0x54] sm:$0xf]
      %v437 = vld [vmem:[%s262 + $0x58] sm:$0xf]
      %v438 = vld [vmem:[%s262 + $0x5c] sm:$0xf]
      %v439 = vld [vmem:[%s262 + $0x60] sm:$0xf]
      %v440 = vld [vmem:[%s262 + $0x64] sm:$0xf]
      %v441 = vld [vmem:[%s262 + $0x68] sm:$0xf]
      %v442 = vld [vmem:[%s262 + $0x6c] sm:$0xf]
      %v443 = vld [vmem:[%s262 + $0x70] sm:$0xf]
      %v444 = vld [vmem:[%s262 + $0x74] sm:$0xf]
      %v445 = vld [vmem:[%s262 + $0x78] sm:$0xf]
      %v446 = vld [vmem:[%s262 + $0x7c] sm:$0xf]
      %v447 = vld [vmem:[%s262 + $0x80] sm:$0xf]
      %v448 = vld [vmem:[%s262 + $0x84] sm:$0xf]
      %v449 = vld [vmem:[%s262 + $0x88] sm:$0xf]
      %v450 = vld [vmem:[%s262 + $0x8c] sm:$0xf]
      %v451 = vld [vmem:[%s262 + $0x90] sm:$0xf]
      %v452 = vld [vmem:[%s262 + $0x94] sm:$0xf]
      %v453 = vld [vmem:[%s262 + $0x98] sm:$0xf]
      %v454 = vld [vmem:[%s262 + $0x9c] sm:$0xf]
      %v455 = vld [vmem:[%s262 + $0xa0] sm:$0xf]
      %v456 = vld [vmem:[%s262 + $0xa4] sm:$0xf]
      %v457 = vld [vmem:[%s262 + $0xa8] sm:$0xf]
      %v458 = vld [vmem:[%s262 + $0xac] sm:$0xf]
      %v459 = vld [vmem:[%s262 + $0xb0] sm:$0xf]
      %v460 = vld [vmem:[%s262 + $0xb4] sm:$0xf]
      %v461 = vld [vmem:[%s262 + $0xb8] sm:$0xf]
      %v462 = vld [vmem:[%s262 + $0xbc] sm:$0xf]
      %v463 = vld [vmem:[%s262 + $0xc0] sm:$0xf]
      %v464 = vld [vmem:[%s262 + $0xc4] sm:$0xf]
      %v465 = vld [vmem:[%s262 + $0xc8] sm:$0xf]
      %v466 = vld [vmem:[%s262 + $0xcc] sm:$0xf]
      %v467 = vld [vmem:[%s262 + $0xd0] sm:$0xf]
      %v468 = vld [vmem:[%s262 + $0xd4] sm:$0xf]
      %v469 = vld [vmem:[%s262 + $0xd8] sm:$0xf]
      %v470 = vld [vmem:[%s262 + $0xdc] sm:$0xf]
      %v471 = vld [vmem:[%s262 + $0xe0] sm:$0xf]
      %v472 = vld [vmem:[%s262 + $0xe4] sm:$0xf]
      %v473 = vld [vmem:[%s262 + $0xe8] sm:$0xf]
      %v474 = vld [vmem:[%s262 + $0xec] sm:$0xf]
      %v475 = vld [vmem:[%s262 + $0xf0] sm:$0xf]
      %v476 = vld [vmem:[%s262 + $0xf4] sm:$0xf]
      %v477 = vld [vmem:[%s262 + $0xf8] sm:$0xf]
      %v478 = vld [vmem:[%s262 + $0xfc] sm:$0xf]
      %v607 = vunpack.c.l.b16 %v287
      %v608 = vunpack.c.h.b16 %v287
      %v609 = vunpack.c.l.b16 %v288
      %v610 = vunpack.c.h.b16 %v288
      %v611 = vunpack.c.l.b16 %v289
      %v612 = vunpack.c.h.b16 %v289
      %v613 = vunpack.c.l.b16 %v290
      %v614 = vunpack.c.h.b16 %v290
      %v615 = vunpack.c.l.b16 %v291
      %v616 = vunpack.c.h.b16 %v291
      %v617 = vunpack.c.l.b16 %v292
      %v618 = vunpack.c.h.b16 %v292
      %v619 = vunpack.c.l.b16 %v293
      %v620 = vunpack.c.h.b16 %v293
      %v621 = vunpack.c.l.b16 %v294
      %v622 = vunpack.c.h.b16 %v294
      %v623 = vunpack.c.l.b16 %v295
      %v624 = vunpack.c.h.b16 %v295
      %v625 = vunpack.c.l.b16 %v296
      %v626 = vunpack.c.h.b16 %v296
      %v627 = vunpack.c.l.b16 %v297
      %v628 = vunpack.c.h.b16 %v297
      %v629 = vunpack.c.l.b16 %v298
      %v630 = vunpack.c.h.b16 %v298
      %v631 = vunpack.c.l.b16 %v299
      %v632 = vunpack.c.h.b16 %v299
      %v633 = vunpack.c.l.b16 %v300
      %v634 = vunpack.c.h.b16 %v300
      %v635 = vunpack.c.l.b16 %v301
      %v636 = vunpack.c.h.b16 %v301
      %v637 = vunpack.c.l.b16 %v302
      %v638 = vunpack.c.h.b16 %v302
      %v639 = vunpack.c.l.b16 %v303
      %v640 = vunpack.c.h.b16 %v303
      %v641 = vunpack.c.l.b16 %v304
      %v642 = vunpack.c.h.b16 %v304
      %v643 = vunpack.c.l.b16 %v305
      %v644 = vunpack.c.h.b16 %v305
      %v645 = vunpack.c.l.b16 %v306
      %v646 = vunpack.c.h.b16 %v306
      %v647 = vunpack.c.l.b16 %v307
      %v648 = vunpack.c.h.b16 %v307
      %v649 = vunpack.c.l.b16 %v308
      %v650 = vunpack.c.h.b16 %v308
      %v651 = vunpack.c.l.b16 %v309
      %v652 = vunpack.c.h.b16 %v309
      %v653 = vunpack.c.l.b16 %v310
      %v654 = vunpack.c.h.b16 %v310
      %v655 = vunpack.c.l.b16 %v311
      %v656 = vunpack.c.h.b16 %v311
      %v657 = vunpack.c.l.b16 %v312
      %v658 = vunpack.c.h.b16 %v312
      %v659 = vunpack.c.l.b16 %v313
      %v660 = vunpack.c.h.b16 %v313
      %v661 = vunpack.c.l.b16 %v314
      %v662 = vunpack.c.h.b16 %v314
      %v663 = vunpack.c.l.b16 %v315
      %v664 = vunpack.c.h.b16 %v315
      %v665 = vunpack.c.l.b16 %v316
      %v666 = vunpack.c.h.b16 %v316
      %v667 = vunpack.c.l.b16 %v317
      %v668 = vunpack.c.h.b16 %v317
      %v669 = vunpack.c.l.b16 %v318
      %v670 = vunpack.c.h.b16 %v318
      %v671 = vunpack.c.l.b16 %v319
      %v672 = vunpack.c.h.b16 %v319
      %v673 = vunpack.c.l.b16 %v320
      %v674 = vunpack.c.h.b16 %v320
      %v675 = vunpack.c.l.b16 %v321
      %v676 = vunpack.c.h.b16 %v321
      %v677 = vunpack.c.l.b16 %v322
      %v678 = vunpack.c.h.b16 %v322
      %v679 = vunpack.c.l.b16 %v323
      %v680 = vunpack.c.h.b16 %v323
      %v681 = vunpack.c.l.b16 %v324
      %v682 = vunpack.c.h.b16 %v324
      %v683 = vunpack.c.l.b16 %v325
      %v684 = vunpack.c.h.b16 %v325
      %v685 = vunpack.c.l.b16 %v326
      %v686 = vunpack.c.h.b16 %v326
      %v687 = vunpack.c.l.b16 %v327
      %v688 = vunpack.c.h.b16 %v327
      %v689 = vunpack.c.l.b16 %v328
      %v690 = vunpack.c.h.b16 %v328
      %v691 = vunpack.c.l.b16 %v329
      %v692 = vunpack.c.h.b16 %v329
      %v693 = vunpack.c.l.b16 %v330
      %v694 = vunpack.c.h.b16 %v330
      %v695 = vunpack.c.l.b16 %v331
      %v696 = vunpack.c.h.b16 %v331
      %v697 = vunpack.c.l.b16 %v332
      %v698 = vunpack.c.h.b16 %v332
      %v699 = vunpack.c.l.b16 %v333
      %v700 = vunpack.c.h.b16 %v333
      %v701 = vunpack.c.l.b16 %v334
      %v702 = vunpack.c.h.b16 %v334
      %v703 = vunpack.c.l.b16 %v335
      %v704 = vunpack.c.h.b16 %v335
      %v705 = vunpack.c.l.b16 %v336
      %v706 = vunpack.c.h.b16 %v336
      %v707 = vunpack.c.l.b16 %v337
      %v708 = vunpack.c.h.b16 %v337
      %v709 = vunpack.c.l.b16 %v338
      %v710 = vunpack.c.h.b16 %v338
      %v711 = vunpack.c.l.b16 %v339
      %v712 = vunpack.c.h.b16 %v339
      %v713 = vunpack.c.l.b16 %v340
      %v714 = vunpack.c.h.b16 %v340
      %v715 = vunpack.c.l.b16 %v341
      %v716 = vunpack.c.h.b16 %v341
      %v717 = vunpack.c.l.b16 %v342
      %v718 = vunpack.c.h.b16 %v342
      %v719 = vunpack.c.l.b16 %v343
      %v720 = vunpack.c.h.b16 %v343
      %v721 = vunpack.c.l.b16 %v344
      %v722 = vunpack.c.h.b16 %v344
      %v723 = vunpack.c.l.b16 %v345
      %v724 = vunpack.c.h.b16 %v345
      %v725 = vunpack.c.l.b16 %v346
      %v726 = vunpack.c.h.b16 %v346
      %v727 = vunpack.c.l.b16 %v347
      %v728 = vunpack.c.h.b16 %v347
      %v729 = vunpack.c.l.b16 %v348
      %v730 = vunpack.c.h.b16 %v348
      %v731 = vunpack.c.l.b16 %v349
      %v732 = vunpack.c.h.b16 %v349
      %v733 = vunpack.c.l.b16 %v350
      %v734 = vunpack.c.h.b16 %v350
      %v735 = vunpack.c.l.b16 %v351
      %v736 = vunpack.c.h.b16 %v351
      %v737 = vunpack.c.l.b16 %v352
      %v738 = vunpack.c.h.b16 %v352
      %v739 = vunpack.c.l.b16 %v353
      %v740 = vunpack.c.h.b16 %v353
      %v741 = vunpack.c.l.b16 %v354
      %v742 = vunpack.c.h.b16 %v354
      %v743 = vunpack.c.l.b16 %v355
      %v744 = vunpack.c.h.b16 %v355
      %v745 = vunpack.c.l.b16 %v356
      %v746 = vunpack.c.h.b16 %v356
      %v747 = vunpack.c.l.b16 %v357
      %v748 = vunpack.c.h.b16 %v357
      %v749 = vunpack.c.l.b16 %v358
      %v750 = vunpack.c.h.b16 %v358
      %v751 = vunpack.c.l.b16 %v359
      %v752 = vunpack.c.h.b16 %v359
      %v753 = vunpack.c.l.b16 %v360
      %v754 = vunpack.c.h.b16 %v360
      %v755 = vunpack.c.l.b16 %v361
      %v756 = vunpack.c.h.b16 %v361
      %v757 = vunpack.c.l.b16 %v362
      %v758 = vunpack.c.h.b16 %v362
      %v759 = vunpack.c.l.b16 %v363
      %v760 = vunpack.c.h.b16 %v363
      %v761 = vunpack.c.l.b16 %v364
      %v762 = vunpack.c.h.b16 %v364
      %v763 = vunpack.c.l.b16 %v365
      %v764 = vunpack.c.h.b16 %v365
      %v765 = vunpack.c.l.b16 %v366
      %v766 = vunpack.c.h.b16 %v366
      %v767 = vunpack.c.l.b16 %v367
      %v768 = vunpack.c.h.b16 %v367
      %v769 = vunpack.c.l.b16 %v368
      %v770 = vunpack.c.h.b16 %v368
      %v771 = vunpack.c.l.b16 %v369
      %v772 = vunpack.c.h.b16 %v369
      %v773 = vunpack.c.l.b16 %v370
      %v774 = vunpack.c.h.b16 %v370
      %v775 = vunpack.c.l.b16 %v371
      %v776 = vunpack.c.h.b16 %v371
      %v777 = vunpack.c.l.b16 %v372
      %v778 = vunpack.c.h.b16 %v372
      %v779 = vunpack.c.l.b16 %v373
      %v780 = vunpack.c.h.b16 %v373
      %v781 = vunpack.c.l.b16 %v374
      %v782 = vunpack.c.h.b16 %v374
      %v783 = vunpack.c.l.b16 %v375
      %v784 = vunpack.c.h.b16 %v375
      %v785 = vunpack.c.l.b16 %v376
      %v786 = vunpack.c.h.b16 %v376
      %v787 = vunpack.c.l.b16 %v377
      %v788 = vunpack.c.h.b16 %v377
      %v789 = vunpack.c.l.b16 %v378
      %v790 = vunpack.c.h.b16 %v378
      %v791 = vunpack.c.l.b16 %v379
      %v792 = vunpack.c.h.b16 %v379
      %v793 = vunpack.c.l.b16 %v380
      %v794 = vunpack.c.h.b16 %v380
      %v795 = vunpack.c.l.b16 %v381
      %v796 = vunpack.c.h.b16 %v381
      %v797 = vunpack.c.l.b16 %v382
      %v798 = vunpack.c.h.b16 %v382
      %v799 = vunpack.c.l.b16 %v383
      %v800 = vunpack.c.h.b16 %v383
      %v801 = vunpack.c.l.b16 %v384
      %v802 = vunpack.c.h.b16 %v384
      %v803 = vunpack.c.l.b16 %v385
      %v804 = vunpack.c.h.b16 %v385
      %v805 = vunpack.c.l.b16 %v386
      %v806 = vunpack.c.h.b16 %v386
      %v807 = vunpack.c.l.b16 %v387
      %v808 = vunpack.c.h.b16 %v387
      %v809 = vunpack.c.l.b16 %v388
      %v810 = vunpack.c.h.b16 %v388
      %v811 = vunpack.c.l.b16 %v389
      %v812 = vunpack.c.h.b16 %v389
      %v813 = vunpack.c.l.b16 %v390
      %v814 = vunpack.c.h.b16 %v390
      %v815 = vunpack.c.l.b16 %v391
      %v816 = vunpack.c.h.b16 %v391
      %v817 = vunpack.c.l.b16 %v392
      %v818 = vunpack.c.h.b16 %v392
      %v819 = vunpack.c.l.b16 %v393
      %v820 = vunpack.c.h.b16 %v393
      %v821 = vunpack.c.l.b16 %v394
      %v822 = vunpack.c.h.b16 %v394
      %v823 = vunpack.c.l.b16 %v395
      %v824 = vunpack.c.h.b16 %v395
      %v825 = vunpack.c.l.b16 %v396
      %v826 = vunpack.c.h.b16 %v396
      %v827 = vunpack.c.l.b16 %v397
      %v828 = vunpack.c.h.b16 %v397
      %v829 = vunpack.c.l.b16 %v398
      %v830 = vunpack.c.h.b16 %v398
      %v831 = vunpack.c.l.b16 %v399
      %v832 = vunpack.c.h.b16 %v399
      %v833 = vunpack.c.l.b16 %v400
      %v834 = vunpack.c.h.b16 %v400
      %v835 = vunpack.c.l.b16 %v401
      %v836 = vunpack.c.h.b16 %v401
      %v837 = vunpack.c.l.b16 %v402
      %v838 = vunpack.c.h.b16 %v402
      %v839 = vunpack.c.l.b16 %v403
      %v840 = vunpack.c.h.b16 %v403
      %v841 = vunpack.c.l.b16 %v404
      %v842 = vunpack.c.h.b16 %v404
      %v843 = vunpack.c.l.b16 %v405
      %v844 = vunpack.c.h.b16 %v405
      %v845 = vunpack.c.l.b16 %v406
      %v846 = vunpack.c.h.b16 %v406
      %v847 = vunpack.c.l.b16 %v407
      %v848 = vunpack.c.h.b16 %v407
      %v849 = vunpack.c.l.b16 %v408
      %v850 = vunpack.c.h.b16 %v408
      %v851 = vunpack.c.l.b16 %v409
      %v852 = vunpack.c.h.b16 %v409
      %v853 = vunpack.c.l.b16 %v410
      %v854 = vunpack.c.h.b16 %v410
      %v855 = vunpack.c.l.b16 %v411
      %v856 = vunpack.c.h.b16 %v411
      %v857 = vunpack.c.l.b16 %v412
      %v858 = vunpack.c.h.b16 %v412
      %v859 = vunpack.c.l.b16 %v413
      %v860 = vunpack.c.h.b16 %v413
      %v861 = vunpack.c.l.b16 %v414
      %v862 = vunpack.c.h.b16 %v414
      %v863 = vpack.c.b16 %v611, %v607
      %v864 = vpack.c.b16 %v612, %v608
      %v865 = vpack.c.b16 %v613, %v609
      %v866 = vpack.c.b16 %v614, %v610
      %v867 = vpack.c.b16 %v619, %v615
      %v868 = vpack.c.b16 %v620, %v616
      %v869 = vpack.c.b16 %v621, %v617
      %v870 = vpack.c.b16 %v622, %v618
      %v871 = vpack.c.b16 %v627, %v623
      %v872 = vpack.c.b16 %v628, %v624
      %v873 = vpack.c.b16 %v629, %v625
      %v874 = vpack.c.b16 %v630, %v626
      %v875 = vpack.c.b16 %v635, %v631
      %v876 = vpack.c.b16 %v636, %v632
      %v877 = vpack.c.b16 %v637, %v633
      %v878 = vpack.c.b16 %v638, %v634
      %v879 = vpack.c.b16 %v643, %v639
      %v880 = vpack.c.b16 %v644, %v640
      %v881 = vpack.c.b16 %v645, %v641
      %v882 = vpack.c.b16 %v646, %v642
      %v883 = vpack.c.b16 %v651, %v647
      %v884 = vpack.c.b16 %v652, %v648
      %v885 = vpack.c.b16 %v653, %v649
      %v886 = vpack.c.b16 %v654, %v650
      %v887 = vpack.c.b16 %v659, %v655
      %v888 = vpack.c.b16 %v660, %v656
      %v889 = vpack.c.b16 %v661, %v657
      %v890 = vpack.c.b16 %v662, %v658
      %v891 = vpack.c.b16 %v667, %v663
      %v892 = vpack.c.b16 %v668, %v664
      %v893 = vpack.c.b16 %v669, %v665
      %v894 = vpack.c.b16 %v670, %v666
      %v895 = vpack.c.b16 %v675, %v671
      %v896 = vpack.c.b16 %v676, %v672
      %v897 = vpack.c.b16 %v677, %v673
      %v898 = vpack.c.b16 %v678, %v674
      %v899 = vpack.c.b16 %v683, %v679
      %v900 = vpack.c.b16 %v684, %v680
      %v901 = vpack.c.b16 %v685, %v681
      %v902 = vpack.c.b16 %v686, %v682
      %v903 = vpack.c.b16 %v691, %v687
      %v904 = vpack.c.b16 %v692, %v688
      %v905 = vpack.c.b16 %v693, %v689
      %v906 = vpack.c.b16 %v694, %v690
      %v907 = vpack.c.b16 %v699, %v695
      %v908 = vpack.c.b16 %v700, %v696
      %v909 = vpack.c.b16 %v701, %v697
      %v910 = vpack.c.b16 %v702, %v698
      %v911 = vpack.c.b16 %v707, %v703
      %v912 = vpack.c.b16 %v708, %v704
      %v913 = vpack.c.b16 %v709, %v705
      %v914 = vpack.c.b16 %v710, %v706
      %v915 = vpack.c.b16 %v715, %v711
      %v916 = vpack.c.b16 %v716, %v712
      %v917 = vpack.c.b16 %v717, %v713
      %v918 = vpack.c.b16 %v718, %v714
      %v919 = vpack.c.b16 %v723, %v719
      %v920 = vpack.c.b16 %v724, %v720
      %v921 = vpack.c.b16 %v725, %v721
      %v922 = vpack.c.b16 %v726, %v722
      %v923 = vpack.c.b16 %v731, %v727
      %v924 = vpack.c.b16 %v732, %v728
      %v925 = vpack.c.b16 %v733, %v729
      %v926 = vpack.c.b16 %v734, %v730
      %v927 = vpack.c.b16 %v739, %v735
      %v928 = vpack.c.b16 %v740, %v736
      %v929 = vpack.c.b16 %v741, %v737
      %v930 = vpack.c.b16 %v742, %v738
      %v931 = vpack.c.b16 %v747, %v743
      %v932 = vpack.c.b16 %v748, %v744
      %v933 = vpack.c.b16 %v749, %v745
      %v934 = vpack.c.b16 %v750, %v746
      %v935 = vpack.c.b16 %v755, %v751
      %v936 = vpack.c.b16 %v756, %v752
      %v937 = vpack.c.b16 %v757, %v753
      %v938 = vpack.c.b16 %v758, %v754
      %v939 = vpack.c.b16 %v763, %v759
      %v940 = vpack.c.b16 %v764, %v760
      %v941 = vpack.c.b16 %v765, %v761
      %v942 = vpack.c.b16 %v766, %v762
      %v943 = vpack.c.b16 %v771, %v767
      %v944 = vpack.c.b16 %v772, %v768
      %v945 = vpack.c.b16 %v773, %v769
      %v946 = vpack.c.b16 %v774, %v770
      %v947 = vpack.c.b16 %v779, %v775
      %v948 = vpack.c.b16 %v780, %v776
      %v949 = vpack.c.b16 %v781, %v777
      %v950 = vpack.c.b16 %v782, %v778
      %v951 = vpack.c.b16 %v787, %v783
      %v952 = vpack.c.b16 %v788, %v784
      %v953 = vpack.c.b16 %v789, %v785
      %v954 = vpack.c.b16 %v790, %v786
      %v955 = vpack.c.b16 %v795, %v791
      %v956 = vpack.c.b16 %v796, %v792
      %v957 = vpack.c.b16 %v797, %v793
      %v958 = vpack.c.b16 %v798, %v794
      %v959 = vpack.c.b16 %v803, %v799
      %v960 = vpack.c.b16 %v804, %v800
      %v961 = vpack.c.b16 %v805, %v801
      %v962 = vpack.c.b16 %v806, %v802
      %v963 = vpack.c.b16 %v811, %v807
      %v964 = vpack.c.b16 %v812, %v808
      %v965 = vpack.c.b16 %v813, %v809
      %v966 = vpack.c.b16 %v814, %v810
      %v967 = vpack.c.b16 %v819, %v815
      %v968 = vpack.c.b16 %v820, %v816
      %v969 = vpack.c.b16 %v821, %v817
      %v970 = vpack.c.b16 %v822, %v818
      %v971 = vpack.c.b16 %v827, %v823
      %v972 = vpack.c.b16 %v828, %v824
      %v973 = vpack.c.b16 %v829, %v825
      %v974 = vpack.c.b16 %v830, %v826
      %v975 = vpack.c.b16 %v835, %v831
      %v976 = vpack.c.b16 %v836, %v832
      %v977 = vpack.c.b16 %v837, %v833
      %v978 = vpack.c.b16 %v838, %v834
      %v979 = vpack.c.b16 %v843, %v839
      %v980 = vpack.c.b16 %v844, %v840
      %v981 = vpack.c.b16 %v845, %v841
      %v982 = vpack.c.b16 %v846, %v842
      %v983 = vpack.c.b16 %v851, %v847
      %v984 = vpack.c.b16 %v852, %v848
      %v985 = vpack.c.b16 %v853, %v849
      %v986 = vpack.c.b16 %v854, %v850
      %v987 = vpack.c.b16 %v859, %v855
      %v988 = vpack.c.b16 %v860, %v856
      %v989 = vpack.c.b16 %v861, %v857
      %v990 = vpack.c.b16 %v862, %v858
      %v1183 = vunpack.c.l.b16 %v415
      %v1184 = vunpack.c.l.b16 %v416
      %v1185 = vunpack.c.l.b16 %v417
      %v1186 = vunpack.c.l.b16 %v418
      %v1187 = vunpack.c.l.b16 %v419
      %v1188 = vunpack.c.l.b16 %v420
      %v1189 = vunpack.c.l.b16 %v421
      %v1190 = vunpack.c.l.b16 %v422
      %v1191 = vunpack.c.l.b16 %v423
      %v1192 = vunpack.c.l.b16 %v424
      %v1193 = vunpack.c.l.b16 %v425
      %v1194 = vunpack.c.l.b16 %v426
      %v1195 = vunpack.c.l.b16 %v427
      %v1196 = vunpack.c.l.b16 %v428
      %v1197 = vunpack.c.l.b16 %v429
      %v1198 = vunpack.c.l.b16 %v430
      %v1199 = vunpack.c.l.b16 %v431
      %v1200 = vunpack.c.l.b16 %v432
      %v1201 = vunpack.c.l.b16 %v433
      %v1202 = vunpack.c.l.b16 %v434
      %v1203 = vunpack.c.l.b16 %v435
      %v1204 = vunpack.c.l.b16 %v436
      %v1205 = vunpack.c.l.b16 %v437
      %v1206 = vunpack.c.l.b16 %v438
      %v1207 = vunpack.c.l.b16 %v439
      %v1208 = vunpack.c.l.b16 %v440
      %v1209 = vunpack.c.l.b16 %v441
      %v1210 = vunpack.c.l.b16 %v442
      %v1211 = vunpack.c.l.b16 %v443
      %v1212 = vunpack.c.l.b16 %v444
      %v1213 = vunpack.c.l.b16 %v445
      %v1214 = vunpack.c.l.b16 %v446
      %v1215 = vunpack.c.l.b16 %v447
      %v1216 = vunpack.c.l.b16 %v448
      %v1217 = vunpack.c.l.b16 %v449
      %v1218 = vunpack.c.l.b16 %v450
      %v1219 = vunpack.c.l.b16 %v451
      %v1220 = vunpack.c.l.b16 %v452
      %v1221 = vunpack.c.l.b16 %v453
      %v1222 = vunpack.c.l.b16 %v454
      %v1223 = vunpack.c.l.b16 %v455
      %v1224 = vunpack.c.l.b16 %v456
      %v1225 = vunpack.c.l.b16 %v457
      %v1226 = vunpack.c.l.b16 %v458
      %v1227 = vunpack.c.l.b16 %v459
      %v1228 = vunpack.c.l.b16 %v460
      %v1229 = vunpack.c.l.b16 %v461
      %v1230 = vunpack.c.l.b16 %v462
      %v1231 = vunpack.c.l.b16 %v463
      %v1232 = vunpack.c.l.b16 %v464
      %v1233 = vunpack.c.l.b16 %v465
      %v1234 = vunpack.c.l.b16 %v466
      %v1235 = vunpack.c.l.b16 %v467
      %v1236 = vunpack.c.l.b16 %v468
      %v1237 = vunpack.c.l.b16 %v469
      %v1238 = vunpack.c.l.b16 %v470
      %v1239 = vunpack.c.l.b16 %v471
      %v1240 = vunpack.c.l.b16 %v472
      %v1241 = vunpack.c.l.b16 %v473
      %v1242 = vunpack.c.l.b16 %v474
      %v1243 = vunpack.c.l.b16 %v475
      %v1244 = vunpack.c.l.b16 %v476
      %v1245 = vunpack.c.l.b16 %v477
      %v1246 = vunpack.c.l.b16 %v478
      %v1247 = vpack.c.b16 %v1184, %v1183
      %v1248 = vpack.c.b16 %v1186, %v1185
      %v1249 = vpack.c.b16 %v1188, %v1187
      %v1250 = vpack.c.b16 %v1190, %v1189
      %v1251 = vpack.c.b16 %v1192, %v1191
      %v1252 = vpack.c.b16 %v1194, %v1193
      %v1253 = vpack.c.b16 %v1196, %v1195
      %v1254 = vpack.c.b16 %v1198, %v1197
      %v1255 = vpack.c.b16 %v1200, %v1199
      %v1256 = vpack.c.b16 %v1202, %v1201
      %v1257 = vpack.c.b16 %v1204, %v1203
      %v1258 = vpack.c.b16 %v1206, %v1205
      %v1259 = vpack.c.b16 %v1208, %v1207
      %v1260 = vpack.c.b16 %v1210, %v1209
      %v1261 = vpack.c.b16 %v1212, %v1211
      %v1262 = vpack.c.b16 %v1214, %v1213
      %v1263 = vpack.c.b16 %v1216, %v1215
      %v1264 = vpack.c.b16 %v1218, %v1217
      %v1265 = vpack.c.b16 %v1220, %v1219
      %v1266 = vpack.c.b16 %v1222, %v1221
      %v1267 = vpack.c.b16 %v1224, %v1223
      %v1268 = vpack.c.b16 %v1226, %v1225
      %v1269 = vpack.c.b16 %v1228, %v1227
      %v1270 = vpack.c.b16 %v1230, %v1229
      %v1271 = vpack.c.b16 %v1232, %v1231
      %v1272 = vpack.c.b16 %v1234, %v1233
      %v1273 = vpack.c.b16 %v1236, %v1235
      %v1274 = vpack.c.b16 %v1238, %v1237
      %v1275 = vpack.c.b16 %v1240, %v1239
      %v1276 = vpack.c.b16 %v1242, %v1241
      %v1277 = vpack.c.b16 %v1244, %v1243
      %v1278 = vpack.c.b16 %v1246, %v1245
      %1311 = vmatprep.subr.bf16.mxu0 0
      %1312 = vmatpush1.bf16.msra.mxu0 %v1247
      %1313 = vmatprep.subr.bf16.mxu0 0
      %1314 = vmatpush1.bf16.msra.mxu0 %v1248
      %1315 = vmatprep.subr.bf16.mxu0 0
      %1316 = vmatpush1.bf16.msra.mxu0 %v1249
      %1317 = vmatprep.subr.bf16.mxu0 0
      %1318 = vmatpush1.bf16.msra.mxu0 %v1250
      %1319 = vmatprep.subr.bf16.mxu0 0
      %1320 = vmatpush1.bf16.msra.mxu0 %v1251
      %1321 = vmatprep.subr.bf16.mxu0 0
      %1322 = vmatpush1.bf16.msra.mxu0 %v1252
      %1323 = vmatprep.subr.bf16.mxu0 0
      %1324 = vmatpush1.bf16.msra.mxu0 %v1253
      %1325 = vmatprep.subr.bf16.mxu0 0
      %1326 = vmatpush1.bf16.msra.mxu0 %v1254
      %1327 = vmatprep.subr.bf16.mxu0 0
      %1328 = vmatpush1.bf16.msra.mxu0 %v1255
      %1329 = vmatprep.subr.bf16.mxu0 0
      %1330 = vmatpush1.bf16.msra.mxu0 %v1256
      %1331 = vmatprep.subr.bf16.mxu0 0
      %1332 = vmatpush1.bf16.msra.mxu0 %v1257
      %1333 = vmatprep.subr.bf16.mxu0 0
      %1334 = vmatpush1.bf16.msra.mxu0 %v1258
      %1335 = vmatprep.subr.bf16.mxu0 0
      %1336 = vmatpush1.bf16.msra.mxu0 %v1259
      %1337 = vmatprep.subr.bf16.mxu0 0
      %1338 = vmatpush1.bf16.msra.mxu0 %v1260
      %1339 = vmatprep.subr.bf16.mxu0 0
      %1340 = vmatpush1.bf16.msra.mxu0 %v1261
      %1341 = vmatprep.subr.bf16.mxu0 0
      %1342 = vmatpush1.bf16.msra.mxu0 %v1262
      %1343 = vmatprep.mubr.bf16.mxu0 %v864
      %1344 = vmatmul.mubr.bf16.gmra.mrb[0].mxu0 %v863
      %v1345 = vpop.f32.mrb[0].mxu0
      %v1346 = vadd.f32 0.0, %v1345
      %v1347 = vpop.f32.mrb[0].mxu0
      %v1348 = vpop.f32.mrb[0].mxu0
      %v1349 = vadd.f32 0.0, %v1348
      %v1350 = vpop.f32.mrb[0].mxu0
      %1351 = vmatprep.mubr.bf16.mxu0 %v868
      %1352 = vmatmul.mubr.bf16.gmra.mrb[0].mxu0 %v867
      %v1353 = vpop.f32.mrb[0].mxu0
      %v1354 = vadd.f32 0.0, %v1353
      %v1355 = vpop.f32.mrb[0].mxu0
      %v1356 = vpop.f32.mrb[0].mxu0
      %v1357 = vadd.f32 0.0, %v1356
      %v1358 = vpop.f32.mrb[0].mxu0
      %1359 = vmatprep.mubr.bf16.mxu0 %v872
      %1360 = vmatmul.mubr.bf16.gmra.mrb[0].mxu0 %v871
      %v1361 = vpop.f32.mrb[0].mxu0
      %v1362 = vadd.f32 0.0, %v1361
      %v1363 = vpop.f32.mrb[0].mxu0
      %v1364 = vpop.f32.mrb[0].mxu0
      %v1365 = vadd.f32 0.0, %v1364
      %v1366 = vpop.f32.mrb[0].mxu0
      %1367 = vmatprep.mubr.bf16.mxu0 %v876
      %1368 = vmatmul.mubr.bf16.gmra.mrb[0].mxu0 %v875
      %v1369 = vpop.f32.mrb[0].mxu0
      %v1370 = vadd.f32 0.0, %v1369
      %v1371 = vpop.f32.mrb[0].mxu0
      %v1372 = vpop.f32.mrb[0].mxu0
      %v1373 = vadd.f32 0.0, %v1372
      %v1374 = vpop.f32.mrb[0].mxu0
      %1375 = vmatprep.mubr.bf16.mxu0 %v880
      %1376 = vmatmul.mubr.bf16.gmra.mrb[0].mxu0 %v879
      %v1377 = vpop.f32.mrb[0].mxu0
      %v1378 = vadd.f32 0.0, %v1377
      %v1379 = vpop.f32.mrb[0].mxu0
      %v1380 = vpop.f32.mrb[0].mxu0
      %v1381 = vadd.f32 0.0, %v1380
      %v1382 = vpop.f32.mrb[0].mxu0
      %1383 = vmatprep.mubr.bf16.mxu0 %v884
      %1384 = vmatmul.mubr.bf16.gmra.mrb[0].mxu0 %v883
      %v1385 = vpop.f32.mrb[0].mxu0
      %v1386 = vadd.f32 0.0, %v1385
      %v1387 = vpop.f32.mrb[0].mxu0
      %v1388 = vpop.f32.mrb[0].mxu0
      %v1389 = vadd.f32 0.0, %v1388
      %v1390 = vpop.f32.mrb[0].mxu0
      %1391 = vmatprep.mubr.bf16.mxu0 %v888
      %1392 = vmatmul.mubr.bf16.gmra.mrb[0].mxu0 %v887
      %v1393 = vpop.f32.mrb[0].mxu0
      %v1394 = vadd.f32 0.0, %v1393
      %v1395 = vpop.f32.mrb[0].mxu0
      %v1396 = vpop.f32.mrb[0].mxu0
      %v1397 = vadd.f32 0.0, %v1396
      %v1398 = vpop.f32.mrb[0].mxu0
      %1399 = vmatprep.mubr.bf16.mxu0 %v892
      %1400 = vmatmul.mubr.bf16.gmra.mrb[0].mxu0 %v891
      %v1401 = vpop.f32.mrb[0].mxu0
      %v1402 = vadd.f32 0.0, %v1401
      %v1403 = vpop.f32.mrb[0].mxu0
      %v1404 = vpop.f32.mrb[0].mxu0
      %v1405 = vadd.f32 0.0, %v1404
      %v1406 = vpop.f32.mrb[0].mxu0
      %1407 = vmatprep.mubr.bf16.mxu0 %v896
      %1408 = vmatmul.mubr.bf16.gmra.mrb[0].mxu0 %v895
      %v1409 = vpop.f32.mrb[0].mxu0
      %v1410 = vadd.f32 0.0, %v1409
      %v1411 = vpop.f32.mrb[0].mxu0
      %v1412 = vpop.f32.mrb[0].mxu0
      %v1413 = vadd.f32 0.0, %v1412
      %v1414 = vpop.f32.mrb[0].mxu0
      %1415 = vmatprep.mubr.bf16.mxu0 %v900
      %1416 = vmatmul.mubr.bf16.gmra.mrb[0].mxu0 %v899
      %v1417 = vpop.f32.mrb[0].mxu0
      %v1418 = vadd.f32 0.0, %v1417
      %v1419 = vpop.f32.mrb[0].mxu0
      %v1420 = vpop.f32.mrb[0].mxu0
      %v1421 = vadd.f32 0.0, %v1420
      %v1422 = vpop.f32.mrb[0].mxu0
      %1423 = vmatprep.mubr.bf16.mxu0 %v904
      %1424 = vmatmul.mubr.bf16.gmra.mrb[0].mxu0 %v903
      %v1425 = vpop.f32.mrb[0].mxu0
      %v1426 = vadd.f32 0.0, %v1425
      %v1427 = vpop.f32.mrb[0].mxu0
      %v1428 = vpop.f32.mrb[0].mxu0
      %v1429 = vadd.f32 0.0, %v1428
      %v1430 = vpop.f32.mrb[0].mxu0
      %1431 = vmatprep.mubr.bf16.mxu0 %v908
      %1432 = vmatmul.mubr.bf16.gmra.mrb[0].mxu0 %v907
      %v1433 = vpop.f32.mrb[0].mxu0
      %v1434 = vadd.f32 0.0, %v1433
      %v1435 = vpop.f32.mrb[0].mxu0
      %v1436 = vpop.f32.mrb[0].mxu0
      %v1437 = vadd.f32 0.0, %v1436
      %v1438 = vpop.f32.mrb[0].mxu0
      %1439 = vmatprep.mubr.bf16.mxu0 %v912
      %1440 = vmatmul.mubr.bf16.gmra.mrb[0].mxu0 %v911
      %v1441 = vpop.f32.mrb[0].mxu0
      %v1442 = vadd.f32 0.0, %v1441
      %v1443 = vpop.f32.mrb[0].mxu0
      %v1444 = vpop.f32.mrb[0].mxu0
      %v1445 = vadd.f32 0.0, %v1444
      %v1446 = vpop.f32.mrb[0].mxu0
      %1447 = vmatprep.mubr.bf16.mxu0 %v916
      %1448 = vmatmul.mubr.bf16.gmra.mrb[0].mxu0 %v915
      %v1449 = vpop.f32.mrb[0].mxu0
      %v1450 = vadd.f32 0.0, %v1449
      %v1451 = vpop.f32.mrb[0].mxu0
      %v1452 = vpop.f32.mrb[0].mxu0
      %v1453 = vadd.f32 0.0, %v1452
      %v1454 = vpop.f32.mrb[0].mxu0
      %1455 = vmatprep.mubr.bf16.mxu0 %v920
      %1456 = vmatmul.mubr.bf16.gmra.mrb[0].mxu0 %v919
      %v1457 = vpop.f32.mrb[0].mxu0
      %v1458 = vadd.f32 0.0, %v1457
      %v1459 = vpop.f32.mrb[0].mxu0
      %v1460 = vpop.f32.mrb[0].mxu0
      %v1461 = vadd.f32 0.0, %v1460
      %v1462 = vpop.f32.mrb[0].mxu0
      %1463 = vmatprep.mubr.bf16.mxu0 %v924
      %1464 = vmatmul.mubr.bf16.gmra.mrb[0].mxu0 %v923
      %v1465 = vpop.f32.mrb[0].mxu0
      %v1466 = vadd.f32 0.0, %v1465
      %v1467 = vpop.f32.mrb[0].mxu0
      %v1468 = vpop.f32.mrb[0].mxu0
      %v1469 = vadd.f32 0.0, %v1468
      %v1470 = vpop.f32.mrb[0].mxu0
      %1471 = vmatprep.mubr.bf16.mxu0 %v928
      %1472 = vmatmul.mubr.bf16.gmra.mrb[0].mxu0 %v927
      %v1473 = vpop.f32.mrb[0].mxu0
      %v1474 = vadd.f32 0.0, %v1473
      %v1475 = vpop.f32.mrb[0].mxu0
      %v1476 = vpop.f32.mrb[0].mxu0
      %v1477 = vadd.f32 0.0, %v1476
      %v1478 = vpop.f32.mrb[0].mxu0
      %1479 = vmatprep.mubr.bf16.mxu0 %v932
      %1480 = vmatmul.mubr.bf16.gmra.mrb[0].mxu0 %v931
      %v1481 = vpop.f32.mrb[0].mxu0
      %v1482 = vadd.f32 0.0, %v1481
      %v1483 = vpop.f32.mrb[0].mxu0
      %v1484 = vpop.f32.mrb[0].mxu0
      %v1485 = vadd.f32 0.0, %v1484
      %v1486 = vpop.f32.mrb[0].mxu0
      %1487 = vmatprep.mubr.bf16.mxu0 %v936
      %1488 = vmatmul.mubr.bf16.gmra.mrb[0].mxu0 %v935
      %v1489 = vpop.f32.mrb[0].mxu0
      %v1490 = vadd.f32 0.0, %v1489
      %v1491 = vpop.f32.mrb[0].mxu0
      %v1492 = vpop.f32.mrb[0].mxu0
      %v1493 = vadd.f32 0.0, %v1492
      %v1494 = vpop.f32.mrb[0].mxu0
      %1495 = vmatprep.mubr.bf16.mxu0 %v940
      %1496 = vmatmul.mubr.bf16.gmra.mrb[0].mxu0 %v939
      %v1497 = vpop.f32.mrb[0].mxu0
      %v1498 = vadd.f32 0.0, %v1497
      %v1499 = vpop.f32.mrb[0].mxu0
      %v1500 = vpop.f32.mrb[0].mxu0
      %v1501 = vadd.f32 0.0, %v1500
      %v1502 = vpop.f32.mrb[0].mxu0
      %1503 = vmatprep.mubr.bf16.mxu0 %v944
      %1504 = vmatmul.mubr.bf16.gmra.mrb[0].mxu0 %v943
      %v1505 = vpop.f32.mrb[0].mxu0
      %v1506 = vadd.f32 0.0, %v1505
      %v1507 = vpop.f32.mrb[0].mxu0
      %v1508 = vpop.f32.mrb[0].mxu0
      %v1509 = vadd.f32 0.0, %v1508
      %v1510 = vpop.f32.mrb[0].mxu0
      %1511 = vmatprep.mubr.bf16.mxu0 %v948
      %1512 = vmatmul.mubr.bf16.gmra.mrb[0].mxu0 %v947
      %v1513 = vpop.f32.mrb[0].mxu0
      %v1514 = vadd.f32 0.0, %v1513
      %v1515 = vpop.f32.mrb[0].mxu0
      %v1516 = vpop.f32.mrb[0].mxu0
      %v1517 = vadd.f32 0.0, %v1516
      %v1518 = vpop.f32.mrb[0].mxu0
      %1519 = vmatprep.mubr.bf16.mxu0 %v952
      %1520 = vmatmul.mubr.bf16.gmra.mrb[0].mxu0 %v951
      %v1521 = vpop.f32.mrb[0].mxu0
      %v1522 = vadd.f32 0.0, %v1521
      %v1523 = vpop.f32.mrb[0].mxu0
      %v1524 = vpop.f32.mrb[0].mxu0
      %v1525 = vadd.f32 0.0, %v1524
      %v1526 = vpop.f32.mrb[0].mxu0
      %1527 = vmatprep.mubr.bf16.mxu0 %v956
      %1528 = vmatmul.mubr.bf16.gmra.mrb[0].mxu0 %v955
      %v1529 = vpop.f32.mrb[0].mxu0
      %v1530 = vadd.f32 0.0, %v1529
      %v1531 = vpop.f32.mrb[0].mxu0
      %v1532 = vpop.f32.mrb[0].mxu0
      %v1533 = vadd.f32 0.0, %v1532
      %v1534 = vpop.f32.mrb[0].mxu0
      %1535 = vmatprep.mubr.bf16.mxu0 %v960
      %1536 = vmatmul.mubr.bf16.gmra.mrb[0].mxu0 %v959
      %v1537 = vpop.f32.mrb[0].mxu0
      %v1538 = vadd.f32 0.0, %v1537
      %v1539 = vpop.f32.mrb[0].mxu0
      %v1540 = vpop.f32.mrb[0].mxu0
      %v1541 = vadd.f32 0.0, %v1540
      %v1542 = vpop.f32.mrb[0].mxu0
      %1543 = vmatprep.mubr.bf16.mxu0 %v964
      %1544 = vmatmul.mubr.bf16.gmra.mrb[0].mxu0 %v963
      %v1545 = vpop.f32.mrb[0].mxu0
      %v1546 = vadd.f32 0.0, %v1545
      %v1547 = vpop.f32.mrb[0].mxu0
      %v1548 = vpop.f32.mrb[0].mxu0
      %v1549 = vadd.f32 0.0, %v1548
      %v1550 = vpop.f32.mrb[0].mxu0
      %1551 = vmatprep.mubr.bf16.mxu0 %v968
      %1552 = vmatmul.mubr.bf16.gmra.mrb[0].mxu0 %v967
      %v1553 = vpop.f32.mrb[0].mxu0
      %v1554 = vadd.f32 0.0, %v1553
      %v1555 = vpop.f32.mrb[0].mxu0
      %v1556 = vpop.f32.mrb[0].mxu0
      %v1557 = vadd.f32 0.0, %v1556
      %v1558 = vpop.f32.mrb[0].mxu0
      %1559 = vmatprep.mubr.bf16.mxu0 %v972
      %1560 = vmatmul.mubr.bf16.gmra.mrb[0].mxu0 %v971
      %v1561 = vpop.f32.mrb[0].mxu0
      %v1562 = vadd.f32 0.0, %v1561
      %v1563 = vpop.f32.mrb[0].mxu0
      %v1564 = vpop.f32.mrb[0].mxu0
      %v1565 = vadd.f32 0.0, %v1564
      %v1566 = vpop.f32.mrb[0].mxu0
      %1567 = vmatprep.mubr.bf16.mxu0 %v976
      %1568 = vmatmul.mubr.bf16.gmra.mrb[0].mxu0 %v975
      %v1569 = vpop.f32.mrb[0].mxu0
      %v1570 = vadd.f32 0.0, %v1569
      %v1571 = vpop.f32.mrb[0].mxu0
      %v1572 = vpop.f32.mrb[0].mxu0
      %v1573 = vadd.f32 0.0, %v1572
      %v1574 = vpop.f32.mrb[0].mxu0
      %1575 = vmatprep.mubr.bf16.mxu0 %v980
      %1576 = vmatmul.mubr.bf16.gmra.mrb[0].mxu0 %v979
      %v1577 = vpop.f32.mrb[0].mxu0
      %v1578 = vadd.f32 0.0, %v1577
      %v1579 = vpop.f32.mrb[0].mxu0
      %v1580 = vpop.f32.mrb[0].mxu0
      %v1581 = vadd.f32 0.0, %v1580
      %v1582 = vpop.f32.mrb[0].mxu0
      %1583 = vmatprep.mubr.bf16.mxu0 %v984
      %1584 = vmatmul.mubr.bf16.gmra.mrb[0].mxu0 %v983
      %v1585 = vpop.f32.mrb[0].mxu0
      %v1586 = vadd.f32 0.0, %v1585
      %v1587 = vpop.f32.mrb[0].mxu0
      %v1588 = vpop.f32.mrb[0].mxu0
      %v1589 = vadd.f32 0.0, %v1588
      %v1590 = vpop.f32.mrb[0].mxu0
      %1591 = vmatprep.mubr.bf16.mxu0 %v988
      %1592 = vmatmul.mubr.bf16.gmra.mrb[0].mxu0 %v987
      %v1593 = vpop.f32.mrb[0].mxu0
      %v1594 = vadd.f32 0.0, %v1593
      %v1595 = vpop.f32.mrb[0].mxu0
      %v1596 = vpop.f32.mrb[0].mxu0
      %v1597 = vadd.f32 0.0, %v1596
      %v1598 = vpop.f32.mrb[0].mxu0
      %1599 = vdwg.mxu0
      %1600 = vmatprep.subr.bf16.mxu0 0
      %1601 = vmatpush1.bf16.msra.mxu0 %v1263
      %1602 = vmatprep.subr.bf16.mxu0 0
      %1603 = vmatpush1.bf16.msra.mxu0 %v1264
      %1604 = vmatprep.subr.bf16.mxu0 0
      %1605 = vmatpush1.bf16.msra.mxu0 %v1265
      %1606 = vmatprep.subr.bf16.mxu0 0
      %1607 = vmatpush1.bf16.msra.mxu0 %v1266
      %1608 = vmatprep.subr.bf16.mxu0 0
      %1609 = vmatpush1.bf16.msra.mxu0 %v1267
      %1610 = vmatprep.subr.bf16.mxu0 0
      %1611 = vmatpush1.bf16.msra.mxu0 %v1268
      %1612 = vmatprep.subr.bf16.mxu0 0
      %1613 = vmatpush1.bf16.msra.mxu0 %v1269
      %1614 = vmatprep.subr.bf16.mxu0 0
      %1615 = vmatpush1.bf16.msra.mxu0 %v1270
      %1616 = vmatprep.subr.bf16.mxu0 0
      %1617 = vmatpush1.bf16.msra.mxu0 %v1271
      %1618 = vmatprep.subr.bf16.mxu0 0
      %1619 = vmatpush1.bf16.msra.mxu0 %v1272
      %1620 = vmatprep.subr.bf16.mxu0 0
      %1621 = vmatpush1.bf16.msra.mxu0 %v1273
      %1622 = vmatprep.subr.bf16.mxu0 0
      %1623 = vmatpush1.bf16.msra.mxu0 %v1274
      %1624 = vmatprep.subr.bf16.mxu0 0
      %1625 = vmatpush1.bf16.msra.mxu0 %v1275
      %1626 = vmatprep.subr.bf16.mxu0 0
      %1627 = vmatpush1.bf16.msra.mxu0 %v1276
      %1628 = vmatprep.subr.bf16.mxu0 0
      %1629 = vmatpush1.bf16.msra.mxu0 %v1277
      %1630 = vmatprep.subr.bf16.mxu0 0
      %1631 = vmatpush1.bf16.msra.mxu0 %v1278
      %1632 = vmatprep.mubr.bf16.mxu0 %v866
      %1633 = vmatmul.mubr.bf16.gmra.mrb[0].mxu0 %v865
      %v1634 = vpop.f32.mrb[0].mxu0
      %v1635 = vadd.f32 %v1346, %v1634
      %v1636 = vpop.f32.mrb[0].mxu0
      %v1637 = vpop.f32.mrb[0].mxu0
      %v1638 = vadd.f32 %v1349, %v1637
      %v1639 = vpop.f32.mrb[0].mxu0
      %1640 = vmatprep.mubr.bf16.mxu0 %v870
      %1641 = vmatmul.mubr.bf16.gmra.mrb[0].mxu0 %v869
      %v1642 = vpop.f32.mrb[0].mxu0
      %v1643 = vadd.f32 %v1354, %v1642
      %v1644 = vpop.f32.mrb[0].mxu0
      %v1645 = vpop.f32.mrb[0].mxu0
      %v1646 = vadd.f32 %v1357, %v1645
      %v1647 = vpop.f32.mrb[0].mxu0
      %1648 = vmatprep.mubr.bf16.mxu0 %v874
      %1649 = vmatmul.mubr.bf16.gmra.mrb[0].mxu0 %v873
      %v1650 = vpop.f32.mrb[0].mxu0
      %v1651 = vadd.f32 %v1362, %v1650
      %v1652 = vpop.f32.mrb[0].mxu0
      %v1653 = vpop.f32.mrb[0].mxu0
      %v1654 = vadd.f32 %v1365, %v1653
      %v1655 = vpop.f32.mrb[0].mxu0
      %1656 = vmatprep.mubr.bf16.mxu0 %v878
      %1657 = vmatmul.mubr.bf16.gmra.mrb[0].mxu0 %v877
      %v1658 = vpop.f32.mrb[0].mxu0
      %v1659 = vadd.f32 %v1370, %v1658
      %v1660 = vpop.f32.mrb[0].mxu0
      %v1661 = vpop.f32.mrb[0].mxu0
      %v1662 = vadd.f32 %v1373, %v1661
      %v1663 = vpop.f32.mrb[0].mxu0
      %1664 = vmatprep.mubr.bf16.mxu0 %v882
      %1665 = vmatmul.mubr.bf16.gmra.mrb[0].mxu0 %v881
      %v1666 = vpop.f32.mrb[0].mxu0
      %v1667 = vadd.f32 %v1378, %v1666
      %v1668 = vpop.f32.mrb[0].mxu0
      %v1669 = vpop.f32.mrb[0].mxu0
      %v1670 = vadd.f32 %v1381, %v1669
      %v1671 = vpop.f32.mrb[0].mxu0
      %1672 = vmatprep.mubr.bf16.mxu0 %v886
      %1673 = vmatmul.mubr.bf16.gmra.mrb[0].mxu0 %v885
      %v1674 = vpop.f32.mrb[0].mxu0
      %v1675 = vadd.f32 %v1386, %v1674
      %v1676 = vpop.f32.mrb[0].mxu0
      %v1677 = vpop.f32.mrb[0].mxu0
      %v1678 = vadd.f32 %v1389, %v1677
      %v1679 = vpop.f32.mrb[0].mxu0
      %1680 = vmatprep.mubr.bf16.mxu0 %v890
      %1681 = vmatmul.mubr.bf16.gmra.mrb[0].mxu0 %v889
      %v1682 = vpop.f32.mrb[0].mxu0
      %v1683 = vadd.f32 %v1394, %v1682
      %v1684 = vpop.f32.mrb[0].mxu0
      %v1685 = vpop.f32.mrb[0].mxu0
      %v1686 = vadd.f32 %v1397, %v1685
      %v1687 = vpop.f32.mrb[0].mxu0
      %1688 = vmatprep.mubr.bf16.mxu0 %v894
      %1689 = vmatmul.mubr.bf16.gmra.mrb[0].mxu0 %v893
      %v1690 = vpop.f32.mrb[0].mxu0
      %v1691 = vadd.f32 %v1402, %v1690
      %v1692 = vpop.f32.mrb[0].mxu0
      %v1693 = vpop.f32.mrb[0].mxu0
      %v1694 = vadd.f32 %v1405, %v1693
      %v1695 = vpop.f32.mrb[0].mxu0
      %1696 = vmatprep.mubr.bf16.mxu0 %v898
      %1697 = vmatmul.mubr.bf16.gmra.mrb[0].mxu0 %v897
      %v1698 = vpop.f32.mrb[0].mxu0
      %v1699 = vadd.f32 %v1410, %v1698
      %v1700 = vpop.f32.mrb[0].mxu0
      %v1701 = vpop.f32.mrb[0].mxu0
      %v1702 = vadd.f32 %v1413, %v1701
      %v1703 = vpop.f32.mrb[0].mxu0
      %1704 = vmatprep.mubr.bf16.mxu0 %v902
      %1705 = vmatmul.mubr.bf16.gmra.mrb[0].mxu0 %v901
      %v1706 = vpop.f32.mrb[0].mxu0
      %v1707 = vadd.f32 %v1418, %v1706
      %v1708 = vpop.f32.mrb[0].mxu0
      %v1709 = vpop.f32.mrb[0].mxu0
      %v1710 = vadd.f32 %v1421, %v1709
      %v1711 = vpop.f32.mrb[0].mxu0
      %1712 = vmatprep.mubr.bf16.mxu0 %v906
      %1713 = vmatmul.mubr.bf16.gmra.mrb[0].mxu0 %v905
      %v1714 = vpop.f32.mrb[0].mxu0
      %v1715 = vadd.f32 %v1426, %v1714
      %v1716 = vpop.f32.mrb[0].mxu0
      %v1717 = vpop.f32.mrb[0].mxu0
      %v1718 = vadd.f32 %v1429, %v1717
      %v1719 = vpop.f32.mrb[0].mxu0
      %1720 = vmatprep.mubr.bf16.mxu0 %v910
      %1721 = vmatmul.mubr.bf16.gmra.mrb[0].mxu0 %v909
      %v1722 = vpop.f32.mrb[0].mxu0
      %v1723 = vadd.f32 %v1434, %v1722
      %v1724 = vpop.f32.mrb[0].mxu0
      %v1725 = vpop.f32.mrb[0].mxu0
      %v1726 = vadd.f32 %v1437, %v1725
      %v1727 = vpop.f32.mrb[0].mxu0
      %1728 = vmatprep.mubr.bf16.mxu0 %v914
      %1729 = vmatmul.mubr.bf16.gmra.mrb[0].mxu0 %v913
      %v1730 = vpop.f32.mrb[0].mxu0
      %v1731 = vadd.f32 %v1442, %v1730
      %v1732 = vpop.f32.mrb[0].mxu0
      %v1733 = vpop.f32.mrb[0].mxu0
      %v1734 = vadd.f32 %v1445, %v1733
      %v1735 = vpop.f32.mrb[0].mxu0
      %1736 = vmatprep.mubr.bf16.mxu0 %v918
      %1737 = vmatmul.mubr.bf16.gmra.mrb[0].mxu0 %v917
      %v1738 = vpop.f32.mrb[0].mxu0
      %v1739 = vadd.f32 %v1450, %v1738
      %v1740 = vpop.f32.mrb[0].mxu0
      %v1741 = vpop.f32.mrb[0].mxu0
      %v1742 = vadd.f32 %v1453, %v1741
      %v1743 = vpop.f32.mrb[0].mxu0
      %1744 = vmatprep.mubr.bf16.mxu0 %v922
      %1745 = vmatmul.mubr.bf16.gmra.mrb[0].mxu0 %v921
      %v1746 = vpop.f32.mrb[0].mxu0
      %v1747 = vadd.f32 %v1458, %v1746
      %v1748 = vpop.f32.mrb[0].mxu0
      %v1749 = vpop.f32.mrb[0].mxu0
      %v1750 = vadd.f32 %v1461, %v1749
      %v1751 = vpop.f32.mrb[0].mxu0
      %1752 = vmatprep.mubr.bf16.mxu0 %v926
      %1753 = vmatmul.mubr.bf16.gmra.mrb[0].mxu0 %v925
      %v1754 = vpop.f32.mrb[0].mxu0
      %v1755 = vadd.f32 %v1466, %v1754
      %v1756 = vpop.f32.mrb[0].mxu0
      %v1757 = vpop.f32.mrb[0].mxu0
      %v1758 = vadd.f32 %v1469, %v1757
      %v1759 = vpop.f32.mrb[0].mxu0
      %1760 = vmatprep.mubr.bf16.mxu0 %v930
      %1761 = vmatmul.mubr.bf16.gmra.mrb[0].mxu0 %v929
      %v1762 = vpop.f32.mrb[0].mxu0
      %v1763 = vadd.f32 %v1474, %v1762
      %v1764 = vpop.f32.mrb[0].mxu0
      %v1765 = vpop.f32.mrb[0].mxu0
      %v1766 = vadd.f32 %v1477, %v1765
      %v1767 = vpop.f32.mrb[0].mxu0
      %1768 = vmatprep.mubr.bf16.mxu0 %v934
      %1769 = vmatmul.mubr.bf16.gmra.mrb[0].mxu0 %v933
      %v1770 = vpop.f32.mrb[0].mxu0
      %v1771 = vadd.f32 %v1482, %v1770
      %v1772 = vpop.f32.mrb[0].mxu0
      %v1773 = vpop.f32.mrb[0].mxu0
      %v1774 = vadd.f32 %v1485, %v1773
      %v1775 = vpop.f32.mrb[0].mxu0
      %1776 = vmatprep.mubr.bf16.mxu0 %v938
      %1777 = vmatmul.mubr.bf16.gmra.mrb[0].mxu0 %v937
      %v1778 = vpop.f32.mrb[0].mxu0
      %v1779 = vadd.f32 %v1490, %v1778
      %v1780 = vpop.f32.mrb[0].mxu0
      %v1781 = vpop.f32.mrb[0].mxu0
      %v1782 = vadd.f32 %v1493, %v1781
      %v1783 = vpop.f32.mrb[0].mxu0
      %1784 = vmatprep.mubr.bf16.mxu0 %v942
      %1785 = vmatmul.mubr.bf16.gmra.mrb[0].mxu0 %v941
      %v1786 = vpop.f32.mrb[0].mxu0
      %v1787 = vadd.f32 %v1498, %v1786
      %v1788 = vpop.f32.mrb[0].mxu0
      %v1789 = vpop.f32.mrb[0].mxu0
      %v1790 = vadd.f32 %v1501, %v1789
      %v1791 = vpop.f32.mrb[0].mxu0
      %1792 = vmatprep.mubr.bf16.mxu0 %v946
      %1793 = vmatmul.mubr.bf16.gmra.mrb[0].mxu0 %v945
      %v1794 = vpop.f32.mrb[0].mxu0
      %v1795 = vadd.f32 %v1506, %v1794
      %v1796 = vpop.f32.mrb[0].mxu0
      %v1797 = vpop.f32.mrb[0].mxu0
      %v1798 = vadd.f32 %v1509, %v1797
      %v1799 = vpop.f32.mrb[0].mxu0
      %1800 = vmatprep.mubr.bf16.mxu0 %v950
      %1801 = vmatmul.mubr.bf16.gmra.mrb[0].mxu0 %v949
      %v1802 = vpop.f32.mrb[0].mxu0
      %v1803 = vadd.f32 %v1514, %v1802
      %v1804 = vpop.f32.mrb[0].mxu0
      %v1805 = vpop.f32.mrb[0].mxu0
      %v1806 = vadd.f32 %v1517, %v1805
      %v1807 = vpop.f32.mrb[0].mxu0
      %1808 = vmatprep.mubr.bf16.mxu0 %v954
      %1809 = vmatmul.mubr.bf16.gmra.mrb[0].mxu0 %v953
      %v1810 = vpop.f32.mrb[0].mxu0
      %v1811 = vadd.f32 %v1522, %v1810
      %v1812 = vpop.f32.mrb[0].mxu0
      %v1813 = vpop.f32.mrb[0].mxu0
      %v1814 = vadd.f32 %v1525, %v1813
      %v1815 = vpop.f32.mrb[0].mxu0
      %1816 = vmatprep.mubr.bf16.mxu0 %v958
      %1817 = vmatmul.mubr.bf16.gmra.mrb[0].mxu0 %v957
      %v1818 = vpop.f32.mrb[0].mxu0
      %v1819 = vadd.f32 %v1530, %v1818
      %v1820 = vpop.f32.mrb[0].mxu0
      %v1821 = vpop.f32.mrb[0].mxu0
      %v1822 = vadd.f32 %v1533, %v1821
      %v1823 = vpop.f32.mrb[0].mxu0
      %1824 = vmatprep.mubr.bf16.mxu0 %v962
      %1825 = vmatmul.mubr.bf16.gmra.mrb[0].mxu0 %v961
      %v1826 = vpop.f32.mrb[0].mxu0
      %v1827 = vadd.f32 %v1538, %v1826
      %v1828 = vpop.f32.mrb[0].mxu0
      %v1829 = vpop.f32.mrb[0].mxu0
      %v1830 = vadd.f32 %v1541, %v1829
      %v1831 = vpop.f32.mrb[0].mxu0
      %1832 = vmatprep.mubr.bf16.mxu0 %v966
      %1833 = vmatmul.mubr.bf16.gmra.mrb[0].mxu0 %v965
      %v1834 = vpop.f32.mrb[0].mxu0
      %v1835 = vadd.f32 %v1546, %v1834
      %v1836 = vpop.f32.mrb[0].mxu0
      %v1837 = vpop.f32.mrb[0].mxu0
      %v1838 = vadd.f32 %v1549, %v1837
      %v1839 = vpop.f32.mrb[0].mxu0
      %1840 = vmatprep.mubr.bf16.mxu0 %v970
      %1841 = vmatmul.mubr.bf16.gmra.mrb[0].mxu0 %v969
      %v1842 = vpop.f32.mrb[0].mxu0
      %v1843 = vadd.f32 %v1554, %v1842
      %v1844 = vpop.f32.mrb[0].mxu0
      %v1845 = vpop.f32.mrb[0].mxu0
      %v1846 = vadd.f32 %v1557, %v1845
      %v1847 = vpop.f32.mrb[0].mxu0
      %1848 = vmatprep.mubr.bf16.mxu0 %v974
      %1849 = vmatmul.mubr.bf16.gmra.mrb[0].mxu0 %v973
      %v1850 = vpop.f32.mrb[0].mxu0
      %v1851 = vadd.f32 %v1562, %v1850
      %v1852 = vpop.f32.mrb[0].mxu0
      %v1853 = vpop.f32.mrb[0].mxu0
      %v1854 = vadd.f32 %v1565, %v1853
      %v1855 = vpop.f32.mrb[0].mxu0
      %1856 = vmatprep.mubr.bf16.mxu0 %v978
      %1857 = vmatmul.mubr.bf16.gmra.mrb[0].mxu0 %v977
      %v1858 = vpop.f32.mrb[0].mxu0
      %v1859 = vadd.f32 %v1570, %v1858
      %v1860 = vpop.f32.mrb[0].mxu0
      %v1861 = vpop.f32.mrb[0].mxu0
      %v1862 = vadd.f32 %v1573, %v1861
      %v1863 = vpop.f32.mrb[0].mxu0
      %1864 = vmatprep.mubr.bf16.mxu0 %v982
      %1865 = vmatmul.mubr.bf16.gmra.mrb[0].mxu0 %v981
      %v1866 = vpop.f32.mrb[0].mxu0
      %v1867 = vadd.f32 %v1578, %v1866
      %v1868 = vpop.f32.mrb[0].mxu0
      %v1869 = vpop.f32.mrb[0].mxu0
      %v1870 = vadd.f32 %v1581, %v1869
      %v1871 = vpop.f32.mrb[0].mxu0
      %1872 = vmatprep.mubr.bf16.mxu0 %v986
      %1873 = vmatmul.mubr.bf16.gmra.mrb[0].mxu0 %v985
      %v1874 = vpop.f32.mrb[0].mxu0
      %v1875 = vadd.f32 %v1586, %v1874
      %v1876 = vpop.f32.mrb[0].mxu0
      %v1877 = vpop.f32.mrb[0].mxu0
      %v1878 = vadd.f32 %v1589, %v1877
      %v1879 = vpop.f32.mrb[0].mxu0
      %1880 = vmatprep.mubr.bf16.mxu0 %v990
      %1881 = vmatmul.mubr.bf16.gmra.mrb[0].mxu0 %v989
      %v1882 = vpop.f32.mrb[0].mxu0
      %v1883 = vadd.f32 %v1594, %v1882
      %v1884 = vpop.f32.mrb[0].mxu0
      %v1885 = vpop.f32.mrb[0].mxu0
      %v1886 = vadd.f32 %v1597, %v1885
      %v1887 = vpop.f32.mrb[0].mxu0
      %1888 = vdwg.mxu0
      %vm1889 = vcmask 523264
      %v1890 = vsel %vm1889, %v1635, 0.0
      %v1891 = vsel %vm1889, %v1638, 0.0
      %v1892 = vadd.f32 %v1890, %v1891
      %v1893 = vsel %vm1889, %v1643, 0.0
      %v1894 = vadd.f32 %v1892, %v1893
      %v1895 = vsel %vm1889, %v1646, 0.0
      %v1896 = vadd.f32 %v1894, %v1895
      %v1897 = vsel %vm1889, %v1651, 0.0
      %v1898 = vadd.f32 %v1896, %v1897
      %v1899 = vsel %vm1889, %v1654, 0.0
      %v1900 = vadd.f32 %v1898, %v1899
      %v1901 = vsel %vm1889, %v1659, 0.0
      %v1902 = vadd.f32 %v1900, %v1901
      %v1903 = vsel %vm1889, %v1662, 0.0
      %v1904 = vadd.f32 %v1902, %v1903
      %v1905 = vsel %vm1889, %v1667, 0.0
      %v1906 = vadd.f32 %v1904, %v1905
      %v1907 = vsel %vm1889, %v1670, 0.0
      %v1908 = vadd.f32 %v1906, %v1907
      %v1909 = vsel %vm1889, %v1675, 0.0
      %v1910 = vadd.f32 %v1908, %v1909
      %v1911 = vsel %vm1889, %v1678, 0.0
      %v1912 = vadd.f32 %v1910, %v1911
      %v1913 = vsel %vm1889, %v1683, 0.0
      %v1914 = vadd.f32 %v1912, %v1913
      %v1915 = vsel %vm1889, %v1686, 0.0
      %v1916 = vadd.f32 %v1914, %v1915
      %v1917 = vsel %vm1889, %v1691, 0.0
      %v1918 = vadd.f32 %v1916, %v1917
      %v1919 = vsel %vm1889, %v1694, 0.0
      %v1920 = vadd.f32 %v1918, %v1919
      %v1921 = vsel %vm1889, %v1699, 0.0
      %v1922 = vadd.f32 %v1920, %v1921
      %v1923 = vsel %vm1889, %v1702, 0.0
      %v1924 = vadd.f32 %v1922, %v1923
      %v1925 = vsel %vm1889, %v1707, 0.0
      %v1926 = vadd.f32 %v1924, %v1925
      %v1927 = vsel %vm1889, %v1710, 0.0
      %v1928 = vadd.f32 %v1926, %v1927
      %v1929 = vsel %vm1889, %v1715, 0.0
      %v1930 = vadd.f32 %v1928, %v1929
      %v1931 = vsel %vm1889, %v1718, 0.0
      %v1932 = vadd.f32 %v1930, %v1931
      %v1933 = vsel %vm1889, %v1723, 0.0
      %v1934 = vadd.f32 %v1932, %v1933
      %v1935 = vsel %vm1889, %v1726, 0.0
      %v1936 = vadd.f32 %v1934, %v1935
      %v1937 = vsel %vm1889, %v1731, 0.0
      %v1938 = vadd.f32 %v1936, %v1937
      %v1939 = vsel %vm1889, %v1734, 0.0
      %v1940 = vadd.f32 %v1938, %v1939
      %v1941 = vsel %vm1889, %v1739, 0.0
      %v1942 = vadd.f32 %v1940, %v1941
      %v1943 = vsel %vm1889, %v1742, 0.0
      %v1944 = vadd.f32 %v1942, %v1943
      %v1945 = vsel %vm1889, %v1747, 0.0
      %v1946 = vadd.f32 %v1944, %v1945
      %v1947 = vsel %vm1889, %v1750, 0.0
      %v1948 = vadd.f32 %v1946, %v1947
      %v1949 = vsel %vm1889, %v1755, 0.0
      %v1950 = vadd.f32 %v1948, %v1949
      %v1951 = vsel %vm1889, %v1758, 0.0
      %v1952 = vadd.f32 %v1950, %v1951
      %v1953 = vsel %vm1889, %v1763, 0.0
      %v1954 = vadd.f32 %v1952, %v1953
      %v1955 = vsel %vm1889, %v1766, 0.0
      %v1956 = vadd.f32 %v1954, %v1955
      %v1957 = vsel %vm1889, %v1771, 0.0
      %v1958 = vadd.f32 %v1956, %v1957
      %v1959 = vsel %vm1889, %v1774, 0.0
      %v1960 = vadd.f32 %v1958, %v1959
      %v1961 = vsel %vm1889, %v1779, 0.0
      %v1962 = vadd.f32 %v1960, %v1961
      %v1963 = vsel %vm1889, %v1782, 0.0
      %v1964 = vadd.f32 %v1962, %v1963
      %v1965 = vsel %vm1889, %v1787, 0.0
      %v1966 = vadd.f32 %v1964, %v1965
      %v1967 = vsel %vm1889, %v1790, 0.0
      %v1968 = vadd.f32 %v1966, %v1967
      %v1969 = vsel %vm1889, %v1795, 0.0
      %v1970 = vadd.f32 %v1968, %v1969
      %v1971 = vsel %vm1889, %v1798, 0.0
      %v1972 = vadd.f32 %v1970, %v1971
      %v1973 = vsel %vm1889, %v1803, 0.0
      %v1974 = vadd.f32 %v1972, %v1973
      %v1975 = vsel %vm1889, %v1806, 0.0
      %v1976 = vadd.f32 %v1974, %v1975
      %v1977 = vsel %vm1889, %v1811, 0.0
      %v1978 = vadd.f32 %v1976, %v1977
      %v1979 = vsel %vm1889, %v1814, 0.0
      %v1980 = vadd.f32 %v1978, %v1979
      %v1981 = vsel %vm1889, %v1819, 0.0
      %v1982 = vadd.f32 %v1980, %v1981
      %v1983 = vsel %vm1889, %v1822, 0.0
      %v1984 = vadd.f32 %v1982, %v1983
      %v1985 = vsel %vm1889, %v1827, 0.0
      %v1986 = vadd.f32 %v1984, %v1985
      %v1987 = vsel %vm1889, %v1830, 0.0
      %v1988 = vadd.f32 %v1986, %v1987
      %v1989 = vsel %vm1889, %v1835, 0.0
      %v1990 = vadd.f32 %v1988, %v1989
      %v1991 = vsel %vm1889, %v1838, 0.0
      %v1992 = vadd.f32 %v1990, %v1991
      %v1993 = vsel %vm1889, %v1843, 0.0
      %v1994 = vadd.f32 %v1992, %v1993
      %v1995 = vsel %vm1889, %v1846, 0.0
      %v1996 = vadd.f32 %v1994, %v1995
      %v1997 = vsel %vm1889, %v1851, 0.0
      %v1998 = vadd.f32 %v1996, %v1997
      %v1999 = vsel %vm1889, %v1854, 0.0
      %v2000 = vadd.f32 %v1998, %v1999
      %v2001 = vsel %vm1889, %v1859, 0.0
      %v2002 = vadd.f32 %v2000, %v2001
      %v2003 = vsel %vm1889, %v1862, 0.0
      %v2004 = vadd.f32 %v2002, %v2003
      %v2005 = vsel %vm1889, %v1867, 0.0
      %v2006 = vadd.f32 %v2004, %v2005
      %v2007 = vsel %vm1889, %v1870, 0.0
      %v2008 = vadd.f32 %v2006, %v2007
      %v2009 = vsel %vm1889, %v1875, 0.0
      %v2010 = vadd.f32 %v2008, %v2009
      %v2011 = vsel %vm1889, %v1878, 0.0
      %v2012 = vadd.f32 %v2010, %v2011
      %v2013 = vsel %vm1889, %v1883, 0.0
      %v2014 = vadd.f32 %v2012, %v2013
      %v2015 = vsel %vm1889, %v1886, 0.0
      %v2016 = vadd.f32 %v2014, %v2015
      %v2017 = vrot.slane %v2016, 4
      %v2018 = vadd.f32 %v2016, %v2017
      %v2019 = vrot.slane %v2018, 2
      %v2020 = vadd.f32 %v2018, %v2019
      %v2021 = vrot.slane %v2020, 1
      %v2022 = vadd.f32 %v2020, %v2021
      %vm2023 = vcmask 516096
      %2024 = vst.msk [vmem:[%s285] sm:$0x1] %vm2023, %v2022
      %v2025 = vmul.f32 %v1635, %v1635
      %v2026 = vmul.f32 %v1638, %v1638
      %v2027 = vmul.f32 %v1643, %v1643
      %v2028 = vmul.f32 %v1646, %v1646
      %v2029 = vmul.f32 %v1651, %v1651
      %v2030 = vmul.f32 %v1654, %v1654
      %v2031 = vmul.f32 %v1659, %v1659
      %v2032 = vmul.f32 %v1662, %v1662
      %v2033 = vmul.f32 %v1667, %v1667
      %v2034 = vmul.f32 %v1670, %v1670
      %v2035 = vmul.f32 %v1675, %v1675
      %v2036 = vmul.f32 %v1678, %v1678
      %v2037 = vmul.f32 %v1683, %v1683
      %v2038 = vmul.f32 %v1686, %v1686
      %v2039 = vmul.f32 %v1691, %v1691
      %v2040 = vmul.f32 %v1694, %v1694
      %v2041 = vmul.f32 %v1699, %v1699
      %v2042 = vmul.f32 %v1702, %v1702
      %v2043 = vmul.f32 %v1707, %v1707
      %v2044 = vmul.f32 %v1710, %v1710
      %v2045 = vmul.f32 %v1715, %v1715
      %v2046 = vmul.f32 %v1718, %v1718
      %v2047 = vmul.f32 %v1723, %v1723
      %v2048 = vmul.f32 %v1726, %v1726
      %v2049 = vmul.f32 %v1731, %v1731
      %v2050 = vmul.f32 %v1734, %v1734
      %v2051 = vmul.f32 %v1739, %v1739
      %v2052 = vmul.f32 %v1742, %v1742
      %v2053 = vmul.f32 %v1747, %v1747
      %v2054 = vmul.f32 %v1750, %v1750
      %v2055 = vmul.f32 %v1755, %v1755
      %v2056 = vmul.f32 %v1758, %v1758
      %v2057 = vmul.f32 %v1763, %v1763
      %v2058 = vmul.f32 %v1766, %v1766
      %v2059 = vmul.f32 %v1771, %v1771
      %v2060 = vmul.f32 %v1774, %v1774
      %v2061 = vmul.f32 %v1779, %v1779
      %v2062 = vmul.f32 %v1782, %v1782
      %v2063 = vmul.f32 %v1787, %v1787
      %v2064 = vmul.f32 %v1790, %v1790
      %v2065 = vmul.f32 %v1795, %v1795
      %v2066 = vmul.f32 %v1798, %v1798
      %v2067 = vmul.f32 %v1803, %v1803
      %v2068 = vmul.f32 %v1806, %v1806
      %v2069 = vmul.f32 %v1811, %v1811
      %v2070 = vmul.f32 %v1814, %v1814
      %v2071 = vmul.f32 %v1819, %v1819
      %v2072 = vmul.f32 %v1822, %v1822
      %v2073 = vmul.f32 %v1827, %v1827
      %v2074 = vmul.f32 %v1830, %v1830
      %v2075 = vmul.f32 %v1835, %v1835
      %v2076 = vmul.f32 %v1838, %v1838
      %v2077 = vmul.f32 %v1843, %v1843
      %v2078 = vmul.f32 %v1846, %v1846
      %v2079 = vmul.f32 %v1851, %v1851
      %v2080 = vmul.f32 %v1854, %v1854
      %v2081 = vmul.f32 %v1859, %v1859
      %v2082 = vmul.f32 %v1862, %v1862
      %v2083 = vmul.f32 %v1867, %v1867
      %v2084 = vmul.f32 %v1870, %v1870
      %v2085 = vmul.f32 %v1875, %v1875
      %v2086 = vmul.f32 %v1878, %v1878
      %v2087 = vmul.f32 %v1883, %v1883
      %v2088 = vmul.f32 %v1886, %v1886
      %v2089 = vsel %vm1889, %v2025, 0.0
      %v2090 = vsel %vm1889, %v2026, 0.0
      %v2091 = vadd.f32 %v2089, %v2090
      %v2092 = vsel %vm1889, %v2027, 0.0
      %v2093 = vadd.f32 %v2091, %v2092
      %v2094 = vsel %vm1889, %v2028, 0.0
      %v2095 = vadd.f32 %v2093, %v2094
      %v2096 = vsel %vm1889, %v2029, 0.0
      %v2097 = vadd.f32 %v2095, %v2096
      %v2098 = vsel %vm1889, %v2030, 0.0
      %v2099 = vadd.f32 %v2097, %v2098
      %v2100 = vsel %vm1889, %v2031, 0.0
      %v2101 = vadd.f32 %v2099, %v2100
      %v2102 = vsel %vm1889, %v2032, 0.0
      %v2103 = vadd.f32 %v2101, %v2102
      %v2104 = vsel %vm1889, %v2033, 0.0
      %v2105 = vadd.f32 %v2103, %v2104
      %v2106 = vsel %vm1889, %v2034, 0.0
      %v2107 = vadd.f32 %v2105, %v2106
      %v2108 = vsel %vm1889, %v2035, 0.0
      %v2109 = vadd.f32 %v2107, %v2108
      %v2110 = vsel %vm1889, %v2036, 0.0
      %v2111 = vadd.f32 %v2109, %v2110
      %v2112 = vsel %vm1889, %v2037, 0.0
      %v2113 = vadd.f32 %v2111, %v2112
      %v2114 = vsel %vm1889, %v2038, 0.0
      %v2115 = vadd.f32 %v2113, %v2114
      %v2116 = vsel %vm1889, %v2039, 0.0
      %v2117 = vadd.f32 %v2115, %v2116
      %v2118 = vsel %vm1889, %v2040, 0.0
      %v2119 = vadd.f32 %v2117, %v2118
      %v2120 = vsel %vm1889, %v2041, 0.0
      %v2121 = vadd.f32 %v2119, %v2120
      %v2122 = vsel %vm1889, %v2042, 0.0
      %v2123 = vadd.f32 %v2121, %v2122
      %v2124 = vsel %vm1889, %v2043, 0.0
      %v2125 = vadd.f32 %v2123, %v2124
      %v2126 = vsel %vm1889, %v2044, 0.0
      %v2127 = vadd.f32 %v2125, %v2126
      %v2128 = vsel %vm1889, %v2045, 0.0
      %v2129 = vadd.f32 %v2127, %v2128
      %v2130 = vsel %vm1889, %v2046, 0.0
      %v2131 = vadd.f32 %v2129, %v2130
      %v2132 = vsel %vm1889, %v2047, 0.0
      %v2133 = vadd.f32 %v2131, %v2132
      %v2134 = vsel %vm1889, %v2048, 0.0
      %v2135 = vadd.f32 %v2133, %v2134
      %v2136 = vsel %vm1889, %v2049, 0.0
      %v2137 = vadd.f32 %v2135, %v2136
      %v2138 = vsel %vm1889, %v2050, 0.0
      %v2139 = vadd.f32 %v2137, %v2138
      %v2140 = vsel %vm1889, %v2051, 0.0
      %v2141 = vadd.f32 %v2139, %v2140
      %v2142 = vsel %vm1889, %v2052, 0.0
      %v2143 = vadd.f32 %v2141, %v2142
      %v2144 = vsel %vm1889, %v2053, 0.0
      %v2145 = vadd.f32 %v2143, %v2144
      %v2146 = vsel %vm1889, %v2054, 0.0
      %v2147 = vadd.f32 %v2145, %v2146
      %v2148 = vsel %vm1889, %v2055, 0.0
      %v2149 = vadd.f32 %v2147, %v2148
      %v2150 = vsel %vm1889, %v2056, 0.0
      %v2151 = vadd.f32 %v2149, %v2150
      %v2152 = vsel %vm1889, %v2057, 0.0
      %v2153 = vadd.f32 %v2151, %v2152
      %v2154 = vsel %vm1889, %v2058, 0.0
      %v2155 = vadd.f32 %v2153, %v2154
      %v2156 = vsel %vm1889, %v2059, 0.0
      %v2157 = vadd.f32 %v2155, %v2156
      %v2158 = vsel %vm1889, %v2060, 0.0
      %v2159 = vadd.f32 %v2157, %v2158
      %v2160 = vsel %vm1889, %v2061, 0.0
      %v2161 = vadd.f32 %v2159, %v2160
      %v2162 = vsel %vm1889, %v2062, 0.0
      %v2163 = vadd.f32 %v2161, %v2162
      %v2164 = vsel %vm1889, %v2063, 0.0
      %v2165 = vadd.f32 %v2163, %v2164
      %v2166 = vsel %vm1889, %v2064, 0.0
      %v2167 = vadd.f32 %v2165, %v2166
      %v2168 = vsel %vm1889, %v2065, 0.0
      %v2169 = vadd.f32 %v2167, %v2168
      %v2170 = vsel %vm1889, %v2066, 0.0
      %v2171 = vadd.f32 %v2169, %v2170
      %v2172 = vsel %vm1889, %v2067, 0.0
      %v2173 = vadd.f32 %v2171, %v2172
      %v2174 = vsel %vm1889, %v2068, 0.0
      %v2175 = vadd.f32 %v2173, %v2174
      %v2176 = vsel %vm1889, %v2069, 0.0
      %v2177 = vadd.f32 %v2175, %v2176
      %v2178 = vsel %vm1889, %v2070, 0.0
      %v2179 = vadd.f32 %v2177, %v2178
      %v2180 = vsel %vm1889, %v2071, 0.0
      %v2181 = vadd.f32 %v2179, %v2180
      %v2182 = vsel %vm1889, %v2072, 0.0
      %v2183 = vadd.f32 %v2181, %v2182
      %v2184 = vsel %vm1889, %v2073, 0.0
      %v2185 = vadd.f32 %v2183, %v2184
      %v2186 = vsel %vm1889, %v2074, 0.0
      %v2187 = vadd.f32 %v2185, %v2186
      %v2188 = vsel %vm1889, %v2075, 0.0
      %v2189 = vadd.f32 %v2187, %v2188
      %v2190 = vsel %vm1889, %v2076, 0.0
      %v2191 = vadd.f32 %v2189, %v2190
      %v2192 = vsel %vm1889, %v2077, 0.0
      %v2193 = vadd.f32 %v2191, %v2192
      %v2194 = vsel %vm1889, %v2078, 0.0
      %v2195 = vadd.f32 %v2193, %v2194
      %v2196 = vsel %vm1889, %v2079, 0.0
      %v2197 = vadd.f32 %v2195, %v2196
      %v2198 = vsel %vm1889, %v2080, 0.0
      %v2199 = vadd.f32 %v2197, %v2198
      %v2200 = vsel %vm1889, %v2081, 0.0
      %v2201 = vadd.f32 %v2199, %v2200
      %v2202 = vsel %vm1889, %v2082, 0.0
      %v2203 = vadd.f32 %v2201, %v2202
      %v2204 = vsel %vm1889, %v2083, 0.0
      %v2205 = vadd.f32 %v2203, %v2204
      %v2206 = vsel %vm1889, %v2084, 0.0
      %v2207 = vadd.f32 %v2205, %v2206
      %v2208 = vsel %vm1889, %v2085, 0.0
      %v2209 = vadd.f32 %v2207, %v2208
      %v2210 = vsel %vm1889, %v2086, 0.0
      %v2211 = vadd.f32 %v2209, %v2210
      %v2212 = vsel %vm1889, %v2087, 0.0
      %v2213 = vadd.f32 %v2211, %v2212
      %v2214 = vsel %vm1889, %v2088, 0.0
      %v2215 = vadd.f32 %v2213, %v2214
      %v2216 = vrot.slane %v2215, 4
      %v2217 = vadd.f32 %v2215, %v2216
      %v2218 = vrot.slane %v2217, 2
      %v2219 = vadd.f32 %v2217, %v2218
      %v2220 = vrot.slane %v2219, 1
      %v2221 = vadd.f32 %v2219, %v2220
      %2222 = vst.msk [vmem:[%s285 + $0x1] sm:$0x1] %vm2023, %v2221
      %v2223 = vpack.c.bf16 %v1638, %v1635
      %v2224 = vpack.c.bf16 %v1646, %v1643
      %v2225 = vpack.c.bf16 %v1654, %v1651
      %v2226 = vpack.c.bf16 %v1662, %v1659
      %v2227 = vpack.c.bf16 %v1670, %v1667
      %v2228 = vpack.c.bf16 %v1678, %v1675
      %v2229 = vpack.c.bf16 %v1686, %v1683
      %v2230 = vpack.c.bf16 %v1694, %v1691
      %v2231 = vpack.c.bf16 %v1702, %v1699
      %v2232 = vpack.c.bf16 %v1710, %v1707
      %v2233 = vpack.c.bf16 %v1718, %v1715
      %v2234 = vpack.c.bf16 %v1726, %v1723
      %v2235 = vpack.c.bf16 %v1734, %v1731
      %v2236 = vpack.c.bf16 %v1742, %v1739
      %v2237 = vpack.c.bf16 %v1750, %v1747
      %v2238 = vpack.c.bf16 %v1758, %v1755
      %v2239 = vpack.c.bf16 %v1766, %v1763
      %v2240 = vpack.c.bf16 %v1774, %v1771
      %v2241 = vpack.c.bf16 %v1782, %v1779
      %v2242 = vpack.c.bf16 %v1790, %v1787
      %v2243 = vpack.c.bf16 %v1798, %v1795
      %v2244 = vpack.c.bf16 %v1806, %v1803
      %v2245 = vpack.c.bf16 %v1814, %v1811
      %v2246 = vpack.c.bf16 %v1822, %v1819
      %v2247 = vpack.c.bf16 %v1830, %v1827
      %v2248 = vpack.c.bf16 %v1838, %v1835
      %v2249 = vpack.c.bf16 %v1846, %v1843
      %v2250 = vpack.c.bf16 %v1854, %v1851
      %v2251 = vpack.c.bf16 %v1862, %v1859
      %v2252 = vpack.c.bf16 %v1870, %v1867
      %v2253 = vpack.c.bf16 %v1878, %v1875
      %v2254 = vpack.c.bf16 %v1886, %v1883
      %v2287 = vunpack.c.l.b16 %v2223
      %v2288 = vunpack.c.h.b16 %v2223
      %v2289 = vunpack.c.l.b16 %v2224
      %v2290 = vunpack.c.h.b16 %v2224
      %v2291 = vunpack.c.l.b16 %v2225
      %v2292 = vunpack.c.h.b16 %v2225
      %v2293 = vunpack.c.l.b16 %v2226
      %v2294 = vunpack.c.h.b16 %v2226
      %v2295 = vunpack.c.l.b16 %v2227
      %v2296 = vunpack.c.h.b16 %v2227
      %v2297 = vunpack.c.l.b16 %v2228
      %v2298 = vunpack.c.h.b16 %v2228
      %v2299 = vunpack.c.l.b16 %v2229
      %v2300 = vunpack.c.h.b16 %v2229
      %v2301 = vunpack.c.l.b16 %v2230
      %v2302 = vunpack.c.h.b16 %v2230
      %v2303 = vunpack.c.l.b16 %v2231
      %v2304 = vunpack.c.h.b16 %v2231
      %v2305 = vunpack.c.l.b16 %v2232
      %v2306 = vunpack.c.h.b16 %v2232
      %v2307 = vunpack.c.l.b16 %v2233
      %v2308 = vunpack.c.h.b16 %v2233
      %v2309 = vunpack.c.l.b16 %v2234
      %v2310 = vunpack.c.h.b16 %v2234
      %v2311 = vunpack.c.l.b16 %v2235
      %v2312 = vunpack.c.h.b16 %v2235
      %v2313 = vunpack.c.l.b16 %v2236
      %v2314 = vunpack.c.h.b16 %v2236
      %v2315 = vunpack.c.l.b16 %v2237
      %v2316 = vunpack.c.h.b16 %v2237
      %v2317 = vunpack.c.l.b16 %v2238
      %v2318 = vunpack.c.h.b16 %v2238
      %v2319 = vunpack.c.l.b16 %v2239
      %v2320 = vunpack.c.h.b16 %v2239
      %v2321 = vunpack.c.l.b16 %v2240
      %v2322 = vunpack.c.h.b16 %v2240
      %v2323 = vunpack.c.l.b16 %v2241
      %v2324 = vunpack.c.h.b16 %v2241
      %v2325 = vunpack.c.l.b16 %v2242
      %v2326 = vunpack.c.h.b16 %v2242
      %v2327 = vunpack.c.l.b16 %v2243
      %v2328 = vunpack.c.h.b16 %v2243
      %v2329 = vunpack.c.l.b16 %v2244
      %v2330 = vunpack.c.h.b16 %v2244
      %v2331 = vunpack.c.l.b16 %v2245
      %v2332 = vunpack.c.h.b16 %v2245
      %v2333 = vunpack.c.l.b16 %v2246
      %v2334 = vunpack.c.h.b16 %v2246
      %v2335 = vunpack.c.l.b16 %v2247
      %v2336 = vunpack.c.h.b16 %v2247
      %v2337 = vunpack.c.l.b16 %v2248
      %v2338 = vunpack.c.h.b16 %v2248
      %v2339 = vunpack.c.l.b16 %v2249
      %v2340 = vunpack.c.h.b16 %v2249
      %v2341 = vunpack.c.l.b16 %v2250
      %v2342 = vunpack.c.h.b16 %v2250
      %v2343 = vunpack.c.l.b16 %v2251
      %v2344 = vunpack.c.h.b16 %v2251
      %v2345 = vunpack.c.l.b16 %v2252
      %v2346 = vunpack.c.h.b16 %v2252
      %v2347 = vunpack.c.l.b16 %v2253
      %v2348 = vunpack.c.h.b16 %v2253
      %v2349 = vunpack.c.l.b16 %v2254
      %v2350 = vunpack.c.h.b16 %v2254
      %v2351 = vpack.c.b16 %v2287, %v2287
      %v2352 = vpack.c.b16 %v2288, %v2288
      %v2353 = vpack.c.b16 %v2289, %v2289
      %v2354 = vpack.c.b16 %v2290, %v2290
      %v2355 = vpack.c.b16 %v2291, %v2291
      %v2356 = vpack.c.b16 %v2292, %v2292
      %v2357 = vpack.c.b16 %v2293, %v2293
      %v2358 = vpack.c.b16 %v2294, %v2294
      %v2359 = vpack.c.b16 %v2295, %v2295
      %v2360 = vpack.c.b16 %v2296, %v2296
      %v2361 = vpack.c.b16 %v2297, %v2297
      %v2362 = vpack.c.b16 %v2298, %v2298
      %v2363 = vpack.c.b16 %v2299, %v2299
      %v2364 = vpack.c.b16 %v2300, %v2300
      %v2365 = vpack.c.b16 %v2301, %v2301
      %v2366 = vpack.c.b16 %v2302, %v2302
      %v2367 = vpack.c.b16 %v2303, %v2303
      %v2368 = vpack.c.b16 %v2304, %v2304
      %v2369 = vpack.c.b16 %v2305, %v2305
      %v2370 = vpack.c.b16 %v2306, %v2306
      %v2371 = vpack.c.b16 %v2307, %v2307
      %v2372 = vpack.c.b16 %v2308, %v2308
      %v2373 = vpack.c.b16 %v2309, %v2309
      %v2374 = vpack.c.b16 %v2310, %v2310
      %v2375 = vpack.c.b16 %v2311, %v2311
      %v2376 = vpack.c.b16 %v2312, %v2312
      %v2377 = vpack.c.b16 %v2313, %v2313
      %v2378 = vpack.c.b16 %v2314, %v2314
      %v2379 = vpack.c.b16 %v2315, %v2315
      %v2380 = vpack.c.b16 %v2316, %v2316
      %v2381 = vpack.c.b16 %v2317, %v2317
      %v2382 = vpack.c.b16 %v2318, %v2318
      %v2383 = vpack.c.b16 %v2319, %v2319
      %v2384 = vpack.c.b16 %v2320, %v2320
      %v2385 = vpack.c.b16 %v2321, %v2321
      %v2386 = vpack.c.b16 %v2322, %v2322
      %v2387 = vpack.c.b16 %v2323, %v2323
      %v2388 = vpack.c.b16 %v2324, %v2324
      %v2389 = vpack.c.b16 %v2325, %v2325
      %v2390 = vpack.c.b16 %v2326, %v2326
      %v2391 = vpack.c.b16 %v2327, %v2327
      %v2392 = vpack.c.b16 %v2328, %v2328
      %v2393 = vpack.c.b16 %v2329, %v2329
      %v2394 = vpack.c.b16 %v2330, %v2330
      %v2395 = vpack.c.b16 %v2331, %v2331
      %v2396 = vpack.c.b16 %v2332, %v2332
      %v2397 = vpack.c.b16 %v2333, %v2333
      %v2398 = vpack.c.b16 %v2334, %v2334
      %v2399 = vpack.c.b16 %v2335, %v2335
      %v2400 = vpack.c.b16 %v2336, %v2336
      %v2401 = vpack.c.b16 %v2337, %v2337
      %v2402 = vpack.c.b16 %v2338, %v2338
      %v2403 = vpack.c.b16 %v2339, %v2339
      %v2404 = vpack.c.b16 %v2340, %v2340
      %v2405 = vpack.c.b16 %v2341, %v2341
      %v2406 = vpack.c.b16 %v2342, %v2342
      %v2407 = vpack.c.b16 %v2343, %v2343
      %v2408 = vpack.c.b16 %v2344, %v2344
      %v2409 = vpack.c.b16 %v2345, %v2345
      %v2410 = vpack.c.b16 %v2346, %v2346
      %v2411 = vpack.c.b16 %v2347, %v2347
      %v2412 = vpack.c.b16 %v2348, %v2348
      %v2413 = vpack.c.b16 %v2349, %v2349
      %v2414 = vpack.c.b16 %v2350, %v2350
      %vm2479 = vcmask 519168
      %2480 = vst.msk [vmem:[%s274] sm:$0xf] %vm2479, %v2351
      %2481 = vst.msk [vmem:[%s274 + $0x4] sm:$0xf] %vm2479, %v2352
      %2482 = vst.msk [vmem:[%s274 + $0x8] sm:$0xf] %vm2479, %v2353
      %2483 = vst.msk [vmem:[%s274 + $0xc] sm:$0xf] %vm2479, %v2354
      %2484 = vst.msk [vmem:[%s274 + $0x10] sm:$0xf] %vm2479, %v2355
      %2485 = vst.msk [vmem:[%s274 + $0x14] sm:$0xf] %vm2479, %v2356
      %2486 = vst.msk [vmem:[%s274 + $0x18] sm:$0xf] %vm2479, %v2357
      %2487 = vst.msk [vmem:[%s274 + $0x1c] sm:$0xf] %vm2479, %v2358
      %2488 = vst.msk [vmem:[%s274 + $0x20] sm:$0xf] %vm2479, %v2359
      %2489 = vst.msk [vmem:[%s274 + $0x24] sm:$0xf] %vm2479, %v2360
      %2490 = vst.msk [vmem:[%s274 + $0x28] sm:$0xf] %vm2479, %v2361
      %2491 = vst.msk [vmem:[%s274 + $0x2c] sm:$0xf] %vm2479, %v2362
      %2492 = vst.msk [vmem:[%s274 + $0x30] sm:$0xf] %vm2479, %v2363
      %2493 = vst.msk [vmem:[%s274 + $0x34] sm:$0xf] %vm2479, %v2364
      %2494 = vst.msk [vmem:[%s274 + $0x38] sm:$0xf] %vm2479, %v2365
      %2495 = vst.msk [vmem:[%s274 + $0x3c] sm:$0xf] %vm2479, %v2366
      %2496 = vst.msk [vmem:[%s274 + $0x40] sm:$0xf] %vm2479, %v2367
      %2497 = vst.msk [vmem:[%s274 + $0x44] sm:$0xf] %vm2479, %v2368
      %2498 = vst.msk [vmem:[%s274 + $0x48] sm:$0xf] %vm2479, %v2369
      %2499 = vst.msk [vmem:[%s274 + $0x4c] sm:$0xf] %vm2479, %v2370
      %2500 = vst.msk [vmem:[%s274 + $0x50] sm:$0xf] %vm2479, %v2371
      %2501 = vst.msk [vmem:[%s274 + $0x54] sm:$0xf] %vm2479, %v2372
      %2502 = vst.msk [vmem:[%s274 + $0x58] sm:$0xf] %vm2479, %v2373
      %2503 = vst.msk [vmem:[%s274 + $0x5c] sm:$0xf] %vm2479, %v2374
      %2504 = vst.msk [vmem:[%s274 + $0x60] sm:$0xf] %vm2479, %v2375
      %2505 = vst.msk [vmem:[%s274 + $0x64] sm:$0xf] %vm2479, %v2376
      %2506 = vst.msk [vmem:[%s274 + $0x68] sm:$0xf] %vm2479, %v2377
      %2507 = vst.msk [vmem:[%s274 + $0x6c] sm:$0xf] %vm2479, %v2378
      %2508 = vst.msk [vmem:[%s274 + $0x70] sm:$0xf] %vm2479, %v2379
      %2509 = vst.msk [vmem:[%s274 + $0x74] sm:$0xf] %vm2479, %v2380
      %2510 = vst.msk [vmem:[%s274 + $0x78] sm:$0xf] %vm2479, %v2381
      %2511 = vst.msk [vmem:[%s274 + $0x7c] sm:$0xf] %vm2479, %v2382
      %2512 = vst.msk [vmem:[%s274 + $0x80] sm:$0xf] %vm2479, %v2383
      %2513 = vst.msk [vmem:[%s274 + $0x84] sm:$0xf] %vm2479, %v2384
      %2514 = vst.msk [vmem:[%s274 + $0x88] sm:$0xf] %vm2479, %v2385
      %2515 = vst.msk [vmem:[%s274 + $0x8c] sm:$0xf] %vm2479, %v2386
      %2516 = vst.msk [vmem:[%s274 + $0x90] sm:$0xf] %vm2479, %v2387
      %2517 = vst.msk [vmem:[%s274 + $0x94] sm:$0xf] %vm2479, %v2388
      %2518 = vst.msk [vmem:[%s274 + $0x98] sm:$0xf] %vm2479, %v2389
      %2519 = vst.msk [vmem:[%s274 + $0x9c] sm:$0xf] %vm2479, %v2390
      %2520 = vst.msk [vmem:[%s274 + $0xa0] sm:$0xf] %vm2479, %v2391
      %2521 = vst.msk [vmem:[%s274 + $0xa4] sm:$0xf] %vm2479, %v2392
      %2522 = vst.msk [vmem:[%s274 + $0xa8] sm:$0xf] %vm2479, %v2393
      %2523 = vst.msk [vmem:[%s274 + $0xac] sm:$0xf] %vm2479, %v2394
      %2524 = vst.msk [vmem:[%s274 + $0xb0] sm:$0xf] %vm2479, %v2395
      %2525 = vst.msk [vmem:[%s274 + $0xb4] sm:$0xf] %vm2479, %v2396
      %2526 = vst.msk [vmem:[%s274 + $0xb8] sm:$0xf] %vm2479, %v2397
      %2527 = vst.msk [vmem:[%s274 + $0xbc] sm:$0xf] %vm2479, %v2398
      %2528 = vst.msk [vmem:[%s274 + $0xc0] sm:$0xf] %vm2479, %v2399
      %2529 = vst.msk [vmem:[%s274 + $0xc4] sm:$0xf] %vm2479, %v2400
      %2530 = vst.msk [vmem:[%s274 + $0xc8] sm:$0xf] %vm2479, %v2401
      %2531 = vst.msk [vmem:[%s274 + $0xcc] sm:$0xf] %vm2479, %v2402
      %2532 = vst.msk [vmem:[%s274 + $0xd0] sm:$0xf] %vm2479, %v2403
      %2533 = vst.msk [vmem:[%s274 + $0xd4] sm:$0xf] %vm2479, %v2404
      %2534 = vst.msk [vmem:[%s274 + $0xd8] sm:$0xf] %vm2479, %v2405
      %2535 = vst.msk [vmem:[%s274 + $0xdc] sm:$0xf] %vm2479, %v2406
      %2536 = vst.msk [vmem:[%s274 + $0xe0] sm:$0xf] %vm2479, %v2407
      %2537 = vst.msk [vmem:[%s274 + $0xe4] sm:$0xf] %vm2479, %v2408
      %2538 = vst.msk [vmem:[%s274 + $0xe8] sm:$0xf] %vm2479, %v2409
      %2539 = vst.msk [vmem:[%s274 + $0xec] sm:$0xf] %vm2479, %v2410
      %2540 = vst.msk [vmem:[%s274 + $0xf0] sm:$0xf] %vm2479, %v2411
      %2541 = vst.msk [vmem:[%s274 + $0xf4] sm:$0xf] %vm2479, %v2412
      %2542 = vst.msk [vmem:[%s274 + $0xf8] sm:$0xf] %vm2479, %v2413
      %2543 = vst.msk [vmem:[%s274 + $0xfc] sm:$0xf] %vm2479, %v2414
      %s2544 = smul.u32 64, %s22
      %p2545 = scmp.lt.s32.totalorder %s20, 3
      %s2546 = scalar_select %p2545, %s20, 3
      %p2547 = scmp.lt.s32.totalorder %s2544, 63
      %s2548 = scalar_select %p2547, %s2544, 63
      %p2549 = scmp.lt.s32.totalorder %s21, 0
      %s2550 = scalar_select %p2549, %s21, 0
      %s2551 = sadd.s32 %s2550, %s2548
      %s2552 = smul.addr %s2546, 64
      %s2553 = sadd.s32 %s2551, %s2552
      %s2554 = smul.addr %s2553, 4
      %s2555 = scalar_lea.vmem %s2, %s2554
      %p2556 = scmp.lt.s32.totalorder %s20, 3
      %s2557 = scalar_select %p2556, %s20, 3
      %p2558 = scmp.lt.s32.totalorder %s22, 0
      %s2559 = scalar_select %p2558, %s22, 0
      %p2560 = scmp.lt.s32.totalorder %s21, 0
      %s2561 = scalar_select %p2560, %s21, 0
      %s2562 = sadd.s32 %s2561, %s2559
      %s2563 = sadd.s32 %s2562, %s2557
      %s2564 = smul.addr %s2563, 2
      %s2565 = scalar_lea.vmem %s3, %s2564
      // Predicated region
      $region29: #{generator_forward.15} parent=27 // pred_check
        %p2566 = pneg %p112
      $region30: #{generator_forward.15} parent=27 // pred_check_branch
        %2568 = sbr.rel (%p2566) target = $region32
      $region31: #{generator_forward.15} parent=27 // pred_region
        %s2569 = smul.u32 64, %s22
      $region32: #{generator_forward.15} parent=27 // pred_fallthru
        _
      // Predicated region
      $region33: #{generator_forward.15} parent=27 // pred_check
        %p2570 = pneg %p142
      $region34: #{generator_forward.15} parent=27 // pred_check_branch
        %2572 = sbr.rel (%p2570) target = $region36
      $region35: #{generator_forward.15} parent=27 // pred_region
        _
      $region36: #{generator_forward.15} parent=27 // pred_fallthru
        _
    $region28: #{generator_forward.15} parent=5 // pred_fallthru
      _
    %p2573 = scmp.le.s32.totalorder 2, %s10
    // Predicated region
    $region37: #{generator_forward.15} parent=5 // pred_check
      %p2574 = pneg %p2573
    $region38: #{generator_forward.15} parent=5 // pred_check_branch
      %2576 = sbr.rel (%p2574) target = $region40
    $region39: #{generator_forward.15} parent=5 // pred_region
      %s2577 = ssub.s32 %s10, 2
      // Predicated region
      $region41: #{generator_forward.15} parent=39 // pred_check
        %p2578 = pneg %p118
      $region42: #{generator_forward.15} parent=39 // pred_check_branch
        %2580 = sbr.rel (%p2578) target = $region44
      $region43: #{generator_forward.15} parent=39 // pred_region
        %s2581 = smul.u32 64, %s25
        %p2582 = scmp.lt.s32.totalorder %s23, 3
        %s2583 = scalar_select %p2582, %s23, 3
        %p2584 = scmp.lt.s32.totalorder %s2581, 63
        %s2585 = scalar_select %p2584, %s2581, 63
        %p2586 = scmp.lt.s32.totalorder %s24, 0
        %s2587 = scalar_select %p2586, %s24, 0
        %s2588 = sadd.s32 %s2587, %s2585
        %s2589 = smul.addr %s2583, 64
        %s2590 = sadd.s32 %s2588, %s2589
        %s2591 = smul.addr %s2590, 4
        %s2592 = scalar_lea.vmem %s2, %s2591
      $region44: #{generator_forward.15} parent=39 // pred_fallthru
        _
      // Predicated region
      $region45: #{generator_forward.15} parent=39 // pred_check
        %p2593 = pneg %p148
      $region46: #{generator_forward.15} parent=39 // pred_check_branch
        %2595 = sbr.rel (%p2593) target = $region48
      $region47: #{generator_forward.15} parent=39 // pred_region
        %p2596 = scmp.lt.s32.totalorder %s23, 3
        %s2597 = scalar_select %p2596, %s23, 3
        %p2598 = scmp.lt.s32.totalorder %s25, 0
        %s2599 = scalar_select %p2598, %s25, 0
        %p2600 = scmp.lt.s32.totalorder %s24, 0
        %s2601 = scalar_select %p2600, %s24, 0
        %s2602 = sadd.s32 %s2601, %s2599
        %s2603 = sadd.s32 %s2602, %s2597
        %s2604 = smul.addr %s2603, 2
        %s2605 = scalar_lea.vmem %s3, %s2604
      $region48: #{generator_forward.15} parent=39 // pred_fallthru
        _
    $region40: #{generator_forward.15} parent=5 // pred_fallthru
      _
  $region6: #{generator_forward.15} parent=0 // loop_footer
    %s14 = sadd.s32 1, %s10
  $region7: #{generator_forward.15} parent=0 // loop_footer_branch
    %9 = sbr.rel target = $region3
  $region8: #{generator_forward.15} parent=0 // loop_exit
    _

// kernel: generator_forward.16
$region0: #{generator_forward.16}
  #allocation0 [shape = 'u32[]', space=smem, size = 0x4, offset = 0x4, fixed_abs, tag = 'smem constant byte address 0x4 - core index']
  #allocation1 [shape = 'u32[144,128]{1,0:T(1,128)}', space=vmem, size = 0x12000, scoped, tag = 'internal scratch']
  %s0 = inlined_call_operand.vmem [shape: bf16[1024,128], index: 0, kind: input, shape index: {}]
  %s1 = inlined_call_operand.vmem [shape: f32[1,128], index: 1, kind: input, shape index: {}]
  %s2 = inlined_call_operand.vmem [shape: f32[1,128], index: 2, kind: input, shape index: {}]
  %s3 = inlined_call_operand.vmem [shape: bf16[1024,128], index: 3, kind: output, shape index: {}]
  %s4 = sld [smem:[#allocation0]]
  $region22: #{generator_forward.16} parent=0
    _
  %s6 = ssub.s32 1, %s4
  %s7 = scalar_select 0, %s6, %s4
  // Predicated region
  $region2: #{generator_forward.16} parent=0 // pred_check
    _
  $region3: #{generator_forward.16} parent=0 // pred_check_branch
    %9 = sbr.rel (0) target = $region5
  $region4: #{generator_forward.16} parent=0 // pred_region
    _
  $region5: #{generator_forward.16} parent=0 // pred_fallthru
    _
  // Predicated region
  $region6: #{generator_forward.16} parent=0 // pred_check
    _
  $region7: #{generator_forward.16} parent=0 // pred_check_branch
    %11 = sbr.rel (0) target = $region9
  $region8: #{generator_forward.16} parent=0 // pred_region
    _
  $region9: #{generator_forward.16} parent=0 // pred_fallthru
    _
  // Predicated region
  $region10: #{generator_forward.16} parent=0 // pred_check
    _
  $region11: #{generator_forward.16} parent=0 // pred_check_branch
    %13 = sbr.rel (0) target = $region13
  $region12: #{generator_forward.16} parent=0 // pred_region
    _
  $region13: #{generator_forward.16} parent=0 // pred_fallthru
    _
  %v14 = vld [vmem:[%s0] sm:$0xf]
  %v15 = vld [vmem:[%s0 + $0x4] sm:$0xf]
  %v16 = vld [vmem:[%s0 + $0x8] sm:$0xf]
  %v17 = vld [vmem:[%s0 + $0xc] sm:$0xf]
  %v18 = vld [vmem:[%s0 + $0x10] sm:$0xf]
  %v19 = vld [vmem:[%s0 + $0x14] sm:$0xf]
  %v20 = vld [vmem:[%s0 + $0x18] sm:$0xf]
  %v21 = vld [vmem:[%s0 + $0x1c] sm:$0xf]
  %v22 = vld [vmem:[%s0 + $0x20] sm:$0xf]
  %v23 = vld [vmem:[%s0 + $0x24] sm:$0xf]
  %v24 = vld [vmem:[%s0 + $0x28] sm:$0xf]
  %v25 = vld [vmem:[%s0 + $0x2c] sm:$0xf]
  %v26 = vld [vmem:[%s0 + $0x30] sm:$0xf]
  %v27 = vld [vmem:[%s0 + $0x34] sm:$0xf]
  %v28 = vld [vmem:[%s0 + $0x38] sm:$0xf]
  %v29 = vld [vmem:[%s0 + $0x3c] sm:$0xf]
  %v30 = vld [vmem:[%s0 + $0x40] sm:$0xf]
  %v31 = vld [vmem:[%s0 + $0x44] sm:$0xf]
  %v32 = vld [vmem:[%s0 + $0x48] sm:$0xf]
  %v33 = vld [vmem:[%s0 + $0x4c] sm:$0xf]
  %v34 = vld [vmem:[%s0 + $0x50] sm:$0xf]
  %v35 = vld [vmem:[%s0 + $0x54] sm:$0xf]
  %v36 = vld [vmem:[%s0 + $0x58] sm:$0xf]
  %v37 = vld [vmem:[%s0 + $0x5c] sm:$0xf]
  %v38 = vld [vmem:[%s0 + $0x60] sm:$0xf]
  %v39 = vld [vmem:[%s0 + $0x64] sm:$0xf]
  %v40 = vld [vmem:[%s0 + $0x68] sm:$0xf]
  %v41 = vld [vmem:[%s0 + $0x6c] sm:$0xf]
  %v42 = vld [vmem:[%s0 + $0x70] sm:$0xf]
  %v43 = vld [vmem:[%s0 + $0x74] sm:$0xf]
  %v44 = vld [vmem:[%s0 + $0x78] sm:$0xf]
  %v45 = vld [vmem:[%s0 + $0x7c] sm:$0xf]
  %v46 = vld [vmem:[%s0 + $0x80] sm:$0xf]
  %v47 = vld [vmem:[%s0 + $0x84] sm:$0xf]
  %v48 = vld [vmem:[%s0 + $0x88] sm:$0xf]
  %v49 = vld [vmem:[%s0 + $0x8c] sm:$0xf]
  %v50 = vld [vmem:[%s0 + $0x90] sm:$0xf]
  %v51 = vld [vmem:[%s0 + $0x94] sm:$0xf]
  %v52 = vld [vmem:[%s0 + $0x98] sm:$0xf]
  %v53 = vld [vmem:[%s0 + $0x9c] sm:$0xf]
  %v54 = vld [vmem:[%s0 + $0xa0] sm:$0xf]
  %v55 = vld [vmem:[%s0 + $0xa4] sm:$0xf]
  %v56 = vld [vmem:[%s0 + $0xa8] sm:$0xf]
  %v57 = vld [vmem:[%s0 + $0xac] sm:$0xf]
  %v58 = vld [vmem:[%s0 + $0xb0] sm:$0xf]
  %v59 = vld [vmem:[%s0 + $0xb4] sm:$0xf]
  %v60 = vld [vmem:[%s0 + $0xb8] sm:$0xf]
  %v61 = vld [vmem:[%s0 + $0xbc] sm:$0xf]
  %v62 = vld [vmem:[%s0 + $0xc0] sm:$0xf]
  %v63 = vld [vmem:[%s0 + $0xc4] sm:$0xf]
  %v64 = vld [vmem:[%s0 + $0xc8] sm:$0xf]
  %v65 = vld [vmem:[%s0 + $0xcc] sm:$0xf]
  %v66 = vld [vmem:[%s0 + $0xd0] sm:$0xf]
  %v67 = vld [vmem:[%s0 + $0xd4] sm:$0xf]
  %v68 = vld [vmem:[%s0 + $0xd8] sm:$0xf]
  %v69 = vld [vmem:[%s0 + $0xdc] sm:$0xf]
  %v70 = vld [vmem:[%s0 + $0xe0] sm:$0xf]
  %v71 = vld [vmem:[%s0 + $0xe4] sm:$0xf]
  %v72 = vld [vmem:[%s0 + $0xe8] sm:$0xf]
  %v73 = vld [vmem:[%s0 + $0xec] sm:$0xf]
  %v74 = vld [vmem:[%s0 + $0xf0] sm:$0xf]
  %v75 = vld [vmem:[%s0 + $0xf4] sm:$0xf]
  %v76 = vld [vmem:[%s0 + $0xf8] sm:$0xf]
  %v77 = vld [vmem:[%s0 + $0xfc] sm:$0xf]
  %v78 = vld [vmem:[%s0 + $0x100] sm:$0xf]
  %v79 = vld [vmem:[%s0 + $0x104] sm:$0xf]
  %v80 = vld [vmem:[%s0 + $0x108] sm:$0xf]
  %v81 = vld [vmem:[%s0 + $0x10c] sm:$0xf]
  %v82 = vld [vmem:[%s0 + $0x110] sm:$0xf]
  %v83 = vld [vmem:[%s0 + $0x114] sm:$0xf]
  %v84 = vld [vmem:[%s0 + $0x118] sm:$0xf]
  %v85 = vld [vmem:[%s0 + $0x11c] sm:$0xf]
  %v86 = vld [vmem:[%s0 + $0x120] sm:$0xf]
  %v87 = vld [vmem:[%s0 + $0x124] sm:$0xf]
  %v88 = vld [vmem:[%s0 + $0x128] sm:$0xf]
  %v89 = vld [vmem:[%s0 + $0x12c] sm:$0xf]
  %v90 = vld [vmem:[%s0 + $0x130] sm:$0xf]
  %v91 = vld [vmem:[%s0 + $0x134] sm:$0xf]
  %v92 = vld [vmem:[%s0 + $0x138] sm:$0xf]
  %v93 = vld [vmem:[%s0 + $0x13c] sm:$0xf]
  %v94 = vld [vmem:[%s0 + $0x140] sm:$0xf]
  %v95 = vld [vmem:[%s0 + $0x144] sm:$0xf]
  %v96 = vld [vmem:[%s0 + $0x148] sm:$0xf]
  %v97 = vld [vmem:[%s0 + $0x14c] sm:$0xf]
  %v98 = vld [vmem:[%s0 + $0x150] sm:$0xf]
  %v99 = vld [vmem:[%s0 + $0x154] sm:$0xf]
  %v100 = vld [vmem:[%s0 + $0x158] sm:$0xf]
  %v101 = vld [vmem:[%s0 + $0x15c] sm:$0xf]
  %v102 = vld [vmem:[%s0 + $0x160] sm:$0xf]
  %v103 = vld [vmem:[%s0 + $0x164] sm:$0xf]
  %v104 = vld [vmem:[%s0 + $0x168] sm:$0xf]
  %v105 = vld [vmem:[%s0 + $0x16c] sm:$0xf]
  %v106 = vld [vmem:[%s0 + $0x170] sm:$0xf]
  %v107 = vld [vmem:[%s0 + $0x174] sm:$0xf]
  %v108 = vld [vmem:[%s0 + $0x178] sm:$0xf]
  %v109 = vld [vmem:[%s0 + $0x17c] sm:$0xf]
  %v110 = vld [vmem:[%s0 + $0x180] sm:$0xf]
  %v111 = vld [vmem:[%s0 + $0x184] sm:$0xf]
  %v112 = vld [vmem:[%s0 + $0x188] sm:$0xf]
  %v113 = vld [vmem:[%s0 + $0x18c] sm:$0xf]
  %v114 = vld [vmem:[%s0 + $0x190] sm:$0xf]
  %v115 = vld [vmem:[%s0 + $0x194] sm:$0xf]
  %v116 = vld [vmem:[%s0 + $0x198] sm:$0xf]
  %v117 = vld [vmem:[%s0 + $0x19c] sm:$0xf]
  %v118 = vld [vmem:[%s0 + $0x1a0] sm:$0xf]
  %v119 = vld [vmem:[%s0 + $0x1a4] sm:$0xf]
  %v120 = vld [vmem:[%s0 + $0x1a8] sm:$0xf]
  %v121 = vld [vmem:[%s0 + $0x1ac] sm:$0xf]
  %v122 = vld [vmem:[%s0 + $0x1b0] sm:$0xf]
  %v123 = vld [vmem:[%s0 + $0x1b4] sm:$0xf]
  %v124 = vld [vmem:[%s0 + $0x1b8] sm:$0xf]
  %v125 = vld [vmem:[%s0 + $0x1bc] sm:$0xf]
  %v126 = vld [vmem:[%s0 + $0x1c0] sm:$0xf]
  %v127 = vld [vmem:[%s0 + $0x1c4] sm:$0xf]
  %v128 = vld [vmem:[%s0 + $0x1c8] sm:$0xf]
  %v129 = vld [vmem:[%s0 + $0x1cc] sm:$0xf]
  %v130 = vld [vmem:[%s0 + $0x1d0] sm:$0xf]
  %v131 = vld [vmem:[%s0 + $0x1d4] sm:$0xf]
  %v132 = vld [vmem:[%s0 + $0x1d8] sm:$0xf]
  %v133 = vld [vmem:[%s0 + $0x1dc] sm:$0xf]
  %v134 = vld [vmem:[%s0 + $0x1e0] sm:$0xf]
  %v135 = vld [vmem:[%s0 + $0x1e4] sm:$0xf]
  %v136 = vld [vmem:[%s0 + $0x1e8] sm:$0xf]
  %v137 = vld [vmem:[%s0 + $0x1ec] sm:$0xf]
  %v138 = vld [vmem:[%s0 + $0x1f0] sm:$0xf]
  %v139 = vld [vmem:[%s0 + $0x1f4] sm:$0xf]
  %v140 = vld [vmem:[%s0 + $0x1f8] sm:$0xf]
  %v141 = vld [vmem:[%s0 + $0x1fc] sm:$0xf]
  %v142 = vunpack.c.l.bf16 %v14
  %v143 = vunpack.c.l.bf16 %v15
  %v144 = vunpack.c.l.bf16 %v16
  %v145 = vunpack.c.l.bf16 %v17
  %v146 = vunpack.c.l.bf16 %v18
  %v147 = vunpack.c.l.bf16 %v19
  %v148 = vunpack.c.l.bf16 %v20
  %v149 = vunpack.c.l.bf16 %v21
  %v150 = vunpack.c.l.bf16 %v22
  %v151 = vunpack.c.l.bf16 %v23
  %v152 = vunpack.c.l.bf16 %v24
  %v153 = vunpack.c.l.bf16 %v25
  %v154 = vunpack.c.l.bf16 %v26
  %v155 = vunpack.c.l.bf16 %v27
  %v156 = vunpack.c.l.bf16 %v28
  %v157 = vunpack.c.l.bf16 %v29
  %v158 = vunpack.c.l.bf16 %v30
  %v159 = vunpack.c.l.bf16 %v31
  %v160 = vunpack.c.l.bf16 %v32
  %v161 = vunpack.c.l.bf16 %v33
  %v162 = vunpack.c.l.bf16 %v34
  %v163 = vunpack.c.l.bf16 %v35
  %v164 = vunpack.c.l.bf16 %v36
  %v165 = vunpack.c.l.bf16 %v37
  %v166 = vunpack.c.l.bf16 %v38
  %v167 = vunpack.c.l.bf16 %v39
  %v168 = vunpack.c.l.bf16 %v40
  %v169 = vunpack.c.l.bf16 %v41
  %v170 = vunpack.c.l.bf16 %v42
  %v171 = vunpack.c.l.bf16 %v43
  %v172 = vunpack.c.l.bf16 %v44
  %v173 = vunpack.c.l.bf16 %v45
  %v174 = vunpack.c.l.bf16 %v46
  %v175 = vunpack.c.l.bf16 %v47
  %v176 = vunpack.c.l.bf16 %v48
  %v177 = vunpack.c.l.bf16 %v49
  %v178 = vunpack.c.l.bf16 %v50
  %v179 = vunpack.c.l.bf16 %v51
  %v180 = vunpack.c.l.bf16 %v52
  %v181 = vunpack.c.l.bf16 %v53
  %v182 = vunpack.c.l.bf16 %v54
  %v183 = vunpack.c.l.bf16 %v55
  %v184 = vunpack.c.l.bf16 %v56
  %v185 = vunpack.c.l.bf16 %v57
  %v186 = vunpack.c.l.bf16 %v58
  %v187 = vunpack.c.l.bf16 %v59
  %v188 = vunpack.c.l.bf16 %v60
  %v189 = vunpack.c.l.bf16 %v61
  %v190 = vunpack.c.l.bf16 %v62
  %v191 = vunpack.c.l.bf16 %v63
  %v192 = vunpack.c.l.bf16 %v64
  %v193 = vunpack.c.l.bf16 %v65
  %v194 = vunpack.c.l.bf16 %v66
  %v195 = vunpack.c.l.bf16 %v67
  %v196 = vunpack.c.l.bf16 %v68
  %v197 = vunpack.c.l.bf16 %v69
  %v198 = vunpack.c.l.bf16 %v70
  %v199 = vunpack.c.l.bf16 %v71
  %v200 = vunpack.c.l.bf16 %v72
  %v201 = vunpack.c.l.bf16 %v73
  %v202 = vunpack.c.l.bf16 %v74
  %v203 = vunpack.c.l.bf16 %v75
  %v204 = vunpack.c.l.bf16 %v76
  %v205 = vunpack.c.l.bf16 %v77
  %v206 = vunpack.c.l.bf16 %v78
  %v207 = vunpack.c.l.bf16 %v79
  %v208 = vunpack.c.l.bf16 %v80
  %v209 = vunpack.c.l.bf16 %v81
  %v210 = vunpack.c.l.bf16 %v82
  %v211 = vunpack.c.l.bf16 %v83
  %v212 = vunpack.c.l.bf16 %v84
  %v213 = vunpack.c.l.bf16 %v85
  %v214 = vunpack.c.l.bf16 %v86
  %v215 = vunpack.c.l.bf16 %v87
  %v216 = vunpack.c.l.bf16 %v88
  %v217 = vunpack.c.l.bf16 %v89
  %v218 = vunpack.c.l.bf16 %v90
  %v219 = vunpack.c.l.bf16 %v91
  %v220 = vunpack.c.l.bf16 %v92
  %v221 = vunpack.c.l.bf16 %v93
  %v222 = vunpack.c.l.bf16 %v94
  %v223 = vunpack.c.l.bf16 %v95
  %v224 = vunpack.c.l.bf16 %v96
  %v225 = vunpack.c.l.bf16 %v97
  %v226 = vunpack.c.l.bf16 %v98
  %v227 = vunpack.c.l.bf16 %v99
  %v228 = vunpack.c.l.bf16 %v100
  %v229 = vunpack.c.l.bf16 %v101
  %v230 = vunpack.c.l.bf16 %v102
  %v231 = vunpack.c.l.bf16 %v103
  %v232 = vunpack.c.l.bf16 %v104
  %v233 = vunpack.c.l.bf16 %v105
  %v234 = vunpack.c.l.bf16 %v106
  %v235 = vunpack.c.l.bf16 %v107
  %v236 = vunpack.c.l.bf16 %v108
  %v237 = vunpack.c.l.bf16 %v109
  %v238 = vunpack.c.l.bf16 %v110
  %v239 = vunpack.c.l.bf16 %v111
  %v240 = vunpack.c.l.bf16 %v112
  %v241 = vunpack.c.l.bf16 %v113
  %v242 = vunpack.c.l.bf16 %v114
  %v243 = vunpack.c.l.bf16 %v115
  %v244 = vunpack.c.l.bf16 %v116
  %v245 = vunpack.c.l.bf16 %v117
  %v246 = vunpack.c.l.bf16 %v118
  %v247 = vunpack.c.l.bf16 %v119
  %v248 = vunpack.c.l.bf16 %v120
  %v249 = vunpack.c.l.bf16 %v121
  %v250 = vunpack.c.l.bf16 %v122
  %v251 = vunpack.c.l.bf16 %v123
  %v252 = vunpack.c.l.bf16 %v124
  %v253 = vunpack.c.l.bf16 %v125
  %v254 = vunpack.c.l.bf16 %v126
  %v255 = vunpack.c.l.bf16 %v127
  %v256 = vunpack.c.l.bf16 %v128
  %v257 = vunpack.c.l.bf16 %v129
  %v258 = vunpack.c.l.bf16 %v130
  %v259 = vunpack.c.l.bf16 %v131
  %v260 = vunpack.c.l.bf16 %v132
  %v261 = vunpack.c.l.bf16 %v133
  %v262 = vunpack.c.l.bf16 %v134
  %v263 = vunpack.c.l.bf16 %v135
  %v264 = vunpack.c.l.bf16 %v136
  %v265 = vunpack.c.l.bf16 %v137
  %v266 = vunpack.c.l.bf16 %v138
  %v267 = vunpack.c.l.bf16 %v139
  %v268 = vunpack.c.l.bf16 %v140
  %v269 = vunpack.c.l.bf16 %v141
  %v270 = vld [vmem:[%s1] sm:$0x1]
  %v272 = vlaneseq
  %v273 = vshrl.u32 %v272, 7
  %v274 = vsub.s32 0, %v273
  %v275 = vrot.slane %v270, %v274
  %v277 = vmul.f32 %v142, %v275
  %v278 = vmul.f32 %v143, %v275
  %v279 = vmul.f32 %v144, %v275
  %v280 = vmul.f32 %v145, %v275
  %v281 = vmul.f32 %v146, %v275
  %v282 = vmul.f32 %v147, %v275
  %v283 = vmul.f32 %v148, %v275
  %v284 = vmul.f32 %v149, %v275
  %v285 = vmul.f32 %v150, %v275
  %v286 = vmul.f32 %v151, %v275
  %v287 = vmul.f32 %v152, %v275
  %v288 = vmul.f32 %v153, %v275
  %v289 = vmul.f32 %v154, %v275
  %v290 = vmul.f32 %v155, %v275
  %v291 = vmul.f32 %v156, %v275
  %v292 = vmul.f32 %v157, %v275
  %v293 = vmul.f32 %v158, %v275
  %v294 = vmul.f32 %v159, %v275
  %v295 = vmul.f32 %v160, %v275
  %v296 = vmul.f32 %v161, %v275
  %v297 = vmul.f32 %v162, %v275
  %v298 = vmul.f32 %v163, %v275
  %v299 = vmul.f32 %v164, %v275
  %v300 = vmul.f32 %v165, %v275
  %v301 = vmul.f32 %v166, %v275
  %v302 = vmul.f32 %v167, %v275
  %v303 = vmul.f32 %v168, %v275
  %v304 = vmul.f32 %v169, %v275
  %v305 = vmul.f32 %v170, %v275
  %v306 = vmul.f32 %v171, %v275
  %v307 = vmul.f32 %v172, %v275
  %v308 = vmul.f32 %v173, %v275
  %v309 = vmul.f32 %v174, %v275
  %v310 = vmul.f32 %v175, %v275
  %v311 = vmul.f32 %v176, %v275
  %v312 = vmul.f32 %v177, %v275
  %v313 = vmul.f32 %v178, %v275
  %v314 = vmul.f32 %v179, %v275
  %v315 = vmul.f32 %v180, %v275
  %v316 = vmul.f32 %v181, %v275
  %v317 = vmul.f32 %v182, %v275
  %v318 = vmul.f32 %v183, %v275
  %v319 = vmul.f32 %v184, %v275
  %v320 = vmul.f32 %v185, %v275
  %v321 = vmul.f32 %v186, %v275
  %v322 = vmul.f32 %v187, %v275
  %v323 = vmul.f32 %v188, %v275
  %v324 = vmul.f32 %v189, %v275
  %v325 = vmul.f32 %v190, %v275
  %v326 = vmul.f32 %v191, %v275
  %v327 = vmul.f32 %v192, %v275
  %v328 = vmul.f32 %v193, %v275
  %v329 = vmul.f32 %v194, %v275
  %v330 = vmul.f32 %v195, %v275
  %v331 = vmul.f32 %v196, %v275
  %v332 = vmul.f32 %v197, %v275
  %v333 = vmul.f32 %v198, %v275
  %v334 = vmul.f32 %v199, %v275
  %v335 = vmul.f32 %v200, %v275
  %v336 = vmul.f32 %v201, %v275
  %v337 = vmul.f32 %v202, %v275
  %v338 = vmul.f32 %v203, %v275
  %v339 = vmul.f32 %v204, %v275
  %v340 = vmul.f32 %v205, %v275
  %v341 = vmul.f32 %v206, %v275
  %v342 = vmul.f32 %v207, %v275
  %v343 = vmul.f32 %v208, %v275
  %v344 = vmul.f32 %v209, %v275
  %v345 = vmul.f32 %v210, %v275
  %v346 = vmul.f32 %v211, %v275
  %v347 = vmul.f32 %v212, %v275
  %v348 = vmul.f32 %v213, %v275
  %v349 = vmul.f32 %v214, %v275
  %v350 = vmul.f32 %v215, %v275
  %v351 = vmul.f32 %v216, %v275
  %v352 = vmul.f32 %v217, %v275
  %v353 = vmul.f32 %v218, %v275
  %v354 = vmul.f32 %v219, %v275
  %v355 = vmul.f32 %v220, %v275
  %v356 = vmul.f32 %v221, %v275
  %v357 = vmul.f32 %v222, %v275
  %v358 = vmul.f32 %v223, %v275
  %v359 = vmul.f32 %v224, %v275
  %v360 = vmul.f32 %v225, %v275
  %v361 = vmul.f32 %v226, %v275
  %v362 = vmul.f32 %v227, %v275
  %v363 = vmul.f32 %v228, %v275
  %v364 = vmul.f32 %v229, %v275
  %v365 = vmul.f32 %v230, %v275
  %v366 = vmul.f32 %v231, %v275
  %v367 = vmul.f32 %v232, %v275
  %v368 = vmul.f32 %v233, %v275
  %v369 = vmul.f32 %v234, %v275
  %v370 = vmul.f32 %v235, %v275
  %v371 = vmul.f32 %v236, %v275
  %v372 = vmul.f32 %v237, %v275
  %v373 = vmul.f32 %v238, %v275
  %v374 = vmul.f32 %v239, %v275
  %v375 = vmul.f32 %v240, %v275
  %v376 = vmul.f32 %v241, %v275
  %v377 = vmul.f32 %v242, %v275
  %v378 = vmul.f32 %v243, %v275
  %v379 = vmul.f32 %v244, %v275
  %v380 = vmul.f32 %v245, %v275
  %v381 = vmul.f32 %v246, %v275
  %v382 = vmul.f32 %v247, %v275
  %v383 = vmul.f32 %v248, %v275
  %v384 = vmul.f32 %v249, %v275
  %v385 = vmul.f32 %v250, %v275
  %v386 = vmul.f32 %v251, %v275
  %v387 = vmul.f32 %v252, %v275
  %v388 = vmul.f32 %v253, %v275
  %v389 = vmul.f32 %v254, %v275
  %v390 = vmul.f32 %v255, %v275
  %v391 = vmul.f32 %v256, %v275
  %v392 = vmul.f32 %v257, %v275
  %v393 = vmul.f32 %v258, %v275
  %v394 = vmul.f32 %v259, %v275
  %v395 = vmul.f32 %v260, %v275
  %v396 = vmul.f32 %v261, %v275
  %v397 = vmul.f32 %v262, %v275
  %v398 = vmul.f32 %v263, %v275
  %v399 = vmul.f32 %v264, %v275
  %v400 = vmul.f32 %v265, %v275
  %v401 = vmul.f32 %v266, %v275
  %v402 = vmul.f32 %v267, %v275
  %v403 = vmul.f32 %v268, %v275
  %v404 = vmul.f32 %v269, %v275
  %v405 = vld [vmem:[%s2] sm:$0x1]
  %v407 = vlaneseq
  %v408 = vshrl.u32 %v407, 7
  %v409 = vsub.s32 0, %v408
  %v410 = vrot.slane %v405, %v409
  %v412 = vadd.f32 %v277, %v410
  %v413 = vadd.f32 %v278, %v410
  %v414 = vadd.f32 %v279, %v410
  %v415 = vadd.f32 %v280, %v410
  %v416 = vadd.f32 %v281, %v410
  %v417 = vadd.f32 %v282, %v410
  %v418 = vadd.f32 %v283, %v410
  %v419 = vadd.f32 %v284, %v410
  %v420 = vadd.f32 %v285, %v410
  %v421 = vadd.f32 %v286, %v410
  %v422 = vadd.f32 %v287, %v410
  %v423 = vadd.f32 %v288, %v410
  %v424 = vadd.f32 %v289, %v410
  %v425 = vadd.f32 %v290, %v410
  %v426 = vadd.f32 %v291, %v410
  %v427 = vadd.f32 %v292, %v410
  %v428 = vadd.f32 %v293, %v410
  %v429 = vadd.f32 %v294, %v410
  %v430 = vadd.f32 %v295, %v410
  %v431 = vadd.f32 %v296, %v410
  %v432 = vadd.f32 %v297, %v410
  %v433 = vadd.f32 %v298, %v410
  %v434 = vadd.f32 %v299, %v410
  %v435 = vadd.f32 %v300, %v410
  %v436 = vadd.f32 %v301, %v410
  %v437 = vadd.f32 %v302, %v410
  %v438 = vadd.f32 %v303, %v410
  %v439 = vadd.f32 %v304, %v410
  %v440 = vadd.f32 %v305, %v410
  %v441 = vadd.f32 %v306, %v410
  %v442 = vadd.f32 %v307, %v410
  %v443 = vadd.f32 %v308, %v410
  %v444 = vadd.f32 %v309, %v410
  %v445 = vadd.f32 %v310, %v410
  %v446 = vadd.f32 %v311, %v410
  %v447 = vadd.f32 %v312, %v410
  %v448 = vadd.f32 %v313, %v410
  %v449 = vadd.f32 %v314, %v410
  %v450 = vadd.f32 %v315, %v410
  %v451 = vadd.f32 %v316, %v410
  %v452 = vadd.f32 %v317, %v410
  %v453 = vadd.f32 %v318, %v410
  %v454 = vadd.f32 %v319, %v410
  %v455 = vadd.f32 %v320, %v410
  %v456 = vadd.f32 %v321, %v410
  %v457 = vadd.f32 %v322, %v410
  %v458 = vadd.f32 %v323, %v410
  %v459 = vadd.f32 %v324, %v410
  %v460 = vadd.f32 %v325, %v410
  %v461 = vadd.f32 %v326, %v410
  %v462 = vadd.f32 %v327, %v410
  %v463 = vadd.f32 %v328, %v410
  %v464 = vadd.f32 %v329, %v410
  %v465 = vadd.f32 %v330, %v410
  %v466 = vadd.f32 %v331, %v410
  %v467 = vadd.f32 %v332, %v410
  %v468 = vadd.f32 %v333, %v410
  %v469 = vadd.f32 %v334, %v410
  %v470 = vadd.f32 %v335, %v410
  %v471 = vadd.f32 %v336, %v410
  %v472 = vadd.f32 %v337, %v410
  %v473 = vadd.f32 %v338, %v410
  %v474 = vadd.f32 %v339, %v410
  %v475 = vadd.f32 %v340, %v410
  %v476 = vadd.f32 %v341, %v410
  %v477 = vadd.f32 %v342, %v410
  %v478 = vadd.f32 %v343, %v410
  %v479 = vadd.f32 %v344, %v410
  %v480 = vadd.f32 %v345, %v410
  %v481 = vadd.f32 %v346, %v410
  %v482 = vadd.f32 %v347, %v410
  %v483 = vadd.f32 %v348, %v410
  %v484 = vadd.f32 %v349, %v410
  %v485 = vadd.f32 %v350, %v410
  %v486 = vadd.f32 %v351, %v410
  %v487 = vadd.f32 %v352, %v410
  %v488 = vadd.f32 %v353, %v410
  %v489 = vadd.f32 %v354, %v410
  %v490 = vadd.f32 %v355, %v410
  %v491 = vadd.f32 %v356, %v410
  %v492 = vadd.f32 %v357, %v410
  %v493 = vadd.f32 %v358, %v410
  %v494 = vadd.f32 %v359, %v410
  %v495 = vadd.f32 %v360, %v410
  %v496 = vadd.f32 %v361, %v410
  %v497 = vadd.f32 %v362, %v410
  %v498 = vadd.f32 %v363, %v410
  %v499 = vadd.f32 %v364, %v410
  %v500 = vadd.f32 %v365, %v410
  %v501 = vadd.f32 %v366, %v410
  %v502 = vadd.f32 %v367, %v410
  %v503 = vadd.f32 %v368, %v410
  %v504 = vadd.f32 %v369, %v410
  %v505 = vadd.f32 %v370, %v410
  %v506 = vadd.f32 %v371, %v410
  %v507 = vadd.f32 %v372, %v410
  %v508 = vadd.f32 %v373, %v410
  %v509 = vadd.f32 %v374, %v410
  %v510 = vadd.f32 %v375, %v410
  %v511 = vadd.f32 %v376, %v410
  %v512 = vadd.f32 %v377, %v410
  %v513 = vadd.f32 %v378, %v410
  %v514 = vadd.f32 %v379, %v410
  %v515 = vadd.f32 %v380, %v410
  %v516 = vadd.f32 %v381, %v410
  %v517 = vadd.f32 %v382, %v410
  %v518 = vadd.f32 %v383, %v410
  %v519 = vadd.f32 %v384, %v410
  %v520 = vadd.f32 %v385, %v410
  %v521 = vadd.f32 %v386, %v410
  %v522 = vadd.f32 %v387, %v410
  %v523 = vadd.f32 %v388, %v410
  %v524 = vadd.f32 %v389, %v410
  %v525 = vadd.f32 %v390, %v410
  %v526 = vadd.f32 %v391, %v410
  %v527 = vadd.f32 %v392, %v410
  %v528 = vadd.f32 %v393, %v410
  %v529 = vadd.f32 %v394, %v410
  %v530 = vadd.f32 %v395, %v410
  %v531 = vadd.f32 %v396, %v410
  %v532 = vadd.f32 %v397, %v410
  %v533 = vadd.f32 %v398, %v410
  %v534 = vadd.f32 %v399, %v410
  %v535 = vadd.f32 %v400, %v410
  %v536 = vadd.f32 %v401, %v410
  %v537 = vadd.f32 %v402, %v410
  %v538 = vadd.f32 %v403, %v410
  %v539 = vadd.f32 %v404, %v410
  %v540 = vmax.f32 %v412, 0.0
  %v541 = vmax.f32 %v413, 0.0
  %v542 = vmax.f32 %v414, 0.0
  %v543 = vmax.f32 %v415, 0.0
  %v544 = vmax.f32 %v416, 0.0
  %v545 = vmax.f32 %v417, 0.0
  %v546 = vmax.f32 %v418, 0.0
  %v547 = vmax.f32 %v419, 0.0
  %v548 = vmax.f32 %v420, 0.0
  %v549 = vmax.f32 %v421, 0.0
  %v550 = vmax.f32 %v422, 0.0
  %v551 = vmax.f32 %v423, 0.0
  %v552 = vmax.f32 %v424, 0.0
  %v553 = vmax.f32 %v425, 0.0
  %v554 = vmax.f32 %v426, 0.0
  %v555 = vmax.f32 %v427, 0.0
  %v556 = vmax.f32 %v428, 0.0
  %v557 = vmax.f32 %v429, 0.0
  %v558 = vmax.f32 %v430, 0.0
  %v559 = vmax.f32 %v431, 0.0
  %v560 = vmax.f32 %v432, 0.0
  %v561 = vmax.f32 %v433, 0.0
  %v562 = vmax.f32 %v434, 0.0
  %v563 = vmax.f32 %v435, 0.0
  %v564 = vmax.f32 %v436, 0.0
  %v565 = vmax.f32 %v437, 0.0
  %v566 = vmax.f32 %v438, 0.0
  %v567 = vmax.f32 %v439, 0.0
  %v568 = vmax.f32 %v440, 0.0
  %v569 = vmax.f32 %v441, 0.0
  %v570 = vmax.f32 %v442, 0.0
  %v571 = vmax.f32 %v443, 0.0
  %v572 = vmax.f32 %v444, 0.0
  %v573 = vmax.f32 %v445, 0.0
  %v574 = vmax.f32 %v446, 0.0
  %v575 = vmax.f32 %v447, 0.0
  %v576 = vmax.f32 %v448, 0.0
  %v577 = vmax.f32 %v449, 0.0
  %v578 = vmax.f32 %v450, 0.0
  %v579 = vmax.f32 %v451, 0.0
  %v580 = vmax.f32 %v452, 0.0
  %v581 = vmax.f32 %v453, 0.0
  %v582 = vmax.f32 %v454, 0.0
  %v583 = vmax.f32 %v455, 0.0
  %v584 = vmax.f32 %v456, 0.0
  %v585 = vmax.f32 %v457, 0.0
  %v586 = vmax.f32 %v458, 0.0
  %v587 = vmax.f32 %v459, 0.0
  %v588 = vmax.f32 %v460, 0.0
  %v589 = vmax.f32 %v461, 0.0
  %v590 = vmax.f32 %v462, 0.0
  %v591 = vmax.f32 %v463, 0.0
  %v592 = vmax.f32 %v464, 0.0
  %v593 = vmax.f32 %v465, 0.0
  %v594 = vmax.f32 %v466, 0.0
  %v595 = vmax.f32 %v467, 0.0
  %v596 = vmax.f32 %v468, 0.0
  %v597 = vmax.f32 %v469, 0.0
  %v598 = vmax.f32 %v470, 0.0
  %v599 = vmax.f32 %v471, 0.0
  %v600 = vmax.f32 %v472, 0.0
  %v601 = vmax.f32 %v473, 0.0
  %v602 = vmax.f32 %v474, 0.0
  %v603 = vmax.f32 %v475, 0.0
  %v604 = vmax.f32 %v476, 0.0
  %v605 = vmax.f32 %v477, 0.0
  %v606 = vmax.f32 %v478, 0.0
  %v607 = vmax.f32 %v479, 0.0
  %v608 = vmax.f32 %v480, 0.0
  %v609 = vmax.f32 %v481, 0.0
  %v610 = vmax.f32 %v482, 0.0
  %v611 = vmax.f32 %v483, 0.0
  %v612 = vmax.f32 %v484, 0.0
  %v613 = vmax.f32 %v485, 0.0
  %v614 = vmax.f32 %v486, 0.0
  %v615 = vmax.f32 %v487, 0.0
  %v616 = vmax.f32 %v488, 0.0
  %v617 = vmax.f32 %v489, 0.0
  %v618 = vmax.f32 %v490, 0.0
  %v619 = vmax.f32 %v491, 0.0
  %v620 = vmax.f32 %v492, 0.0
  %v621 = vmax.f32 %v493, 0.0
  %v622 = vmax.f32 %v494, 0.0
  %v623 = vmax.f32 %v495, 0.0
  %v624 = vmax.f32 %v496, 0.0
  %v625 = vmax.f32 %v497, 0.0
  %v626 = vmax.f32 %v498, 0.0
  %v627 = vmax.f32 %v499, 0.0
  %v628 = vmax.f32 %v500, 0.0
  %v629 = vmax.f32 %v501, 0.0
  %v630 = vmax.f32 %v502, 0.0
  %v631 = vmax.f32 %v503, 0.0
  %v632 = vmax.f32 %v504, 0.0
  %v633 = vmax.f32 %v505, 0.0
  %v634 = vmax.f32 %v506, 0.0
  %v635 = vmax.f32 %v507, 0.0
  %v636 = vmax.f32 %v508, 0.0
  %v637 = vmax.f32 %v509, 0.0
  %v638 = vmax.f32 %v510, 0.0
  %v639 = vmax.f32 %v511, 0.0
  %v640 = vmax.f32 %v512, 0.0
  %v641 = vmax.f32 %v513, 0.0
  %v642 = vmax.f32 %v514, 0.0
  %v643 = vmax.f32 %v515, 0.0
  %v644 = vmax.f32 %v516, 0.0
  %v645 = vmax.f32 %v517, 0.0
  %v646 = vmax.f32 %v518, 0.0
  %v647 = vmax.f32 %v519, 0.0
  %v648 = vmax.f32 %v520, 0.0
  %v649 = vmax.f32 %v521, 0.0
  %v650 = vmax.f32 %v522, 0.0
  %v651 = vmax.f32 %v523, 0.0
  %v652 = vmax.f32 %v524, 0.0
  %v653 = vmax.f32 %v525, 0.0
  %v654 = vmax.f32 %v526, 0.0
  %v655 = vmax.f32 %v527, 0.0
  %v656 = vmax.f32 %v528, 0.0
  %v657 = vmax.f32 %v529, 0.0
  %v658 = vmax.f32 %v530, 0.0
  %v659 = vmax.f32 %v531, 0.0
  %v660 = vmax.f32 %v532, 0.0
  %v661 = vmax.f32 %v533, 0.0
  %v662 = vmax.f32 %v534, 0.0
  %v663 = vmax.f32 %v535, 0.0
  %v664 = vmax.f32 %v536, 0.0
  %v665 = vmax.f32 %v537, 0.0
  %v666 = vmax.f32 %v538, 0.0
  %v667 = vmax.f32 %v539, 0.0
  %v668 = vpack.c.bf16 %v541, %v540
  %v669 = vpack.c.bf16 %v543, %v542
  %v670 = vpack.c.bf16 %v545, %v544
  %v671 = vpack.c.bf16 %v547, %v546
  %v672 = vpack.c.bf16 %v549, %v548
  %v673 = vpack.c.bf16 %v551, %v550
  %v674 = vpack.c.bf16 %v553, %v552
  %v675 = vpack.c.bf16 %v555, %v554
  %v676 = vpack.c.bf16 %v557, %v556
  %v677 = vpack.c.bf16 %v559, %v558
  %v678 = vpack.c.bf16 %v561, %v560
  %v679 = vpack.c.bf16 %v563, %v562
  %v680 = vpack.c.bf16 %v565, %v564
  %v681 = vpack.c.bf16 %v567, %v566
  %v682 = vpack.c.bf16 %v569, %v568
  %v683 = vpack.c.bf16 %v571, %v570
  %v684 = vpack.c.bf16 %v573, %v572
  %v685 = vpack.c.bf16 %v575, %v574
  %v686 = vpack.c.bf16 %v577, %v576
  %v687 = vpack.c.bf16 %v579, %v578
  %v688 = vpack.c.bf16 %v581, %v580
  %v689 = vpack.c.bf16 %v583, %v582
  %v690 = vpack.c.bf16 %v585, %v584
  %v691 = vpack.c.bf16 %v587, %v586
  %v692 = vpack.c.bf16 %v589, %v588
  %v693 = vpack.c.bf16 %v591, %v590
  %v694 = vpack.c.bf16 %v593, %v592
  %v695 = vpack.c.bf16 %v595, %v594
  %v696 = vpack.c.bf16 %v597, %v596
  %v697 = vpack.c.bf16 %v599, %v598
  %v698 = vpack.c.bf16 %v601, %v600
  %v699 = vpack.c.bf16 %v603, %v602
  %v700 = vpack.c.bf16 %v605, %v604
  %v701 = vpack.c.bf16 %v607, %v606
  %v702 = vpack.c.bf16 %v609, %v608
  %v703 = vpack.c.bf16 %v611, %v610
  %v704 = vpack.c.bf16 %v613, %v612
  %v705 = vpack.c.bf16 %v615, %v614
  %v706 = vpack.c.bf16 %v617, %v616
  %v707 = vpack.c.bf16 %v619, %v618
  %v708 = vpack.c.bf16 %v621, %v620
  %v709 = vpack.c.bf16 %v623, %v622
  %v710 = vpack.c.bf16 %v625, %v624
  %v711 = vpack.c.bf16 %v627, %v626
  %v712 = vpack.c.bf16 %v629, %v628
  %v713 = vpack.c.bf16 %v631, %v630
  %v714 = vpack.c.bf16 %v633, %v632
  %v715 = vpack.c.bf16 %v635, %v634
  %v716 = vpack.c.bf16 %v637, %v636
  %v717 = vpack.c.bf16 %v639, %v638
  %v718 = vpack.c.bf16 %v641, %v640
  %v719 = vpack.c.bf16 %v643, %v642
  %v720 = vpack.c.bf16 %v645, %v644
  %v721 = vpack.c.bf16 %v647, %v646
  %v722 = vpack.c.bf16 %v649, %v648
  %v723 = vpack.c.bf16 %v651, %v650
  %v724 = vpack.c.bf16 %v653, %v652
  %v725 = vpack.c.bf16 %v655, %v654
  %v726 = vpack.c.bf16 %v657, %v656
  %v727 = vpack.c.bf16 %v659, %v658
  %v728 = vpack.c.bf16 %v661, %v660
  %v729 = vpack.c.bf16 %v663, %v662
  %v730 = vpack.c.bf16 %v665, %v664
  %v731 = vpack.c.bf16 %v667, %v666
  %v796 = vunpack.c.l.b16 %v668
  %v797 = vunpack.c.h.b16 %v668
  %v798 = vunpack.c.l.b16 %v669
  %v799 = vunpack.c.h.b16 %v669
  %v800 = vunpack.c.l.b16 %v670
  %v801 = vunpack.c.h.b16 %v670
  %v802 = vunpack.c.l.b16 %v671
  %v803 = vunpack.c.h.b16 %v671
  %v804 = vunpack.c.l.b16 %v672
  %v805 = vunpack.c.h.b16 %v672
  %v806 = vunpack.c.l.b16 %v673
  %v807 = vunpack.c.h.b16 %v673
  %v808 = vunpack.c.l.b16 %v674
  %v809 = vunpack.c.h.b16 %v674
  %v810 = vunpack.c.l.b16 %v675
  %v811 = vunpack.c.h.b16 %v675
  %v812 = vunpack.c.l.b16 %v676
  %v813 = vunpack.c.h.b16 %v676
  %v814 = vunpack.c.l.b16 %v677
  %v815 = vunpack.c.h.b16 %v677
  %v816 = vunpack.c.l.b16 %v678
  %v817 = vunpack.c.h.b16 %v678
  %v818 = vunpack.c.l.b16 %v679
  %v819 = vunpack.c.h.b16 %v679
  %v820 = vunpack.c.l.b16 %v680
  %v821 = vunpack.c.h.b16 %v680
  %v822 = vunpack.c.l.b16 %v681
  %v823 = vunpack.c.h.b16 %v681
  %v824 = vunpack.c.l.b16 %v682
  %v825 = vunpack.c.h.b16 %v682
  %v826 = vunpack.c.l.b16 %v683
  %v827 = vunpack.c.h.b16 %v683
  %v828 = vunpack.c.l.b16 %v684
  %v829 = vunpack.c.h.b16 %v684
  %v830 = vunpack.c.l.b16 %v685
  %v831 = vunpack.c.h.b16 %v685
  %v832 = vunpack.c.l.b16 %v686
  %v833 = vunpack.c.h.b16 %v686
  %v834 = vunpack.c.l.b16 %v687
  %v835 = vunpack.c.h.b16 %v687
  %v836 = vunpack.c.l.b16 %v688
  %v837 = vunpack.c.h.b16 %v688
  %v838 = vunpack.c.l.b16 %v689
  %v839 = vunpack.c.h.b16 %v689
  %v840 = vunpack.c.l.b16 %v690
  %v841 = vunpack.c.h.b16 %v690
  %v842 = vunpack.c.l.b16 %v691
  %v843 = vunpack.c.h.b16 %v691
  %v844 = vunpack.c.l.b16 %v692
  %v845 = vunpack.c.h.b16 %v692
  %v846 = vunpack.c.l.b16 %v693
  %v847 = vunpack.c.h.b16 %v693
  %v848 = vunpack.c.l.b16 %v694
  %v849 = vunpack.c.h.b16 %v694
  %v850 = vunpack.c.l.b16 %v695
  %v851 = vunpack.c.h.b16 %v695
  %v852 = vunpack.c.l.b16 %v696
  %v853 = vunpack.c.h.b16 %v696
  %v854 = vunpack.c.l.b16 %v697
  %v855 = vunpack.c.h.b16 %v697
  %v856 = vunpack.c.l.b16 %v698
  %v857 = vunpack.c.h.b16 %v698
  %v858 = vunpack.c.l.b16 %v699
  %v859 = vunpack.c.h.b16 %v699
  %v860 = vunpack.c.l.b16 %v700
  %v861 = vunpack.c.h.b16 %v700
  %v862 = vunpack.c.l.b16 %v701
  %v863 = vunpack.c.h.b16 %v701
  %v864 = vunpack.c.l.b16 %v702
  %v865 = vunpack.c.h.b16 %v702
  %v866 = vunpack.c.l.b16 %v703
  %v867 = vunpack.c.h.b16 %v703
  %v868 = vunpack.c.l.b16 %v704
  %v869 = vunpack.c.h.b16 %v704
  %v870 = vunpack.c.l.b16 %v705
  %v871 = vunpack.c.h.b16 %v705
  %v872 = vunpack.c.l.b16 %v706
  %v873 = vunpack.c.h.b16 %v706
  %v874 = vunpack.c.l.b16 %v707
  %v875 = vunpack.c.h.b16 %v707
  %v876 = vunpack.c.l.b16 %v708
  %v877 = vunpack.c.h.b16 %v708
  %v878 = vunpack.c.l.b16 %v709
  %v879 = vunpack.c.h.b16 %v709
  %v880 = vunpack.c.l.b16 %v710
  %v881 = vunpack.c.h.b16 %v710
  %v882 = vunpack.c.l.b16 %v711
  %v883 = vunpack.c.h.b16 %v711
  %v884 = vunpack.c.l.b16 %v712
  %v885 = vunpack.c.h.b16 %v712
  %v886 = vunpack.c.l.b16 %v713
  %v887 = vunpack.c.h.b16 %v713
  %v888 = vunpack.c.l.b16 %v714
  %v889 = vunpack.c.h.b16 %v714
  %v890 = vunpack.c.l.b16 %v715
  %v891 = vunpack.c.h.b16 %v715
  %v892 = vunpack.c.l.b16 %v716
  %v893 = vunpack.c.h.b16 %v716
  %v894 = vunpack.c.l.b16 %v717
  %v895 = vunpack.c.h.b16 %v717
  %v896 = vunpack.c.l.b16 %v718
  %v897 = vunpack.c.h.b16 %v718
  %v898 = vunpack.c.l.b16 %v719
  %v899 = vunpack.c.h.b16 %v719
  %v900 = vunpack.c.l.b16 %v720
  %v901 = vunpack.c.h.b16 %v720
  %v902 = vunpack.c.l.b16 %v721
  %v903 = vunpack.c.h.b16 %v721
  %v904 = vunpack.c.l.b16 %v722
  %v905 = vunpack.c.h.b16 %v722
  %v906 = vunpack.c.l.b16 %v723
  %v907 = vunpack.c.h.b16 %v723
  %v908 = vunpack.c.l.b16 %v724
  %v909 = vunpack.c.h.b16 %v724
  %v910 = vunpack.c.l.b16 %v725
  %v911 = vunpack.c.h.b16 %v725
  %v912 = vunpack.c.l.b16 %v726
  %v913 = vunpack.c.h.b16 %v726
  %v914 = vunpack.c.l.b16 %v727
  %v915 = vunpack.c.h.b16 %v727
  %v916 = vunpack.c.l.b16 %v728
  %v917 = vunpack.c.h.b16 %v728
  %v918 = vunpack.c.l.b16 %v729
  %v919 = vunpack.c.h.b16 %v729
  %v920 = vunpack.c.l.b16 %v730
  %v921 = vunpack.c.h.b16 %v730
  %v922 = vunpack.c.l.b16 %v731
  %v923 = vunpack.c.h.b16 %v731
  %v924 = vpack.c.b16 %v796, %v796
  %v925 = vpack.c.b16 %v797, %v797
  %v926 = vpack.c.b16 %v798, %v798
  %v927 = vpack.c.b16 %v799, %v799
  %v928 = vpack.c.b16 %v800, %v800
  %v929 = vpack.c.b16 %v801, %v801
  %v930 = vpack.c.b16 %v802, %v802
  %v931 = vpack.c.b16 %v803, %v803
  %v932 = vpack.c.b16 %v804, %v804
  %v933 = vpack.c.b16 %v805, %v805
  %v934 = vpack.c.b16 %v806, %v806
  %v935 = vpack.c.b16 %v807, %v807
  %v936 = vpack.c.b16 %v808, %v808
  %v937 = vpack.c.b16 %v809, %v809
  %v938 = vpack.c.b16 %v810, %v810
  %v939 = vpack.c.b16 %v811, %v811
  %v940 = vpack.c.b16 %v812, %v812
  %v941 = vpack.c.b16 %v813, %v813
  %v942 = vpack.c.b16 %v814, %v814
  %v943 = vpack.c.b16 %v815, %v815
  %v944 = vpack.c.b16 %v816, %v816
  %v945 = vpack.c.b16 %v817, %v817
  %v946 = vpack.c.b16 %v818, %v818
  %v947 = vpack.c.b16 %v819, %v819
  %v948 = vpack.c.b16 %v820, %v820
  %v949 = vpack.c.b16 %v821, %v821
  %v950 = vpack.c.b16 %v822, %v822
  %v951 = vpack.c.b16 %v823, %v823
  %v952 = vpack.c.b16 %v824, %v824
  %v953 = vpack.c.b16 %v825, %v825
  %v954 = vpack.c.b16 %v826, %v826
  %v955 = vpack.c.b16 %v827, %v827
  %v956 = vpack.c.b16 %v828, %v828
  %v957 = vpack.c.b16 %v829, %v829
  %v958 = vpack.c.b16 %v830, %v830
  %v959 = vpack.c.b16 %v831, %v831
  %v960 = vpack.c.b16 %v832, %v832
  %v961 = vpack.c.b16 %v833, %v833
  %v962 = vpack.c.b16 %v834, %v834
  %v963 = vpack.c.b16 %v835, %v835
  %v964 = vpack.c.b16 %v836, %v836
  %v965 = vpack.c.b16 %v837, %v837
  %v966 = vpack.c.b16 %v838, %v838
  %v967 = vpack.c.b16 %v839, %v839
  %v968 = vpack.c.b16 %v840, %v840
  %v969 = vpack.c.b16 %v841, %v841
  %v970 = vpack.c.b16 %v842, %v842
  %v971 = vpack.c.b16 %v843, %v843
  %v972 = vpack.c.b16 %v844, %v844
  %v973 = vpack.c.b16 %v845, %v845
  %v974 = vpack.c.b16 %v846, %v846
  %v975 = vpack.c.b16 %v847, %v847
  %v976 = vpack.c.b16 %v848, %v848
  %v977 = vpack.c.b16 %v849, %v849
  %v978 = vpack.c.b16 %v850, %v850
  %v979 = vpack.c.b16 %v851, %v851
  %v980 = vpack.c.b16 %v852, %v852
  %v981 = vpack.c.b16 %v853, %v853
  %v982 = vpack.c.b16 %v854, %v854
  %v983 = vpack.c.b16 %v855, %v855
  %v984 = vpack.c.b16 %v856, %v856
  %v985 = vpack.c.b16 %v857, %v857
  %v986 = vpack.c.b16 %v858, %v858
  %v987 = vpack.c.b16 %v859, %v859
  %v988 = vpack.c.b16 %v860, %v860
  %v989 = vpack.c.b16 %v861, %v861
  %v990 = vpack.c.b16 %v862, %v862
  %v991 = vpack.c.b16 %v863, %v863
  %v992 = vpack.c.b16 %v864, %v864
  %v993 = vpack.c.b16 %v865, %v865
  %v994 = vpack.c.b16 %v866, %v866
  %v995 = vpack.c.b16 %v867, %v867
  %v996 = vpack.c.b16 %v868, %v868
  %v997 = vpack.c.b16 %v869, %v869
  %v998 = vpack.c.b16 %v870, %v870
  %v999 = vpack.c.b16 %v871, %v871
  %v1000 = vpack.c.b16 %v872, %v872
  %v1001 = vpack.c.b16 %v873, %v873
  %v1002 = vpack.c.b16 %v874, %v874
  %v1003 = vpack.c.b16 %v875, %v875
  %v1004 = vpack.c.b16 %v876, %v876
  %v1005 = vpack.c.b16 %v877, %v877
  %v1006 = vpack.c.b16 %v878, %v878
  %v1007 = vpack.c.b16 %v879, %v879
  %v1008 = vpack.c.b16 %v880, %v880
  %v1009 = vpack.c.b16 %v881, %v881
  %v1010 = vpack.c.b16 %v882, %v882
  %v1011 = vpack.c.b16 %v883, %v883
  %v1012 = vpack.c.b16 %v884, %v884
  %v1013 = vpack.c.b16 %v885, %v885
  %v1014 = vpack.c.b16 %v886, %v886
  %v1015 = vpack.c.b16 %v887, %v887
  %v1016 = vpack.c.b16 %v888, %v888
  %v1017 = vpack.c.b16 %v889, %v889
  %v1018 = vpack.c.b16 %v890, %v890
  %v1019 = vpack.c.b16 %v891, %v891
  %v1020 = vpack.c.b16 %v892, %v892
  %v1021 = vpack.c.b16 %v893, %v893
  %v1022 = vpack.c.b16 %v894, %v894
  %v1023 = vpack.c.b16 %v895, %v895
  %v1024 = vpack.c.b16 %v896, %v896
  %v1025 = vpack.c.b16 %v897, %v897
  %v1026 = vpack.c.b16 %v898, %v898
  %v1027 = vpack.c.b16 %v899, %v899
  %v1028 = vpack.c.b16 %v900, %v900
  %v1029 = vpack.c.b16 %v901, %v901
  %v1030 = vpack.c.b16 %v902, %v902
  %v1031 = vpack.c.b16 %v903, %v903
  %v1032 = vpack.c.b16 %v904, %v904
  %v1033 = vpack.c.b16 %v905, %v905
  %v1034 = vpack.c.b16 %v906, %v906
  %v1035 = vpack.c.b16 %v907, %v907
  %v1036 = vpack.c.b16 %v908, %v908
  %v1037 = vpack.c.b16 %v909, %v909
  %v1038 = vpack.c.b16 %v910, %v910
  %v1039 = vpack.c.b16 %v911, %v911
  %v1040 = vpack.c.b16 %v912, %v912
  %v1041 = vpack.c.b16 %v913, %v913
  %v1042 = vpack.c.b16 %v914, %v914
  %v1043 = vpack.c.b16 %v915, %v915
  %v1044 = vpack.c.b16 %v916, %v916
  %v1045 = vpack.c.b16 %v917, %v917
  %v1046 = vpack.c.b16 %v918, %v918
  %v1047 = vpack.c.b16 %v919, %v919
  %v1048 = vpack.c.b16 %v920, %v920
  %v1049 = vpack.c.b16 %v921, %v921
  %v1050 = vpack.c.b16 %v922, %v922
  %v1051 = vpack.c.b16 %v923, %v923
  %1180 = vst [vmem:[%s3] sm:$0xf] %v924
  %1181 = vst [vmem:[%s3 + $0x4] sm:$0xf] %v925
  %1182 = vst [vmem:[%s3 + $0x8] sm:$0xf] %v926
  %1183 = vst [vmem:[%s3 + $0xc] sm:$0xf] %v927
  %1184 = vst [vmem:[%s3 + $0x10] sm:$0xf] %v928
  %1185 = vst [vmem:[%s3 + $0x14] sm:$0xf] %v929
  %1186 = vst [vmem:[%s3 + $0x18] sm:$0xf] %v930
  %1187 = vst [vmem:[%s3 + $0x1c] sm:$0xf] %v931
  %1188 = vst [vmem:[%s3 + $0x20] sm:$0xf] %v932
  %1189 = vst [vmem:[%s3 + $0x24] sm:$0xf] %v933
  %1190 = vst [vmem:[%s3 + $0x28] sm:$0xf] %v934
  %1191 = vst [vmem:[%s3 + $0x2c] sm:$0xf] %v935
  %1192 = vst [vmem:[%s3 + $0x30] sm:$0xf] %v936
  %1193 = vst [vmem:[%s3 + $0x34] sm:$0xf] %v937
  %1194 = vst [vmem:[%s3 + $0x38] sm:$0xf] %v938
  %1195 = vst [vmem:[%s3 + $0x3c] sm:$0xf] %v939
  %1196 = vst [vmem:[%s3 + $0x40] sm:$0xf] %v940
  %1197 = vst [vmem:[%s3 + $0x44] sm:$0xf] %v941
  %1198 = vst [vmem:[%s3 + $0x48] sm:$0xf] %v942
  %1199 = vst [vmem:[%s3 + $0x4c] sm:$0xf] %v943
  %1200 = vst [vmem:[%s3 + $0x50] sm:$0xf] %v944
  %1201 = vst [vmem:[%s3 + $0x54] sm:$0xf] %v945
  %1202 = vst [vmem:[%s3 + $0x58] sm:$0xf] %v946
  %1203 = vst [vmem:[%s3 + $0x5c] sm:$0xf] %v947
  %1204 = vst [vmem:[%s3 + $0x60] sm:$0xf] %v948
  %1205 = vst [vmem:[%s3 + $0x64] sm:$0xf] %v949
  %1206 = vst [vmem:[%s3 + $0x68] sm:$0xf] %v950
  %1207 = vst [vmem:[%s3 + $0x6c] sm:$0xf] %v951
  %1208 = vst [vmem:[%s3 + $0x70] sm:$0xf] %v952
  %1209 = vst [vmem:[%s3 + $0x74] sm:$0xf] %v953
  %1210 = vst [vmem:[%s3 + $0x78] sm:$0xf] %v954
  %1211 = vst [vmem:[%s3 + $0x7c] sm:$0xf] %v955
  %1212 = vst [vmem:[%s3 + $0x80] sm:$0xf] %v956
  %1213 = vst [vmem:[%s3 + $0x84] sm:$0xf] %v957
  %1214 = vst [vmem:[%s3 + $0x88] sm:$0xf] %v958
  %1215 = vst [vmem:[%s3 + $0x8c] sm:$0xf] %v959
  %1216 = vst [vmem:[%s3 + $0x90] sm:$0xf] %v960
  %1217 = vst [vmem:[%s3 + $0x94] sm:$0xf] %v961
  %1218 = vst [vmem:[%s3 + $0x98] sm:$0xf] %v962
  %1219 = vst [vmem:[%s3 + $0x9c] sm:$0xf] %v963
  %1220 = vst [vmem:[%s3 + $0xa0] sm:$0xf] %v964
  %1221 = vst [vmem:[%s3 + $0xa4] sm:$0xf] %v965
  %1222 = vst [vmem:[%s3 + $0xa8] sm:$0xf] %v966
  %1223 = vst [vmem:[%s3 + $0xac] sm:$0xf] %v967
  %1224 = vst [vmem:[%s3 + $0xb0] sm:$0xf] %v968
  %1225 = vst [vmem:[%s3 + $0xb4] sm:$0xf] %v969
  %1226 = vst [vmem:[%s3 + $0xb8] sm:$0xf] %v970
  %1227 = vst [vmem:[%s3 + $0xbc] sm:$0xf] %v971
  %1228 = vst [vmem:[%s3 + $0xc0] sm:$0xf] %v972
  %1229 = vst [vmem:[%s3 + $0xc4] sm:$0xf] %v973
  %1230 = vst [vmem:[%s3 + $0xc8] sm:$0xf] %v974
  %1231 = vst [vmem:[%s3 + $0xcc] sm:$0xf] %v975
  %1232 = vst [vmem:[%s3 + $0xd0] sm:$0xf] %v976
  %1233 = vst [vmem:[%s3 + $0xd4] sm:$0xf] %v977
  %1234 = vst [vmem:[%s3 + $0xd8] sm:$0xf] %v978
  %1235 = vst [vmem:[%s3 + $0xdc] sm:$0xf] %v979
  %1236 = vst [vmem:[%s3 + $0xe0] sm:$0xf] %v980
  %1237 = vst [vmem:[%s3 + $0xe4] sm:$0xf] %v981
  %1238 = vst [vmem:[%s3 + $0xe8] sm:$0xf] %v982
  %1239 = vst [vmem:[%s3 + $0xec] sm:$0xf] %v983
  %1240 = vst [vmem:[%s3 + $0xf0] sm:$0xf] %v984
  %1241 = vst [vmem:[%s3 + $0xf4] sm:$0xf] %v985
  %1242 = vst [vmem:[%s3 + $0xf8] sm:$0xf] %v986
  %1243 = vst [vmem:[%s3 + $0xfc] sm:$0xf] %v987
  %1244 = vst [vmem:[%s3 + $0x100] sm:$0xf] %v988
  %1245 = vst [vmem:[%s3 + $0x104] sm:$0xf] %v989
  %1246 = vst [vmem:[%s3 + $0x108] sm:$0xf] %v990
  %1247 = vst [vmem:[%s3 + $0x10c] sm:$0xf] %v991
  %1248 = vst [vmem:[%s3 + $0x110] sm:$0xf] %v992
  %1249 = vst [vmem:[%s3 + $0x114] sm:$0xf] %v993
  %1250 = vst [vmem:[%s3 + $0x118] sm:$0xf] %v994
  %1251 = vst [vmem:[%s3 + $0x11c] sm:$0xf] %v995
  %1252 = vst [vmem:[%s3 + $0x120] sm:$0xf] %v996
  %1253 = vst [vmem:[%s3 + $0x124] sm:$0xf] %v997
  %1254 = vst [vmem:[%s3 + $0x128] sm:$0xf] %v998
  %1255 = vst [vmem:[%s3 + $0x12c] sm:$0xf] %v999
  %1256 = vst [vmem:[%s3 + $0x130] sm:$0xf] %v1000
  %1257 = vst [vmem:[%s3 + $0x134] sm:$0xf] %v1001
  %1258 = vst [vmem:[%s3 + $0x138] sm:$0xf] %v1002
  %1259 = vst [vmem:[%s3 + $0x13c] sm:$0xf] %v1003
  %1260 = vst [vmem:[%s3 + $0x140] sm:$0xf] %v1004
  %1261 = vst [vmem:[%s3 + $0x144] sm:$0xf] %v1005
  %1262 = vst [vmem:[%s3 + $0x148] sm:$0xf] %v1006
  %1263 = vst [vmem:[%s3 + $0x14c] sm:$0xf] %v1007
  %1264 = vst [vmem:[%s3 + $0x150] sm:$0xf] %v1008
  %1265 = vst [vmem:[%s3 + $0x154] sm:$0xf] %v1009
  %1266 = vst [vmem:[%s3 + $0x158] sm:$0xf] %v1010
  %1267 = vst [vmem:[%s3 + $0x15c] sm:$0xf] %v1011
  %1268 = vst [vmem:[%s3 + $0x160] sm:$0xf] %v1012
  %1269 = vst [vmem:[%s3 + $0x164] sm:$0xf] %v1013
  %1270 = vst [vmem:[%s3 + $0x168] sm:$0xf] %v1014
  %1271 = vst [vmem:[%s3 + $0x16c] sm:$0xf] %v1015
  %1272 = vst [vmem:[%s3 + $0x170] sm:$0xf] %v1016
  %1273 = vst [vmem:[%s3 + $0x174] sm:$0xf] %v1017
  %1274 = vst [vmem:[%s3 + $0x178] sm:$0xf] %v1018
  %1275 = vst [vmem:[%s3 + $0x17c] sm:$0xf] %v1019
  %1276 = vst [vmem:[%s3 + $0x180] sm:$0xf] %v1020
  %1277 = vst [vmem:[%s3 + $0x184] sm:$0xf] %v1021
  %1278 = vst [vmem:[%s3 + $0x188] sm:$0xf] %v1022
  %1279 = vst [vmem:[%s3 + $0x18c] sm:$0xf] %v1023
  %1280 = vst [vmem:[%s3 + $0x190] sm:$0xf] %v1024
  %1281 = vst [vmem:[%s3 + $0x194] sm:$0xf] %v1025
  %1282 = vst [vmem:[%s3 + $0x198] sm:$0xf] %v1026
  %1283 = vst [vmem:[%s3 + $0x19c] sm:$0xf] %v1027
  %1284 = vst [vmem:[%s3 + $0x1a0] sm:$0xf] %v1028
  %1285 = vst [vmem:[%s3 + $0x1a4] sm:$0xf] %v1029
  %1286 = vst [vmem:[%s3 + $0x1a8] sm:$0xf] %v1030
  %1287 = vst [vmem:[%s3 + $0x1ac] sm:$0xf] %v1031
  %1288 = vst [vmem:[%s3 + $0x1b0] sm:$0xf] %v1032
  %1289 = vst [vmem:[%s3 + $0x1b4] sm:$0xf] %v1033
  %1290 = vst [vmem:[%s3 + $0x1b8] sm:$0xf] %v1034
  %1291 = vst [vmem:[%s3 + $0x1bc] sm:$0xf] %v1035
  %1292 = vst [vmem:[%s3 + $0x1c0] sm:$0xf] %v1036
  %1293 = vst [vmem:[%s3 + $0x1c4] sm:$0xf] %v1037
  %1294 = vst [vmem:[%s3 + $0x1c8] sm:$0xf] %v1038
  %1295 = vst [vmem:[%s3 + $0x1cc] sm:$0xf] %v1039
  %1296 = vst [vmem:[%s3 + $0x1d0] sm:$0xf] %v1040
  %1297 = vst [vmem:[%s3 + $0x1d4] sm:$0xf] %v1041
  %1298 = vst [vmem:[%s3 + $0x1d8] sm:$0xf] %v1042
  %1299 = vst [vmem:[%s3 + $0x1dc] sm:$0xf] %v1043
  %1300 = vst [vmem:[%s3 + $0x1e0] sm:$0xf] %v1044
  %1301 = vst [vmem:[%s3 + $0x1e4] sm:$0xf] %v1045
  %1302 = vst [vmem:[%s3 + $0x1e8] sm:$0xf] %v1046
  %1303 = vst [vmem:[%s3 + $0x1ec] sm:$0xf] %v1047
  %1304 = vst [vmem:[%s3 + $0x1f0] sm:$0xf] %v1048
  %1305 = vst [vmem:[%s3 + $0x1f4] sm:$0xf] %v1049
  %1306 = vst [vmem:[%s3 + $0x1f8] sm:$0xf] %v1050
  %1307 = vst [vmem:[%s3 + $0x1fc] sm:$0xf] %v1051
  // Predicated region
  $region14: #{generator_forward.16} parent=0 // pred_check
    _
  $region15: #{generator_forward.16} parent=0 // pred_check_branch
    %1309 = sbr.rel (0) target = $region17
  $region16: #{generator_forward.16} parent=0 // pred_region
    _
  $region17: #{generator_forward.16} parent=0 // pred_fallthru
    _
  // Predicated region
  $region18: #{generator_forward.16} parent=0 // pred_check
    _
  $region19: #{generator_forward.16} parent=0 // pred_check_branch
    %1311 = sbr.rel (0) target = $region21
  $region20: #{generator_forward.16} parent=0 // pred_region
    _
  $region21: #{generator_forward.16} parent=0 // pred_fallthru
    _

// kernel: generator_forward.17
$region0: #{generator_forward.17}
  #allocation0 [shape = 'u32[]', space=smem, size = 0x4, offset = 0x4, fixed_abs, tag = 'smem constant byte address 0x4 - core index']
  #allocation1 [shape = 'u32[144,128]{1,0:T(1,128)}', space=vmem, size = 0x12000, scoped, tag = 'internal scratch']
  %s0 = inlined_call_operand.vmem [shape: bf16[4,2048,256], index: 0, kind: input, shape index: {}]
  %s1 = inlined_call_operand.vmem [shape: bf16[4,256,3], index: 1, kind: input, shape index: {}]
  %s2 = inlined_call_operand.vmem [shape: f32[4,2048,3], index: 2, kind: output, shape index: {}]
  %s3 = sld [smem:[#allocation0]]
  $region41: #{generator_forward.17} parent=0
    _
  %s5 = ssub.s32 1, %s3
  %s6 = scalar_select 0, %s5, %s3
  loop: start=0, step=1, limit=18
  $region2: #{generator_forward.17} parent=0 // loop_pre_header
    _
  $region3: #{generator_forward.17} parent=0 // loop_header
    %s8 = sphi 0, %s12
    %p9 = scmp.ge.s32.totalorder %s8, 18
    %s15 = sphi 0, %s34
    %s16 = sphi 0, %s30
    %s17 = sphi 0, %s26
    %s18 = sphi 0, %s15
    %s19 = sphi 0, %s16
    %s20 = sphi 0, %s17
    %s21 = sphi 0, %s18
    %s22 = sphi 0, %s19
    %s23 = sphi 0, %s20
    %s39 = sphi 0, %s41
    %s42 = sphi 0, %s39
    %s43 = sphi 0, %s42
    %s59 = sphi 0, %s43
    %s67 = sphi 0, %s69
    %s70 = sphi 0, %s67
    %s71 = sphi 0, %s70
    %s87 = sphi 0, %s71
    %s97 = sphi 0, %s99
    %s100 = sphi 0, %s97
    %s101 = sphi 0, %s100
    %s117 = sphi 0, %s101
  $region4: #{generator_forward.17} parent=0 // loop_header_branch
    %11 = sbr.rel (%p9) target = $region8
  $region5: #{generator_forward.17} parent=0 // loop_body
    %s13 = ssub.s32 %s8, 1
    %s14 = ssub.s32 %s8, 2
    %s24 = sadd.s32 1, %s17
    %p25 = scmp.ge.s32.totalorder %s24, 4
    %s26 = scalar_select %p25, 0, %s24
    %s27 = sadd.s32 1, %s16
    %s28 = scalar_select %p25, %s27, %s16
    %p29 = scmp.ge.s32.totalorder %s28, 1
    %s30 = scalar_select %p29, 0, %s28
    %s31 = sadd.s32 1, %s15
    %s32 = scalar_select %p29, %s31, %s15
    %p33 = scmp.ge.s32.totalorder %s32, 4
    %s34 = scalar_select %p33, 0, %s32
    %s35 = ssub.s32 %s15, %s34
    %s36 = ssub.s32 %s17, %s26
    %s37 = sor.u32 %s35, %s36
    %p38 = scmp.eq.s32.totalorder %s37, 0
    %s40 = sadd.s32 %s39, 1
    %s41 = scalar_select %p38, %s39, %s40
    %p44 = pneg %p38
    %p45 = scmp.eq.s32.totalorder %s8, 15
    %p46 = por %p44, %p45
    %p47 = scmp.ne.s32.totalorder %s39, %s42
    %p48 = scmp.eq.s32.totalorder %s8, 0
    %p49 = por %p47, %p48
    %p50 = scmp.ne.s32.totalorder %s39, %s42
    %p51 = scmp.eq.s32.totalorder %s13, 15
    %p52 = por %p50, %p51
    %p53 = scmp.ne.s32.totalorder %s42, %s43
    %p54 = scmp.eq.s32.totalorder %s13, 0
    %p55 = por %p53, %p54
    %p56 = scmp.ne.s32.totalorder %s42, %s43
    %p57 = scmp.eq.s32.totalorder %s14, 15
    %p58 = por %p56, %p57
    %p60 = scmp.ne.s32.totalorder %s43, %s59
    %p61 = scmp.eq.s32.totalorder %s14, 0
    %p62 = por %p60, %p61
    %s63 = ssub.s32 %s15, %s34
    %s64 = ssub.s32 %s16, %s30
    %s65 = sor.u32 %s63, %s64
    %p66 = scmp.eq.s32.totalorder %s65, 0
    %s68 = sadd.s32 %s67, 1
    %s69 = scalar_select %p66, %s67, %s68
    %p72 = pneg %p66
    %p73 = scmp.eq.s32.totalorder %s8, 15
    %p74 = por %p72, %p73
    %p75 = scmp.ne.s32.totalorder %s67, %s70
    %p76 = scmp.eq.s32.totalorder %s8, 0
    %p77 = por %p75, %p76
    %p78 = scmp.ne.s32.totalorder %s67, %s70
    %p79 = scmp.eq.s32.totalorder %s13, 15
    %p80 = por %p78, %p79
    %p81 = scmp.ne.s32.totalorder %s70, %s71
    %p82 = scmp.eq.s32.totalorder %s13, 0
    %p83 = por %p81, %p82
    %p84 = scmp.ne.s32.totalorder %s70, %s71
    %p85 = scmp.eq.s32.totalorder %s14, 15
    %p86 = por %p84, %p85
    %p88 = scmp.ne.s32.totalorder %s71, %s87
    %p89 = scmp.eq.s32.totalorder %s14, 0
    %p90 = por %p88, %p89
    %s91 = ssub.s32 %s15, %s34
    %s92 = ssub.s32 %s17, %s26
    %s93 = sor.u32 %s91, %s92
    %s94 = ssub.s32 %s16, %s30
    %s95 = sor.u32 %s93, %s94
    %p96 = scmp.eq.s32.totalorder %s95, 0
    %s98 = sadd.s32 %s97, 1
    %s99 = scalar_select %p96, %s97, %s98
    %p102 = pneg %p96
    %p103 = scmp.eq.s32.totalorder %s8, 15
    %p104 = por %p102, %p103
    %p105 = scmp.ne.s32.totalorder %s97, %s100
    %p106 = scmp.eq.s32.totalorder %s8, 0
    %p107 = por %p105, %p106
    %p108 = scmp.ne.s32.totalorder %s97, %s100
    %p109 = scmp.eq.s32.totalorder %s13, 15
    %p110 = por %p108, %p109
    %p111 = scmp.ne.s32.totalorder %s100, %s101
    %p112 = scmp.eq.s32.totalorder %s13, 0
    %p113 = por %p111, %p112
    %p114 = scmp.ne.s32.totalorder %s100, %s101
    %p115 = scmp.eq.s32.totalorder %s14, 15
    %p116 = por %p114, %p115
    %p118 = scmp.ne.s32.totalorder %s101, %s117
    %p119 = scmp.eq.s32.totalorder %s14, 0
    %p120 = por %p118, %p119
    %p121 = scmp.le.s32.totalorder 1, %s8
    %p122 = scmp.lt.s32.totalorder %s8, 17
    %p123 = pnand %p121, %p122
    %p124 = pneg %p123
    // Predicated region
    $region9: #{generator_forward.17} parent=5 // pred_check
      _
    $region10: #{generator_forward.17} parent=5 // pred_check_branch
      %126 = sbr.rel (%p123) target = $region12
    $region11: #{generator_forward.17} parent=5 // pred_region
      %s127 = ssub.s32 %s8, 1
    $region12: #{generator_forward.17} parent=5 // pred_fallthru
      _
    %p128 = scmp.lt.s32.totalorder %s8, 16
    // Predicated region
    $region13: #{generator_forward.17} parent=5 // pred_check
      %p129 = pneg %p128
    $region14: #{generator_forward.17} parent=5 // pred_check_branch
      %131 = sbr.rel (%p129) target = $region16
    $region15: #{generator_forward.17} parent=5 // pred_region
      // Predicated region
      $region17: #{generator_forward.17} parent=15 // pred_check
        %p132 = pneg %p49
      $region18: #{generator_forward.17} parent=15 // pred_check_branch
        %134 = sbr.rel (%p132) target = $region20
      $region19: #{generator_forward.17} parent=15 // pred_region
        %s135 = smul.u32 64, %s17
        %p136 = scmp.lt.s32.totalorder %s15, 3
        %s137 = scalar_select %p136, %s15, 3
        %p138 = scmp.lt.s32.totalorder %s135, 255
        %s139 = scalar_select %p138, %s135, 255
        %s140 = smul.addr %s139, 2
        %s141 = smul.addr %s137, 512
        %s142 = sadd.s32 %s140, %s141
        %s143 = smul.addr %s142, 4
        %s144 = scalar_lea.vmem %s0, %s143
        %s145 = smul.u32 64, %s17
      $region20: #{generator_forward.17} parent=15 // pred_fallthru
        _
      // Predicated region
      $region21: #{generator_forward.17} parent=15 // pred_check
        %p146 = pneg %p77
      $region22: #{generator_forward.17} parent=15 // pred_check_branch
        %148 = sbr.rel (%p146) target = $region24
      $region23: #{generator_forward.17} parent=15 // pred_region
        %p149 = scmp.lt.s32.totalorder %s15, 3
        %s150 = scalar_select %p149, %s15, 3
        %p151 = scmp.lt.s32.totalorder %s16, 0
        %s152 = scalar_select %p151, %s16, 0
        %s153 = smul.addr %s150, 32
        %s154 = sadd.s32 %s152, %s153
        %s155 = smul.addr %s154, 4
        %s156 = scalar_lea.vmem %s1, %s155
      $region24: #{generator_forward.17} parent=15 // pred_fallthru
        _
    $region16: #{generator_forward.17} parent=5 // pred_fallthru
      _
    %p157 = scmp.le.s32.totalorder 1, %s8
    %p158 = scmp.lt.s32.totalorder %s8, 17
    %p159 = pnand %p157, %p158
    %p160 = pneg %p159
    // Predicated region
    $region25: #{generator_forward.17} parent=5 // pred_check
      _
    $region26: #{generator_forward.17} parent=5 // pred_check_branch
      %162 = sbr.rel (%p159) target = $region28
    $region27: #{generator_forward.17} parent=5 // pred_region
      %s163 = ssub.s32 %s8, 1
      %s164 = smul.u32 64, %s20
      %p165 = scmp.lt.s32.totalorder %s18, 3
      %s166 = scalar_select %p165, %s18, 3
      %p167 = scmp.lt.s32.totalorder %s164, 255
      %s168 = scalar_select %p167, %s164, 255
      %s169 = smul.addr %s168, 2
      %s170 = smul.addr %s166, 512
      %s171 = sadd.s32 %s169, %s170
      %s172 = smul.addr %s171, 4
      %s173 = scalar_lea.vmem %s0, %s172
      %p174 = pneg %p55
      %p175 = pneg %p52
      %p176 = scmp.lt.s32.totalorder %s18, 3
      %s177 = scalar_select %p176, %s18, 3
      %p178 = scmp.lt.s32.totalorder %s19, 0
      %s179 = scalar_select %p178, %s19, 0
      %s180 = smul.addr %s177, 32
      %s181 = sadd.s32 %s179, %s180
      %s182 = smul.addr %s181, 4
      %s183 = scalar_lea.vmem %s1, %s182
      %p184 = pneg %p83
      %p185 = pneg %p80
      %p186 = pneg %p113
      %p187 = pneg %p110
      %s188 = smul.u32 64, %s20
      %p189 = scmp.lt.s32.totalorder %s18, 3
      %s190 = scalar_select %p189, %s18, 3
      %p191 = scmp.lt.s32.totalorder %s188, 255
      %s192 = scalar_select %p191, %s188, 255
      %p193 = scmp.lt.s32.totalorder %s19, 0
      %s194 = scalar_select %p193, %s19, 0
      %s195 = sadd.s32 %s194, %s192
      %s196 = smul.addr %s190, 256
      %s197 = sadd.s32 %s195, %s196
      %s198 = smul.addr %s197, 8
      %s199 = scalar_lea.vmem %s2, %s198
      %s200 = smul.u32 64, %s20
      %p201 = scmp.lt.s32.totalorder %s18, 3
      %s202 = scalar_select %p201, %s18, 3
      %p203 = scmp.lt.s32.totalorder %s200, 255
      %s204 = scalar_select %p203, %s200, 255
      %s205 = smul.addr %s204, 2
      %s206 = smul.addr %s202, 512
      %s207 = sadd.s32 %s205, %s206
      %s208 = smul.addr %s207, 4
      %s209 = scalar_lea.vmem %s0, %s208
      %s210 = smul.u32 64, %s20
      %p211 = scmp.lt.s32.totalorder %s18, 3
      %s212 = scalar_select %p211, %s18, 3
      %p213 = scmp.lt.s32.totalorder %s19, 0
      %s214 = scalar_select %p213, %s19, 0
      %s215 = smul.addr %s212, 32
      %s216 = sadd.s32 %s214, %s215
      %s217 = smul.addr %s216, 4
      %s218 = scalar_lea.vmem %s1, %s217
      %s219 = smul.u32 64, %s20
      %p220 = scmp.lt.s32.totalorder %s18, 3
      %s221 = scalar_select %p220, %s18, 3
      %p222 = scmp.lt.s32.totalorder %s219, 255
      %s223 = scalar_select %p222, %s219, 255
      %p224 = scmp.lt.s32.totalorder %s19, 0
      %s225 = scalar_select %p224, %s19, 0
      %s226 = sadd.s32 %s225, %s223
      %s227 = smul.addr %s221, 256
      %s228 = sadd.s32 %s226, %s227
      %s229 = smul.addr %s228, 8
      %s230 = scalar_lea.vmem %s2, %s229
      %s231 = smul.u32 64, %s20
      %v233 = vld [vmem:[%s209] sm:$0xff]
      %v234 = vld [vmem:[%s209 + $0x8] sm:$0xff]
      %v235 = vld [vmem:[%s209 + $0x10] sm:$0xff]
      %v236 = vld [vmem:[%s209 + $0x18] sm:$0xff]
      %v237 = vld [vmem:[%s209 + $0x20] sm:$0xff]
      %v238 = vld [vmem:[%s209 + $0x28] sm:$0xff]
      %v239 = vld [vmem:[%s209 + $0x30] sm:$0xff]
      %v240 = vld [vmem:[%s209 + $0x38] sm:$0xff]
      %v241 = vld [vmem:[%s209 + $0x40] sm:$0xff]
      %v242 = vld [vmem:[%s209 + $0x48] sm:$0xff]
      %v243 = vld [vmem:[%s209 + $0x50] sm:$0xff]
      %v244 = vld [vmem:[%s209 + $0x58] sm:$0xff]
      %v245 = vld [vmem:[%s209 + $0x60] sm:$0xff]
      %v246 = vld [vmem:[%s209 + $0x68] sm:$0xff]
      %v247 = vld [vmem:[%s209 + $0x70] sm:$0xff]
      %v248 = vld [vmem:[%s209 + $0x78] sm:$0xff]
      %v249 = vld [vmem:[%s209 + $0x80] sm:$0xff]
      %v250 = vld [vmem:[%s209 + $0x88] sm:$0xff]
      %v251 = vld [vmem:[%s209 + $0x90] sm:$0xff]
      %v252 = vld [vmem:[%s209 + $0x98] sm:$0xff]
      %v253 = vld [vmem:[%s209 + $0xa0] sm:$0xff]
      %v254 = vld [vmem:[%s209 + $0xa8] sm:$0xff]
      %v255 = vld [vmem:[%s209 + $0xb0] sm:$0xff]
      %v256 = vld [vmem:[%s209 + $0xb8] sm:$0xff]
      %v257 = vld [vmem:[%s209 + $0xc0] sm:$0xff]
      %v258 = vld [vmem:[%s209 + $0xc8] sm:$0xff]
      %v259 = vld [vmem:[%s209 + $0xd0] sm:$0xff]
      %v260 = vld [vmem:[%s209 + $0xd8] sm:$0xff]
      %v261 = vld [vmem:[%s209 + $0xe0] sm:$0xff]
      %v262 = vld [vmem:[%s209 + $0xe8] sm:$0xff]
      %v263 = vld [vmem:[%s209 + $0xf0] sm:$0xff]
      %v264 = vld [vmem:[%s209 + $0xf8] sm:$0xff]
      %v265 = vld [vmem:[%s209 + $0x100] sm:$0xff]
      %v266 = vld [vmem:[%s209 + $0x108] sm:$0xff]
      %v267 = vld [vmem:[%s209 + $0x110] sm:$0xff]
      %v268 = vld [vmem:[%s209 + $0x118] sm:$0xff]
      %v269 = vld [vmem:[%s209 + $0x120] sm:$0xff]
      %v270 = vld [vmem:[%s209 + $0x128] sm:$0xff]
      %v271 = vld [vmem:[%s209 + $0x130] sm:$0xff]
      %v272 = vld [vmem:[%s209 + $0x138] sm:$0xff]
      %v273 = vld [vmem:[%s209 + $0x140] sm:$0xff]
      %v274 = vld [vmem:[%s209 + $0x148] sm:$0xff]
      %v275 = vld [vmem:[%s209 + $0x150] sm:$0xff]
      %v276 = vld [vmem:[%s209 + $0x158] sm:$0xff]
      %v277 = vld [vmem:[%s209 + $0x160] sm:$0xff]
      %v278 = vld [vmem:[%s209 + $0x168] sm:$0xff]
      %v279 = vld [vmem:[%s209 + $0x170] sm:$0xff]
      %v280 = vld [vmem:[%s209 + $0x178] sm:$0xff]
      %v281 = vld [vmem:[%s209 + $0x180] sm:$0xff]
      %v282 = vld [vmem:[%s209 + $0x188] sm:$0xff]
      %v283 = vld [vmem:[%s209 + $0x190] sm:$0xff]
      %v284 = vld [vmem:[%s209 + $0x198] sm:$0xff]
      %v285 = vld [vmem:[%s209 + $0x1a0] sm:$0xff]
      %v286 = vld [vmem:[%s209 + $0x1a8] sm:$0xff]
      %v287 = vld [vmem:[%s209 + $0x1b0] sm:$0xff]
      %v288 = vld [vmem:[%s209 + $0x1b8] sm:$0xff]
      %v289 = vld [vmem:[%s209 + $0x1c0] sm:$0xff]
      %v290 = vld [vmem:[%s209 + $0x1c8] sm:$0xff]
      %v291 = vld [vmem:[%s209 + $0x1d0] sm:$0xff]
      %v292 = vld [vmem:[%s209 + $0x1d8] sm:$0xff]
      %v293 = vld [vmem:[%s209 + $0x1e0] sm:$0xff]
      %v294 = vld [vmem:[%s209 + $0x1e8] sm:$0xff]
      %v295 = vld [vmem:[%s209 + $0x1f0] sm:$0xff]
      %v296 = vld [vmem:[%s209 + $0x1f8] sm:$0xff]
      %v297 = vld [vmem:[%s218] sm:$0xf]
      %v298 = vld [vmem:[%s218 + $0x4] sm:$0xf]
      %v299 = vld [vmem:[%s218 + $0x8] sm:$0xf]
      %v300 = vld [vmem:[%s218 + $0xc] sm:$0xf]
      %v301 = vld [vmem:[%s218 + $0x10] sm:$0xf]
      %v302 = vld [vmem:[%s218 + $0x14] sm:$0xf]
      %v303 = vld [vmem:[%s218 + $0x18] sm:$0xf]
      %v304 = vld [vmem:[%s218 + $0x1c] sm:$0xf]
      %v305 = vld [vmem:[%s218 + $0x20] sm:$0xf]
      %v306 = vld [vmem:[%s218 + $0x24] sm:$0xf]
      %v307 = vld [vmem:[%s218 + $0x28] sm:$0xf]
      %v308 = vld [vmem:[%s218 + $0x2c] sm:$0xf]
      %v309 = vld [vmem:[%s218 + $0x30] sm:$0xf]
      %v310 = vld [vmem:[%s218 + $0x34] sm:$0xf]
      %v311 = vld [vmem:[%s218 + $0x38] sm:$0xf]
      %v312 = vld [vmem:[%s218 + $0x3c] sm:$0xf]
      %v313 = vld [vmem:[%s218 + $0x40] sm:$0xf]
      %v314 = vld [vmem:[%s218 + $0x44] sm:$0xf]
      %v315 = vld [vmem:[%s218 + $0x48] sm:$0xf]
      %v316 = vld [vmem:[%s218 + $0x4c] sm:$0xf]
      %v317 = vld [vmem:[%s218 + $0x50] sm:$0xf]
      %v318 = vld [vmem:[%s218 + $0x54] sm:$0xf]
      %v319 = vld [vmem:[%s218 + $0x58] sm:$0xf]
      %v320 = vld [vmem:[%s218 + $0x5c] sm:$0xf]
      %v321 = vld [vmem:[%s218 + $0x60] sm:$0xf]
      %v322 = vld [vmem:[%s218 + $0x64] sm:$0xf]
      %v323 = vld [vmem:[%s218 + $0x68] sm:$0xf]
      %v324 = vld [vmem:[%s218 + $0x6c] sm:$0xf]
      %v325 = vld [vmem:[%s218 + $0x70] sm:$0xf]
      %v326 = vld [vmem:[%s218 + $0x74] sm:$0xf]
      %v327 = vld [vmem:[%s218 + $0x78] sm:$0xf]
      %v328 = vld [vmem:[%s218 + $0x7c] sm:$0xf]
      %v393 = vunpack.c.l.b16 %v233
      %v394 = vunpack.c.h.b16 %v233
      %v395 = vunpack.c.l.b16 %v234
      %v396 = vunpack.c.h.b16 %v234
      %v397 = vunpack.c.l.b16 %v235
      %v398 = vunpack.c.h.b16 %v235
      %v399 = vunpack.c.l.b16 %v236
      %v400 = vunpack.c.h.b16 %v236
      %v401 = vunpack.c.l.b16 %v237
      %v402 = vunpack.c.h.b16 %v237
      %v403 = vunpack.c.l.b16 %v238
      %v404 = vunpack.c.h.b16 %v238
      %v405 = vunpack.c.l.b16 %v239
      %v406 = vunpack.c.h.b16 %v239
      %v407 = vunpack.c.l.b16 %v240
      %v408 = vunpack.c.h.b16 %v240
      %v409 = vunpack.c.l.b16 %v241
      %v410 = vunpack.c.h.b16 %v241
      %v411 = vunpack.c.l.b16 %v242
      %v412 = vunpack.c.h.b16 %v242
      %v413 = vunpack.c.l.b16 %v243
      %v414 = vunpack.c.h.b16 %v243
      %v415 = vunpack.c.l.b16 %v244
      %v416 = vunpack.c.h.b16 %v244
      %v417 = vunpack.c.l.b16 %v245
      %v418 = vunpack.c.h.b16 %v245
      %v419 = vunpack.c.l.b16 %v246
      %v420 = vunpack.c.h.b16 %v246
      %v421 = vunpack.c.l.b16 %v247
      %v422 = vunpack.c.h.b16 %v247
      %v423 = vunpack.c.l.b16 %v248
      %v424 = vunpack.c.h.b16 %v248
      %v425 = vunpack.c.l.b16 %v249
      %v426 = vunpack.c.h.b16 %v249
      %v427 = vunpack.c.l.b16 %v250
      %v428 = vunpack.c.h.b16 %v250
      %v429 = vunpack.c.l.b16 %v251
      %v430 = vunpack.c.h.b16 %v251
      %v431 = vunpack.c.l.b16 %v252
      %v432 = vunpack.c.h.b16 %v252
      %v433 = vunpack.c.l.b16 %v253
      %v434 = vunpack.c.h.b16 %v253
      %v435 = vunpack.c.l.b16 %v254
      %v436 = vunpack.c.h.b16 %v254
      %v437 = vunpack.c.l.b16 %v255
      %v438 = vunpack.c.h.b16 %v255
      %v439 = vunpack.c.l.b16 %v256
      %v440 = vunpack.c.h.b16 %v256
      %v441 = vunpack.c.l.b16 %v257
      %v442 = vunpack.c.h.b16 %v257
      %v443 = vunpack.c.l.b16 %v258
      %v444 = vunpack.c.h.b16 %v258
      %v445 = vunpack.c.l.b16 %v259
      %v446 = vunpack.c.h.b16 %v259
      %v447 = vunpack.c.l.b16 %v260
      %v448 = vunpack.c.h.b16 %v260
      %v449 = vunpack.c.l.b16 %v261
      %v450 = vunpack.c.h.b16 %v261
      %v451 = vunpack.c.l.b16 %v262
      %v452 = vunpack.c.h.b16 %v262
      %v453 = vunpack.c.l.b16 %v263
      %v454 = vunpack.c.h.b16 %v263
      %v455 = vunpack.c.l.b16 %v264
      %v456 = vunpack.c.h.b16 %v264
      %v457 = vunpack.c.l.b16 %v265
      %v458 = vunpack.c.h.b16 %v265
      %v459 = vunpack.c.l.b16 %v266
      %v460 = vunpack.c.h.b16 %v266
      %v461 = vunpack.c.l.b16 %v267
      %v462 = vunpack.c.h.b16 %v267
      %v463 = vunpack.c.l.b16 %v268
      %v464 = vunpack.c.h.b16 %v268
      %v465 = vunpack.c.l.b16 %v269
      %v466 = vunpack.c.h.b16 %v269
      %v467 = vunpack.c.l.b16 %v270
      %v468 = vunpack.c.h.b16 %v270
      %v469 = vunpack.c.l.b16 %v271
      %v470 = vunpack.c.h.b16 %v271
      %v471 = vunpack.c.l.b16 %v272
      %v472 = vunpack.c.h.b16 %v272
      %v473 = vunpack.c.l.b16 %v273
      %v474 = vunpack.c.h.b16 %v273
      %v475 = vunpack.c.l.b16 %v274
      %v476 = vunpack.c.h.b16 %v274
      %v477 = vunpack.c.l.b16 %v275
      %v478 = vunpack.c.h.b16 %v275
      %v479 = vunpack.c.l.b16 %v276
      %v480 = vunpack.c.h.b16 %v276
      %v481 = vunpack.c.l.b16 %v277
      %v482 = vunpack.c.h.b16 %v277
      %v483 = vunpack.c.l.b16 %v278
      %v484 = vunpack.c.h.b16 %v278
      %v485 = vunpack.c.l.b16 %v279
      %v486 = vunpack.c.h.b16 %v279
      %v487 = vunpack.c.l.b16 %v280
      %v488 = vunpack.c.h.b16 %v280
      %v489 = vunpack.c.l.b16 %v281
      %v490 = vunpack.c.h.b16 %v281
      %v491 = vunpack.c.l.b16 %v282
      %v492 = vunpack.c.h.b16 %v282
      %v493 = vunpack.c.l.b16 %v283
      %v494 = vunpack.c.h.b16 %v283
      %v495 = vunpack.c.l.b16 %v284
      %v496 = vunpack.c.h.b16 %v284
      %v497 = vunpack.c.l.b16 %v285
      %v498 = vunpack.c.h.b16 %v285
      %v499 = vunpack.c.l.b16 %v286
      %v500 = vunpack.c.h.b16 %v286
      %v501 = vunpack.c.l.b16 %v287
      %v502 = vunpack.c.h.b16 %v287
      %v503 = vunpack.c.l.b16 %v288
      %v504 = vunpack.c.h.b16 %v288
      %v505 = vunpack.c.l.b16 %v289
      %v506 = vunpack.c.h.b16 %v289
      %v507 = vunpack.c.l.b16 %v290
      %v508 = vunpack.c.h.b16 %v290
      %v509 = vunpack.c.l.b16 %v291
      %v510 = vunpack.c.h.b16 %v291
      %v511 = vunpack.c.l.b16 %v292
      %v512 = vunpack.c.h.b16 %v292
      %v513 = vunpack.c.l.b16 %v293
      %v514 = vunpack.c.h.b16 %v293
      %v515 = vunpack.c.l.b16 %v294
      %v516 = vunpack.c.h.b16 %v294
      %v517 = vunpack.c.l.b16 %v295
      %v518 = vunpack.c.h.b16 %v295
      %v519 = vunpack.c.l.b16 %v296
      %v520 = vunpack.c.h.b16 %v296
      %v521 = vpack.c.b16 %v395, %v393
      %v522 = vpack.c.b16 %v396, %v394
      %v523 = vpack.c.b16 %v399, %v397
      %v524 = vpack.c.b16 %v400, %v398
      %v525 = vpack.c.b16 %v403, %v401
      %v526 = vpack.c.b16 %v404, %v402
      %v527 = vpack.c.b16 %v407, %v405
      %v528 = vpack.c.b16 %v408, %v406
      %v529 = vpack.c.b16 %v411, %v409
      %v530 = vpack.c.b16 %v412, %v410
      %v531 = vpack.c.b16 %v415, %v413
      %v532 = vpack.c.b16 %v416, %v414
      %v533 = vpack.c.b16 %v419, %v417
      %v534 = vpack.c.b16 %v420, %v418
      %v535 = vpack.c.b16 %v423, %v421
      %v536 = vpack.c.b16 %v424, %v422
      %v537 = vpack.c.b16 %v427, %v425
      %v538 = vpack.c.b16 %v428, %v426
      %v539 = vpack.c.b16 %v431, %v429
      %v540 = vpack.c.b16 %v432, %v430
      %v541 = vpack.c.b16 %v435, %v433
      %v542 = vpack.c.b16 %v436, %v434
      %v543 = vpack.c.b16 %v439, %v437
      %v544 = vpack.c.b16 %v440, %v438
      %v545 = vpack.c.b16 %v443, %v441
      %v546 = vpack.c.b16 %v444, %v442
      %v547 = vpack.c.b16 %v447, %v445
      %v548 = vpack.c.b16 %v448, %v446
      %v549 = vpack.c.b16 %v451, %v449
      %v550 = vpack.c.b16 %v452, %v450
      %v551 = vpack.c.b16 %v455, %v453
      %v552 = vpack.c.b16 %v456, %v454
      %v553 = vpack.c.b16 %v459, %v457
      %v554 = vpack.c.b16 %v460, %v458
      %v555 = vpack.c.b16 %v463, %v461
      %v556 = vpack.c.b16 %v464, %v462
      %v557 = vpack.c.b16 %v467, %v465
      %v558 = vpack.c.b16 %v468, %v466
      %v559 = vpack.c.b16 %v471, %v469
      %v560 = vpack.c.b16 %v472, %v470
      %v561 = vpack.c.b16 %v475, %v473
      %v562 = vpack.c.b16 %v476, %v474
      %v563 = vpack.c.b16 %v479, %v477
      %v564 = vpack.c.b16 %v480, %v478
      %v565 = vpack.c.b16 %v483, %v481
      %v566 = vpack.c.b16 %v484, %v482
      %v567 = vpack.c.b16 %v487, %v485
      %v568 = vpack.c.b16 %v488, %v486
      %v569 = vpack.c.b16 %v491, %v489
      %v570 = vpack.c.b16 %v492, %v490
      %v571 = vpack.c.b16 %v495, %v493
      %v572 = vpack.c.b16 %v496, %v494
      %v573 = vpack.c.b16 %v499, %v497
      %v574 = vpack.c.b16 %v500, %v498
      %v575 = vpack.c.b16 %v503, %v501
      %v576 = vpack.c.b16 %v504, %v502
      %v577 = vpack.c.b16 %v507, %v505
      %v578 = vpack.c.b16 %v508, %v506
      %v579 = vpack.c.b16 %v511, %v509
      %v580 = vpack.c.b16 %v512, %v510
      %v581 = vpack.c.b16 %v515, %v513
      %v582 = vpack.c.b16 %v516, %v514
      %v583 = vpack.c.b16 %v519, %v517
      %v584 = vpack.c.b16 %v520, %v518
      %v681 = vunpack.c.l.b16 %v297
      %v682 = vunpack.c.l.b16 %v298
      %v683 = vunpack.c.l.b16 %v299
      %v684 = vunpack.c.l.b16 %v300
      %v685 = vunpack.c.l.b16 %v301
      %v686 = vunpack.c.l.b16 %v302
      %v687 = vunpack.c.l.b16 %v303
      %v688 = vunpack.c.l.b16 %v304
      %v689 = vunpack.c.l.b16 %v305
      %v690 = vunpack.c.l.b16 %v306
      %v691 = vunpack.c.l.b16 %v307
      %v692 = vunpack.c.l.b16 %v308
      %v693 = vunpack.c.l.b16 %v309
      %v694 = vunpack.c.l.b16 %v310
      %v695 = vunpack.c.l.b16 %v311
      %v696 = vunpack.c.l.b16 %v312
      %v697 = vunpack.c.l.b16 %v313
      %v698 = vunpack.c.l.b16 %v314
      %v699 = vunpack.c.l.b16 %v315
      %v700 = vunpack.c.l.b16 %v316
      %v701 = vunpack.c.l.b16 %v317
      %v702 = vunpack.c.l.b16 %v318
      %v703 = vunpack.c.l.b16 %v319
      %v704 = vunpack.c.l.b16 %v320
      %v705 = vunpack.c.l.b16 %v321
      %v706 = vunpack.c.l.b16 %v322
      %v707 = vunpack.c.l.b16 %v323
      %v708 = vunpack.c.l.b16 %v324
      %v709 = vunpack.c.l.b16 %v325
      %v710 = vunpack.c.l.b16 %v326
      %v711 = vunpack.c.l.b16 %v327
      %v712 = vunpack.c.l.b16 %v328
      %v713 = vpack.c.b16 %v682, %v681
      %v714 = vpack.c.b16 %v684, %v683
      %v715 = vpack.c.b16 %v686, %v685
      %v716 = vpack.c.b16 %v688, %v687
      %v717 = vpack.c.b16 %v690, %v689
      %v718 = vpack.c.b16 %v692, %v691
      %v719 = vpack.c.b16 %v694, %v693
      %v720 = vpack.c.b16 %v696, %v695
      %v721 = vpack.c.b16 %v698, %v697
      %v722 = vpack.c.b16 %v700, %v699
      %v723 = vpack.c.b16 %v702, %v701
      %v724 = vpack.c.b16 %v704, %v703
      %v725 = vpack.c.b16 %v706, %v705
      %v726 = vpack.c.b16 %v708, %v707
      %v727 = vpack.c.b16 %v710, %v709
      %v728 = vpack.c.b16 %v712, %v711
      %745 = vmatprep.subr.bf16.mxu0 0
      %746 = vmatpush1.bf16.msra.mxu0 %v713
      %747 = vmatprep.subr.bf16.mxu0 0
      %748 = vmatpush1.bf16.msra.mxu0 %v714
      %749 = vmatprep.subr.bf16.mxu0 0
      %750 = vmatpush1.bf16.msra.mxu0 %v715
      %751 = vmatprep.subr.bf16.mxu0 0
      %752 = vmatpush1.bf16.msra.mxu0 %v716
      %753 = vmatprep.subr.bf16.mxu0 0
      %754 = vmatpush1.bf16.msra.mxu0 %v717
      %755 = vmatprep.subr.bf16.mxu0 0
      %756 = vmatpush1.bf16.msra.mxu0 %v718
      %757 = vmatprep.subr.bf16.mxu0 0
      %758 = vmatpush1.bf16.msra.mxu0 %v719
      %759 = vmatprep.subr.bf16.mxu0 0
      %760 = vmatpush1.bf16.msra.mxu0 %v720
      %761 = vmatprep.subr.bf16.mxu0 0
      %762 = vmatpush1.bf16.msra.mxu0 %v721
      %763 = vmatprep.subr.bf16.mxu0 0
      %764 = vmatpush1.bf16.msra.mxu0 %v722
      %765 = vmatprep.subr.bf16.mxu0 0
      %766 = vmatpush1.bf16.msra.mxu0 %v723
      %767 = vmatprep.subr.bf16.mxu0 0
      %768 = vmatpush1.bf16.msra.mxu0 %v724
      %769 = vmatprep.subr.bf16.mxu0 0
      %770 = vmatpush1.bf16.msra.mxu0 %v725
      %771 = vmatprep.subr.bf16.mxu0 0
      %772 = vmatpush1.bf16.msra.mxu0 %v726
      %773 = vmatprep.subr.bf16.mxu0 0
      %774 = vmatpush1.bf16.msra.mxu0 %v727
      %775 = vmatprep.subr.bf16.mxu0 0
      %776 = vmatpush1.bf16.msra.mxu0 %v728
      %777 = vmatprep.mubr.bf16.mxu0 %v522
      %778 = vmatmul.mubr.bf16.gmra.mrb[0].mxu0 %v521
      %v779 = vpop.f32.mrb[0].mxu0
      %v780 = vadd.f32 0.0, %v779
      %v781 = vpop.f32.mrb[0].mxu0
      %v782 = vpop.f32.mrb[0].mxu0
      %v783 = vadd.f32 0.0, %v782
      %v784 = vpop.f32.mrb[0].mxu0
      %785 = vmatprep.mubr.bf16.mxu0 %v524
      %786 = vmatmul.mubr.bf16.gmra.mrb[0].mxu0 %v523
      %v787 = vpop.f32.mrb[0].mxu0
      %v788 = vadd.f32 0.0, %v787
      %v789 = vpop.f32.mrb[0].mxu0
      %v790 = vpop.f32.mrb[0].mxu0
      %v791 = vadd.f32 0.0, %v790
      %v792 = vpop.f32.mrb[0].mxu0
      %793 = vmatprep.mubr.bf16.mxu0 %v526
      %794 = vmatmul.mubr.bf16.gmra.mrb[0].mxu0 %v525
      %v795 = vpop.f32.mrb[0].mxu0
      %v796 = vadd.f32 0.0, %v795
      %v797 = vpop.f32.mrb[0].mxu0
      %v798 = vpop.f32.mrb[0].mxu0
      %v799 = vadd.f32 0.0, %v798
      %v800 = vpop.f32.mrb[0].mxu0
      %801 = vmatprep.mubr.bf16.mxu0 %v528
      %802 = vmatmul.mubr.bf16.gmra.mrb[0].mxu0 %v527
      %v803 = vpop.f32.mrb[0].mxu0
      %v804 = vadd.f32 0.0, %v803
      %v805 = vpop.f32.mrb[0].mxu0
      %v806 = vpop.f32.mrb[0].mxu0
      %v807 = vadd.f32 0.0, %v806
      %v808 = vpop.f32.mrb[0].mxu0
      %809 = vmatprep.mubr.bf16.mxu0 %v530
      %810 = vmatmul.mubr.bf16.gmra.mrb[0].mxu0 %v529
      %v811 = vpop.f32.mrb[0].mxu0
      %v812 = vadd.f32 0.0, %v811
      %v813 = vpop.f32.mrb[0].mxu0
      %v814 = vpop.f32.mrb[0].mxu0
      %v815 = vadd.f32 0.0, %v814
      %v816 = vpop.f32.mrb[0].mxu0
      %817 = vmatprep.mubr.bf16.mxu0 %v532
      %818 = vmatmul.mubr.bf16.gmra.mrb[0].mxu0 %v531
      %v819 = vpop.f32.mrb[0].mxu0
      %v820 = vadd.f32 0.0, %v819
      %v821 = vpop.f32.mrb[0].mxu0
      %v822 = vpop.f32.mrb[0].mxu0
      %v823 = vadd.f32 0.0, %v822
      %v824 = vpop.f32.mrb[0].mxu0
      %825 = vmatprep.mubr.bf16.mxu0 %v534
      %826 = vmatmul.mubr.bf16.gmra.mrb[0].mxu0 %v533
      %v827 = vpop.f32.mrb[0].mxu0
      %v828 = vadd.f32 0.0, %v827
      %v829 = vpop.f32.mrb[0].mxu0
      %v830 = vpop.f32.mrb[0].mxu0
      %v831 = vadd.f32 0.0, %v830
      %v832 = vpop.f32.mrb[0].mxu0
      %833 = vmatprep.mubr.bf16.mxu0 %v536
      %834 = vmatmul.mubr.bf16.gmra.mrb[0].mxu0 %v535
      %v835 = vpop.f32.mrb[0].mxu0
      %v836 = vadd.f32 0.0, %v835
      %v837 = vpop.f32.mrb[0].mxu0
      %v838 = vpop.f32.mrb[0].mxu0
      %v839 = vadd.f32 0.0, %v838
      %v840 = vpop.f32.mrb[0].mxu0
      %841 = vmatprep.mubr.bf16.mxu0 %v538
      %842 = vmatmul.mubr.bf16.gmra.mrb[0].mxu0 %v537
      %v843 = vpop.f32.mrb[0].mxu0
      %v844 = vadd.f32 0.0, %v843
      %v845 = vpop.f32.mrb[0].mxu0
      %v846 = vpop.f32.mrb[0].mxu0
      %v847 = vadd.f32 0.0, %v846
      %v848 = vpop.f32.mrb[0].mxu0
      %849 = vmatprep.mubr.bf16.mxu0 %v540
      %850 = vmatmul.mubr.bf16.gmra.mrb[0].mxu0 %v539
      %v851 = vpop.f32.mrb[0].mxu0
      %v852 = vadd.f32 0.0, %v851
      %v853 = vpop.f32.mrb[0].mxu0
      %v854 = vpop.f32.mrb[0].mxu0
      %v855 = vadd.f32 0.0, %v854
      %v856 = vpop.f32.mrb[0].mxu0
      %857 = vmatprep.mubr.bf16.mxu0 %v542
      %858 = vmatmul.mubr.bf16.gmra.mrb[0].mxu0 %v541
      %v859 = vpop.f32.mrb[0].mxu0
      %v860 = vadd.f32 0.0, %v859
      %v861 = vpop.f32.mrb[0].mxu0
      %v862 = vpop.f32.mrb[0].mxu0
      %v863 = vadd.f32 0.0, %v862
      %v864 = vpop.f32.mrb[0].mxu0
      %865 = vmatprep.mubr.bf16.mxu0 %v544
      %866 = vmatmul.mubr.bf16.gmra.mrb[0].mxu0 %v543
      %v867 = vpop.f32.mrb[0].mxu0
      %v868 = vadd.f32 0.0, %v867
      %v869 = vpop.f32.mrb[0].mxu0
      %v870 = vpop.f32.mrb[0].mxu0
      %v871 = vadd.f32 0.0, %v870
      %v872 = vpop.f32.mrb[0].mxu0
      %873 = vmatprep.mubr.bf16.mxu0 %v546
      %874 = vmatmul.mubr.bf16.gmra.mrb[0].mxu0 %v545
      %v875 = vpop.f32.mrb[0].mxu0
      %v876 = vadd.f32 0.0, %v875
      %v877 = vpop.f32.mrb[0].mxu0
      %v878 = vpop.f32.mrb[0].mxu0
      %v879 = vadd.f32 0.0, %v878
      %v880 = vpop.f32.mrb[0].mxu0
      %881 = vmatprep.mubr.bf16.mxu0 %v548
      %882 = vmatmul.mubr.bf16.gmra.mrb[0].mxu0 %v547
      %v883 = vpop.f32.mrb[0].mxu0
      %v884 = vadd.f32 0.0, %v883
      %v885 = vpop.f32.mrb[0].mxu0
      %v886 = vpop.f32.mrb[0].mxu0
      %v887 = vadd.f32 0.0, %v886
      %v888 = vpop.f32.mrb[0].mxu0
      %889 = vmatprep.mubr.bf16.mxu0 %v550
      %890 = vmatmul.mubr.bf16.gmra.mrb[0].mxu0 %v549
      %v891 = vpop.f32.mrb[0].mxu0
      %v892 = vadd.f32 0.0, %v891
      %v893 = vpop.f32.mrb[0].mxu0
      %v894 = vpop.f32.mrb[0].mxu0
      %v895 = vadd.f32 0.0, %v894
      %v896 = vpop.f32.mrb[0].mxu0
      %897 = vmatprep.mubr.bf16.mxu0 %v552
      %898 = vmatmul.mubr.bf16.gmra.mrb[0].mxu0 %v551
      %v899 = vpop.f32.mrb[0].mxu0
      %v900 = vadd.f32 0.0, %v899
      %v901 = vpop.f32.mrb[0].mxu0
      %v902 = vpop.f32.mrb[0].mxu0
      %v903 = vadd.f32 0.0, %v902
      %v904 = vpop.f32.mrb[0].mxu0
      %905 = vmatprep.mubr.bf16.mxu0 %v554
      %906 = vmatmul.mubr.bf16.gmra.mrb[0].mxu0 %v553
      %v907 = vpop.f32.mrb[0].mxu0
      %v908 = vadd.f32 0.0, %v907
      %v909 = vpop.f32.mrb[0].mxu0
      %v910 = vpop.f32.mrb[0].mxu0
      %v911 = vadd.f32 0.0, %v910
      %v912 = vpop.f32.mrb[0].mxu0
      %913 = vmatprep.mubr.bf16.mxu0 %v556
      %914 = vmatmul.mubr.bf16.gmra.mrb[0].mxu0 %v555
      %v915 = vpop.f32.mrb[0].mxu0
      %v916 = vadd.f32 0.0, %v915
      %v917 = vpop.f32.mrb[0].mxu0
      %v918 = vpop.f32.mrb[0].mxu0
      %v919 = vadd.f32 0.0, %v918
      %v920 = vpop.f32.mrb[0].mxu0
      %921 = vmatprep.mubr.bf16.mxu0 %v558
      %922 = vmatmul.mubr.bf16.gmra.mrb[0].mxu0 %v557
      %v923 = vpop.f32.mrb[0].mxu0
      %v924 = vadd.f32 0.0, %v923
      %v925 = vpop.f32.mrb[0].mxu0
      %v926 = vpop.f32.mrb[0].mxu0
      %v927 = vadd.f32 0.0, %v926
      %v928 = vpop.f32.mrb[0].mxu0
      %929 = vmatprep.mubr.bf16.mxu0 %v560
      %930 = vmatmul.mubr.bf16.gmra.mrb[0].mxu0 %v559
      %v931 = vpop.f32.mrb[0].mxu0
      %v932 = vadd.f32 0.0, %v931
      %v933 = vpop.f32.mrb[0].mxu0
      %v934 = vpop.f32.mrb[0].mxu0
      %v935 = vadd.f32 0.0, %v934
      %v936 = vpop.f32.mrb[0].mxu0
      %937 = vmatprep.mubr.bf16.mxu0 %v562
      %938 = vmatmul.mubr.bf16.gmra.mrb[0].mxu0 %v561
      %v939 = vpop.f32.mrb[0].mxu0
      %v940 = vadd.f32 0.0, %v939
      %v941 = vpop.f32.mrb[0].mxu0
      %v942 = vpop.f32.mrb[0].mxu0
      %v943 = vadd.f32 0.0, %v942
      %v944 = vpop.f32.mrb[0].mxu0
      %945 = vmatprep.mubr.bf16.mxu0 %v564
      %946 = vmatmul.mubr.bf16.gmra.mrb[0].mxu0 %v563
      %v947 = vpop.f32.mrb[0].mxu0
      %v948 = vadd.f32 0.0, %v947
      %v949 = vpop.f32.mrb[0].mxu0
      %v950 = vpop.f32.mrb[0].mxu0
      %v951 = vadd.f32 0.0, %v950
      %v952 = vpop.f32.mrb[0].mxu0
      %953 = vmatprep.mubr.bf16.mxu0 %v566
      %954 = vmatmul.mubr.bf16.gmra.mrb[0].mxu0 %v565
      %v955 = vpop.f32.mrb[0].mxu0
      %v956 = vadd.f32 0.0, %v955
      %v957 = vpop.f32.mrb[0].mxu0
      %v958 = vpop.f32.mrb[0].mxu0
      %v959 = vadd.f32 0.0, %v958
      %v960 = vpop.f32.mrb[0].mxu0
      %961 = vmatprep.mubr.bf16.mxu0 %v568
      %962 = vmatmul.mubr.bf16.gmra.mrb[0].mxu0 %v567
      %v963 = vpop.f32.mrb[0].mxu0
      %v964 = vadd.f32 0.0, %v963
      %v965 = vpop.f32.mrb[0].mxu0
      %v966 = vpop.f32.mrb[0].mxu0
      %v967 = vadd.f32 0.0, %v966
      %v968 = vpop.f32.mrb[0].mxu0
      %969 = vmatprep.mubr.bf16.mxu0 %v570
      %970 = vmatmul.mubr.bf16.gmra.mrb[0].mxu0 %v569
      %v971 = vpop.f32.mrb[0].mxu0
      %v972 = vadd.f32 0.0, %v971
      %v973 = vpop.f32.mrb[0].mxu0
      %v974 = vpop.f32.mrb[0].mxu0
      %v975 = vadd.f32 0.0, %v974
      %v976 = vpop.f32.mrb[0].mxu0
      %977 = vmatprep.mubr.bf16.mxu0 %v572
      %978 = vmatmul.mubr.bf16.gmra.mrb[0].mxu0 %v571
      %v979 = vpop.f32.mrb[0].mxu0
      %v980 = vadd.f32 0.0, %v979
      %v981 = vpop.f32.mrb[0].mxu0
      %v982 = vpop.f32.mrb[0].mxu0
      %v983 = vadd.f32 0.0, %v982
      %v984 = vpop.f32.mrb[0].mxu0
      %985 = vmatprep.mubr.bf16.mxu0 %v574
      %986 = vmatmul.mubr.bf16.gmra.mrb[0].mxu0 %v573
      %v987 = vpop.f32.mrb[0].mxu0
      %v988 = vadd.f32 0.0, %v987
      %v989 = vpop.f32.mrb[0].mxu0
      %v990 = vpop.f32.mrb[0].mxu0
      %v991 = vadd.f32 0.0, %v990
      %v992 = vpop.f32.mrb[0].mxu0
      %993 = vmatprep.mubr.bf16.mxu0 %v576
      %994 = vmatmul.mubr.bf16.gmra.mrb[0].mxu0 %v575
      %v995 = vpop.f32.mrb[0].mxu0
      %v996 = vadd.f32 0.0, %v995
      %v997 = vpop.f32.mrb[0].mxu0
      %v998 = vpop.f32.mrb[0].mxu0
      %v999 = vadd.f32 0.0, %v998
      %v1000 = vpop.f32.mrb[0].mxu0
      %1001 = vmatprep.mubr.bf16.mxu0 %v578
      %1002 = vmatmul.mubr.bf16.gmra.mrb[0].mxu0 %v577
      %v1003 = vpop.f32.mrb[0].mxu0
      %v1004 = vadd.f32 0.0, %v1003
      %v1005 = vpop.f32.mrb[0].mxu0
      %v1006 = vpop.f32.mrb[0].mxu0
      %v1007 = vadd.f32 0.0, %v1006
      %v1008 = vpop.f32.mrb[0].mxu0
      %1009 = vmatprep.mubr.bf16.mxu0 %v580
      %1010 = vmatmul.mubr.bf16.gmra.mrb[0].mxu0 %v579
      %v1011 = vpop.f32.mrb[0].mxu0
      %v1012 = vadd.f32 0.0, %v1011
      %v1013 = vpop.f32.mrb[0].mxu0
      %v1014 = vpop.f32.mrb[0].mxu0
      %v1015 = vadd.f32 0.0, %v1014
      %v1016 = vpop.f32.mrb[0].mxu0
      %1017 = vmatprep.mubr.bf16.mxu0 %v582
      %1018 = vmatmul.mubr.bf16.gmra.mrb[0].mxu0 %v581
      %v1019 = vpop.f32.mrb[0].mxu0
      %v1020 = vadd.f32 0.0, %v1019
      %v1021 = vpop.f32.mrb[0].mxu0
      %v1022 = vpop.f32.mrb[0].mxu0
      %v1023 = vadd.f32 0.0, %v1022
      %v1024 = vpop.f32.mrb[0].mxu0
      %1025 = vmatprep.mubr.bf16.mxu0 %v584
      %1026 = vmatmul.mubr.bf16.gmra.mrb[0].mxu0 %v583
      %v1027 = vpop.f32.mrb[0].mxu0
      %v1028 = vadd.f32 0.0, %v1027
      %v1029 = vpop.f32.mrb[0].mxu0
      %v1030 = vpop.f32.mrb[0].mxu0
      %v1031 = vadd.f32 0.0, %v1030
      %v1032 = vpop.f32.mrb[0].mxu0
      %1033 = vdwg.mxu0
      %v1034 = vtanh.pop %v780
      %v1035 = vtanh.pop %v783
      %v1036 = vtanh.pop %v788
      %v1037 = vtanh.pop %v791
      %v1038 = vtanh.pop %v796
      %v1039 = vtanh.pop %v799
      %v1040 = vtanh.pop %v804
      %v1041 = vtanh.pop %v807
      %v1042 = vtanh.pop %v812
      %v1043 = vtanh.pop %v815
      %v1044 = vtanh.pop %v820
      %v1045 = vtanh.pop %v823
      %v1046 = vtanh.pop %v828
      %v1047 = vtanh.pop %v831
      %v1048 = vtanh.pop %v836
      %v1049 = vtanh.pop %v839
      %v1050 = vtanh.pop %v844
      %v1051 = vtanh.pop %v847
      %v1052 = vtanh.pop %v852
      %v1053 = vtanh.pop %v855
      %v1054 = vtanh.pop %v860
      %v1055 = vtanh.pop %v863
      %v1056 = vtanh.pop %v868
      %v1057 = vtanh.pop %v871
      %v1058 = vtanh.pop %v876
      %v1059 = vtanh.pop %v879
      %v1060 = vtanh.pop %v884
      %v1061 = vtanh.pop %v887
      %v1062 = vtanh.pop %v892
      %v1063 = vtanh.pop %v895
      %v1064 = vtanh.pop %v900
      %v1065 = vtanh.pop %v903
      %v1066 = vtanh.pop %v908
      %v1067 = vtanh.pop %v911
      %v1068 = vtanh.pop %v916
      %v1069 = vtanh.pop %v919
      %v1070 = vtanh.pop %v924
      %v1071 = vtanh.pop %v927
      %v1072 = vtanh.pop %v932
      %v1073 = vtanh.pop %v935
      %v1074 = vtanh.pop %v940
      %v1075 = vtanh.pop %v943
      %v1076 = vtanh.pop %v948
      %v1077 = vtanh.pop %v951
      %v1078 = vtanh.pop %v956
      %v1079 = vtanh.pop %v959
      %v1080 = vtanh.pop %v964
      %v1081 = vtanh.pop %v967
      %v1082 = vtanh.pop %v972
      %v1083 = vtanh.pop %v975
      %v1084 = vtanh.pop %v980
      %v1085 = vtanh.pop %v983
      %v1086 = vtanh.pop %v988
      %v1087 = vtanh.pop %v991
      %v1088 = vtanh.pop %v996
      %v1089 = vtanh.pop %v999
      %v1090 = vtanh.pop %v1004
      %v1091 = vtanh.pop %v1007
      %v1092 = vtanh.pop %v1012
      %v1093 = vtanh.pop %v1015
      %v1094 = vtanh.pop %v1020
      %v1095 = vtanh.pop %v1023
      %v1096 = vtanh.pop %v1028
      %v1097 = vtanh.pop %v1031
      %vm1098 = vcmask 23552
      %1099 = vst.msk [vmem:[%s230] sm:$0xff] %vm1098, %v1034
      %1100 = vst.msk [vmem:[%s230 + $0x8] sm:$0xff] %vm1098, %v1035
      %1101 = vst.msk [vmem:[%s230 + $0x10] sm:$0xff] %vm1098, %v1036
      %1102 = vst.msk [vmem:[%s230 + $0x18] sm:$0xff] %vm1098, %v1037
      %1103 = vst.msk [vmem:[%s230 + $0x20] sm:$0xff] %vm1098, %v1038
      %1104 = vst.msk [vmem:[%s230 + $0x28] sm:$0xff] %vm1098, %v1039
      %1105 = vst.msk [vmem:[%s230 + $0x30] sm:$0xff] %vm1098, %v1040
      %1106 = vst.msk [vmem:[%s230 + $0x38] sm:$0xff] %vm1098, %v1041
      %1107 = vst.msk [vmem:[%s230 + $0x40] sm:$0xff] %vm1098, %v1042
      %1108 = vst.msk [vmem:[%s230 + $0x48] sm:$0xff] %vm1098, %v1043
      %1109 = vst.msk [vmem:[%s230 + $0x50] sm:$0xff] %vm1098, %v1044
      %1110 = vst.msk [vmem:[%s230 + $0x58] sm:$0xff] %vm1098, %v1045
      %1111 = vst.msk [vmem:[%s230 + $0x60] sm:$0xff] %vm1098, %v1046
      %1112 = vst.msk [vmem:[%s230 + $0x68] sm:$0xff] %vm1098, %v1047
      %1113 = vst.msk [vmem:[%s230 + $0x70] sm:$0xff] %vm1098, %v1048
      %1114 = vst.msk [vmem:[%s230 + $0x78] sm:$0xff] %vm1098, %v1049
      %1115 = vst.msk [vmem:[%s230 + $0x80] sm:$0xff] %vm1098, %v1050
      %1116 = vst.msk [vmem:[%s230 + $0x88] sm:$0xff] %vm1098, %v1051
      %1117 = vst.msk [vmem:[%s230 + $0x90] sm:$0xff] %vm1098, %v1052
      %1118 = vst.msk [vmem:[%s230 + $0x98] sm:$0xff] %vm1098, %v1053
      %1119 = vst.msk [vmem:[%s230 + $0xa0] sm:$0xff] %vm1098, %v1054
      %1120 = vst.msk [vmem:[%s230 + $0xa8] sm:$0xff] %vm1098, %v1055
      %1121 = vst.msk [vmem:[%s230 + $0xb0] sm:$0xff] %vm1098, %v1056
      %1122 = vst.msk [vmem:[%s230 + $0xb8] sm:$0xff] %vm1098, %v1057
      %1123 = vst.msk [vmem:[%s230 + $0xc0] sm:$0xff] %vm1098, %v1058
      %1124 = vst.msk [vmem:[%s230 + $0xc8] sm:$0xff] %vm1098, %v1059
      %1125 = vst.msk [vmem:[%s230 + $0xd0] sm:$0xff] %vm1098, %v1060
      %1126 = vst.msk [vmem:[%s230 + $0xd8] sm:$0xff] %vm1098, %v1061
      %1127 = vst.msk [vmem:[%s230 + $0xe0] sm:$0xff] %vm1098, %v1062
      %1128 = vst.msk [vmem:[%s230 + $0xe8] sm:$0xff] %vm1098, %v1063
      %1129 = vst.msk [vmem:[%s230 + $0xf0] sm:$0xff] %vm1098, %v1064
      %1130 = vst.msk [vmem:[%s230 + $0xf8] sm:$0xff] %vm1098, %v1065
      %1131 = vst.msk [vmem:[%s230 + $0x100] sm:$0xff] %vm1098, %v1066
      %1132 = vst.msk [vmem:[%s230 + $0x108] sm:$0xff] %vm1098, %v1067
      %1133 = vst.msk [vmem:[%s230 + $0x110] sm:$0xff] %vm1098, %v1068
      %1134 = vst.msk [vmem:[%s230 + $0x118] sm:$0xff] %vm1098, %v1069
      %1135 = vst.msk [vmem:[%s230 + $0x120] sm:$0xff] %vm1098, %v1070
      %1136 = vst.msk [vmem:[%s230 + $0x128] sm:$0xff] %vm1098, %v1071
      %1137 = vst.msk [vmem:[%s230 + $0x130] sm:$0xff] %vm1098, %v1072
      %1138 = vst.msk [vmem:[%s230 + $0x138] sm:$0xff] %vm1098, %v1073
      %1139 = vst.msk [vmem:[%s230 + $0x140] sm:$0xff] %vm1098, %v1074
      %1140 = vst.msk [vmem:[%s230 + $0x148] sm:$0xff] %vm1098, %v1075
      %1141 = vst.msk [vmem:[%s230 + $0x150] sm:$0xff] %vm1098, %v1076
      %1142 = vst.msk [vmem:[%s230 + $0x158] sm:$0xff] %vm1098, %v1077
      %1143 = vst.msk [vmem:[%s230 + $0x160] sm:$0xff] %vm1098, %v1078
      %1144 = vst.msk [vmem:[%s230 + $0x168] sm:$0xff] %vm1098, %v1079
      %1145 = vst.msk [vmem:[%s230 + $0x170] sm:$0xff] %vm1098, %v1080
      %1146 = vst.msk [vmem:[%s230 + $0x178] sm:$0xff] %vm1098, %v1081
      %1147 = vst.msk [vmem:[%s230 + $0x180] sm:$0xff] %vm1098, %v1082
      %1148 = vst.msk [vmem:[%s230 + $0x188] sm:$0xff] %vm1098, %v1083
      %1149 = vst.msk [vmem:[%s230 + $0x190] sm:$0xff] %vm1098, %v1084
      %1150 = vst.msk [vmem:[%s230 + $0x198] sm:$0xff] %vm1098, %v1085
      %1151 = vst.msk [vmem:[%s230 + $0x1a0] sm:$0xff] %vm1098, %v1086
      %1152 = vst.msk [vmem:[%s230 + $0x1a8] sm:$0xff] %vm1098, %v1087
      %1153 = vst.msk [vmem:[%s230 + $0x1b0] sm:$0xff] %vm1098, %v1088
      %1154 = vst.msk [vmem:[%s230 + $0x1b8] sm:$0xff] %vm1098, %v1089
      %1155 = vst.msk [vmem:[%s230 + $0x1c0] sm:$0xff] %vm1098, %v1090
      %1156 = vst.msk [vmem:[%s230 + $0x1c8] sm:$0xff] %vm1098, %v1091
      %1157 = vst.msk [vmem:[%s230 + $0x1d0] sm:$0xff] %vm1098, %v1092
      %1158 = vst.msk [vmem:[%s230 + $0x1d8] sm:$0xff] %vm1098, %v1093
      %1159 = vst.msk [vmem:[%s230 + $0x1e0] sm:$0xff] %vm1098, %v1094
      %1160 = vst.msk [vmem:[%s230 + $0x1e8] sm:$0xff] %vm1098, %v1095
      %1161 = vst.msk [vmem:[%s230 + $0x1f0] sm:$0xff] %vm1098, %v1096
      %1162 = vst.msk [vmem:[%s230 + $0x1f8] sm:$0xff] %vm1098, %v1097
      %s1163 = smul.u32 64, %s20
      %p1164 = scmp.lt.s32.totalorder %s18, 3
      %s1165 = scalar_select %p1164, %s18, 3
      %p1166 = scmp.lt.s32.totalorder %s1163, 255
      %s1167 = scalar_select %p1166, %s1163, 255
      %p1168 = scmp.lt.s32.totalorder %s19, 0
      %s1169 = scalar_select %p1168, %s19, 0
      %s1170 = sadd.s32 %s1169, %s1167
      %s1171 = smul.addr %s1165, 256
      %s1172 = sadd.s32 %s1170, %s1171
      %s1173 = smul.addr %s1172, 8
      %s1174 = scalar_lea.vmem %s2, %s1173
      // Predicated region
      $region29: #{generator_forward.17} parent=27 // pred_check
        %p1175 = pneg %p110
      $region30: #{generator_forward.17} parent=27 // pred_check_branch
        %1177 = sbr.rel (%p1175) target = $region32
      $region31: #{generator_forward.17} parent=27 // pred_region
        %s1178 = smul.u32 64, %s20
      $region32: #{generator_forward.17} parent=27 // pred_fallthru
        _
    $region28: #{generator_forward.17} parent=5 // pred_fallthru
      _
    %p1179 = scmp.le.s32.totalorder 2, %s8
    // Predicated region
    $region33: #{generator_forward.17} parent=5 // pred_check
      %p1180 = pneg %p1179
    $region34: #{generator_forward.17} parent=5 // pred_check_branch
      %1182 = sbr.rel (%p1180) target = $region36
    $region35: #{generator_forward.17} parent=5 // pred_region
      %s1183 = ssub.s32 %s8, 2
      // Predicated region
      $region37: #{generator_forward.17} parent=35 // pred_check
        %p1184 = pneg %p116
      $region38: #{generator_forward.17} parent=35 // pred_check_branch
        %1186 = sbr.rel (%p1184) target = $region40
      $region39: #{generator_forward.17} parent=35 // pred_region
        %s1187 = smul.u32 64, %s23
        %p1188 = scmp.lt.s32.totalorder %s21, 3
        %s1189 = scalar_select %p1188, %s21, 3
        %p1190 = scmp.lt.s32.totalorder %s1187, 255
        %s1191 = scalar_select %p1190, %s1187, 255
        %p1192 = scmp.lt.s32.totalorder %s22, 0
        %s1193 = scalar_select %p1192, %s22, 0
        %s1194 = sadd.s32 %s1193, %s1191
        %s1195 = smul.addr %s1189, 256
        %s1196 = sadd.s32 %s1194, %s1195
        %s1197 = smul.addr %s1196, 8
        %s1198 = scalar_lea.vmem %s2, %s1197
      $region40: #{generator_forward.17} parent=35 // pred_fallthru
        _
    $region36: #{generator_forward.17} parent=5 // pred_fallthru
      _
  $region6: #{generator_forward.17} parent=0 // loop_footer
    %s12 = sadd.s32 1, %s8
  $region7: #{generator_forward.17} parent=0 // loop_footer_branch
    %7 = sbr.rel target = $region3
  $region8: #{generator_forward.17} parent=0 // loop_exit
    _

</llo_original>
